<compile_context>
chip_gen: v5e
topology: v5e:2x2
jax: 0.10.0
libtpu: 0.0.40
codegen_flags: <defaults>
</compile_context>

<pallas_src>
import functools

import jax
import jax.numpy as jnp
from jax.experimental import pallas as pl
from jax.experimental.pallas import tpu as pltpu


# ----------------------------------------------------------------------------
# In-kernel helper math (traced inside the Pallas bodies)
# ----------------------------------------------------------------------------

def _erf(x):
    # Abramowitz & Stegun 7.1.26 rational approximation (max abs err ~1.5e-7),
    # built only from exp/mul/add/where so exact GELU stays inside the fused
    # kernel regardless of whether lax.erf has a Mosaic lowering.
    a1, a2, a3, a4, a5 = (0.254829592, -0.284496736, 1.421413741,
                          -1.453152027, 1.061405429)
    p = 0.3275911
    ax = jnp.abs(x)
    t = 1.0 / (1.0 + p * ax)
    poly = ((((a5 * t + a4) * t + a3) * t + a2) * t + a1) * t
    y = 1.0 - poly * jnp.exp(-ax * ax)
    return jnp.where(x >= 0, y, -y)


def _gelu_exact(x):
    # matches torch.nn.GELU() (erf based) to ~1e-7 absolute
    return 0.5 * x * (1.0 + _erf(x * 0.7071067811865476))


def _group_layernorm(x, gamma, beta, groups, d, eps):
    # x: (N, groups*d); gamma/beta: (1, groups*d)
    # torch GroupLayerNorm: (x - mean) / (sqrt(var_pop) + eps) * g + b
    parts = []
    for gi in range(groups):
        xg = x[:, gi * d:(gi + 1) * d]
        mean = jnp.mean(xg, axis=-1, keepdims=True)
        var = jnp.mean(jnp.square(xg - mean), axis=-1, keepdims=True)
        parts.append((xg - mean) / (jnp.sqrt(var) + eps))
    xn = parts[0] if groups == 1 else jnp.concatenate(parts, axis=-1)
    return xn * gamma + beta


# ----------------------------------------------------------------------------
# Fused kernels
# ----------------------------------------------------------------------------

def _block_kernel(x_ref, ag_ref, ab_ref, wqkv_ref, wout_ref, bout_ref,
                  fg_ref, fb_ref, wff1_ref, bff1_ref, wff2_ref, bff2_ref,
                  o_ref, *, groups, heads, dim, dim_head, eps, use_bf16):
    # One full TransformerBlock for one batch element; grid is over batch.
    cdt = jnp.bfloat16 if use_bf16 else jnp.float32

    def dot(a, b):
        return jnp.dot(a.astype(cdt), b.astype(cdt),
                       preferred_element_type=jnp.float32)

    x = x_ref[0].astype(jnp.float32)                     # (N, C), C = groups*dim
    inner = groups * heads * dim_head

    # --- pre-norm + fused QKV projection (softmax scale pre-folded into W_q) ---
    h = _group_layernorm(x, ag_ref[...], ab_ref[...], groups, dim, eps)
    qkv = dot(h, wqkv_ref[...])                          # (N, 3*inner)
    q = qkv[:, :inner]
    k = qkv[:, inner:2 * inner]
    v = qkv[:, 2 * inner:]

    # --- per-(group, head) attention; ESBN cumulative sum of sim over groups ---
    # TODO(synk): key-padding / causal masks not implemented (reference forward
    # is exercised with mask=None, causal=False).
    outs = [[None] * heads for _ in range(groups)]
    for hi in range(heads):
        acc = None
        for gi in range(groups):
            off = (gi * heads + hi) * dim_head           # channel order 'g h d'
            qg = q[:, off:off + dim_head]
            kg = k[:, off:off + dim_head]
            vg = v[:, off:off + dim_head]
            sim = jax.lax.dot_general(
                qg.astype(cdt), kg.astype(cdt), (((1,), (1,)), ((), ())),
                preferred_element_type=jnp.float32)      # (N, N)
            acc = sim if acc is None else acc + sim      # cumsum over groups
            m = jnp.max(acc, axis=-1, keepdims=True)
            p = jnp.exp(acc - m)
            attn = p * pl.reciprocal(jnp.sum(p, axis=-1, keepdims=True))
            outs[gi][hi] = dot(attn, vg)                 # (N, Dh)
    attn_out = jnp.concatenate(
        [outs[gi][hi] for gi in range(groups) for hi in range(heads)], axis=-1)

    # --- output projection + residual ---
    x1 = dot(attn_out, wout_ref[...]) + bout_ref[...] + x

    # --- pre-norm + grouped FFN (block-diagonal weights, one matmul each) ---
    h2 = _group_layernorm(x1, fg_ref[...], fb_ref[...], groups, dim, eps)
    hid = _gelu_exact(dot(h2, wff1_ref[...]) + bff1_ref[...])
    o_ref[0] = (dot(hid, wff2_ref[...]) + bff2_ref[...] + x1).astype(o_ref.dtype)


def _head_kernel(x_ref, w_ref, b_ref, lw_ref, lb_ref, o_ref, *, eps, use_bf16):
    # nn.LayerNorm (rsqrt(var+eps)) followed by the logits Linear, fused.
    cdt = jnp.bfloat16 if use_bf16 else jnp.float32
    x = x_ref[0].astype(jnp.float32)
    mean = jnp.mean(x, axis=-1, keepdims=True)
    var = jnp.mean(jnp.square(x - mean), axis=-1, keepdims=True)
    y = (x - mean) * jax.lax.rsqrt(var + eps)
    y = y * w_ref[...] + b_ref[...]
    o_ref[0] = (jnp.dot(y.astype(cdt), lw_ref[...].astype(cdt),
                        preferred_element_type=jnp.float32)
                + lb_ref[...]).astype(o_ref.dtype)


# ----------------------------------------------------------------------------
# Wrappers
# ----------------------------------------------------------------------------

def _full_spec(arr):
    zeros = (0,) * arr.ndim
    return pl.BlockSpec(arr.shape, lambda b: zeros)      # weight resident in VMEM


def transformer_block(x, fp, *, dim, dim_head, heads, groups,
                      eps=1e-5, use_bf16=False):
    B, N, C = x.shape
    assert C == groups * dim
    kernel = functools.partial(_block_kernel, groups=groups, heads=heads,
                               dim=dim, dim_head=dim_head, eps=eps,
                               use_bf16=use_bf16)
    operands = (x, fp['attn_g'], fp['attn_b'], fp['wqkv'], fp['wout'],
                fp['bout'], fp['ff_g'], fp['ff_b'], fp['wff1'], fp['bff1'],
                fp['wff2'], fp['bff2'])
    in_specs = [pl.BlockSpec((1, N, C), lambda b: (b, 0, 0))]
    in_specs += [_full_spec(a) for a in operands[1:]]
    return pl.pallas_call(
        kernel,
        out_shape=jax.ShapeDtypeStruct((B, N, C), x.dtype),
        grid=(B,),
        in_specs=in_specs,
        out_specs=pl.BlockSpec((1, N, C), lambda b: (b, 0, 0)),
        compiler_params=pltpu.CompilerParams(
            dimension_semantics=("parallel",)),          # both TCs on v7x
    )(*operands)


def lm_head(x, ln_w, ln_b, lin_wt, lin_b, *, eps=1e-5, use_bf16=False):
    B, N, D = x.shape
    V = lin_wt.shape[1]
    return pl.pallas_call(
        functools.partial(_head_kernel, eps=eps, use_bf16=use_bf16),
        out_shape=jax.ShapeDtypeStruct((B, N, V), x.dtype),
        grid=(B,),
        in_specs=[pl.BlockSpec((1, N, D), lambda b: (b, 0, 0)),
                  pl.BlockSpec((1, D), lambda b: (0, 0)),
                  pl.BlockSpec((1, D), lambda b: (0, 0)),
                  pl.BlockSpec((D, V), lambda b: (0, 0)),
                  pl.BlockSpec((1, V), lambda b: (0, 0))],
        out_specs=pl.BlockSpec((1, N, V), lambda b: (b, 0, 0)),
        compiler_params=pltpu.CompilerParams(
            dimension_semantics=("parallel",)),
    )(x, ln_w.reshape(1, D), ln_b.reshape(1, D), lin_wt, lin_b.reshape(1, V))


def esbn_forward(tokens, fparams, *, dim, dim_head, heads, use_bf16=False):
    B, N = tokens.shape
    # Embedding gathers stay in plain JAX (no Pallas win at this size).
    x = fparams['token_emb'][tokens] + fparams['pos_emb'][:N][None]   # (B, N, dim)

    kw = dict(dim=dim, dim_head=dim_head, heads=heads, use_bf16=use_bf16)
    x = transformer_block(x, fparams['pre_block'], groups=1, **kw)

    # Mirrors the reference's `symbols[:, :n]` (feature-axis slice); like the
    # PyTorch module it requires N == max_seq_len and dim <= N.
    symbols = fparams['symbols'][:, :N]
    sym = jnp.broadcast_to(symbols[None], (B,) + symbols.shape)       # (B, N, dim)
    x = jnp.concatenate([x[:, :, None, :], sym[:, :, None, :]], axis=2)
    x = x.reshape(B, N, 2 * dim)                                      # groups=2

    for layer_fp in fparams['layers']:
        x = transformer_block(x, layer_fp, groups=2, **kw)

    x = x[..., dim:2 * dim]                    # select symbol stream (s = 1)
    x = transformer_block(x, fparams['post_block'], groups=1, **kw)
    return lm_head(x, fparams['ln_w'], fparams['ln_b'],
                   fparams['lin_wt'], fparams['lin_b'], use_bf16=use_bf16)


# ----------------------------------------------------------------------------
# Parameter handling (PyTorch-convention shapes -> fused kernel operands)
# ----------------------------------------------------------------------------

def _block_diag_t(w):
    # w: (g, out_g, in_g)  ->  (g*in_g, g*out_g) block-diagonal of per-group W^T,
    # so a grouped 1x1 Conv1d becomes one lane-dense matmul inside the kernel.
    g, og, ig = w.shape
    out = jnp.zeros((g * ig, g * og), w.dtype)
    for gi in range(g):
        out = jax.lax.dynamic_update_slice(
            out, jnp.transpose(w[gi]), (gi * ig, gi * og))
    return out


def fuse_block_params(p, *, dim, dim_head, heads, groups):
    scale = dim_head ** -0.5
    hidden = p['ff_w1'].shape[1]
    wqkv = jnp.concatenate(
        [jnp.transpose(p['w_q']) * scale,      # fold softmax scale into W_q
         jnp.transpose(p['w_k']),
         jnp.transpose(p['w_v'])], axis=1)     # (C, 3*inner)
    return {
        'attn_g': p['attn_norm_g'].reshape(1, groups * dim),
        'attn_b': p['attn_norm_b'].reshape(1, groups * dim),
        'wqkv': wqkv,
        'wout': jnp.transpose(p['w_out']),                 # (inner, C)
        'bout': p['b_out'].reshape(1, groups * dim),
        'ff_g': p['ff_norm_g'].reshape(1, groups * dim),
        'ff_b': p['ff_norm_b'].reshape(1, groups * dim),
        'wff1': _block_diag_t(p['ff_w1']),                 # (C, g*hidden)
        'bff1': p['ff_b1'].reshape(1, groups * hidden),
        'wff2': _block_diag_t(p['ff_w2']),                 # (g*hidden, C)
        'bff2': p['ff_b2'].reshape(1, groups * dim),
    }


def fuse_params(params, *, dim, dim_head, heads):
    fb = functools.partial(fuse_block_params, dim=dim, dim_head=dim_head,
                           heads=heads)
    return {
        'token_emb': params['token_emb'],
        'pos_emb': params['pos_emb'],
        'symbols': params['symbols'],
        'pre_block': fb(params['pre_block'], groups=1),
        'layers': [fb(lp, groups=2) for lp in params['layers']],
        'post_block': fb(params['post_block'], groups=1),
        'ln_w': params['ln_w'],
        'ln_b': params['ln_b'],
        'lin_wt': jnp.transpose(params['lin_w']),
        'lin_b': params['lin_b'],
    }


# Deterministic parameter init (shapes follow the PyTorch module __init__)
def _init_block(key, *, dim, dim_head, heads, ff_mult, groups):
    inner = dim_head * heads * groups
    input_dim = dim * groups
    hidden = dim * ff_mult
    ks = jax.random.split(key, 6)
    std = 0.02
    f32 = jnp.float32
    return {
        'attn_norm_g': jnp.ones((groups, 1, dim), f32),
        'attn_norm_b': jnp.zeros((groups, 1, dim), f32),
        'w_q': std * jax.random.normal(ks[0], (inner, input_dim), f32),
        'w_k': std * jax.random.normal(ks[1], (inner, input_dim), f32),
        'w_v': std * jax.random.normal(ks[2], (inner, input_dim), f32),
        'w_out': std * jax.random.normal(ks[3], (input_dim, inner), f32),
        'b_out': jnp.zeros((input_dim,), f32),
        'ff_norm_g': jnp.ones((groups, 1, dim), f32),
        'ff_norm_b': jnp.zeros((groups, 1, dim), f32),
        'ff_w1': std * jax.random.normal(ks[4], (groups, hidden, dim), f32),
        'ff_b1': jnp.zeros((groups, hidden), f32),
        'ff_w2': std * jax.random.normal(ks[5], (groups, dim, hidden), f32),
        'ff_b2': jnp.zeros((groups, dim), f32),
    }


def init_params(key, *, dim, depth, num_tokens, max_seq_len, dim_head, heads, ff_mult):
    f32 = jnp.float32
    std = 0.02
    keys = jax.random.split(key, 6 + depth)
    return {
        'token_emb': std * jax.random.normal(keys[0], (num_tokens, dim), f32),
        'pos_emb': std * jax.random.normal(keys[1], (max_seq_len, dim), f32),
        'symbols': jax.random.normal(keys[2], (max_seq_len, dim), f32),
        'pre_block': _init_block(keys[3], dim=dim, dim_head=dim_head,
                                 heads=heads, ff_mult=ff_mult, groups=1),
        'layers': [_init_block(keys[6 + i], dim=dim, dim_head=dim_head,
                               heads=heads, ff_mult=ff_mult, groups=2)
                   for i in range(depth)],
        'post_block': _init_block(keys[4], dim=dim, dim_head=dim_head,
                                  heads=heads, ff_mult=ff_mult, groups=1),
        'ln_w': jnp.ones((dim,), f32),
        'ln_b': jnp.zeros((dim,), f32),
        'lin_w': std * jax.random.normal(keys[5], (num_tokens, dim), f32),
        'lin_b': jnp.zeros((num_tokens,), f32),
    }


if __name__ == "__main__":
    dim, depth, num_tokens, max_seq_len = 32, 2, 50, 32
    dim_head, heads, ff_mult = 16, 4, 4
    B, N = 2, max_seq_len    # reference symbol-concat requires N == max_seq_len

    key = jax.random.PRNGKey(0)
    pkey, dkey = jax.random.split(key)
    params = init_params(pkey, dim=dim, depth=depth, num_tokens=num_tokens,
                         max_seq_len=max_seq_len, dim_head=dim_head,
                         heads=heads, ff_mult=ff_mult)
    # Build fused kernel operands once (weight-only concats / block-diagonals).
    fparams = fuse_params(params, dim=dim, dim_head=dim_head, heads=heads)
    tokens = jax.random.randint(dkey, (B, N), 0, num_tokens, dtype=jnp.int32)

    # use_bf16=True enables bf16 MXU operands (f32 accumulation) on v6e/v7x;
    # kept False by default to stay bit-close to the f32 reference.
    fwd = jax.jit(functools.partial(esbn_forward, dim=dim, dim_head=dim_head,
                                    heads=heads, use_bf16=False))
    logits = fwd(tokens, fparams)
    jax.block_until_ready(logits)
    assert logits.shape == (B, N, num_tokens), logits.shape
    print("KERNEL_OK")
</pallas_src>

<mosaic_0001>
module attributes {stable_mosaic.version = 11 : i64} {
  func.func @_block_kernel(%arg0: i32, %arg1: memref<1x32x32xf32, #tpu.memory_space<vmem>>, %arg2: memref<1x32xf32, #tpu.memory_space<vmem>>, %arg3: memref<1x32xf32, #tpu.memory_space<vmem>>, %arg4: memref<32x192xf32, #tpu.memory_space<vmem>>, %arg5: memref<64x32xf32, #tpu.memory_space<vmem>>, %arg6: memref<1x32xf32, #tpu.memory_space<vmem>>, %arg7: memref<1x32xf32, #tpu.memory_space<vmem>>, %arg8: memref<1x32xf32, #tpu.memory_space<vmem>>, %arg9: memref<32x128xf32, #tpu.memory_space<vmem>>, %arg10: memref<1x128xf32, #tpu.memory_space<vmem>>, %arg11: memref<128x32xf32, #tpu.memory_space<vmem>>, %arg12: memref<1x32xf32, #tpu.memory_space<vmem>>, %arg13: memref<1x32x32xf32, #tpu.memory_space<vmem>>) attributes {dimension_semantics = [#tpu.dimension_semantics<parallel>], iteration_bounds = array<i64: 2>, scalar_prefetch = 0 : i64, scratch_operands = 0 : i64, tpu.core_type = #tpu.core_type<tc>, window_params = [{transform_indices = @transform_0, window_bounds = array<i64: 1, 32, 32>}, {pipeline_mode = #tpu.pipeline_mode<synchronous>, transform_indices = @transform_1, window_bounds = array<i64: 1, 32>}, {pipeline_mode = #tpu.pipeline_mode<synchronous>, transform_indices = @transform_2, window_bounds = array<i64: 1, 32>}, {pipeline_mode = #tpu.pipeline_mode<synchronous>, transform_indices = @transform_3, window_bounds = array<i64: 32, 192>}, {pipeline_mode = #tpu.pipeline_mode<synchronous>, transform_indices = @transform_4, window_bounds = array<i64: 64, 32>}, {pipeline_mode = #tpu.pipeline_mode<synchronous>, transform_indices = @transform_5, window_bounds = array<i64: 1, 32>}, {pipeline_mode = #tpu.pipeline_mode<synchronous>, transform_indices = @transform_6, window_bounds = array<i64: 1, 32>}, {pipeline_mode = #tpu.pipeline_mode<synchronous>, transform_indices = @transform_7, window_bounds = array<i64: 1, 32>}, {pipeline_mode = #tpu.pipeline_mode<synchronous>, transform_indices = @transform_8, window_bounds = array<i64: 32, 128>}, {pipeline_mode = #tpu.pipeline_mode<synchronous>, transform_indices = @transform_9, window_bounds = array<i64: 1, 128>}, {pipeline_mode = #tpu.pipeline_mode<synchronous>, transform_indices = @transform_10, window_bounds = array<i64: 128, 32>}, {pipeline_mode = #tpu.pipeline_mode<synchronous>, transform_indices = @transform_11, window_bounds = array<i64: 1, 32>}, {transform_indices = @transform_12, window_bounds = array<i64: 1, 32, 32>}]} {
    %c0 = arith.constant 0 : index
    %c0_0 = arith.constant 0 : index
    %c0_1 = arith.constant 0 : index
    %0 = vector.load %arg1[%c0, %c0_0, %c0_1] : memref<1x32x32xf32, #tpu.memory_space<vmem>>, vector<1x32x32xf32>
    %1 = vector.shape_cast %0 : vector<1x32x32xf32> to vector<32x32xf32>
    %c0_2 = arith.constant 0 : index
    %c0_3 = arith.constant 0 : index
    %2 = vector.load %arg2[%c0_2, %c0_3] : memref<1x32xf32, #tpu.memory_space<vmem>>, vector<1x32xf32>
    %c0_4 = arith.constant 0 : index
    %c0_5 = arith.constant 0 : index
    %3 = vector.load %arg3[%c0_4, %c0_5] : memref<1x32xf32, #tpu.memory_space<vmem>>, vector<1x32xf32>
    %cst = arith.constant dense<0.000000e+00> : vector<32xf32>
    %4 = vector.multi_reduction <add>, %1, %cst [1] : vector<32x32xf32> to vector<32xf32>
    %5 = vector.shape_cast %4 : vector<32xf32> to vector<32x1xf32>
    %cst_6 = arith.constant 3.200000e+01 : f32
    %6 = vector.broadcast %cst_6 : f32 to vector<32x1xf32>
    %7 = arith.divf %5, %6 : vector<32x1xf32>
    %8 = vector.broadcast %7 : vector<32x1xf32> to vector<32x32xf32>
    %9 = arith.subf %1, %8 : vector<32x32xf32>
    %10 = arith.mulf %9, %9 : vector<32x32xf32>
    %cst_7 = arith.constant dense<0.000000e+00> : vector<32xf32>
    %11 = vector.multi_reduction <add>, %10, %cst_7 [1] : vector<32x32xf32> to vector<32xf32>
    %12 = vector.shape_cast %11 : vector<32xf32> to vector<32x1xf32>
    %cst_8 = arith.constant 3.200000e+01 : f32
    %13 = vector.broadcast %cst_8 : f32 to vector<32x1xf32>
    %14 = arith.divf %12, %13 : vector<32x1xf32>
    %15 = vector.broadcast %7 : vector<32x1xf32> to vector<32x32xf32>
    %16 = arith.subf %1, %15 : vector<32x32xf32>
    %17 = math.sqrt %14 : vector<32x1xf32>
    %cst_9 = arith.constant 9.99999974E-6 : f32
    %18 = vector.broadcast %cst_9 : f32 to vector<32x1xf32>
    %19 = arith.addf %17, %18 : vector<32x1xf32>
    %20 = vector.broadcast %19 : vector<32x1xf32> to vector<32x32xf32>
    %21 = arith.divf %16, %20 : vector<32x32xf32>
    %22 = vector.broadcast %2 : vector<1x32xf32> to vector<32x32xf32>
    %23 = arith.mulf %21, %22 : vector<32x32xf32>
    %24 = vector.broadcast %3 : vector<1x32xf32> to vector<32x32xf32>
    %25 = arith.addf %23, %24 : vector<32x32xf32>
    %c0_10 = arith.constant 0 : index
    %c0_11 = arith.constant 0 : index
    %26 = vector.load %arg4[%c0_10, %c0_11] : memref<32x192xf32, #tpu.memory_space<vmem>>, vector<32x192xf32>
    %cst_12 = arith.constant dense<0.000000e+00> : vector<32x192xf32>
    %27 = tpu.matmul %25, %26, %cst_12 {dimension_numbers = #tpu.dot_dimension_numbers<[1], [0], [0], [1], [0, 0, 1, 1], [], []>} : vector<32x32xf32>, vector<32x192xf32>, vector<32x192xf32> -> vector<32x192xf32>
    %28 = vector.extract_strided_slice %27 {offsets = [0, 0], sizes = [32, 64], strides = [1, 1]} : vector<32x192xf32> to vector<32x64xf32>
    %29 = vector.extract_strided_slice %27 {offsets = [0, 64], sizes = [32, 64], strides = [1, 1]} : vector<32x192xf32> to vector<32x64xf32>
    %30 = vector.extract_strided_slice %27 {offsets = [0, 128], sizes = [32, 64], strides = [1, 1]} : vector<32x192xf32> to vector<32x64xf32>
    %31 = vector.extract_strided_slice %28 {offsets = [0, 0], sizes = [32, 16], strides = [1, 1]} : vector<32x64xf32> to vector<32x16xf32>
    %32 = vector.extract_strided_slice %29 {offsets = [0, 0], sizes = [32, 16], strides = [1, 1]} : vector<32x64xf32> to vector<32x16xf32>
    %33 = vector.extract_strided_slice %30 {offsets = [0, 0], sizes = [32, 16], strides = [1, 1]} : vector<32x64xf32> to vector<32x16xf32>
    %cst_13 = arith.constant dense<0.000000e+00> : vector<32x32xf32>
    %34 = tpu.matmul %31, %32, %cst_13 {dimension_numbers = #tpu.dot_dimension_numbers<[1], [1], [0], [0], [0, 0, 1, 0], [], []>} : vector<32x16xf32>, vector<32x16xf32>, vector<32x32xf32> -> vector<32x32xf32>
    %cst_14 = arith.constant dense<0xFF800000> : vector<32xf32>
    %35 = vector.multi_reduction <maximumf>, %34, %cst_14 [1] : vector<32x32xf32> to vector<32xf32>
    %36 = vector.shape_cast %35 : vector<32xf32> to vector<32x1xf32>
    %37 = vector.broadcast %36 : vector<32x1xf32> to vector<32x32xf32>
    %38 = arith.subf %34, %37 : vector<32x32xf32>
    %39 = math.exp %38 : vector<32x32xf32>
    %cst_15 = arith.constant dense<0.000000e+00> : vector<32xf32>
    %40 = vector.multi_reduction <add>, %39, %cst_15 [1] : vector<32x32xf32> to vector<32xf32>
    %41 = vector.shape_cast %40 : vector<32xf32> to vector<32x1xf32>
    %42 = tpu.reciprocal %41 : vector<32x1xf32> -> vector<32x1xf32>
    %43 = vector.broadcast %42 : vector<32x1xf32> to vector<32x32xf32>
    %44 = arith.mulf %39, %43 : vector<32x32xf32>
    %cst_16 = arith.constant dense<0.000000e+00> : vector<32x16xf32>
    %45 = tpu.matmul %44, %33, %cst_16 {dimension_numbers = #tpu.dot_dimension_numbers<[1], [0], [0], [1], [0, 0, 1, 1], [], []>} : vector<32x32xf32>, vector<32x16xf32>, vector<32x16xf32> -> vector<32x16xf32>
    %46 = vector.extract_strided_slice %28 {offsets = [0, 16], sizes = [32, 16], strides = [1, 1]} : vector<32x64xf32> to vector<32x16xf32>
    %47 = vector.extract_strided_slice %29 {offsets = [0, 16], sizes = [32, 16], strides = [1, 1]} : vector<32x64xf32> to vector<32x16xf32>
    %48 = vector.extract_strided_slice %30 {offsets = [0, 16], sizes = [32, 16], strides = [1, 1]} : vector<32x64xf32> to vector<32x16xf32>
    %cst_17 = arith.constant dense<0.000000e+00> : vector<32x32xf32>
    %49 = tpu.matmul %46, %47, %cst_17 {dimension_numbers = #tpu.dot_dimension_numbers<[1], [1], [0], [0], [0, 0, 1, 0], [], []>} : vector<32x16xf32>, vector<32x16xf32>, vector<32x32xf32> -> vector<32x32xf32>
    %cst_18 = arith.constant dense<0xFF800000> : vector<32xf32>
    %50 = vector.multi_reduction <maximumf>, %49, %cst_18 [1] : vector<32x32xf32> to vector<32xf32>
    %51 = vector.shape_cast %50 : vector<32xf32> to vector<32x1xf32>
    %52 = vector.broadcast %51 : vector<32x1xf32> to vector<32x32xf32>
    %53 = arith.subf %49, %52 : vector<32x32xf32>
    %54 = math.exp %53 : vector<32x32xf32>
    %cst_19 = arith.constant dense<0.000000e+00> : vector<32xf32>
    %55 = vector.multi_reduction <add>, %54, %cst_19 [1] : vector<32x32xf32> to vector<32xf32>
    %56 = vector.shape_cast %55 : vector<32xf32> to vector<32x1xf32>
    %57 = tpu.reciprocal %56 : vector<32x1xf32> -> vector<32x1xf32>
    %58 = vector.broadcast %57 : vector<32x1xf32> to vector<32x32xf32>
    %59 = arith.mulf %54, %58 : vector<32x32xf32>
    %cst_20 = arith.constant dense<0.000000e+00> : vector<32x16xf32>
    %60 = tpu.matmul %59, %48, %cst_20 {dimension_numbers = #tpu.dot_dimension_numbers<[1], [0], [0], [1], [0, 0, 1, 1], [], []>} : vector<32x32xf32>, vector<32x16xf32>, vector<32x16xf32> -> vector<32x16xf32>
    %61 = vector.extract_strided_slice %28 {offsets = [0, 32], sizes = [32, 16], strides = [1, 1]} : vector<32x64xf32> to vector<32x16xf32>
    %62 = vector.extract_strided_slice %29 {offsets = [0, 32], sizes = [32, 16], strides = [1, 1]} : vector<32x64xf32> to vector<32x16xf32>
    %63 = vector.extract_strided_slice %30 {offsets = [0, 32], sizes = [32, 16], strides = [1, 1]} : vector<32x64xf32> to vector<32x16xf32>
    %cst_21 = arith.constant dense<0.000000e+00> : vector<32x32xf32>
    %64 = tpu.matmul %61, %62, %cst_21 {dimension_numbers = #tpu.dot_dimension_numbers<[1], [1], [0], [0], [0, 0, 1, 0], [], []>} : vector<32x16xf32>, vector<32x16xf32>, vector<32x32xf32> -> vector<32x32xf32>
    %cst_22 = arith.constant dense<0xFF800000> : vector<32xf32>
    %65 = vector.multi_reduction <maximumf>, %64, %cst_22 [1] : vector<32x32xf32> to vector<32xf32>
    %66 = vector.shape_cast %65 : vector<32xf32> to vector<32x1xf32>
    %67 = vector.broadcast %66 : vector<32x1xf32> to vector<32x32xf32>
    %68 = arith.subf %64, %67 : vector<32x32xf32>
    %69 = math.exp %68 : vector<32x32xf32>
    %cst_23 = arith.constant dense<0.000000e+00> : vector<32xf32>
    %70 = vector.multi_reduction <add>, %69, %cst_23 [1] : vector<32x32xf32> to vector<32xf32>
    %71 = vector.shape_cast %70 : vector<32xf32> to vector<32x1xf32>
    %72 = tpu.reciprocal %71 : vector<32x1xf32> -> vector<32x1xf32>
    %73 = vector.broadcast %72 : vector<32x1xf32> to vector<32x32xf32>
    %74 = arith.mulf %69, %73 : vector<32x32xf32>
    %cst_24 = arith.constant dense<0.000000e+00> : vector<32x16xf32>
    %75 = tpu.matmul %74, %63, %cst_24 {dimension_numbers = #tpu.dot_dimension_numbers<[1], [0], [0], [1], [0, 0, 1, 1], [], []>} : vector<32x32xf32>, vector<32x16xf32>, vector<32x16xf32> -> vector<32x16xf32>
    %76 = vector.extract_strided_slice %28 {offsets = [0, 48], sizes = [32, 16], strides = [1, 1]} : vector<32x64xf32> to vector<32x16xf32>
    %77 = vector.extract_strided_slice %29 {offsets = [0, 48], sizes = [32, 16], strides = [1, 1]} : vector<32x64xf32> to vector<32x16xf32>
    %78 = vector.extract_strided_slice %30 {offsets = [0, 48], sizes = [32, 16], strides = [1, 1]} : vector<32x64xf32> to vector<32x16xf32>
    %cst_25 = arith.constant dense<0.000000e+00> : vector<32x32xf32>
    %79 = tpu.matmul %76, %77, %cst_25 {dimension_numbers = #tpu.dot_dimension_numbers<[1], [1], [0], [0], [0, 0, 1, 0], [], []>} : vector<32x16xf32>, vector<32x16xf32>, vector<32x32xf32> -> vector<32x32xf32>
    %cst_26 = arith.constant dense<0xFF800000> : vector<32xf32>
    %80 = vector.multi_reduction <maximumf>, %79, %cst_26 [1] : vector<32x32xf32> to vector<32xf32>
    %81 = vector.shape_cast %80 : vector<32xf32> to vector<32x1xf32>
    %82 = vector.broadcast %81 : vector<32x1xf32> to vector<32x32xf32>
    %83 = arith.subf %79, %82 : vector<32x32xf32>
    %84 = math.exp %83 : vector<32x32xf32>
    %cst_27 = arith.constant dense<0.000000e+00> : vector<32xf32>
    %85 = vector.multi_reduction <add>, %84, %cst_27 [1] : vector<32x32xf32> to vector<32xf32>
    %86 = vector.shape_cast %85 : vector<32xf32> to vector<32x1xf32>
    %87 = tpu.reciprocal %86 : vector<32x1xf32> -> vector<32x1xf32>
    %88 = vector.broadcast %87 : vector<32x1xf32> to vector<32x32xf32>
    %89 = arith.mulf %84, %88 : vector<32x32xf32>
    %cst_28 = arith.constant dense<0.000000e+00> : vector<32x16xf32>
    %90 = tpu.matmul %89, %78, %cst_28 {dimension_numbers = #tpu.dot_dimension_numbers<[1], [0], [0], [1], [0, 0, 1, 1], [], []>} : vector<32x32xf32>, vector<32x16xf32>, vector<32x16xf32> -> vector<32x16xf32>
    %91 = tpu.concatenate %45, %60, %75, %90 in 1 : vector<32x16xf32>, vector<32x16xf32>, vector<32x16xf32>, vector<32x16xf32> -> vector<32x64xf32>
    %c0_29 = arith.constant 0 : index
    %c0_30 = arith.constant 0 : index
    %92 = vector.load %arg5[%c0_29, %c0_30] : memref<64x32xf32, #tpu.memory_space<vmem>>, vector<64x32xf32>
    %cst_31 = arith.constant dense<0.000000e+00> : vector<32x32xf32>
    %93 = tpu.matmul %91, %92, %cst_31 {dimension_numbers = #tpu.dot_dimension_numbers<[1], [0], [0], [1], [0, 0, 1, 1], [], []>} : vector<32x64xf32>, vector<64x32xf32>, vector<32x32xf32> -> vector<32x32xf32>
    %c0_32 = arith.constant 0 : index
    %c0_33 = arith.constant 0 : index
    %94 = vector.load %arg6[%c0_32, %c0_33] : memref<1x32xf32, #tpu.memory_space<vmem>>, vector<1x32xf32>
    %95 = vector.broadcast %94 : vector<1x32xf32> to vector<32x32xf32>
    %96 = arith.addf %93, %95 : vector<32x32xf32>
    %97 = arith.addf %96, %1 : vector<32x32xf32>
    %c0_34 = arith.constant 0 : index
    %c0_35 = arith.constant 0 : index
    %98 = vector.load %arg7[%c0_34, %c0_35] : memref<1x32xf32, #tpu.memory_space<vmem>>, vector<1x32xf32>
    %c0_36 = arith.constant 0 : index
    %c0_37 = arith.constant 0 : index
    %99 = vector.load %arg8[%c0_36, %c0_37] : memref<1x32xf32, #tpu.memory_space<vmem>>, vector<1x32xf32>
    %cst_38 = arith.constant dense<0.000000e+00> : vector<32xf32>
    %100 = vector.multi_reduction <add>, %97, %cst_38 [1] : vector<32x32xf32> to vector<32xf32>
    %101 = vector.shape_cast %100 : vector<32xf32> to vector<32x1xf32>
    %cst_39 = arith.constant 3.200000e+01 : f32
    %102 = vector.broadcast %cst_39 : f32 to vector<32x1xf32>
    %103 = arith.divf %101, %102 : vector<32x1xf32>
    %104 = vector.broadcast %103 : vector<32x1xf32> to vector<32x32xf32>
    %105 = arith.subf %97, %104 : vector<32x32xf32>
    %106 = arith.mulf %105, %105 : vector<32x32xf32>
    %cst_40 = arith.constant dense<0.000000e+00> : vector<32xf32>
    %107 = vector.multi_reduction <add>, %106, %cst_40 [1] : vector<32x32xf32> to vector<32xf32>
    %108 = vector.shape_cast %107 : vector<32xf32> to vector<32x1xf32>
    %cst_41 = arith.constant 3.200000e+01 : f32
    %109 = vector.broadcast %cst_41 : f32 to vector<32x1xf32>
    %110 = arith.divf %108, %109 : vector<32x1xf32>
    %111 = vector.broadcast %103 : vector<32x1xf32> to vector<32x32xf32>
    %112 = arith.subf %97, %111 : vector<32x32xf32>
    %113 = math.sqrt %110 : vector<32x1xf32>
    %cst_42 = arith.constant 9.99999974E-6 : f32
    %114 = vector.broadcast %cst_42 : f32 to vector<32x1xf32>
    %115 = arith.addf %113, %114 : vector<32x1xf32>
    %116 = vector.broadcast %115 : vector<32x1xf32> to vector<32x32xf32>
    %117 = arith.divf %112, %116 : vector<32x32xf32>
    %118 = vector.broadcast %98 : vector<1x32xf32> to vector<32x32xf32>
    %119 = arith.mulf %117, %118 : vector<32x32xf32>
    %120 = vector.broadcast %99 : vector<1x32xf32> to vector<32x32xf32>
    %121 = arith.addf %119, %120 : vector<32x32xf32>
    %c0_43 = arith.constant 0 : index
    %c0_44 = arith.constant 0 : index
    %122 = vector.load %arg9[%c0_43, %c0_44] : memref<32x128xf32, #tpu.memory_space<vmem>>, vector<32x128xf32>
    %cst_45 = arith.constant dense<0.000000e+00> : vector<32x128xf32>
    %123 = tpu.matmul %121, %122, %cst_45 {dimension_numbers = #tpu.dot_dimension_numbers<[1], [0], [0], [1], [0, 0, 1, 1], [], []>} : vector<32x32xf32>, vector<32x128xf32>, vector<32x128xf32> -> vector<32x128xf32>
    %c0_46 = arith.constant 0 : index
    %c0_47 = arith.constant 0 : index
    %124 = vector.load %arg10[%c0_46, %c0_47] : memref<1x128xf32, #tpu.memory_space<vmem>>, vector<1x128xf32>
    %125 = vector.broadcast %124 : vector<1x128xf32> to vector<32x128xf32>
    %126 = arith.addf %123, %125 : vector<32x128xf32>
    %cst_48 = arith.constant 5.000000e-01 : f32
    %127 = vector.broadcast %cst_48 : f32 to vector<32x128xf32>
    %128 = arith.mulf %127, %126 : vector<32x128xf32>
    %cst_49 = arith.constant 0.707106769 : f32
    %129 = vector.broadcast %cst_49 : f32 to vector<32x128xf32>
    %130 = arith.mulf %126, %129 : vector<32x128xf32>
    %131 = math.absf %130 : vector<32x128xf32>
    %cst_50 = arith.constant 0.327591091 : f32
    %132 = vector.broadcast %cst_50 : f32 to vector<32x128xf32>
    %133 = arith.mulf %132, %131 : vector<32x128xf32>
    %cst_51 = arith.constant 1.000000e+00 : f32
    %134 = vector.broadcast %cst_51 : f32 to vector<32x128xf32>
    %135 = arith.addf %134, %133 : vector<32x128xf32>
    %cst_52 = arith.constant 1.000000e+00 : f32
    %136 = vector.broadcast %cst_52 : f32 to vector<32x128xf32>
    %137 = arith.divf %136, %135 : vector<32x128xf32>
    %cst_53 = arith.constant 1.06140542 : f32
    %138 = vector.broadcast %cst_53 : f32 to vector<32x128xf32>
    %139 = arith.mulf %138, %137 : vector<32x128xf32>
    %cst_54 = arith.constant -1.45315206 : f32
    %140 = vector.broadcast %cst_54 : f32 to vector<32x128xf32>
    %141 = arith.addf %139, %140 : vector<32x128xf32>
    %142 = arith.mulf %141, %137 : vector<32x128xf32>
    %cst_55 = arith.constant 1.42141378 : f32
    %143 = vector.broadcast %cst_55 : f32 to vector<32x128xf32>
    %144 = arith.addf %142, %143 : vector<32x128xf32>
    %145 = arith.mulf %144, %137 : vector<32x128xf32>
    %cst_56 = arith.constant -0.284496725 : f32
    %146 = vector.broadcast %cst_56 : f32 to vector<32x128xf32>
    %147 = arith.addf %145, %146 : vector<32x128xf32>
    %148 = arith.mulf %147, %137 : vector<32x128xf32>
    %cst_57 = arith.constant 0.254829586 : f32
    %149 = vector.broadcast %cst_57 : f32 to vector<32x128xf32>
    %150 = arith.addf %148, %149 : vector<32x128xf32>
    %151 = arith.mulf %150, %137 : vector<32x128xf32>
    %cst_58 = arith.constant 0.000000e+00 : f32
    %152 = vector.broadcast %cst_58 : f32 to vector<32x128xf32>
    %153 = arith.subf %152, %131 : vector<32x128xf32>
    %154 = arith.mulf %153, %131 : vector<32x128xf32>
    %155 = math.exp %154 : vector<32x128xf32>
    %156 = arith.mulf %151, %155 : vector<32x128xf32>
    %cst_59 = arith.constant 1.000000e+00 : f32
    %157 = vector.broadcast %cst_59 : f32 to vector<32x128xf32>
    %158 = arith.subf %157, %156 : vector<32x128xf32>
    %cst_60 = arith.constant 0.000000e+00 : f32
    %159 = vector.broadcast %cst_60 : f32 to vector<32x128xf32>
    %160 = arith.cmpf oge, %130, %159 : vector<32x128xf32>
    %cst_61 = arith.constant 0.000000e+00 : f32
    %161 = vector.broadcast %cst_61 : f32 to vector<32x128xf32>
    %162 = arith.subf %161, %158 : vector<32x128xf32>
    %163 = arith.select %160, %158, %162 : vector<32x128xi1>, vector<32x128xf32>
    %cst_62 = arith.constant 1.000000e+00 : f32
    %164 = vector.broadcast %cst_62 : f32 to vector<32x128xf32>
    %165 = arith.addf %164, %163 : vector<32x128xf32>
    %166 = arith.mulf %128, %165 : vector<32x128xf32>
    %c0_63 = arith.constant 0 : index
    %c0_64 = arith.constant 0 : index
    %167 = vector.load %arg11[%c0_63, %c0_64] : memref<128x32xf32, #tpu.memory_space<vmem>>, vector<128x32xf32>
    %cst_65 = arith.constant dense<0.000000e+00> : vector<32x32xf32>
    %168 = tpu.matmul %166, %167, %cst_65 {dimension_numbers = #tpu.dot_dimension_numbers<[1], [0], [0], [1], [0, 0, 1, 1], [], []>} : vector<32x128xf32>, vector<128x32xf32>, vector<32x32xf32> -> vector<32x32xf32>
    %c0_66 = arith.constant 0 : index
    %c0_67 = arith.constant 0 : index
    %169 = vector.load %arg12[%c0_66, %c0_67] : memref<1x32xf32, #tpu.memory_space<vmem>>, vector<1x32xf32>
    %170 = vector.broadcast %169 : vector<1x32xf32> to vector<32x32xf32>
    %171 = arith.addf %168, %170 : vector<32x32xf32>
    %172 = arith.addf %171, %97 : vector<32x32xf32>
    %c0_68 = arith.constant 0 : index
    %c0_69 = arith.constant 0 : index
    %c0_70 = arith.constant 0 : index
    %173 = vector.load %arg13[%c0_68, %c0_69, %c0_70] : memref<1x32x32xf32, #tpu.memory_space<vmem>>, vector<1x32x32xf32>
    %174 = vector.shape_cast %173 : vector<1x32x32xf32> to vector<32x32xf32>
    %175 = vector.shape_cast %172 : vector<32x32xf32> to vector<1x32x32xf32>
    tpu.vector_store %arg13[%c0_68, %c0_69, %c0_70], %175 {strides = array<i32>} : memref<1x32x32xf32, #tpu.memory_space<vmem>>, vector<1x32x32xf32>,
    return
  }
  func.func @transform_0(%arg0: i32) -> (i32, i32, i32) {
    %c0_i32 = arith.constant 0 : i32
    %c0_i32_0 = arith.constant 0 : i32
    %c0_i32_1 = arith.constant 0 : i32
    return %arg0, %c0_i32, %c0_i32_0 : i32, i32, i32
  }
  func.func @transform_1(%arg0: i32) -> (i32, i32) {
    %c0_i32 = arith.constant 0 : i32
    %c0_i32_0 = arith.constant 0 : i32
    %c0_i32_1 = arith.constant 0 : i32
    return %c0_i32, %c0_i32_0 : i32, i32
  }
  func.func @transform_2(%arg0: i32) -> (i32, i32) {
    %c0_i32 = arith.constant 0 : i32
    %c0_i32_0 = arith.constant 0 : i32
    %c0_i32_1 = arith.constant 0 : i32
    return %c0_i32, %c0_i32_0 : i32, i32
  }
  func.func @transform_3(%arg0: i32) -> (i32, i32) {
    %c0_i32 = arith.constant 0 : i32
    %c0_i32_0 = arith.constant 0 : i32
    %c0_i32_1 = arith.constant 0 : i32
    return %c0_i32, %c0_i32_0 : i32, i32
  }
  func.func @transform_4(%arg0: i32) -> (i32, i32) {
    %c0_i32 = arith.constant 0 : i32
    %c0_i32_0 = arith.constant 0 : i32
    %c0_i32_1 = arith.constant 0 : i32
    return %c0_i32, %c0_i32_0 : i32, i32
  }
  func.func @transform_5(%arg0: i32) -> (i32, i32) {
    %c0_i32 = arith.constant 0 : i32
    %c0_i32_0 = arith.constant 0 : i32
    %c0_i32_1 = arith.constant 0 : i32
    return %c0_i32, %c0_i32_0 : i32, i32
  }
  func.func @transform_6(%arg0: i32) -> (i32, i32) {
    %c0_i32 = arith.constant 0 : i32
    %c0_i32_0 = arith.constant 0 : i32
    %c0_i32_1 = arith.constant 0 : i32
    return %c0_i32, %c0_i32_0 : i32, i32
  }
  func.func @transform_7(%arg0: i32) -> (i32, i32) {
    %c0_i32 = arith.constant 0 : i32
    %c0_i32_0 = arith.constant 0 : i32
    %c0_i32_1 = arith.constant 0 : i32
    return %c0_i32, %c0_i32_0 : i32, i32
  }
  func.func @transform_8(%arg0: i32) -> (i32, i32) {
    %c0_i32 = arith.constant 0 : i32
    %c0_i32_0 = arith.constant 0 : i32
    %c0_i32_1 = arith.constant 0 : i32
    return %c0_i32, %c0_i32_0 : i32, i32
  }
  func.func @transform_9(%arg0: i32) -> (i32, i32) {
    %c0_i32 = arith.constant 0 : i32
    %c0_i32_0 = arith.constant 0 : i32
    %c0_i32_1 = arith.constant 0 : i32
    return %c0_i32, %c0_i32_0 : i32, i32
  }
  func.func @transform_10(%arg0: i32) -> (i32, i32) {
    %c0_i32 = arith.constant 0 : i32
    %c0_i32_0 = arith.constant 0 : i32
    %c0_i32_1 = arith.constant 0 : i32
    return %c0_i32, %c0_i32_0 : i32, i32
  }
  func.func @transform_11(%arg0: i32) -> (i32, i32) {
    %c0_i32 = arith.constant 0 : i32
    %c0_i32_0 = arith.constant 0 : i32
    %c0_i32_1 = arith.constant 0 : i32
    return %c0_i32, %c0_i32_0 : i32, i32
  }
  func.func @transform_12(%arg0: i32) -> (i32, i32, i32) {
    %c0_i32 = arith.constant 0 : i32
    %c0_i32_0 = arith.constant 0 : i32
    %c0_i32_1 = arith.constant 0 : i32
    return %arg0, %c0_i32, %c0_i32_0 : i32, i32, i32
  }
}

module attributes {stable_mosaic.version = 11 : i64} {
  func.func @_block_kernel(%arg0: i32, %arg1: memref<1x32x64xf32, #tpu.memory_space<vmem>>, %arg2: memref<1x64xf32, #tpu.memory_space<vmem>>, %arg3: memref<1x64xf32, #tpu.memory_space<vmem>>, %arg4: memref<64x384xf32, #tpu.memory_space<vmem>>, %arg5: memref<128x64xf32, #tpu.memory_space<vmem>>, %arg6: memref<1x64xf32, #tpu.memory_space<vmem>>, %arg7: memref<1x64xf32, #tpu.memory_space<vmem>>, %arg8: memref<1x64xf32, #tpu.memory_space<vmem>>, %arg9: memref<64x256xf32, #tpu.memory_space<vmem>>, %arg10: memref<1x256xf32, #tpu.memory_space<vmem>>, %arg11: memref<256x64xf32, #tpu.memory_space<vmem>>, %arg12: memref<1x64xf32, #tpu.memory_space<vmem>>, %arg13: memref<1x32x64xf32, #tpu.memory_space<vmem>>) attributes {dimension_semantics = [#tpu.dimension_semantics<parallel>], iteration_bounds = array<i64: 2>, scalar_prefetch = 0 : i64, scratch_operands = 0 : i64, tpu.core_type = #tpu.core_type<tc>, window_params = [{transform_indices = @transform_0, window_bounds = array<i64: 1, 32, 64>}, {pipeline_mode = #tpu.pipeline_mode<synchronous>, transform_indices = @transform_1, window_bounds = array<i64: 1, 64>}, {pipeline_mode = #tpu.pipeline_mode<synchronous>, transform_indices = @transform_2, window_bounds = array<i64: 1, 64>}, {pipeline_mode = #tpu.pipeline_mode<synchronous>, transform_indices = @transform_3, window_bounds = array<i64: 64, 384>}, {pipeline_mode = #tpu.pipeline_mode<synchronous>, transform_indices = @transform_4, window_bounds = array<i64: 128, 64>}, {pipeline_mode = #tpu.pipeline_mode<synchronous>, transform_indices = @transform_5, window_bounds = array<i64: 1, 64>}, {pipeline_mode = #tpu.pipeline_mode<synchronous>, transform_indices = @transform_6, window_bounds = array<i64: 1, 64>}, {pipeline_mode = #tpu.pipeline_mode<synchronous>, transform_indices = @transform_7, window_bounds = array<i64: 1, 64>}, {pipeline_mode = #tpu.pipeline_mode<synchronous>, transform_indices = @transform_8, window_bounds = array<i64: 64, 256>}, {pipeline_mode = #tpu.pipeline_mode<synchronous>, transform_indices = @transform_9, window_bounds = array<i64: 1, 256>}, {pipeline_mode = #tpu.pipeline_mode<synchronous>, transform_indices = @transform_10, window_bounds = array<i64: 256, 64>}, {pipeline_mode = #tpu.pipeline_mode<synchronous>, transform_indices = @transform_11, window_bounds = array<i64: 1, 64>}, {transform_indices = @transform_12, window_bounds = array<i64: 1, 32, 64>}]} {
    %c0 = arith.constant 0 : index
    %c0_0 = arith.constant 0 : index
    %c0_1 = arith.constant 0 : index
    %0 = vector.load %arg1[%c0, %c0_0, %c0_1] : memref<1x32x64xf32, #tpu.memory_space<vmem>>, vector<1x32x64xf32>
    %1 = vector.shape_cast %0 : vector<1x32x64xf32> to vector<32x64xf32>
    %c0_2 = arith.constant 0 : index
    %c0_3 = arith.constant 0 : index
    %2 = vector.load %arg2[%c0_2, %c0_3] : memref<1x64xf32, #tpu.memory_space<vmem>>, vector<1x64xf32>
    %c0_4 = arith.constant 0 : index
    %c0_5 = arith.constant 0 : index
    %3 = vector.load %arg3[%c0_4, %c0_5] : memref<1x64xf32, #tpu.memory_space<vmem>>, vector<1x64xf32>
    %4 = vector.extract_strided_slice %1 {offsets = [0, 0], sizes = [32, 32], strides = [1, 1]} : vector<32x64xf32> to vector<32x32xf32>
    %cst = arith.constant dense<0.000000e+00> : vector<32xf32>
    %5 = vector.multi_reduction <add>, %4, %cst [1] : vector<32x32xf32> to vector<32xf32>
    %6 = vector.shape_cast %5 : vector<32xf32> to vector<32x1xf32>
    %cst_6 = arith.constant 3.200000e+01 : f32
    %7 = vector.broadcast %cst_6 : f32 to vector<32x1xf32>
    %8 = arith.divf %6, %7 : vector<32x1xf32>
    %9 = vector.broadcast %8 : vector<32x1xf32> to vector<32x32xf32>
    %10 = arith.subf %4, %9 : vector<32x32xf32>
    %11 = arith.mulf %10, %10 : vector<32x32xf32>
    %cst_7 = arith.constant dense<0.000000e+00> : vector<32xf32>
    %12 = vector.multi_reduction <add>, %11, %cst_7 [1] : vector<32x32xf32> to vector<32xf32>
    %13 = vector.shape_cast %12 : vector<32xf32> to vector<32x1xf32>
    %cst_8 = arith.constant 3.200000e+01 : f32
    %14 = vector.broadcast %cst_8 : f32 to vector<32x1xf32>
    %15 = arith.divf %13, %14 : vector<32x1xf32>
    %16 = vector.broadcast %8 : vector<32x1xf32> to vector<32x32xf32>
    %17 = arith.subf %4, %16 : vector<32x32xf32>
    %18 = math.sqrt %15 : vector<32x1xf32>
    %cst_9 = arith.constant 9.99999974E-6 : f32
    %19 = vector.broadcast %cst_9 : f32 to vector<32x1xf32>
    %20 = arith.addf %18, %19 : vector<32x1xf32>
    %21 = vector.broadcast %20 : vector<32x1xf32> to vector<32x32xf32>
    %22 = arith.divf %17, %21 : vector<32x32xf32>
    %23 = vector.extract_strided_slice %1 {offsets = [0, 32], sizes = [32, 32], strides = [1, 1]} : vector<32x64xf32> to vector<32x32xf32>
    %cst_10 = arith.constant dense<0.000000e+00> : vector<32xf32>
    %24 = vector.multi_reduction <add>, %23, %cst_10 [1] : vector<32x32xf32> to vector<32xf32>
    %25 = vector.shape_cast %24 : vector<32xf32> to vector<32x1xf32>
    %cst_11 = arith.constant 3.200000e+01 : f32
    %26 = vector.broadcast %cst_11 : f32 to vector<32x1xf32>
    %27 = arith.divf %25, %26 : vector<32x1xf32>
    %28 = vector.broadcast %27 : vector<32x1xf32> to vector<32x32xf32>
    %29 = arith.subf %23, %28 : vector<32x32xf32>
    %30 = arith.mulf %29, %29 : vector<32x32xf32>
    %cst_12 = arith.constant dense<0.000000e+00> : vector<32xf32>
    %31 = vector.multi_reduction <add>, %30, %cst_12 [1] : vector<32x32xf32> to vector<32xf32>
    %32 = vector.shape_cast %31 : vector<32xf32> to vector<32x1xf32>
    %cst_13 = arith.constant 3.200000e+01 : f32
    %33 = vector.broadcast %cst_13 : f32 to vector<32x1xf32>
    %34 = arith.divf %32, %33 : vector<32x1xf32>
    %35 = vector.broadcast %27 : vector<32x1xf32> to vector<32x32xf32>
    %36 = arith.subf %23, %35 : vector<32x32xf32>
    %37 = math.sqrt %34 : vector<32x1xf32>
    %cst_14 = arith.constant 9.99999974E-6 : f32
    %38 = vector.broadcast %cst_14 : f32 to vector<32x1xf32>
    %39 = arith.addf %37, %38 : vector<32x1xf32>
    %40 = vector.broadcast %39 : vector<32x1xf32> to vector<32x32xf32>
    %41 = arith.divf %36, %40 : vector<32x32xf32>
    %42 = tpu.concatenate %22, %41 in 1 : vector<32x32xf32>, vector<32x32xf32> -> vector<32x64xf32>
    %43 = vector.broadcast %2 : vector<1x64xf32> to vector<32x64xf32>
    %44 = arith.mulf %42, %43 : vector<32x64xf32>
    %45 = vector.broadcast %3 : vector<1x64xf32> to vector<32x64xf32>
    %46 = arith.addf %44, %45 : vector<32x64xf32>
    %c0_15 = arith.constant 0 : index
    %c0_16 = arith.constant 0 : index
    %47 = vector.load %arg4[%c0_15, %c0_16] : memref<64x384xf32, #tpu.memory_space<vmem>>, vector<64x384xf32>
    %cst_17 = arith.constant dense<0.000000e+00> : vector<32x384xf32>
    %48 = tpu.matmul %46, %47, %cst_17 {dimension_numbers = #tpu.dot_dimension_numbers<[1], [0], [0], [1], [0, 0, 1, 1], [], []>} : vector<32x64xf32>, vector<64x384xf32>, vector<32x384xf32> -> vector<32x384xf32>
    %49 = vector.extract_strided_slice %48 {offsets = [0, 0], sizes = [32, 128], strides = [1, 1]} : vector<32x384xf32> to vector<32x128xf32>
    %50 = vector.extract_strided_slice %48 {offsets = [0, 128], sizes = [32, 128], strides = [1, 1]} : vector<32x384xf32> to vector<32x128xf32>
    %51 = vector.extract_strided_slice %48 {offsets = [0, 256], sizes = [32, 128], strides = [1, 1]} : vector<32x384xf32> to vector<32x128xf32>
    %52 = vector.extract_strided_slice %49 {offsets = [0, 0], sizes = [32, 16], strides = [1, 1]} : vector<32x128xf32> to vector<32x16xf32>
    %53 = vector.extract_strided_slice %50 {offsets = [0, 0], sizes = [32, 16], strides = [1, 1]} : vector<32x128xf32> to vector<32x16xf32>
    %54 = vector.extract_strided_slice %51 {offsets = [0, 0], sizes = [32, 16], strides = [1, 1]} : vector<32x128xf32> to vector<32x16xf32>
    %cst_18 = arith.constant dense<0.000000e+00> : vector<32x32xf32>
    %55 = tpu.matmul %52, %53, %cst_18 {dimension_numbers = #tpu.dot_dimension_numbers<[1], [1], [0], [0], [0, 0, 1, 0], [], []>} : vector<32x16xf32>, vector<32x16xf32>, vector<32x32xf32> -> vector<32x32xf32>
    %cst_19 = arith.constant dense<0xFF800000> : vector<32xf32>
    %56 = vector.multi_reduction <maximumf>, %55, %cst_19 [1] : vector<32x32xf32> to vector<32xf32>
    %57 = vector.shape_cast %56 : vector<32xf32> to vector<32x1xf32>
    %58 = vector.broadcast %57 : vector<32x1xf32> to vector<32x32xf32>
    %59 = arith.subf %55, %58 : vector<32x32xf32>
    %60 = math.exp %59 : vector<32x32xf32>
    %cst_20 = arith.constant dense<0.000000e+00> : vector<32xf32>
    %61 = vector.multi_reduction <add>, %60, %cst_20 [1] : vector<32x32xf32> to vector<32xf32>
    %62 = vector.shape_cast %61 : vector<32xf32> to vector<32x1xf32>
    %63 = tpu.reciprocal %62 : vector<32x1xf32> -> vector<32x1xf32>
    %64 = vector.broadcast %63 : vector<32x1xf32> to vector<32x32xf32>
    %65 = arith.mulf %60, %64 : vector<32x32xf32>
    %cst_21 = arith.constant dense<0.000000e+00> : vector<32x16xf32>
    %66 = tpu.matmul %65, %54, %cst_21 {dimension_numbers = #tpu.dot_dimension_numbers<[1], [0], [0], [1], [0, 0, 1, 1], [], []>} : vector<32x32xf32>, vector<32x16xf32>, vector<32x16xf32> -> vector<32x16xf32>
    %67 = vector.extract_strided_slice %49 {offsets = [0, 64], sizes = [32, 16], strides = [1, 1]} : vector<32x128xf32> to vector<32x16xf32>
    %68 = vector.extract_strided_slice %50 {offsets = [0, 64], sizes = [32, 16], strides = [1, 1]} : vector<32x128xf32> to vector<32x16xf32>
    %69 = vector.extract_strided_slice %51 {offsets = [0, 64], sizes = [32, 16], strides = [1, 1]} : vector<32x128xf32> to vector<32x16xf32>
    %cst_22 = arith.constant dense<0.000000e+00> : vector<32x32xf32>
    %70 = tpu.matmul %67, %68, %cst_22 {dimension_numbers = #tpu.dot_dimension_numbers<[1], [1], [0], [0], [0, 0, 1, 0], [], []>} : vector<32x16xf32>, vector<32x16xf32>, vector<32x32xf32> -> vector<32x32xf32>
    %71 = arith.addf %55, %70 : vector<32x32xf32>
    %cst_23 = arith.constant dense<0xFF800000> : vector<32xf32>
    %72 = vector.multi_reduction <maximumf>, %71, %cst_23 [1] : vector<32x32xf32> to vector<32xf32>
    %73 = vector.shape_cast %72 : vector<32xf32> to vector<32x1xf32>
    %74 = vector.broadcast %73 : vector<32x1xf32> to vector<32x32xf32>
    %75 = arith.subf %71, %74 : vector<32x32xf32>
    %76 = math.exp %75 : vector<32x32xf32>
    %cst_24 = arith.constant dense<0.000000e+00> : vector<32xf32>
    %77 = vector.multi_reduction <add>, %76, %cst_24 [1] : vector<32x32xf32> to vector<32xf32>
    %78 = vector.shape_cast %77 : vector<32xf32> to vector<32x1xf32>
    %79 = tpu.reciprocal %78 : vector<32x1xf32> -> vector<32x1xf32>
    %80 = vector.broadcast %79 : vector<32x1xf32> to vector<32x32xf32>
    %81 = arith.mulf %76, %80 : vector<32x32xf32>
    %cst_25 = arith.constant dense<0.000000e+00> : vector<32x16xf32>
    %82 = tpu.matmul %81, %69, %cst_25 {dimension_numbers = #tpu.dot_dimension_numbers<[1], [0], [0], [1], [0, 0, 1, 1], [], []>} : vector<32x32xf32>, vector<32x16xf32>, vector<32x16xf32> -> vector<32x16xf32>
    %83 = vector.extract_strided_slice %49 {offsets = [0, 16], sizes = [32, 16], strides = [1, 1]} : vector<32x128xf32> to vector<32x16xf32>
    %84 = vector.extract_strided_slice %50 {offsets = [0, 16], sizes = [32, 16], strides = [1, 1]} : vector<32x128xf32> to vector<32x16xf32>
    %85 = vector.extract_strided_slice %51 {offsets = [0, 16], sizes = [32, 16], strides = [1, 1]} : vector<32x128xf32> to vector<32x16xf32>
    %cst_26 = arith.constant dense<0.000000e+00> : vector<32x32xf32>
    %86 = tpu.matmul %83, %84, %cst_26 {dimension_numbers = #tpu.dot_dimension_numbers<[1], [1], [0], [0], [0, 0, 1, 0], [], []>} : vector<32x16xf32>, vector<32x16xf32>, vector<32x32xf32> -> vector<32x32xf32>
    %cst_27 = arith.constant dense<0xFF800000> : vector<32xf32>
    %87 = vector.multi_reduction <maximumf>, %86, %cst_27 [1] : vector<32x32xf32> to vector<32xf32>
    %88 = vector.shape_cast %87 : vector<32xf32> to vector<32x1xf32>
    %89 = vector.broadcast %88 : vector<32x1xf32> to vector<32x32xf32>
    %90 = arith.subf %86, %89 : vector<32x32xf32>
    %91 = math.exp %90 : vector<32x32xf32>
    %cst_28 = arith.constant dense<0.000000e+00> : vector<32xf32>
    %92 = vector.multi_reduction <add>, %91, %cst_28 [1] : vector<32x32xf32> to vector<32xf32>
    %93 = vector.shape_cast %92 : vector<32xf32> to vector<32x1xf32>
    %94 = tpu.reciprocal %93 : vector<32x1xf32> -> vector<32x1xf32>
    %95 = vector.broadcast %94 : vector<32x1xf32> to vector<32x32xf32>
    %96 = arith.mulf %91, %95 : vector<32x32xf32>
    %cst_29 = arith.constant dense<0.000000e+00> : vector<32x16xf32>
    %97 = tpu.matmul %96, %85, %cst_29 {dimension_numbers = #tpu.dot_dimension_numbers<[1], [0], [0], [1], [0, 0, 1, 1], [], []>} : vector<32x32xf32>, vector<32x16xf32>, vector<32x16xf32> -> vector<32x16xf32>
    %98 = vector.extract_strided_slice %49 {offsets = [0, 80], sizes = [32, 16], strides = [1, 1]} : vector<32x128xf32> to vector<32x16xf32>
    %99 = vector.extract_strided_slice %50 {offsets = [0, 80], sizes = [32, 16], strides = [1, 1]} : vector<32x128xf32> to vector<32x16xf32>
    %100 = vector.extract_strided_slice %51 {offsets = [0, 80], sizes = [32, 16], strides = [1, 1]} : vector<32x128xf32> to vector<32x16xf32>
    %cst_30 = arith.constant dense<0.000000e+00> : vector<32x32xf32>
    %101 = tpu.matmul %98, %99, %cst_30 {dimension_numbers = #tpu.dot_dimension_numbers<[1], [1], [0], [0], [0, 0, 1, 0], [], []>} : vector<32x16xf32>, vector<32x16xf32>, vector<32x32xf32> -> vector<32x32xf32>
    %102 = arith.addf %86, %101 : vector<32x32xf32>
    %cst_31 = arith.constant dense<0xFF800000> : vector<32xf32>
    %103 = vector.multi_reduction <maximumf>, %102, %cst_31 [1] : vector<32x32xf32> to vector<32xf32>
    %104 = vector.shape_cast %103 : vector<32xf32> to vector<32x1xf32>
    %105 = vector.broadcast %104 : vector<32x1xf32> to vector<32x32xf32>
    %106 = arith.subf %102, %105 : vector<32x32xf32>
    %107 = math.exp %106 : vector<32x32xf32>
    %cst_32 = arith.constant dense<0.000000e+00> : vector<32xf32>
    %108 = vector.multi_reduction <add>, %107, %cst_32 [1] : vector<32x32xf32> to vector<32xf32>
    %109 = vector.shape_cast %108 : vector<32xf32> to vector<32x1xf32>
    %110 = tpu.reciprocal %109 : vector<32x1xf32> -> vector<32x1xf32>
    %111 = vector.broadcast %110 : vector<32x1xf32> to vector<32x32xf32>
    %112 = arith.mulf %107, %111 : vector<32x32xf32>
    %cst_33 = arith.constant dense<0.000000e+00> : vector<32x16xf32>
    %113 = tpu.matmul %112, %100, %cst_33 {dimension_numbers = #tpu.dot_dimension_numbers<[1], [0], [0], [1], [0, 0, 1, 1], [], []>} : vector<32x32xf32>, vector<32x16xf32>, vector<32x16xf32> -> vector<32x16xf32>
    %114 = vector.extract_strided_slice %49 {offsets = [0, 32], sizes = [32, 16], strides = [1, 1]} : vector<32x128xf32> to vector<32x16xf32>
    %115 = vector.extract_strided_slice %50 {offsets = [0, 32], sizes = [32, 16], strides = [1, 1]} : vector<32x128xf32> to vector<32x16xf32>
    %116 = vector.extract_strided_slice %51 {offsets = [0, 32], sizes = [32, 16], strides = [1, 1]} : vector<32x128xf32> to vector<32x16xf32>
    %cst_34 = arith.constant dense<0.000000e+00> : vector<32x32xf32>
    %117 = tpu.matmul %114, %115, %cst_34 {dimension_numbers = #tpu.dot_dimension_numbers<[1], [1], [0], [0], [0, 0, 1, 0], [], []>} : vector<32x16xf32>, vector<32x16xf32>, vector<32x32xf32> -> vector<32x32xf32>
    %cst_35 = arith.constant dense<0xFF800000> : vector<32xf32>
    %118 = vector.multi_reduction <maximumf>, %117, %cst_35 [1] : vector<32x32xf32> to vector<32xf32>
    %119 = vector.shape_cast %118 : vector<32xf32> to vector<32x1xf32>
    %120 = vector.broadcast %119 : vector<32x1xf32> to vector<32x32xf32>
    %121 = arith.subf %117, %120 : vector<32x32xf32>
    %122 = math.exp %121 : vector<32x32xf32>
    %cst_36 = arith.constant dense<0.000000e+00> : vector<32xf32>
    %123 = vector.multi_reduction <add>, %122, %cst_36 [1] : vector<32x32xf32> to vector<32xf32>
    %124 = vector.shape_cast %123 : vector<32xf32> to vector<32x1xf32>
    %125 = tpu.reciprocal %124 : vector<32x1xf32> -> vector<32x1xf32>
    %126 = vector.broadcast %125 : vector<32x1xf32> to vector<32x32xf32>
    %127 = arith.mulf %122, %126 : vector<32x32xf32>
    %cst_37 = arith.constant dense<0.000000e+00> : vector<32x16xf32>
    %128 = tpu.matmul %127, %116, %cst_37 {dimension_numbers = #tpu.dot_dimension_numbers<[1], [0], [0], [1], [0, 0, 1, 1], [], []>} : vector<32x32xf32>, vector<32x16xf32>, vector<32x16xf32> -> vector<32x16xf32>
    %129 = vector.extract_strided_slice %49 {offsets = [0, 96], sizes = [32, 16], strides = [1, 1]} : vector<32x128xf32> to vector<32x16xf32>
    %130 = vector.extract_strided_slice %50 {offsets = [0, 96], sizes = [32, 16], strides = [1, 1]} : vector<32x128xf32> to vector<32x16xf32>
    %131 = vector.extract_strided_slice %51 {offsets = [0, 96], sizes = [32, 16], strides = [1, 1]} : vector<32x128xf32> to vector<32x16xf32>
    %cst_38 = arith.constant dense<0.000000e+00> : vector<32x32xf32>
    %132 = tpu.matmul %129, %130, %cst_38 {dimension_numbers = #tpu.dot_dimension_numbers<[1], [1], [0], [0], [0, 0, 1, 0], [], []>} : vector<32x16xf32>, vector<32x16xf32>, vector<32x32xf32> -> vector<32x32xf32>
    %133 = arith.addf %117, %132 : vector<32x32xf32>
    %cst_39 = arith.constant dense<0xFF800000> : vector<32xf32>
    %134 = vector.multi_reduction <maximumf>, %133, %cst_39 [1] : vector<32x32xf32> to vector<32xf32>
    %135 = vector.shape_cast %134 : vector<32xf32> to vector<32x1xf32>
    %136 = vector.broadcast %135 : vector<32x1xf32> to vector<32x32xf32>
    %137 = arith.subf %133, %136 : vector<32x32xf32>
    %138 = math.exp %137 : vector<32x32xf32>
    %cst_40 = arith.constant dense<0.000000e+00> : vector<32xf32>
    %139 = vector.multi_reduction <add>, %138, %cst_40 [1] : vector<32x32xf32> to vector<32xf32>
    %140 = vector.shape_cast %139 : vector<32xf32> to vector<32x1xf32>
    %141 = tpu.reciprocal %140 : vector<32x1xf32> -> vector<32x1xf32>
    %142 = vector.broadcast %141 : vector<32x1xf32> to vector<32x32xf32>
    %143 = arith.mulf %138, %142 : vector<32x32xf32>
    %cst_41 = arith.constant dense<0.000000e+00> : vector<32x16xf32>
    %144 = tpu.matmul %143, %131, %cst_41 {dimension_numbers = #tpu.dot_dimension_numbers<[1], [0], [0], [1], [0, 0, 1, 1], [], []>} : vector<32x32xf32>, vector<32x16xf32>, vector<32x16xf32> -> vector<32x16xf32>
    %145 = vector.extract_strided_slice %49 {offsets = [0, 48], sizes = [32, 16], strides = [1, 1]} : vector<32x128xf32> to vector<32x16xf32>
    %146 = vector.extract_strided_slice %50 {offsets = [0, 48], sizes = [32, 16], strides = [1, 1]} : vector<32x128xf32> to vector<32x16xf32>
    %147 = vector.extract_strided_slice %51 {offsets = [0, 48], sizes = [32, 16], strides = [1, 1]} : vector<32x128xf32> to vector<32x16xf32>
    %cst_42 = arith.constant dense<0.000000e+00> : vector<32x32xf32>
    %148 = tpu.matmul %145, %146, %cst_42 {dimension_numbers = #tpu.dot_dimension_numbers<[1], [1], [0], [0], [0, 0, 1, 0], [], []>} : vector<32x16xf32>, vector<32x16xf32>, vector<32x32xf32> -> vector<32x32xf32>
    %cst_43 = arith.constant dense<0xFF800000> : vector<32xf32>
    %149 = vector.multi_reduction <maximumf>, %148, %cst_43 [1] : vector<32x32xf32> to vector<32xf32>
    %150 = vector.shape_cast %149 : vector<32xf32> to vector<32x1xf32>
    %151 = vector.broadcast %150 : vector<32x1xf32> to vector<32x32xf32>
    %152 = arith.subf %148, %151 : vector<32x32xf32>
    %153 = math.exp %152 : vector<32x32xf32>
    %cst_44 = arith.constant dense<0.000000e+00> : vector<32xf32>
    %154 = vector.multi_reduction <add>, %153, %cst_44 [1] : vector<32x32xf32> to vector<32xf32>
    %155 = vector.shape_cast %154 : vector<32xf32> to vector<32x1xf32>
    %156 = tpu.reciprocal %155 : vector<32x1xf32> -> vector<32x1xf32>
    %157 = vector.broadcast %156 : vector<32x1xf32> to vector<32x32xf32>
    %158 = arith.mulf %153, %157 : vector<32x32xf32>
    %cst_45 = arith.constant dense<0.000000e+00> : vector<32x16xf32>
    %159 = tpu.matmul %158, %147, %cst_45 {dimension_numbers = #tpu.dot_dimension_numbers<[1], [0], [0], [1], [0, 0, 1, 1], [], []>} : vector<32x32xf32>, vector<32x16xf32>, vector<32x16xf32> -> vector<32x16xf32>
    %160 = vector.extract_strided_slice %49 {offsets = [0, 112], sizes = [32, 16], strides = [1, 1]} : vector<32x128xf32> to vector<32x16xf32>
    %161 = vector.extract_strided_slice %50 {offsets = [0, 112], sizes = [32, 16], strides = [1, 1]} : vector<32x128xf32> to vector<32x16xf32>
    %162 = vector.extract_strided_slice %51 {offsets = [0, 112], sizes = [32, 16], strides = [1, 1]} : vector<32x128xf32> to vector<32x16xf32>
    %cst_46 = arith.constant dense<0.000000e+00> : vector<32x32xf32>
    %163 = tpu.matmul %160, %161, %cst_46 {dimension_numbers = #tpu.dot_dimension_numbers<[1], [1], [0], [0], [0, 0, 1, 0], [], []>} : vector<32x16xf32>, vector<32x16xf32>, vector<32x32xf32> -> vector<32x32xf32>
    %164 = arith.addf %148, %163 : vector<32x32xf32>
    %cst_47 = arith.constant dense<0xFF800000> : vector<32xf32>
    %165 = vector.multi_reduction <maximumf>, %164, %cst_47 [1] : vector<32x32xf32> to vector<32xf32>
    %166 = vector.shape_cast %165 : vector<32xf32> to vector<32x1xf32>
    %167 = vector.broadcast %166 : vector<32x1xf32> to vector<32x32xf32>
    %168 = arith.subf %164, %167 : vector<32x32xf32>
    %169 = math.exp %168 : vector<32x32xf32>
    %cst_48 = arith.constant dense<0.000000e+00> : vector<32xf32>
    %170 = vector.multi_reduction <add>, %169, %cst_48 [1] : vector<32x32xf32> to vector<32xf32>
    %171 = vector.shape_cast %170 : vector<32xf32> to vector<32x1xf32>
    %172 = tpu.reciprocal %171 : vector<32x1xf32> -> vector<32x1xf32>
    %173 = vector.broadcast %172 : vector<32x1xf32> to vector<32x32xf32>
    %174 = arith.mulf %169, %173 : vector<32x32xf32>
    %cst_49 = arith.constant dense<0.000000e+00> : vector<32x16xf32>
    %175 = tpu.matmul %174, %162, %cst_49 {dimension_numbers = #tpu.dot_dimension_numbers<[1], [0], [0], [1], [0, 0, 1, 1], [], []>} : vector<32x32xf32>, vector<32x16xf32>, vector<32x16xf32> -> vector<32x16xf32>
    %176 = tpu.concatenate %66, %97, %128, %159, %82, %113, %144, %175 in 1 : vector<32x16xf32>, vector<32x16xf32>, vector<32x16xf32>, vector<32x16xf32>, vector<32x16xf32>, vector<32x16xf32>, vector<32x16xf32>, vector<32x16xf32> -> vector<32x128xf32>
    %c0_50 = arith.constant 0 : index
    %c0_51 = arith.constant 0 : index
    %177 = vector.load %arg5[%c0_50, %c0_51] : memref<128x64xf32, #tpu.memory_space<vmem>>, vector<128x64xf32>
    %cst_52 = arith.constant dense<0.000000e+00> : vector<32x64xf32>
    %178 = tpu.matmul %176, %177, %cst_52 {dimension_numbers = #tpu.dot_dimension_numbers<[1], [0], [0], [1], [0, 0, 1, 1], [], []>} : vector<32x128xf32>, vector<128x64xf32>, vector<32x64xf32> -> vector<32x64xf32>
    %c0_53 = arith.constant 0 : index
    %c0_54 = arith.constant 0 : index
    %179 = vector.load %arg6[%c0_53, %c0_54] : memref<1x64xf32, #tpu.memory_space<vmem>>, vector<1x64xf32>
    %180 = vector.broadcast %179 : vector<1x64xf32> to vector<32x64xf32>
    %181 = arith.addf %178, %180 : vector<32x64xf32>
    %182 = arith.addf %181, %1 : vector<32x64xf32>
    %c0_55 = arith.constant 0 : index
    %c0_56 = arith.constant 0 : index
    %183 = vector.load %arg7[%c0_55, %c0_56] : memref<1x64xf32, #tpu.memory_space<vmem>>, vector<1x64xf32>
    %c0_57 = arith.constant 0 : index
    %c0_58 = arith.constant 0 : index
    %184 = vector.load %arg8[%c0_57, %c0_58] : memref<1x64xf32, #tpu.memory_space<vmem>>, vector<1x64xf32>
    %185 = vector.extract_strided_slice %182 {offsets = [0, 0], sizes = [32, 32], strides = [1, 1]} : vector<32x64xf32> to vector<32x32xf32>
    %cst_59 = arith.constant dense<0.000000e+00> : vector<32xf32>
    %186 = vector.multi_reduction <add>, %185, %cst_59 [1] : vector<32x32xf32> to vector<32xf32>
    %187 = vector.shape_cast %186 : vector<32xf32> to vector<32x1xf32>
    %cst_60 = arith.constant 3.200000e+01 : f32
    %188 = vector.broadcast %cst_60 : f32 to vector<32x1xf32>
    %189 = arith.divf %187, %188 : vector<32x1xf32>
    %190 = vector.broadcast %189 : vector<32x1xf32> to vector<32x32xf32>
    %191 = arith.subf %185, %190 : vector<32x32xf32>
    %192 = arith.mulf %191, %191 : vector<32x32xf32>
    %cst_61 = arith.constant dense<0.000000e+00> : vector<32xf32>
    %193 = vector.multi_reduction <add>, %192, %cst_61 [1] : vector<32x32xf32> to vector<32xf32>
    %194 = vector.shape_cast %193 : vector<32xf32> to vector<32x1xf32>
    %cst_62 = arith.constant 3.200000e+01 : f32
    %195 = vector.broadcast %cst_62 : f32 to vector<32x1xf32>
    %196 = arith.divf %194, %195 : vector<32x1xf32>
    %197 = vector.broadcast %189 : vector<32x1xf32> to vector<32x32xf32>
    %198 = arith.subf %185, %197 : vector<32x32xf32>
    %199 = math.sqrt %196 : vector<32x1xf32>
    %cst_63 = arith.constant 9.99999974E-6 : f32
    %200 = vector.broadcast %cst_63 : f32 to vector<32x1xf32>
    %201 = arith.addf %199, %200 : vector<32x1xf32>
    %202 = vector.broadcast %201 : vector<32x1xf32> to vector<32x32xf32>
    %203 = arith.divf %198, %202 : vector<32x32xf32>
    %204 = vector.extract_strided_slice %182 {offsets = [0, 32], sizes = [32, 32], strides = [1, 1]} : vector<32x64xf32> to vector<32x32xf32>
    %cst_64 = arith.constant dense<0.000000e+00> : vector<32xf32>
    %205 = vector.multi_reduction <add>, %204, %cst_64 [1] : vector<32x32xf32> to vector<32xf32>
    %206 = vector.shape_cast %205 : vector<32xf32> to vector<32x1xf32>
    %cst_65 = arith.constant 3.200000e+01 : f32
    %207 = vector.broadcast %cst_65 : f32 to vector<32x1xf32>
    %208 = arith.divf %206, %207 : vector<32x1xf32>
    %209 = vector.broadcast %208 : vector<32x1xf32> to vector<32x32xf32>
    %210 = arith.subf %204, %209 : vector<32x32xf32>
    %211 = arith.mulf %210, %210 : vector<32x32xf32>
    %cst_66 = arith.constant dense<0.000000e+00> : vector<32xf32>
    %212 = vector.multi_reduction <add>, %211, %cst_66 [1] : vector<32x32xf32> to vector<32xf32>
    %213 = vector.shape_cast %212 : vector<32xf32> to vector<32x1xf32>
    %cst_67 = arith.constant 3.200000e+01 : f32
    %214 = vector.broadcast %cst_67 : f32 to vector<32x1xf32>
    %215 = arith.divf %213, %214 : vector<32x1xf32>
    %216 = vector.broadcast %208 : vector<32x1xf32> to vector<32x32xf32>
    %217 = arith.subf %204, %216 : vector<32x32xf32>
    %218 = math.sqrt %215 : vector<32x1xf32>
    %cst_68 = arith.constant 9.99999974E-6 : f32
    %219 = vector.broadcast %cst_68 : f32 to vector<32x1xf32>
    %220 = arith.addf %218, %219 : vector<32x1xf32>
    %221 = vector.broadcast %220 : vector<32x1xf32> to vector<32x32xf32>
    %222 = arith.divf %217, %221 : vector<32x32xf32>
    %223 = tpu.concatenate %203, %222 in 1 : vector<32x32xf32>, vector<32x32xf32> -> vector<32x64xf32>
    %224 = vector.broadcast %183 : vector<1x64xf32> to vector<32x64xf32>
    %225 = arith.mulf %223, %224 : vector<32x64xf32>
    %226 = vector.broadcast %184 : vector<1x64xf32> to vector<32x64xf32>
    %227 = arith.addf %225, %226 : vector<32x64xf32>
    %c0_69 = arith.constant 0 : index
    %c0_70 = arith.constant 0 : index
    %228 = vector.load %arg9[%c0_69, %c0_70] : memref<64x256xf32, #tpu.memory_space<vmem>>, vector<64x256xf32>
    %cst_71 = arith.constant dense<0.000000e+00> : vector<32x256xf32>
    %229 = tpu.matmul %227, %228, %cst_71 {dimension_numbers = #tpu.dot_dimension_numbers<[1], [0], [0], [1], [0, 0, 1, 1], [], []>} : vector<32x64xf32>, vector<64x256xf32>, vector<32x256xf32> -> vector<32x256xf32>
    %c0_72 = arith.constant 0 : index
    %c0_73 = arith.constant 0 : index
    %230 = vector.load %arg10[%c0_72, %c0_73] : memref<1x256xf32, #tpu.memory_space<vmem>>, vector<1x256xf32>
    %231 = vector.broadcast %230 : vector<1x256xf32> to vector<32x256xf32>
    %232 = arith.addf %229, %231 : vector<32x256xf32>
    %cst_74 = arith.constant 5.000000e-01 : f32
    %233 = vector.broadcast %cst_74 : f32 to vector<32x256xf32>
    %234 = arith.mulf %233, %232 : vector<32x256xf32>
    %cst_75 = arith.constant 0.707106769 : f32
    %235 = vector.broadcast %cst_75 : f32 to vector<32x256xf32>
    %236 = arith.mulf %232, %235 : vector<32x256xf32>
    %237 = math.absf %236 : vector<32x256xf32>
    %cst_76 = arith.constant 0.327591091 : f32
    %238 = vector.broadcast %cst_76 : f32 to vector<32x256xf32>
    %239 = arith.mulf %238, %237 : vector<32x256xf32>
    %cst_77 = arith.constant 1.000000e+00 : f32
    %240 = vector.broadcast %cst_77 : f32 to vector<32x256xf32>
    %241 = arith.addf %240, %239 : vector<32x256xf32>
    %cst_78 = arith.constant 1.000000e+00 : f32
    %242 = vector.broadcast %cst_78 : f32 to vector<32x256xf32>
    %243 = arith.divf %242, %241 : vector<32x256xf32>
    %cst_79 = arith.constant 1.06140542 : f32
    %244 = vector.broadcast %cst_79 : f32 to vector<32x256xf32>
    %245 = arith.mulf %244, %243 : vector<32x256xf32>
    %cst_80 = arith.constant -1.45315206 : f32
    %246 = vector.broadcast %cst_80 : f32 to vector<32x256xf32>
    %247 = arith.addf %245, %246 : vector<32x256xf32>
    %248 = arith.mulf %247, %243 : vector<32x256xf32>
    %cst_81 = arith.constant 1.42141378 : f32
    %249 = vector.broadcast %cst_81 : f32 to vector<32x256xf32>
    %250 = arith.addf %248, %249 : vector<32x256xf32>
    %251 = arith.mulf %250, %243 : vector<32x256xf32>
    %cst_82 = arith.constant -0.284496725 : f32
    %252 = vector.broadcast %cst_82 : f32 to vector<32x256xf32>
    %253 = arith.addf %251, %252 : vector<32x256xf32>
    %254 = arith.mulf %253, %243 : vector<32x256xf32>
    %cst_83 = arith.constant 0.254829586 : f32
    %255 = vector.broadcast %cst_83 : f32 to vector<32x256xf32>
    %256 = arith.addf %254, %255 : vector<32x256xf32>
    %257 = arith.mulf %256, %243 : vector<32x256xf32>
    %cst_84 = arith.constant 0.000000e+00 : f32
    %258 = vector.broadcast %cst_84 : f32 to vector<32x256xf32>
    %259 = arith.subf %258, %237 : vector<32x256xf32>
    %260 = arith.mulf %259, %237 : vector<32x256xf32>
    %261 = math.exp %260 : vector<32x256xf32>
    %262 = arith.mulf %257, %261 : vector<32x256xf32>
    %cst_85 = arith.constant 1.000000e+00 : f32
    %263 = vector.broadcast %cst_85 : f32 to vector<32x256xf32>
    %264 = arith.subf %263, %262 : vector<32x256xf32>
    %cst_86 = arith.constant 0.000000e+00 : f32
    %265 = vector.broadcast %cst_86 : f32 to vector<32x256xf32>
    %266 = arith.cmpf oge, %236, %265 : vector<32x256xf32>
    %cst_87 = arith.constant 0.000000e+00 : f32
    %267 = vector.broadcast %cst_87 : f32 to vector<32x256xf32>
    %268 = arith.subf %267, %264 : vector<32x256xf32>
    %269 = arith.select %266, %264, %268 : vector<32x256xi1>, vector<32x256xf32>
    %cst_88 = arith.constant 1.000000e+00 : f32
    %270 = vector.broadcast %cst_88 : f32 to vector<32x256xf32>
    %271 = arith.addf %270, %269 : vector<32x256xf32>
    %272 = arith.mulf %234, %271 : vector<32x256xf32>
    %c0_89 = arith.constant 0 : index
    %c0_90 = arith.constant 0 : index
    %273 = vector.load %arg11[%c0_89, %c0_90] : memref<256x64xf32, #tpu.memory_space<vmem>>, vector<256x64xf32>
    %cst_91 = arith.constant dense<0.000000e+00> : vector<32x64xf32>
    %274 = tpu.matmul %272, %273, %cst_91 {dimension_numbers = #tpu.dot_dimension_numbers<[1], [0], [0], [1], [0, 0, 1, 1], [], []>} : vector<32x256xf32>, vector<256x64xf32>, vector<32x64xf32> -> vector<32x64xf32>
    %c0_92 = arith.constant 0 : index
    %c0_93 = arith.constant 0 : index
    %275 = vector.load %arg12[%c0_92, %c0_93] : memref<1x64xf32, #tpu.memory_space<vmem>>, vector<1x64xf32>
    %276 = vector.broadcast %275 : vector<1x64xf32> to vector<32x64xf32>
    %277 = arith.addf %274, %276 : vector<32x64xf32>
    %278 = arith.addf %277, %182 : vector<32x64xf32>
    %c0_94 = arith.constant 0 : index
    %c0_95 = arith.constant 0 : index
    %c0_96 = arith.constant 0 : index
    %279 = vector.load %arg13[%c0_94, %c0_95, %c0_96] : memref<1x32x64xf32, #tpu.memory_space<vmem>>, vector<1x32x64xf32>
    %280 = vector.shape_cast %279 : vector<1x32x64xf32> to vector<32x64xf32>
    %281 = vector.shape_cast %278 : vector<32x64xf32> to vector<1x32x64xf32>
    tpu.vector_store %arg13[%c0_94, %c0_95, %c0_96], %281 {strides = array<i32>} : memref<1x32x64xf32, #tpu.memory_space<vmem>>, vector<1x32x64xf32>,
    return
  }
  func.func @transform_0(%arg0: i32) -> (i32, i32, i32) {
    %c0_i32 = arith.constant 0 : i32
    %c0_i32_0 = arith.constant 0 : i32
    %c0_i32_1 = arith.constant 0 : i32
    return %arg0, %c0_i32, %c0_i32_0 : i32, i32, i32
  }
  func.func @transform_1(%arg0: i32) -> (i32, i32) {
    %c0_i32 = arith.constant 0 : i32
    %c0_i32_0 = arith.constant 0 : i32
    %c0_i32_1 = arith.constant 0 : i32
    return %c0_i32, %c0_i32_0 : i32, i32
  }
  func.func @transform_2(%arg0: i32) -> (i32, i32) {
    %c0_i32 = arith.constant 0 : i32
    %c0_i32_0 = arith.constant 0 : i32
    %c0_i32_1 = arith.constant 0 : i32
    return %c0_i32, %c0_i32_0 : i32, i32
  }
  func.func @transform_3(%arg0: i32) -> (i32, i32) {
    %c0_i32 = arith.constant 0 : i32
    %c0_i32_0 = arith.constant 0 : i32
    %c0_i32_1 = arith.constant 0 : i32
    return %c0_i32, %c0_i32_0 : i32, i32
  }
  func.func @transform_4(%arg0: i32) -> (i32, i32) {
    %c0_i32 = arith.constant 0 : i32
    %c0_i32_0 = arith.constant 0 : i32
    %c0_i32_1 = arith.constant 0 : i32
    return %c0_i32, %c0_i32_0 : i32, i32
  }
  func.func @transform_5(%arg0: i32) -> (i32, i32) {
    %c0_i32 = arith.constant 0 : i32
    %c0_i32_0 = arith.constant 0 : i32
    %c0_i32_1 = arith.constant 0 : i32
    return %c0_i32, %c0_i32_0 : i32, i32
  }
  func.func @transform_6(%arg0: i32) -> (i32, i32) {
    %c0_i32 = arith.constant 0 : i32
    %c0_i32_0 = arith.constant 0 : i32
    %c0_i32_1 = arith.constant 0 : i32
    return %c0_i32, %c0_i32_0 : i32, i32
  }
  func.func @transform_7(%arg0: i32) -> (i32, i32) {
    %c0_i32 = arith.constant 0 : i32
    %c0_i32_0 = arith.constant 0 : i32
    %c0_i32_1 = arith.constant 0 : i32
    return %c0_i32, %c0_i32_0 : i32, i32
  }
  func.func @transform_8(%arg0: i32) -> (i32, i32) {
    %c0_i32 = arith.constant 0 : i32
    %c0_i32_0 = arith.constant 0 : i32
    %c0_i32_1 = arith.constant 0 : i32
    return %c0_i32, %c0_i32_0 : i32, i32
  }
  func.func @transform_9(%arg0: i32) -> (i32, i32) {
    %c0_i32 = arith.constant 0 : i32
    %c0_i32_0 = arith.constant 0 : i32
    %c0_i32_1 = arith.constant 0 : i32
    return %c0_i32, %c0_i32_0 : i32, i32
  }
  func.func @transform_10(%arg0: i32) -> (i32, i32) {
    %c0_i32 = arith.constant 0 : i32
    %c0_i32_0 = arith.constant 0 : i32
    %c0_i32_1 = arith.constant 0 : i32
    return %c0_i32, %c0_i32_0 : i32, i32
  }
  func.func @transform_11(%arg0: i32) -> (i32, i32) {
    %c0_i32 = arith.constant 0 : i32
    %c0_i32_0 = arith.constant 0 : i32
    %c0_i32_1 = arith.constant 0 : i32
    return %c0_i32, %c0_i32_0 : i32, i32
  }
  func.func @transform_12(%arg0: i32) -> (i32, i32, i32) {
    %c0_i32 = arith.constant 0 : i32
    %c0_i32_0 = arith.constant 0 : i32
    %c0_i32_1 = arith.constant 0 : i32
    return %arg0, %c0_i32, %c0_i32_0 : i32, i32, i32
  }
}

module attributes {stable_mosaic.version = 11 : i64} {
  func.func @_head_kernel(%arg0: i32, %arg1: memref<1x32x32xf32, #tpu.memory_space<vmem>>, %arg2: memref<1x32xf32, #tpu.memory_space<vmem>>, %arg3: memref<1x32xf32, #tpu.memory_space<vmem>>, %arg4: memref<32x50xf32, #tpu.memory_space<vmem>>, %arg5: memref<1x50xf32, #tpu.memory_space<vmem>>, %arg6: memref<1x32x50xf32, #tpu.memory_space<vmem>>) attributes {dimension_semantics = [#tpu.dimension_semantics<parallel>], iteration_bounds = array<i64: 2>, scalar_prefetch = 0 : i64, scratch_operands = 0 : i64, tpu.core_type = #tpu.core_type<tc>, window_params = [{transform_indices = @transform_0, window_bounds = array<i64: 1, 32, 32>}, {pipeline_mode = #tpu.pipeline_mode<synchronous>, transform_indices = @transform_1, window_bounds = array<i64: 1, 32>}, {pipeline_mode = #tpu.pipeline_mode<synchronous>, transform_indices = @transform_2, window_bounds = array<i64: 1, 32>}, {pipeline_mode = #tpu.pipeline_mode<synchronous>, transform_indices = @transform_3, window_bounds = array<i64: 32, 50>}, {pipeline_mode = #tpu.pipeline_mode<synchronous>, transform_indices = @transform_4, window_bounds = array<i64: 1, 50>}, {transform_indices = @transform_5, window_bounds = array<i64: 1, 32, 50>}]} {
    %c0 = arith.constant 0 : index
    %c0_0 = arith.constant 0 : index
    %c0_1 = arith.constant 0 : index
    %0 = vector.load %arg1[%c0, %c0_0, %c0_1] : memref<1x32x32xf32, #tpu.memory_space<vmem>>, vector<1x32x32xf32>
    %1 = vector.shape_cast %0 : vector<1x32x32xf32> to vector<32x32xf32>
    %cst = arith.constant dense<0.000000e+00> : vector<32xf32>
    %2 = vector.multi_reduction <add>, %1, %cst [1] : vector<32x32xf32> to vector<32xf32>
    %3 = vector.shape_cast %2 : vector<32xf32> to vector<32x1xf32>
    %cst_2 = arith.constant 3.200000e+01 : f32
    %4 = vector.broadcast %cst_2 : f32 to vector<32x1xf32>
    %5 = arith.divf %3, %4 : vector<32x1xf32>
    %6 = vector.broadcast %5 : vector<32x1xf32> to vector<32x32xf32>
    %7 = arith.subf %1, %6 : vector<32x32xf32>
    %8 = arith.mulf %7, %7 : vector<32x32xf32>
    %cst_3 = arith.constant dense<0.000000e+00> : vector<32xf32>
    %9 = vector.multi_reduction <add>, %8, %cst_3 [1] : vector<32x32xf32> to vector<32xf32>
    %10 = vector.shape_cast %9 : vector<32xf32> to vector<32x1xf32>
    %cst_4 = arith.constant 3.200000e+01 : f32
    %11 = vector.broadcast %cst_4 : f32 to vector<32x1xf32>
    %12 = arith.divf %10, %11 : vector<32x1xf32>
    %13 = vector.broadcast %5 : vector<32x1xf32> to vector<32x32xf32>
    %14 = arith.subf %1, %13 : vector<32x32xf32>
    %cst_5 = arith.constant 9.99999974E-6 : f32
    %15 = vector.broadcast %cst_5 : f32 to vector<32x1xf32>
    %16 = arith.addf %12, %15 : vector<32x1xf32>
    %17 = math.rsqrt %16 : vector<32x1xf32>
    %18 = vector.broadcast %17 : vector<32x1xf32> to vector<32x32xf32>
    %19 = arith.mulf %14, %18 : vector<32x32xf32>
    %c0_6 = arith.constant 0 : index
    %c0_7 = arith.constant 0 : index
    %20 = vector.load %arg2[%c0_6, %c0_7] : memref<1x32xf32, #tpu.memory_space<vmem>>, vector<1x32xf32>
    %21 = vector.broadcast %20 : vector<1x32xf32> to vector<32x32xf32>
    %22 = arith.mulf %19, %21 : vector<32x32xf32>
    %c0_8 = arith.constant 0 : index
    %c0_9 = arith.constant 0 : index
    %23 = vector.load %arg3[%c0_8, %c0_9] : memref<1x32xf32, #tpu.memory_space<vmem>>, vector<1x32xf32>
    %24 = vector.broadcast %23 : vector<1x32xf32> to vector<32x32xf32>
    %25 = arith.addf %22, %24 : vector<32x32xf32>
    %c0_10 = arith.constant 0 : index
    %c0_11 = arith.constant 0 : index
    %26 = vector.load %arg4[%c0_10, %c0_11] : memref<32x50xf32, #tpu.memory_space<vmem>>, vector<32x50xf32>
    %cst_12 = arith.constant dense<0.000000e+00> : vector<32x50xf32>
    %27 = tpu.matmul %25, %26, %cst_12 {dimension_numbers = #tpu.dot_dimension_numbers<[1], [0], [0], [1], [0, 0, 1, 1], [], []>} : vector<32x32xf32>, vector<32x50xf32>, vector<32x50xf32> -> vector<32x50xf32>
    %c0_13 = arith.constant 0 : index
    %c0_14 = arith.constant 0 : index
    %28 = vector.load %arg5[%c0_13, %c0_14] : memref<1x50xf32, #tpu.memory_space<vmem>>, vector<1x50xf32>
    %29 = vector.broadcast %28 : vector<1x50xf32> to vector<32x50xf32>
    %30 = arith.addf %27, %29 : vector<32x50xf32>
    %c0_15 = arith.constant 0 : index
    %c0_16 = arith.constant 0 : index
    %c0_17 = arith.constant 0 : index
    %31 = vector.load %arg6[%c0_15, %c0_16, %c0_17] : memref<1x32x50xf32, #tpu.memory_space<vmem>>, vector<1x32x50xf32>
    %32 = vector.shape_cast %31 : vector<1x32x50xf32> to vector<32x50xf32>
    %33 = vector.shape_cast %30 : vector<32x50xf32> to vector<1x32x50xf32>
    tpu.vector_store %arg6[%c0_15, %c0_16, %c0_17], %33 {strides = array<i32>} : memref<1x32x50xf32, #tpu.memory_space<vmem>>, vector<1x32x50xf32>,
    return
  }
  func.func @transform_0(%arg0: i32) -> (i32, i32, i32) {
    %c0_i32 = arith.constant 0 : i32
    %c0_i32_0 = arith.constant 0 : i32
    %c0_i32_1 = arith.constant 0 : i32
    return %arg0, %c0_i32, %c0_i32_0 : i32, i32, i32
  }
  func.func @transform_1(%arg0: i32) -> (i32, i32) {
    %c0_i32 = arith.constant 0 : i32
    %c0_i32_0 = arith.constant 0 : i32
    %c0_i32_1 = arith.constant 0 : i32
    return %c0_i32, %c0_i32_0 : i32, i32
  }
  func.func @transform_2(%arg0: i32) -> (i32, i32) {
    %c0_i32 = arith.constant 0 : i32
    %c0_i32_0 = arith.constant 0 : i32
    %c0_i32_1 = arith.constant 0 : i32
    return %c0_i32, %c0_i32_0 : i32, i32
  }
  func.func @transform_3(%arg0: i32) -> (i32, i32) {
    %c0_i32 = arith.constant 0 : i32
    %c0_i32_0 = arith.constant 0 : i32
    %c0_i32_1 = arith.constant 0 : i32
    return %c0_i32, %c0_i32_0 : i32, i32
  }
  func.func @transform_4(%arg0: i32) -> (i32, i32) {
    %c0_i32 = arith.constant 0 : i32
    %c0_i32_0 = arith.constant 0 : i32
    %c0_i32_1 = arith.constant 0 : i32
    return %c0_i32, %c0_i32_0 : i32, i32
  }
  func.func @transform_5(%arg0: i32) -> (i32, i32, i32) {
    %c0_i32 = arith.constant 0 : i32
    %c0_i32_0 = arith.constant 0 : i32
    %c0_i32_1 = arith.constant 0 : i32
    return %arg0, %c0_i32, %c0_i32_0 : i32, i32, i32
  }
}

</mosaic_0001>

<llo_original>
// kernel: esbn_forward.9
$region0: #{esbn_forward.9}
  #allocation0 [shape = 'u32[]', space=smem, size = 0x4, offset = 0x4, fixed_abs, tag = 'smem constant byte address 0x4 - core index']
  #allocation1 [shape = 'u32[72,128]{1,0:T(1,128)}', space=vmem, size = 0x9000, scoped, tag = 'internal scratch']
  %s0 = inlined_call_operand.vmem [shape: f32[2,32,32], index: 0, kind: input, shape index: {}]
  %s1 = inlined_call_operand.vmem [shape: f32[1,32], index: 1, kind: input, shape index: {}]
  %s2 = inlined_call_operand.vmem [shape: f32[1,32], index: 2, kind: input, shape index: {}]
  %s3 = inlined_call_operand.vmem [shape: f32[32,50], index: 3, kind: input, shape index: {}]
  %s4 = inlined_call_operand.vmem [shape: f32[1,50], index: 4, kind: input, shape index: {}]
  %s5 = inlined_call_operand.hbm [shape: f32[2,32,50], index: 5, kind: output, shape index: {}]
  %s6 = sld [smem:[#allocation0]]
  $region53: #{esbn_forward.9} parent=0
    _
  %s8 = ssub.s32 1, %s6
  %s9 = scalar_select 0, %s8, %s6
  $region1: #{esbn_forward.9} parent=0
    #allocation2 [shape = 'u8[32768]{0}', space=vmem, size = 0x8000, scoped, tag = 'output window, operand 0']
    #allocation3 [shape = 's32[2]{0}', space=sflag, size = 0x8, scoped, tag = 'scoped memory for esbn_forward.9']
    %10 = vsyncpa [#allocation3], 0
    %s11 = scalar_lea.sflag [#allocation3], 1
    %12 = vsyncpa %s11, 0
    loop: start=0, step=1, limit=4
    $region2: #{esbn_forward.9} parent=1 // loop_pre_header
      _
    $region3: #{esbn_forward.9} parent=1 // loop_header
      %s14 = sphi 0, %s18
      %p15 = scmp.ge.s32.totalorder %s14, 4
      %s24 = sphi 0, %s26
      %s27 = sphi 0, %s24
      %s28 = sphi 0, %s27
      %s44 = sphi 0, %s28
      %s48 = sphi 0, %s48
      %s50 = sphi 0, %s48
      %s51 = sphi 0, %s50
      %s65 = sphi 0, %s51
      %s69 = sphi 0, %s69
      %s71 = sphi 0, %s69
      %s72 = sphi 0, %s71
      %s86 = sphi 0, %s72
      %s90 = sphi 0, %s90
      %s92 = sphi 0, %s90
      %s93 = sphi 0, %s92
      %s107 = sphi 0, %s93
      %s111 = sphi 0, %s111
      %s113 = sphi 0, %s111
      %s114 = sphi 0, %s113
      %s128 = sphi 0, %s114
      %s134 = sphi 0, %s136
      %s137 = sphi 0, %s134
      %s138 = sphi 0, %s137
      %s154 = sphi 0, %s138
    $region4: #{esbn_forward.9} parent=1 // loop_header_branch
      %17 = sbr.rel (%p15) target = $region8
    $region5: #{esbn_forward.9} parent=1 // loop_body
      %s19 = ssub.s32 %s14, 1
      %s20 = ssub.s32 %s14, 2
      %s21 = sadd.s32 %s14, 1
      %s22 = ssub.s32 %s14, %s21
      %p23 = scmp.eq.s32.totalorder %s22, 0
      %s25 = sadd.s32 %s24, 1
      %s26 = scalar_select %p23, %s24, %s25
      %p29 = pneg %p23
      %p30 = scmp.eq.s32.totalorder %s14, 1
      %p31 = por %p29, %p30
      %p32 = scmp.ne.s32.totalorder %s24, %s27
      %p33 = scmp.eq.s32.totalorder %s14, 0
      %p34 = por %p32, %p33
      %p35 = scmp.ne.s32.totalorder %s24, %s27
      %p36 = scmp.eq.s32.totalorder %s19, 1
      %p37 = por %p35, %p36
      %p38 = scmp.ne.s32.totalorder %s27, %s28
      %p39 = scmp.eq.s32.totalorder %s19, 0
      %p40 = por %p38, %p39
      %p41 = scmp.ne.s32.totalorder %s27, %s28
      %p42 = scmp.eq.s32.totalorder %s20, 1
      %p43 = por %p41, %p42
      %p45 = scmp.ne.s32.totalorder %s28, %s44
      %p46 = scmp.eq.s32.totalorder %s20, 0
      %p47 = por %p45, %p46
      %s49 = sadd.s32 %s48, 1
      %p52 = scmp.eq.s32.totalorder %s14, 1
      %p53 = scmp.ne.s32.totalorder %s48, %s50
      %p54 = scmp.eq.s32.totalorder %s14, 0
      %p55 = por %p53, %p54
      %p56 = scmp.ne.s32.totalorder %s48, %s50
      %p57 = scmp.eq.s32.totalorder %s19, 1
      %p58 = por %p56, %p57
      %p59 = scmp.ne.s32.totalorder %s50, %s51
      %p60 = scmp.eq.s32.totalorder %s19, 0
      %p61 = por %p59, %p60
      %p62 = scmp.ne.s32.totalorder %s50, %s51
      %p63 = scmp.eq.s32.totalorder %s20, 1
      %p64 = por %p62, %p63
      %p66 = scmp.ne.s32.totalorder %s51, %s65
      %p67 = scmp.eq.s32.totalorder %s20, 0
      %p68 = por %p66, %p67
      %s70 = sadd.s32 %s69, 1
      %p73 = scmp.eq.s32.totalorder %s14, 1
      %p74 = scmp.ne.s32.totalorder %s69, %s71
      %p75 = scmp.eq.s32.totalorder %s14, 0
      %p76 = por %p74, %p75
      %p77 = scmp.ne.s32.totalorder %s69, %s71
      %p78 = scmp.eq.s32.totalorder %s19, 1
      %p79 = por %p77, %p78
      %p80 = scmp.ne.s32.totalorder %s71, %s72
      %p81 = scmp.eq.s32.totalorder %s19, 0
      %p82 = por %p80, %p81
      %p83 = scmp.ne.s32.totalorder %s71, %s72
      %p84 = scmp.eq.s32.totalorder %s20, 1
      %p85 = por %p83, %p84
      %p87 = scmp.ne.s32.totalorder %s72, %s86
      %p88 = scmp.eq.s32.totalorder %s20, 0
      %p89 = por %p87, %p88
      %s91 = sadd.s32 %s90, 1
      %p94 = scmp.eq.s32.totalorder %s14, 1
      %p95 = scmp.ne.s32.totalorder %s90, %s92
      %p96 = scmp.eq.s32.totalorder %s14, 0
      %p97 = por %p95, %p96
      %p98 = scmp.ne.s32.totalorder %s90, %s92
      %p99 = scmp.eq.s32.totalorder %s19, 1
      %p100 = por %p98, %p99
      %p101 = scmp.ne.s32.totalorder %s92, %s93
      %p102 = scmp.eq.s32.totalorder %s19, 0
      %p103 = por %p101, %p102
      %p104 = scmp.ne.s32.totalorder %s92, %s93
      %p105 = scmp.eq.s32.totalorder %s20, 1
      %p106 = por %p104, %p105
      %p108 = scmp.ne.s32.totalorder %s93, %s107
      %p109 = scmp.eq.s32.totalorder %s20, 0
      %p110 = por %p108, %p109
      %s112 = sadd.s32 %s111, 1
      %p115 = scmp.eq.s32.totalorder %s14, 1
      %p116 = scmp.ne.s32.totalorder %s111, %s113
      %p117 = scmp.eq.s32.totalorder %s14, 0
      %p118 = por %p116, %p117
      %p119 = scmp.ne.s32.totalorder %s111, %s113
      %p120 = scmp.eq.s32.totalorder %s19, 1
      %p121 = por %p119, %p120
      %p122 = scmp.ne.s32.totalorder %s113, %s114
      %p123 = scmp.eq.s32.totalorder %s19, 0
      %p124 = por %p122, %p123
      %p125 = scmp.ne.s32.totalorder %s113, %s114
      %p126 = scmp.eq.s32.totalorder %s20, 1
      %p127 = por %p125, %p126
      %p129 = scmp.ne.s32.totalorder %s114, %s128
      %p130 = scmp.eq.s32.totalorder %s20, 0
      %p131 = por %p129, %p130
      %s132 = ssub.s32 %s14, %s21
      %p133 = scmp.eq.s32.totalorder %s132, 0
      %s135 = sadd.s32 %s134, 1
      %s136 = scalar_select %p133, %s134, %s135
      %p139 = pneg %p133
      %p140 = scmp.eq.s32.totalorder %s14, 1
      %p141 = por %p139, %p140
      %p142 = scmp.ne.s32.totalorder %s134, %s137
      %p143 = scmp.eq.s32.totalorder %s14, 0
      %p144 = por %p142, %p143
      %p145 = scmp.ne.s32.totalorder %s134, %s137
      %p146 = scmp.eq.s32.totalorder %s19, 1
      %p147 = por %p145, %p146
      %p148 = scmp.ne.s32.totalorder %s137, %s138
      %p149 = scmp.eq.s32.totalorder %s19, 0
      %p150 = por %p148, %p149
      %p151 = scmp.ne.s32.totalorder %s137, %s138
      %p152 = scmp.eq.s32.totalorder %s20, 1
      %p153 = por %p151, %p152
      %p155 = scmp.ne.s32.totalorder %s138, %s154
      %p156 = scmp.eq.s32.totalorder %s20, 0
      %p157 = por %p155, %p156
      %p158 = scmp.le.s32.totalorder 1, %s14
      %p159 = scmp.lt.s32.totalorder %s14, 3
      %p160 = pnand %p158, %p159
      %p161 = pneg %p160
      // Predicated region
      $region9: #{esbn_forward.9} parent=5 // pred_check
        _
      $region10: #{esbn_forward.9} parent=5 // pred_check_branch
        %163 = sbr.rel (%p160) target = $region12
      $region11: #{esbn_forward.9} parent=5 // pred_region
        %s164 = ssub.s32 %s14, 1
        // Predicated region
        $region13: #{esbn_forward.9} parent=11 // pred_check
          %p165 = pneg %p61
        $region14: #{esbn_forward.9} parent=11 // pred_check_branch
          %167 = sbr.rel (%p165) target = $region16
        $region15: #{esbn_forward.9} parent=11 // pred_region
          _
        $region16: #{esbn_forward.9} parent=11 // pred_fallthru
          _
        // Predicated region
        $region17: #{esbn_forward.9} parent=11 // pred_check
          %p168 = pneg %p82
        $region18: #{esbn_forward.9} parent=11 // pred_check_branch
          %170 = sbr.rel (%p168) target = $region20
        $region19: #{esbn_forward.9} parent=11 // pred_region
          _
        $region20: #{esbn_forward.9} parent=11 // pred_fallthru
          _
        // Predicated region
        $region21: #{esbn_forward.9} parent=11 // pred_check
          %p171 = pneg %p103
        $region22: #{esbn_forward.9} parent=11 // pred_check_branch
          %173 = sbr.rel (%p171) target = $region24
        $region23: #{esbn_forward.9} parent=11 // pred_region
          _
        $region24: #{esbn_forward.9} parent=11 // pred_fallthru
          _
        // Predicated region
        $region25: #{esbn_forward.9} parent=11 // pred_check
          %p174 = pneg %p124
        $region26: #{esbn_forward.9} parent=11 // pred_check_branch
          %176 = sbr.rel (%p174) target = $region28
        $region27: #{esbn_forward.9} parent=11 // pred_region
          _
        $region28: #{esbn_forward.9} parent=11 // pred_fallthru
          _
      $region12: #{esbn_forward.9} parent=5 // pred_fallthru
        _
      %p177 = scmp.lt.s32.totalorder %s14, 2
      // Predicated region
      $region29: #{esbn_forward.9} parent=5 // pred_check
        %p178 = pneg %p177
      $region30: #{esbn_forward.9} parent=5 // pred_check_branch
        %180 = sbr.rel (%p178) target = $region32
      $region31: #{esbn_forward.9} parent=5 // pred_region
        // Predicated region
        $region33: #{esbn_forward.9} parent=31 // pred_check
          %p181 = pneg %p34
        $region34: #{esbn_forward.9} parent=31 // pred_check_branch
          %183 = sbr.rel (%p181) target = $region36
        $region35: #{esbn_forward.9} parent=31 // pred_region
          %p184 = scmp.lt.s32.totalorder %s14, 1
          %s185 = scalar_select %p184, %s14, 1
          %s186 = smul.addr %s185, 4
          %s187 = smul.addr %s186, 8
          %s188 = scalar_lea.vmem %s0, %s187
        $region36: #{esbn_forward.9} parent=31 // pred_fallthru
          _
      $region32: #{esbn_forward.9} parent=5 // pred_fallthru
        _
      %p189 = scmp.le.s32.totalorder 1, %s14
      %p190 = scmp.lt.s32.totalorder %s14, 3
      %p191 = pnand %p189, %p190
      %p192 = pneg %p191
      // Predicated region
      $region37: #{esbn_forward.9} parent=5 // pred_check
        _
      $region38: #{esbn_forward.9} parent=5 // pred_check_branch
        %194 = sbr.rel (%p191) target = $region40
      $region39: #{esbn_forward.9} parent=5 // pred_region
        %s195 = ssub.s32 %s14, 1
        %p196 = scmp.lt.s32.totalorder %s19, 1
        %s197 = scalar_select %p196, %s19, 1
        %s198 = smul.addr %s197, 4
        %s199 = smul.addr %s198, 8
        %s200 = scalar_lea.vmem %s0, %s199
        %p201 = pneg %p40
        %p202 = pneg %p37
        %p203 = pneg %p61
        %p204 = pneg %p58
        %p205 = pneg %p82
        %p206 = pneg %p79
        %p207 = pneg %p103
        %p208 = pneg %p100
        %p209 = pneg %p124
        %p210 = pneg %p121
        %p211 = pneg %p150
        %p212 = pneg %p147
        %s213 = sand.u32 %s137, 1
        %s214 = scalar_lea.sflag [#allocation3], %s213
        %s215 = sand.u32 %s137, 1
        %s216 = smul.addr %s215, 32
        %s217 = scalar_lea.vmem [#allocation2], %s216
        %p218 = scmp.lt.s32.totalorder %s19, 1
        %s219 = scalar_select %p218, %s19, 1
        %s220 = smul.addr %s219, 4
        %s221 = smul.addr %s220, 8
        %s222 = scalar_lea.vmem %s0, %s221
        %v223 = vld [vmem:[%s222] sm:$0xff]
        %v224 = vld [vmem:[%s222 + $0x8] sm:$0xff]
        %v225 = vld [vmem:[%s222 + $0x10] sm:$0xff]
        %v226 = vld [vmem:[%s222 + $0x18] sm:$0xff]
        %vm227 = vcmask 261120
        %v228 = vsel %vm227, %v223, 0.0
        %229 = vadd.xlane.f32.xlu0 %v228
        %v230 = vpop.xlane.xlu0 %229
        %v231 = vsel %vm227, %v224, 0.0
        %232 = vadd.xlane.f32.xlu0 %v231
        %v233 = vpop.xlane.xlu0 %232
        %v234 = vsel %vm227, %v225, 0.0
        %235 = vadd.xlane.f32.xlu0 %v234
        %v236 = vpop.xlane.xlu0 %235
        %v237 = vsel %vm227, %v226, 0.0
        %238 = vadd.xlane.f32.xlu0 %v237
        %v239 = vpop.xlane.xlu0 %238
        %v240 = vrcp.pop 32.0
        %v241 = vmul.f32 32.0, %v240
        %v242 = vsub.f32 1.0, %v241
        %v243 = vmul.f32 %v240, %v242
        %v244 = vadd.f32 %v240, %v243
        %vm245 = vweird.f32 %v240
        %v246 = vsel %vm245, %v240, %v244
        %v247 = vmul.f32 %v230, %v246
        %v248 = vmul.f32 %v233, %v246
        %v249 = vmul.f32 %v236, %v246
        %v250 = vmul.f32 %v239, %v246
        %v251 = vsub.f32 %v223, %v247
        %v252 = vsub.f32 %v224, %v248
        %v253 = vsub.f32 %v225, %v249
        %v254 = vsub.f32 %v226, %v250
        %v255 = vmul.f32 %v251, %v251
        %v256 = vmul.f32 %v252, %v252
        %v257 = vmul.f32 %v253, %v253
        %v258 = vmul.f32 %v254, %v254
        %v259 = vsel %vm227, %v255, 0.0
        %260 = vadd.xlane.f32.xlu0 %v259
        %v261 = vpop.xlane.xlu0 %260
        %v262 = vsel %vm227, %v256, 0.0
        %263 = vadd.xlane.f32.xlu0 %v262
        %v264 = vpop.xlane.xlu0 %263
        %v265 = vsel %vm227, %v257, 0.0
        %266 = vadd.xlane.f32.xlu0 %v265
        %v267 = vpop.xlane.xlu0 %266
        %v268 = vsel %vm227, %v258, 0.0
        %269 = vadd.xlane.f32.xlu0 %v268
        %v270 = vpop.xlane.xlu0 %269
        %v271 = vmul.f32 %v261, %v246
        %v272 = vmul.f32 %v264, %v246
        %v273 = vmul.f32 %v267, %v246
        %v274 = vmul.f32 %v270, %v246
        %v275 = vadd.f32 %v271, 1e-05
        %v276 = vadd.f32 %v272, 1e-05
        %v277 = vadd.f32 %v273, 1e-05
        %v278 = vadd.f32 %v274, 1e-05
        %v279 = vrsqrt.pop %v275
        %v280 = vmul.f32 %v279, %v275
        %v281 = vmul.f32 %v280, %v279
        %v282 = vmul.f32 0.5, %v281
        %v283 = vsub.f32 1.5, %v282
        %v284 = vmul.f32 %v279, %v283
        %vm285 = vweird.f32 %v275
        %vm286 = vweird.f32 %v279
        %vm287 = vmor %vm285, %vm286
        %v288 = vsel %vm287, %v279, %v284
        %v289 = vrsqrt.pop %v276
        %v290 = vmul.f32 %v289, %v276
        %v291 = vmul.f32 %v290, %v289
        %v292 = vmul.f32 0.5, %v291
        %v293 = vsub.f32 1.5, %v292
        %v294 = vmul.f32 %v289, %v293
        %vm295 = vweird.f32 %v276
        %vm296 = vweird.f32 %v289
        %vm297 = vmor %vm295, %vm296
        %v298 = vsel %vm297, %v289, %v294
        %v299 = vrsqrt.pop %v277
        %v300 = vmul.f32 %v299, %v277
        %v301 = vmul.f32 %v300, %v299
        %v302 = vmul.f32 0.5, %v301
        %v303 = vsub.f32 1.5, %v302
        %v304 = vmul.f32 %v299, %v303
        %vm305 = vweird.f32 %v277
        %vm306 = vweird.f32 %v299
        %vm307 = vmor %vm305, %vm306
        %v308 = vsel %vm307, %v299, %v304
        %v309 = vrsqrt.pop %v278
        %v310 = vmul.f32 %v309, %v278
        %v311 = vmul.f32 %v310, %v309
        %v312 = vmul.f32 0.5, %v311
        %v313 = vsub.f32 1.5, %v312
        %v314 = vmul.f32 %v309, %v313
        %vm315 = vweird.f32 %v278
        %vm316 = vweird.f32 %v309
        %vm317 = vmor %vm315, %vm316
        %v318 = vsel %vm317, %v309, %v314
        %v319 = vmul.f32 %v251, %v288
        %v320 = vmul.f32 %v252, %v298
        %v321 = vmul.f32 %v253, %v308
        %v322 = vmul.f32 %v254, %v318
        %v323 = vld [vmem:[%s1] sm:$0x1]
        %v325 = vperm.slane %v323, 0
        %v327 = vmul.f32 %v319, %v325
        %v328 = vmul.f32 %v320, %v325
        %v329 = vmul.f32 %v321, %v325
        %v330 = vmul.f32 %v322, %v325
        %v331 = vld [vmem:[%s2] sm:$0x1]
        %v333 = vperm.slane %v331, 0
        %v335 = vadd.f32 %v327, %v333
        %v336 = vadd.f32 %v328, %v333
        %v337 = vadd.f32 %v329, %v333
        %v338 = vadd.f32 %v330, %v333
        %v339 = vld [vmem:[%s3] sm:$0xff]
        %v340 = vld [vmem:[%s3 + $0x8] sm:$0xff]
        %v341 = vld [vmem:[%s3 + $0x10] sm:$0xff]
        %v342 = vld [vmem:[%s3 + $0x18] sm:$0xff]
        %v343 = vld [vmem:[%s4] sm:$0x1]
        %v345 = vperm.slane %v343, 0
        %v348 = vsel %vm227, %v335, 0
        %v351 = vsel %vm227, %v336, 0
        %v354 = vsel %vm227, %v337, 0
        %v357 = vsel %vm227, %v338, 0
        %359 = vmatpush.msra.mxu0 0.0
        %360 = vmatpush.msra.mxu0 0.0
        %361 = vmatpush.msra.mxu0 0.0
        %362 = vmatpush.msra.mxu0 0.0
        %363 = vmatpush.msra.mxu0 0.0
        %364 = vmatpush.msra.mxu0 0.0
        %365 = vmatpush.msra.mxu0 0.0
        %366 = vmatpush.msra.mxu0 0.0
        %367 = vmatpush.msra.mxu0 0.0
        %368 = vmatpush.msra.mxu0 0.0
        %369 = vmatpush.msra.mxu0 0.0
        %370 = vmatpush.msra.mxu0 0.0
        %371 = vmatpush.msra.mxu0 %v342
        %372 = vmatpush.msra.mxu0 %v341
        %373 = vmatpush.msra.mxu0 %v340
        %374 = vmatpush.msra.mxu0 %v339
        %375 = vmatmul.f32.gmra.mxu0 %v348
        %v376 = vpop.f32.mrf.mxu0
        %v377 = vadd.f32 %v345, %v376
        %378 = vmatmul.f32.gmra.mxu0 %v351
        %v379 = vpop.f32.mrf.mxu0
        %v380 = vadd.f32 %v345, %v379
        %381 = vmatmul.f32.gmra.mxu0 %v354
        %v382 = vpop.f32.mrf.mxu0
        %v383 = vadd.f32 %v345, %v382
        %384 = vmatmul.f32.gmra.mxu0 %v357
        %v385 = vpop.f32.mrf.mxu0
        %v386 = vadd.f32 %v345, %v385
        %387 = vdwg.mxu0
        %vm388 = vcmask 408576
        %389 = vst.msk [vmem:[%s217] sm:$0xff] %vm388, %v377
        %390 = vst.msk [vmem:[%s217 + $0x8] sm:$0xff] %vm388, %v380
        %391 = vst.msk [vmem:[%s217 + $0x10] sm:$0xff] %vm388, %v383
        %392 = vst.msk [vmem:[%s217 + $0x18] sm:$0xff] %vm388, %v386
        %s393 = sand.u32 %s137, 1
        %s394 = scalar_lea.sflag [#allocation3], %s393
        %s395 = sand.u32 %s137, 1
        %s396 = smul.addr %s395, 32
        %s397 = scalar_lea.vmem [#allocation2], %s396
        // Predicated region
        $region41: #{esbn_forward.9} parent=39 // pred_check
          %p398 = pneg %p147
        $region42: #{esbn_forward.9} parent=39 // pred_check_branch
          %400 = sbr.rel (%p398) target = $region44
        $region43: #{esbn_forward.9} parent=39 // pred_region
          %402 = vsyncadd %s394, 0
          %s403 = smul.addr %s19, 4
          %s404 = smul.addr %s403, 8
          %s405 = scalar_lea.hbm %s5, %s404
          %s406 = sshll.u32 %s397, 4
          %s407 = int_to_ptr.vmem [resolvable:$true] %s406
          %s408 = sshll.u32 %s405, 4
          %s409 = int_to_ptr.hbm [resolvable:$true] %s408
          %414 = dma.vmem_to_hbm [thread:$0]  %s407, 512, %s409, %s394, 128, 128, 8
        $region44: #{esbn_forward.9} parent=39 // pred_fallthru
          _
      $region40: #{esbn_forward.9} parent=5 // pred_fallthru
        _
      %p415 = scmp.le.s32.totalorder 2, %s14
      // Predicated region
      $region45: #{esbn_forward.9} parent=5 // pred_check
        %p416 = pneg %p415
      $region46: #{esbn_forward.9} parent=5 // pred_check_branch
        %418 = sbr.rel (%p416) target = $region48
      $region47: #{esbn_forward.9} parent=5 // pred_region
        %s419 = ssub.s32 %s14, 2
        // Predicated region
        $region49: #{esbn_forward.9} parent=47 // pred_check
          %p420 = pneg %p153
        $region50: #{esbn_forward.9} parent=47 // pred_check_branch
          %422 = sbr.rel (%p420) target = $region52
        $region51: #{esbn_forward.9} parent=47 // pred_region
          %s423 = sand.u32 %s138, 1
          %s424 = scalar_lea.sflag [#allocation3], %s423
          %s425 = sand.u32 %s138, 1
          %s426 = smul.addr %s425, 32
          %s427 = scalar_lea.vmem [#allocation2], %s426
          %429 = dma.done %s424, 512
        $region52: #{esbn_forward.9} parent=47 // pred_fallthru
          _
      $region48: #{esbn_forward.9} parent=5 // pred_fallthru
        _
    $region6: #{esbn_forward.9} parent=1 // loop_footer
      %s18 = sadd.s32 1, %s14
    $region7: #{esbn_forward.9} parent=1 // loop_footer_branch
      %13 = sbr.rel target = $region3
    $region8: #{esbn_forward.9} parent=1 // loop_exit
      _
    %430 = vsyncpa [#allocation3], 1
    %s431 = scalar_lea.sflag [#allocation3], 1
    %432 = vsyncpa %s431, 1

// kernel: esbn_forward.5
$region0: #{esbn_forward.5}
  #allocation0 [shape = 'u32[]', space=smem, size = 0x4, offset = 0x4, fixed_abs, tag = 'smem constant byte address 0x4 - core index']
  #allocation1 [shape = 'u32[72,128]{1,0:T(1,128)}', space=vmem, size = 0x9000, scoped, tag = 'internal scratch']
  %s0 = inlined_call_operand.vmem [shape: f32[2,32,32], index: 0, kind: input, shape index: {}]
  %s1 = inlined_call_operand.vmem [shape: f32[1,32], index: 1, kind: input, shape index: {}]
  %s2 = inlined_call_operand.vmem [shape: f32[1,32], index: 2, kind: input, shape index: {}]
  %s3 = inlined_call_operand.vmem [shape: f32[32,192], index: 3, kind: input, shape index: {}]
  %s4 = inlined_call_operand.vmem [shape: f32[64,32], index: 4, kind: input, shape index: {}]
  %s5 = inlined_call_operand.vmem [shape: f32[1,32], index: 5, kind: input, shape index: {}]
  %s6 = inlined_call_operand.vmem [shape: f32[1,32], index: 6, kind: input, shape index: {}]
  %s7 = inlined_call_operand.vmem [shape: f32[1,32], index: 7, kind: input, shape index: {}]
  %s8 = inlined_call_operand.vmem [shape: f32[32,128], index: 8, kind: input, shape index: {}]
  %s9 = inlined_call_operand.vmem [shape: f32[1,128], index: 9, kind: input, shape index: {}]
  %s10 = inlined_call_operand.vmem [shape: f32[128,32], index: 10, kind: input, shape index: {}]
  %s11 = inlined_call_operand.vmem [shape: f32[1,32], index: 11, kind: input, shape index: {}]
  %s12 = inlined_call_operand.vmem [shape: f32[2,32,32], index: 12, kind: output, shape index: {}]
  %s13 = sld [smem:[#allocation0]]
  $region81: #{esbn_forward.5} parent=0
    _
  %s15 = ssub.s32 1, %s13
  %s16 = scalar_select 0, %s15, %s13
  loop: start=0, step=1, limit=4
  $region2: #{esbn_forward.5} parent=0 // loop_pre_header
    _
  $region3: #{esbn_forward.5} parent=0 // loop_header
    %s18 = sphi 0, %s22
    %p19 = scmp.ge.s32.totalorder %s18, 4
    %s28 = sphi 0, %s30
    %s31 = sphi 0, %s28
    %s32 = sphi 0, %s31
    %s48 = sphi 0, %s32
    %s52 = sphi 0, %s52
    %s54 = sphi 0, %s52
    %s55 = sphi 0, %s54
    %s69 = sphi 0, %s55
    %s73 = sphi 0, %s73
    %s75 = sphi 0, %s73
    %s76 = sphi 0, %s75
    %s90 = sphi 0, %s76
    %s94 = sphi 0, %s94
    %s96 = sphi 0, %s94
    %s97 = sphi 0, %s96
    %s111 = sphi 0, %s97
    %s115 = sphi 0, %s115
    %s117 = sphi 0, %s115
    %s118 = sphi 0, %s117
    %s132 = sphi 0, %s118
    %s136 = sphi 0, %s136
    %s138 = sphi 0, %s136
    %s139 = sphi 0, %s138
    %s153 = sphi 0, %s139
    %s157 = sphi 0, %s157
    %s159 = sphi 0, %s157
    %s160 = sphi 0, %s159
    %s174 = sphi 0, %s160
    %s178 = sphi 0, %s178
    %s180 = sphi 0, %s178
    %s181 = sphi 0, %s180
    %s195 = sphi 0, %s181
    %s199 = sphi 0, %s199
    %s201 = sphi 0, %s199
    %s202 = sphi 0, %s201
    %s216 = sphi 0, %s202
    %s220 = sphi 0, %s220
    %s222 = sphi 0, %s220
    %s223 = sphi 0, %s222
    %s237 = sphi 0, %s223
    %s241 = sphi 0, %s241
    %s243 = sphi 0, %s241
    %s244 = sphi 0, %s243
    %s258 = sphi 0, %s244
    %s262 = sphi 0, %s262
    %s264 = sphi 0, %s262
    %s265 = sphi 0, %s264
    %s279 = sphi 0, %s265
    %s285 = sphi 0, %s287
    %s288 = sphi 0, %s285
    %s289 = sphi 0, %s288
    %s305 = sphi 0, %s289
  $region4: #{esbn_forward.5} parent=0 // loop_header_branch
    %21 = sbr.rel (%p19) target = $region8
  $region5: #{esbn_forward.5} parent=0 // loop_body
    %s23 = ssub.s32 %s18, 1
    %s24 = ssub.s32 %s18, 2
    %s25 = sadd.s32 %s18, 1
    %s26 = ssub.s32 %s18, %s25
    %p27 = scmp.eq.s32.totalorder %s26, 0
    %s29 = sadd.s32 %s28, 1
    %s30 = scalar_select %p27, %s28, %s29
    %p33 = pneg %p27
    %p34 = scmp.eq.s32.totalorder %s18, 1
    %p35 = por %p33, %p34
    %p36 = scmp.ne.s32.totalorder %s28, %s31
    %p37 = scmp.eq.s32.totalorder %s18, 0
    %p38 = por %p36, %p37
    %p39 = scmp.ne.s32.totalorder %s28, %s31
    %p40 = scmp.eq.s32.totalorder %s23, 1
    %p41 = por %p39, %p40
    %p42 = scmp.ne.s32.totalorder %s31, %s32
    %p43 = scmp.eq.s32.totalorder %s23, 0
    %p44 = por %p42, %p43
    %p45 = scmp.ne.s32.totalorder %s31, %s32
    %p46 = scmp.eq.s32.totalorder %s24, 1
    %p47 = por %p45, %p46
    %p49 = scmp.ne.s32.totalorder %s32, %s48
    %p50 = scmp.eq.s32.totalorder %s24, 0
    %p51 = por %p49, %p50
    %s53 = sadd.s32 %s52, 1
    %p56 = scmp.eq.s32.totalorder %s18, 1
    %p57 = scmp.ne.s32.totalorder %s52, %s54
    %p58 = scmp.eq.s32.totalorder %s18, 0
    %p59 = por %p57, %p58
    %p60 = scmp.ne.s32.totalorder %s52, %s54
    %p61 = scmp.eq.s32.totalorder %s23, 1
    %p62 = por %p60, %p61
    %p63 = scmp.ne.s32.totalorder %s54, %s55
    %p64 = scmp.eq.s32.totalorder %s23, 0
    %p65 = por %p63, %p64
    %p66 = scmp.ne.s32.totalorder %s54, %s55
    %p67 = scmp.eq.s32.totalorder %s24, 1
    %p68 = por %p66, %p67
    %p70 = scmp.ne.s32.totalorder %s55, %s69
    %p71 = scmp.eq.s32.totalorder %s24, 0
    %p72 = por %p70, %p71
    %s74 = sadd.s32 %s73, 1
    %p77 = scmp.eq.s32.totalorder %s18, 1
    %p78 = scmp.ne.s32.totalorder %s73, %s75
    %p79 = scmp.eq.s32.totalorder %s18, 0
    %p80 = por %p78, %p79
    %p81 = scmp.ne.s32.totalorder %s73, %s75
    %p82 = scmp.eq.s32.totalorder %s23, 1
    %p83 = por %p81, %p82
    %p84 = scmp.ne.s32.totalorder %s75, %s76
    %p85 = scmp.eq.s32.totalorder %s23, 0
    %p86 = por %p84, %p85
    %p87 = scmp.ne.s32.totalorder %s75, %s76
    %p88 = scmp.eq.s32.totalorder %s24, 1
    %p89 = por %p87, %p88
    %p91 = scmp.ne.s32.totalorder %s76, %s90
    %p92 = scmp.eq.s32.totalorder %s24, 0
    %p93 = por %p91, %p92
    %s95 = sadd.s32 %s94, 1
    %p98 = scmp.eq.s32.totalorder %s18, 1
    %p99 = scmp.ne.s32.totalorder %s94, %s96
    %p100 = scmp.eq.s32.totalorder %s18, 0
    %p101 = por %p99, %p100
    %p102 = scmp.ne.s32.totalorder %s94, %s96
    %p103 = scmp.eq.s32.totalorder %s23, 1
    %p104 = por %p102, %p103
    %p105 = scmp.ne.s32.totalorder %s96, %s97
    %p106 = scmp.eq.s32.totalorder %s23, 0
    %p107 = por %p105, %p106
    %p108 = scmp.ne.s32.totalorder %s96, %s97
    %p109 = scmp.eq.s32.totalorder %s24, 1
    %p110 = por %p108, %p109
    %p112 = scmp.ne.s32.totalorder %s97, %s111
    %p113 = scmp.eq.s32.totalorder %s24, 0
    %p114 = por %p112, %p113
    %s116 = sadd.s32 %s115, 1
    %p119 = scmp.eq.s32.totalorder %s18, 1
    %p120 = scmp.ne.s32.totalorder %s115, %s117
    %p121 = scmp.eq.s32.totalorder %s18, 0
    %p122 = por %p120, %p121
    %p123 = scmp.ne.s32.totalorder %s115, %s117
    %p124 = scmp.eq.s32.totalorder %s23, 1
    %p125 = por %p123, %p124
    %p126 = scmp.ne.s32.totalorder %s117, %s118
    %p127 = scmp.eq.s32.totalorder %s23, 0
    %p128 = por %p126, %p127
    %p129 = scmp.ne.s32.totalorder %s117, %s118
    %p130 = scmp.eq.s32.totalorder %s24, 1
    %p131 = por %p129, %p130
    %p133 = scmp.ne.s32.totalorder %s118, %s132
    %p134 = scmp.eq.s32.totalorder %s24, 0
    %p135 = por %p133, %p134
    %s137 = sadd.s32 %s136, 1
    %p140 = scmp.eq.s32.totalorder %s18, 1
    %p141 = scmp.ne.s32.totalorder %s136, %s138
    %p142 = scmp.eq.s32.totalorder %s18, 0
    %p143 = por %p141, %p142
    %p144 = scmp.ne.s32.totalorder %s136, %s138
    %p145 = scmp.eq.s32.totalorder %s23, 1
    %p146 = por %p144, %p145
    %p147 = scmp.ne.s32.totalorder %s138, %s139
    %p148 = scmp.eq.s32.totalorder %s23, 0
    %p149 = por %p147, %p148
    %p150 = scmp.ne.s32.totalorder %s138, %s139
    %p151 = scmp.eq.s32.totalorder %s24, 1
    %p152 = por %p150, %p151
    %p154 = scmp.ne.s32.totalorder %s139, %s153
    %p155 = scmp.eq.s32.totalorder %s24, 0
    %p156 = por %p154, %p155
    %s158 = sadd.s32 %s157, 1
    %p161 = scmp.eq.s32.totalorder %s18, 1
    %p162 = scmp.ne.s32.totalorder %s157, %s159
    %p163 = scmp.eq.s32.totalorder %s18, 0
    %p164 = por %p162, %p163
    %p165 = scmp.ne.s32.totalorder %s157, %s159
    %p166 = scmp.eq.s32.totalorder %s23, 1
    %p167 = por %p165, %p166
    %p168 = scmp.ne.s32.totalorder %s159, %s160
    %p169 = scmp.eq.s32.totalorder %s23, 0
    %p170 = por %p168, %p169
    %p171 = scmp.ne.s32.totalorder %s159, %s160
    %p172 = scmp.eq.s32.totalorder %s24, 1
    %p173 = por %p171, %p172
    %p175 = scmp.ne.s32.totalorder %s160, %s174
    %p176 = scmp.eq.s32.totalorder %s24, 0
    %p177 = por %p175, %p176
    %s179 = sadd.s32 %s178, 1
    %p182 = scmp.eq.s32.totalorder %s18, 1
    %p183 = scmp.ne.s32.totalorder %s178, %s180
    %p184 = scmp.eq.s32.totalorder %s18, 0
    %p185 = por %p183, %p184
    %p186 = scmp.ne.s32.totalorder %s178, %s180
    %p187 = scmp.eq.s32.totalorder %s23, 1
    %p188 = por %p186, %p187
    %p189 = scmp.ne.s32.totalorder %s180, %s181
    %p190 = scmp.eq.s32.totalorder %s23, 0
    %p191 = por %p189, %p190
    %p192 = scmp.ne.s32.totalorder %s180, %s181
    %p193 = scmp.eq.s32.totalorder %s24, 1
    %p194 = por %p192, %p193
    %p196 = scmp.ne.s32.totalorder %s181, %s195
    %p197 = scmp.eq.s32.totalorder %s24, 0
    %p198 = por %p196, %p197
    %s200 = sadd.s32 %s199, 1
    %p203 = scmp.eq.s32.totalorder %s18, 1
    %p204 = scmp.ne.s32.totalorder %s199, %s201
    %p205 = scmp.eq.s32.totalorder %s18, 0
    %p206 = por %p204, %p205
    %p207 = scmp.ne.s32.totalorder %s199, %s201
    %p208 = scmp.eq.s32.totalorder %s23, 1
    %p209 = por %p207, %p208
    %p210 = scmp.ne.s32.totalorder %s201, %s202
    %p211 = scmp.eq.s32.totalorder %s23, 0
    %p212 = por %p210, %p211
    %p213 = scmp.ne.s32.totalorder %s201, %s202
    %p214 = scmp.eq.s32.totalorder %s24, 1
    %p215 = por %p213, %p214
    %p217 = scmp.ne.s32.totalorder %s202, %s216
    %p218 = scmp.eq.s32.totalorder %s24, 0
    %p219 = por %p217, %p218
    %s221 = sadd.s32 %s220, 1
    %p224 = scmp.eq.s32.totalorder %s18, 1
    %p225 = scmp.ne.s32.totalorder %s220, %s222
    %p226 = scmp.eq.s32.totalorder %s18, 0
    %p227 = por %p225, %p226
    %p228 = scmp.ne.s32.totalorder %s220, %s222
    %p229 = scmp.eq.s32.totalorder %s23, 1
    %p230 = por %p228, %p229
    %p231 = scmp.ne.s32.totalorder %s222, %s223
    %p232 = scmp.eq.s32.totalorder %s23, 0
    %p233 = por %p231, %p232
    %p234 = scmp.ne.s32.totalorder %s222, %s223
    %p235 = scmp.eq.s32.totalorder %s24, 1
    %p236 = por %p234, %p235
    %p238 = scmp.ne.s32.totalorder %s223, %s237
    %p239 = scmp.eq.s32.totalorder %s24, 0
    %p240 = por %p238, %p239
    %s242 = sadd.s32 %s241, 1
    %p245 = scmp.eq.s32.totalorder %s18, 1
    %p246 = scmp.ne.s32.totalorder %s241, %s243
    %p247 = scmp.eq.s32.totalorder %s18, 0
    %p248 = por %p246, %p247
    %p249 = scmp.ne.s32.totalorder %s241, %s243
    %p250 = scmp.eq.s32.totalorder %s23, 1
    %p251 = por %p249, %p250
    %p252 = scmp.ne.s32.totalorder %s243, %s244
    %p253 = scmp.eq.s32.totalorder %s23, 0
    %p254 = por %p252, %p253
    %p255 = scmp.ne.s32.totalorder %s243, %s244
    %p256 = scmp.eq.s32.totalorder %s24, 1
    %p257 = por %p255, %p256
    %p259 = scmp.ne.s32.totalorder %s244, %s258
    %p260 = scmp.eq.s32.totalorder %s24, 0
    %p261 = por %p259, %p260
    %s263 = sadd.s32 %s262, 1
    %p266 = scmp.eq.s32.totalorder %s18, 1
    %p267 = scmp.ne.s32.totalorder %s262, %s264
    %p268 = scmp.eq.s32.totalorder %s18, 0
    %p269 = por %p267, %p268
    %p270 = scmp.ne.s32.totalorder %s262, %s264
    %p271 = scmp.eq.s32.totalorder %s23, 1
    %p272 = por %p270, %p271
    %p273 = scmp.ne.s32.totalorder %s264, %s265
    %p274 = scmp.eq.s32.totalorder %s23, 0
    %p275 = por %p273, %p274
    %p276 = scmp.ne.s32.totalorder %s264, %s265
    %p277 = scmp.eq.s32.totalorder %s24, 1
    %p278 = por %p276, %p277
    %p280 = scmp.ne.s32.totalorder %s265, %s279
    %p281 = scmp.eq.s32.totalorder %s24, 0
    %p282 = por %p280, %p281
    %s283 = ssub.s32 %s18, %s25
    %p284 = scmp.eq.s32.totalorder %s283, 0
    %s286 = sadd.s32 %s285, 1
    %s287 = scalar_select %p284, %s285, %s286
    %p290 = pneg %p284
    %p291 = scmp.eq.s32.totalorder %s18, 1
    %p292 = por %p290, %p291
    %p293 = scmp.ne.s32.totalorder %s285, %s288
    %p294 = scmp.eq.s32.totalorder %s18, 0
    %p295 = por %p293, %p294
    %p296 = scmp.ne.s32.totalorder %s285, %s288
    %p297 = scmp.eq.s32.totalorder %s23, 1
    %p298 = por %p296, %p297
    %p299 = scmp.ne.s32.totalorder %s288, %s289
    %p300 = scmp.eq.s32.totalorder %s23, 0
    %p301 = por %p299, %p300
    %p302 = scmp.ne.s32.totalorder %s288, %s289
    %p303 = scmp.eq.s32.totalorder %s24, 1
    %p304 = por %p302, %p303
    %p306 = scmp.ne.s32.totalorder %s289, %s305
    %p307 = scmp.eq.s32.totalorder %s24, 0
    %p308 = por %p306, %p307
    %p309 = scmp.le.s32.totalorder 1, %s18
    %p310 = scmp.lt.s32.totalorder %s18, 3
    %p311 = pnand %p309, %p310
    %p312 = pneg %p311
    // Predicated region
    $region9: #{esbn_forward.5} parent=5 // pred_check
      _
    $region10: #{esbn_forward.5} parent=5 // pred_check_branch
      %314 = sbr.rel (%p311) target = $region12
    $region11: #{esbn_forward.5} parent=5 // pred_region
      %s315 = ssub.s32 %s18, 1
      // Predicated region
      $region13: #{esbn_forward.5} parent=11 // pred_check
        %p316 = pneg %p65
      $region14: #{esbn_forward.5} parent=11 // pred_check_branch
        %318 = sbr.rel (%p316) target = $region16
      $region15: #{esbn_forward.5} parent=11 // pred_region
        _
      $region16: #{esbn_forward.5} parent=11 // pred_fallthru
        _
      // Predicated region
      $region17: #{esbn_forward.5} parent=11 // pred_check
        %p319 = pneg %p86
      $region18: #{esbn_forward.5} parent=11 // pred_check_branch
        %321 = sbr.rel (%p319) target = $region20
      $region19: #{esbn_forward.5} parent=11 // pred_region
        _
      $region20: #{esbn_forward.5} parent=11 // pred_fallthru
        _
      // Predicated region
      $region21: #{esbn_forward.5} parent=11 // pred_check
        %p322 = pneg %p107
      $region22: #{esbn_forward.5} parent=11 // pred_check_branch
        %324 = sbr.rel (%p322) target = $region24
      $region23: #{esbn_forward.5} parent=11 // pred_region
        _
      $region24: #{esbn_forward.5} parent=11 // pred_fallthru
        _
      // Predicated region
      $region25: #{esbn_forward.5} parent=11 // pred_check
        %p325 = pneg %p128
      $region26: #{esbn_forward.5} parent=11 // pred_check_branch
        %327 = sbr.rel (%p325) target = $region28
      $region27: #{esbn_forward.5} parent=11 // pred_region
        _
      $region28: #{esbn_forward.5} parent=11 // pred_fallthru
        _
      // Predicated region
      $region29: #{esbn_forward.5} parent=11 // pred_check
        %p328 = pneg %p149
      $region30: #{esbn_forward.5} parent=11 // pred_check_branch
        %330 = sbr.rel (%p328) target = $region32
      $region31: #{esbn_forward.5} parent=11 // pred_region
        _
      $region32: #{esbn_forward.5} parent=11 // pred_fallthru
        _
      // Predicated region
      $region33: #{esbn_forward.5} parent=11 // pred_check
        %p331 = pneg %p170
      $region34: #{esbn_forward.5} parent=11 // pred_check_branch
        %333 = sbr.rel (%p331) target = $region36
      $region35: #{esbn_forward.5} parent=11 // pred_region
        _
      $region36: #{esbn_forward.5} parent=11 // pred_fallthru
        _
      // Predicated region
      $region37: #{esbn_forward.5} parent=11 // pred_check
        %p334 = pneg %p191
      $region38: #{esbn_forward.5} parent=11 // pred_check_branch
        %336 = sbr.rel (%p334) target = $region40
      $region39: #{esbn_forward.5} parent=11 // pred_region
        _
      $region40: #{esbn_forward.5} parent=11 // pred_fallthru
        _
      // Predicated region
      $region41: #{esbn_forward.5} parent=11 // pred_check
        %p337 = pneg %p212
      $region42: #{esbn_forward.5} parent=11 // pred_check_branch
        %339 = sbr.rel (%p337) target = $region44
      $region43: #{esbn_forward.5} parent=11 // pred_region
        _
      $region44: #{esbn_forward.5} parent=11 // pred_fallthru
        _
      // Predicated region
      $region45: #{esbn_forward.5} parent=11 // pred_check
        %p340 = pneg %p233
      $region46: #{esbn_forward.5} parent=11 // pred_check_branch
        %342 = sbr.rel (%p340) target = $region48
      $region47: #{esbn_forward.5} parent=11 // pred_region
        _
      $region48: #{esbn_forward.5} parent=11 // pred_fallthru
        _
      // Predicated region
      $region49: #{esbn_forward.5} parent=11 // pred_check
        %p343 = pneg %p254
      $region50: #{esbn_forward.5} parent=11 // pred_check_branch
        %345 = sbr.rel (%p343) target = $region52
      $region51: #{esbn_forward.5} parent=11 // pred_region
        _
      $region52: #{esbn_forward.5} parent=11 // pred_fallthru
        _
      // Predicated region
      $region53: #{esbn_forward.5} parent=11 // pred_check
        %p346 = pneg %p275
      $region54: #{esbn_forward.5} parent=11 // pred_check_branch
        %348 = sbr.rel (%p346) target = $region56
      $region55: #{esbn_forward.5} parent=11 // pred_region
        _
      $region56: #{esbn_forward.5} parent=11 // pred_fallthru
        _
    $region12: #{esbn_forward.5} parent=5 // pred_fallthru
      _
    %p349 = scmp.lt.s32.totalorder %s18, 2
    // Predicated region
    $region57: #{esbn_forward.5} parent=5 // pred_check
      %p350 = pneg %p349
    $region58: #{esbn_forward.5} parent=5 // pred_check_branch
      %352 = sbr.rel (%p350) target = $region60
    $region59: #{esbn_forward.5} parent=5 // pred_region
      // Predicated region
      $region61: #{esbn_forward.5} parent=59 // pred_check
        %p353 = pneg %p38
      $region62: #{esbn_forward.5} parent=59 // pred_check_branch
        %355 = sbr.rel (%p353) target = $region64
      $region63: #{esbn_forward.5} parent=59 // pred_region
        %p356 = scmp.lt.s32.totalorder %s18, 1
        %s357 = scalar_select %p356, %s18, 1
        %s358 = smul.addr %s357, 4
        %s359 = smul.addr %s358, 8
        %s360 = scalar_lea.vmem %s0, %s359
      $region64: #{esbn_forward.5} parent=59 // pred_fallthru
        _
    $region60: #{esbn_forward.5} parent=5 // pred_fallthru
      _
    %p361 = scmp.le.s32.totalorder 1, %s18
    %p362 = scmp.lt.s32.totalorder %s18, 3
    %p363 = pnand %p361, %p362
    %p364 = pneg %p363
    // Predicated region
    $region65: #{esbn_forward.5} parent=5 // pred_check
      _
    $region66: #{esbn_forward.5} parent=5 // pred_check_branch
      %366 = sbr.rel (%p363) target = $region68
    $region67: #{esbn_forward.5} parent=5 // pred_region
      %s367 = ssub.s32 %s18, 1
      %p368 = scmp.lt.s32.totalorder %s23, 1
      %s369 = scalar_select %p368, %s23, 1
      %s370 = smul.addr %s369, 4
      %s371 = smul.addr %s370, 8
      %s372 = scalar_lea.vmem %s0, %s371
      %p373 = pneg %p44
      %p374 = pneg %p41
      %p375 = pneg %p65
      %p376 = pneg %p62
      %p377 = pneg %p86
      %p378 = pneg %p83
      %p379 = pneg %p107
      %p380 = pneg %p104
      %p381 = pneg %p128
      %p382 = pneg %p125
      %p383 = pneg %p149
      %p384 = pneg %p146
      %p385 = pneg %p170
      %p386 = pneg %p167
      %p387 = pneg %p191
      %p388 = pneg %p188
      %p389 = pneg %p212
      %p390 = pneg %p209
      %p391 = pneg %p233
      %p392 = pneg %p230
      %p393 = pneg %p254
      %p394 = pneg %p251
      %p395 = pneg %p275
      %p396 = pneg %p272
      %p397 = pneg %p301
      %p398 = pneg %p298
      %p399 = scmp.lt.s32.totalorder %s23, 1
      %s400 = scalar_select %p399, %s23, 1
      %s401 = smul.addr %s400, 4
      %s402 = smul.addr %s401, 8
      %s403 = scalar_lea.vmem %s12, %s402
      %p404 = scmp.lt.s32.totalorder %s23, 1
      %s405 = scalar_select %p404, %s23, 1
      %s406 = smul.addr %s405, 4
      %s407 = smul.addr %s406, 8
      %s408 = scalar_lea.vmem %s0, %s407
      %p409 = scmp.lt.s32.totalorder %s23, 1
      %s410 = scalar_select %p409, %s23, 1
      %s411 = smul.addr %s410, 4
      %s412 = smul.addr %s411, 8
      %s413 = scalar_lea.vmem %s12, %s412
      %v414 = vld [vmem:[%s408] sm:$0xff]
      %v415 = vld [vmem:[%s408 + $0x8] sm:$0xff]
      %v416 = vld [vmem:[%s408 + $0x10] sm:$0xff]
      %v417 = vld [vmem:[%s408 + $0x18] sm:$0xff]
      %v418 = vld [vmem:[%s1] sm:$0x1]
      %v419 = vld [vmem:[%s2] sm:$0x1]
      %vm420 = vcmask 261120
      %v421 = vsel %vm420, %v414, 0.0
      %422 = vadd.xlane.f32.xlu0 %v421
      %v423 = vpop.xlane.xlu0 %422
      %v424 = vsel %vm420, %v415, 0.0
      %425 = vadd.xlane.f32.xlu0 %v424
      %v426 = vpop.xlane.xlu0 %425
      %v427 = vsel %vm420, %v416, 0.0
      %428 = vadd.xlane.f32.xlu0 %v427
      %v429 = vpop.xlane.xlu0 %428
      %v430 = vsel %vm420, %v417, 0.0
      %431 = vadd.xlane.f32.xlu0 %v430
      %v432 = vpop.xlane.xlu0 %431
      %v433 = vrcp.pop 32.0
      %v434 = vmul.f32 32.0, %v433
      %v435 = vsub.f32 1.0, %v434
      %v436 = vmul.f32 %v433, %v435
      %v437 = vadd.f32 %v433, %v436
      %vm438 = vweird.f32 %v433
      %v439 = vsel %vm438, %v433, %v437
      %v440 = vmul.f32 %v423, %v439
      %v441 = vmul.f32 %v426, %v439
      %v442 = vmul.f32 %v429, %v439
      %v443 = vmul.f32 %v432, %v439
      %v444 = vsub.f32 %v414, %v440
      %v445 = vsub.f32 %v415, %v441
      %v446 = vsub.f32 %v416, %v442
      %v447 = vsub.f32 %v417, %v443
      %v448 = vmul.f32 %v444, %v444
      %v449 = vmul.f32 %v445, %v445
      %v450 = vmul.f32 %v446, %v446
      %v451 = vmul.f32 %v447, %v447
      %v452 = vsel %vm420, %v448, 0.0
      %453 = vadd.xlane.f32.xlu0 %v452
      %v454 = vpop.xlane.xlu0 %453
      %v455 = vsel %vm420, %v449, 0.0
      %456 = vadd.xlane.f32.xlu0 %v455
      %v457 = vpop.xlane.xlu0 %456
      %v458 = vsel %vm420, %v450, 0.0
      %459 = vadd.xlane.f32.xlu0 %v458
      %v460 = vpop.xlane.xlu0 %459
      %v461 = vsel %vm420, %v451, 0.0
      %462 = vadd.xlane.f32.xlu0 %v461
      %v463 = vpop.xlane.xlu0 %462
      %v464 = vmul.f32 %v454, %v439
      %v465 = vmul.f32 %v457, %v439
      %v466 = vmul.f32 %v460, %v439
      %v467 = vmul.f32 %v463, %v439
      %v468 = vrsqrt.pop %v464
      %v469 = vmul.f32 %v468, %v464
      %v470 = vmul.f32 %v469, %v468
      %v471 = vmul.f32 0.5, %v470
      %v472 = vsub.f32 1.5, %v471
      %v473 = vmul.f32 %v468, %v472
      %v474 = vmul.f32 %v464, %v473
      %vm475 = vcmp.eq.f32.partialorder %v464, inf
      %v476 = vsel %vm475, %v464, %v474
      %vm477 = vcmp.eq.f32.partialorder %v464, 0.0
      %v478 = vand.u32 %v464, 2147483648
      %v479 = vsel %vm477, %v478, %v476
      %v480 = vrsqrt.pop %v465
      %v481 = vmul.f32 %v480, %v465
      %v482 = vmul.f32 %v481, %v480
      %v483 = vmul.f32 0.5, %v482
      %v484 = vsub.f32 1.5, %v483
      %v485 = vmul.f32 %v480, %v484
      %v486 = vmul.f32 %v465, %v485
      %vm487 = vcmp.eq.f32.partialorder %v465, inf
      %v488 = vsel %vm487, %v465, %v486
      %vm489 = vcmp.eq.f32.partialorder %v465, 0.0
      %v490 = vand.u32 %v465, 2147483648
      %v491 = vsel %vm489, %v490, %v488
      %v492 = vrsqrt.pop %v466
      %v493 = vmul.f32 %v492, %v466
      %v494 = vmul.f32 %v493, %v492
      %v495 = vmul.f32 0.5, %v494
      %v496 = vsub.f32 1.5, %v495
      %v497 = vmul.f32 %v492, %v496
      %v498 = vmul.f32 %v466, %v497
      %vm499 = vcmp.eq.f32.partialorder %v466, inf
      %v500 = vsel %vm499, %v466, %v498
      %vm501 = vcmp.eq.f32.partialorder %v466, 0.0
      %v502 = vand.u32 %v466, 2147483648
      %v503 = vsel %vm501, %v502, %v500
      %v504 = vrsqrt.pop %v467
      %v505 = vmul.f32 %v504, %v467
      %v506 = vmul.f32 %v505, %v504
      %v507 = vmul.f32 0.5, %v506
      %v508 = vsub.f32 1.5, %v507
      %v509 = vmul.f32 %v504, %v508
      %v510 = vmul.f32 %v467, %v509
      %vm511 = vcmp.eq.f32.partialorder %v467, inf
      %v512 = vsel %vm511, %v467, %v510
      %vm513 = vcmp.eq.f32.partialorder %v467, 0.0
      %v514 = vand.u32 %v467, 2147483648
      %v515 = vsel %vm513, %v514, %v512
      %v516 = vadd.f32 %v479, 1e-05
      %v517 = vadd.f32 %v491, 1e-05
      %v518 = vadd.f32 %v503, 1e-05
      %v519 = vadd.f32 %v515, 1e-05
      %v520 = vrcp.pop %v516
      %v521 = vmul.f32 %v516, %v520
      %v522 = vsub.f32 1.0, %v521
      %v523 = vmul.f32 %v520, %v522
      %v524 = vadd.f32 %v520, %v523
      %vm525 = vweird.f32 %v516
      %vm526 = vweird.f32 %v520
      %vm527 = vmor %vm525, %vm526
      %v528 = vsel %vm527, %v520, %v524
      %v529 = vand.u32 2147483647, %v516
      %vm530 = vcmp.eq.f32.partialorder %v529, 8.507059e+37
      %v531 = vand.u32 %v516, 2147483648
      %v532 = vor.u32 1.1754944e-38, %v531
      %v533 = vsel %vm530, %v532, %v528
      %v534 = vmul.f32 %v444, %v533
      %v535 = vrcp.pop %v517
      %v536 = vmul.f32 %v517, %v535
      %v537 = vsub.f32 1.0, %v536
      %v538 = vmul.f32 %v535, %v537
      %v539 = vadd.f32 %v535, %v538
      %vm540 = vweird.f32 %v517
      %vm541 = vweird.f32 %v535
      %vm542 = vmor %vm540, %vm541
      %v543 = vsel %vm542, %v535, %v539
      %v544 = vand.u32 2147483647, %v517
      %vm545 = vcmp.eq.f32.partialorder %v544, 8.507059e+37
      %v546 = vand.u32 %v517, 2147483648
      %v547 = vor.u32 1.1754944e-38, %v546
      %v548 = vsel %vm545, %v547, %v543
      %v549 = vmul.f32 %v445, %v548
      %v550 = vrcp.pop %v518
      %v551 = vmul.f32 %v518, %v550
      %v552 = vsub.f32 1.0, %v551
      %v553 = vmul.f32 %v550, %v552
      %v554 = vadd.f32 %v550, %v553
      %vm555 = vweird.f32 %v518
      %vm556 = vweird.f32 %v550
      %vm557 = vmor %vm555, %vm556
      %v558 = vsel %vm557, %v550, %v554
      %v559 = vand.u32 2147483647, %v518
      %vm560 = vcmp.eq.f32.partialorder %v559, 8.507059e+37
      %v561 = vand.u32 %v518, 2147483648
      %v562 = vor.u32 1.1754944e-38, %v561
      %v563 = vsel %vm560, %v562, %v558
      %v564 = vmul.f32 %v446, %v563
      %v565 = vrcp.pop %v519
      %v566 = vmul.f32 %v519, %v565
      %v567 = vsub.f32 1.0, %v566
      %v568 = vmul.f32 %v565, %v567
      %v569 = vadd.f32 %v565, %v568
      %vm570 = vweird.f32 %v519
      %vm571 = vweird.f32 %v565
      %vm572 = vmor %vm570, %vm571
      %v573 = vsel %vm572, %v565, %v569
      %v574 = vand.u32 2147483647, %v519
      %vm575 = vcmp.eq.f32.partialorder %v574, 8.507059e+37
      %v576 = vand.u32 %v519, 2147483648
      %v577 = vor.u32 1.1754944e-38, %v576
      %v578 = vsel %vm575, %v577, %v573
      %v579 = vmul.f32 %v447, %v578
      %v581 = vperm.slane %v418, 0
      %v583 = vmul.f32 %v534, %v581
      %v584 = vmul.f32 %v549, %v581
      %v585 = vmul.f32 %v564, %v581
      %v586 = vmul.f32 %v579, %v581
      %v588 = vperm.slane %v419, 0
      %v590 = vadd.f32 %v583, %v588
      %v591 = vadd.f32 %v584, %v588
      %v592 = vadd.f32 %v585, %v588
      %v593 = vadd.f32 %v586, %v588
      %v594 = vld [vmem:[%s3] sm:$0xff]
      %v595 = vld [vmem:[%s3 + $0x8] sm:$0xff]
      %v596 = vld [vmem:[%s3 + $0x10] sm:$0xff]
      %v597 = vld [vmem:[%s3 + $0x18] sm:$0xff]
      %v598 = vld [vmem:[%s3 + $0x20] sm:$0xff]
      %v599 = vld [vmem:[%s3 + $0x28] sm:$0xff]
      %v600 = vld [vmem:[%s3 + $0x30] sm:$0xff]
      %v601 = vld [vmem:[%s3 + $0x38] sm:$0xff]
      %v603 = vsel %vm420, %v590, 0
      %v606 = vsel %vm420, %v591, 0
      %v609 = vsel %vm420, %v592, 0
      %v612 = vsel %vm420, %v593, 0
      %614 = vmatpush.msra.mxu0 0.0
      %615 = vmatpush.msra.mxu0 0.0
      %616 = vmatpush.msra.mxu0 0.0
      %617 = vmatpush.msra.mxu0 0.0
      %618 = vmatpush.msra.mxu0 0.0
      %619 = vmatpush.msra.mxu0 0.0
      %620 = vmatpush.msra.mxu0 0.0
      %621 = vmatpush.msra.mxu0 0.0
      %622 = vmatpush.msra.mxu0 0.0
      %623 = vmatpush.msra.mxu0 0.0
      %624 = vmatpush.msra.mxu0 0.0
      %625 = vmatpush.msra.mxu0 0.0
      %626 = vmatpush.msra.mxu0 %v600
      %627 = vmatpush.msra.mxu0 %v598
      %628 = vmatpush.msra.mxu0 %v596
      %629 = vmatpush.msra.mxu0 %v594
      %630 = vmatmul.f32.gmra.mxu0 %v603
      %v631 = vpop.f32.mrf.mxu0
      %v632 = vadd.f32 0.0, %v631
      %633 = vmatmul.f32.gmra.mxu0 %v606
      %v634 = vpop.f32.mrf.mxu0
      %v635 = vadd.f32 0.0, %v634
      %636 = vmatmul.f32.gmra.mxu0 %v609
      %v637 = vpop.f32.mrf.mxu0
      %v638 = vadd.f32 0.0, %v637
      %639 = vmatmul.f32.gmra.mxu0 %v612
      %v640 = vpop.f32.mrf.mxu0
      %v641 = vadd.f32 0.0, %v640
      %642 = vdwg.mxu0
      %643 = vmatpush.msra.mxu0 0.0
      %644 = vmatpush.msra.mxu0 0.0
      %645 = vmatpush.msra.mxu0 0.0
      %646 = vmatpush.msra.mxu0 0.0
      %647 = vmatpush.msra.mxu0 0.0
      %648 = vmatpush.msra.mxu0 0.0
      %649 = vmatpush.msra.mxu0 0.0
      %650 = vmatpush.msra.mxu0 0.0
      %651 = vmatpush.msra.mxu0 0.0
      %652 = vmatpush.msra.mxu0 0.0
      %653 = vmatpush.msra.mxu0 0.0
      %654 = vmatpush.msra.mxu0 0.0
      %655 = vmatpush.msra.mxu0 %v601
      %656 = vmatpush.msra.mxu0 %v599
      %657 = vmatpush.msra.mxu0 %v597
      %658 = vmatpush.msra.mxu0 %v595
      %659 = vmatmul.f32.gmra.mxu0 %v603
      %v660 = vpop.f32.mrf.mxu0
      %v661 = vadd.f32 0.0, %v660
      %662 = vmatmul.f32.gmra.mxu0 %v606
      %v663 = vpop.f32.mrf.mxu0
      %v664 = vadd.f32 0.0, %v663
      %665 = vmatmul.f32.gmra.mxu0 %v609
      %v666 = vpop.f32.mrf.mxu0
      %v667 = vadd.f32 0.0, %v666
      %668 = vmatmul.f32.gmra.mxu0 %v612
      %v669 = vpop.f32.mrf.mxu0
      %v670 = vadd.f32 0.0, %v669
      %671 = vdwg.mxu0
      %676 = vrot.lane.b32.xlu0 %v632, 64
      %v677 = vpop.permute.xlu0 %676
      %678 = vrot.lane.b32.xlu0 %v635, 64
      %v679 = vpop.permute.xlu0 %678
      %680 = vrot.lane.b32.xlu0 %v638, 64
      %v681 = vpop.permute.xlu0 %680
      %682 = vrot.lane.b32.xlu0 %v641, 64
      %v683 = vpop.permute.xlu0 %682
      %vm684 = vcmask 130048
      %v685 = vsel %vm684, %v632, 0
      %v687 = vsel %vm684, %v635, 0
      %v689 = vsel %vm684, %v638, 0
      %v691 = vsel %vm684, %v641, 0
      %v693 = vsel %vm684, %v677, 0
      %v695 = vsel %vm684, %v679, 0
      %v697 = vsel %vm684, %v681, 0
      %v699 = vsel %vm684, %v683, 0
      %701 = vmatpush.xpose.msra.mxu0 0.0
      %702 = vmatpush.xpose.msra.mxu0 0.0
      %703 = vmatpush.xpose.msra.mxu0 0.0
      %704 = vmatpush.xpose.msra.mxu0 0.0
      %705 = vmatpush.xpose.msra.mxu0 0.0
      %706 = vmatpush.xpose.msra.mxu0 0.0
      %707 = vmatpush.xpose.msra.mxu0 0.0
      %708 = vmatpush.xpose.msra.mxu0 0.0
      %709 = vmatpush.xpose.msra.mxu0 0.0
      %710 = vmatpush.xpose.msra.mxu0 0.0
      %711 = vmatpush.xpose.msra.mxu0 0.0
      %712 = vmatpush.xpose.msra.mxu0 0.0
      %713 = vmatpush.xpose.msra.mxu0 %v699
      %714 = vmatpush.xpose.msra.mxu0 %v697
      %715 = vmatpush.xpose.msra.mxu0 %v695
      %716 = vmatpush.xpose.msra.mxu0 %v693
      %717 = vmatmul.f32.gmra.mxu0 %v685
      %v718 = vpop.f32.mrf.mxu0
      %v719 = vadd.f32 0.0, %v718
      %720 = vmatmul.f32.gmra.mxu0 %v687
      %v721 = vpop.f32.mrf.mxu0
      %v722 = vadd.f32 0.0, %v721
      %723 = vmatmul.f32.gmra.mxu0 %v689
      %v724 = vpop.f32.mrf.mxu0
      %v725 = vadd.f32 0.0, %v724
      %726 = vmatmul.f32.gmra.mxu0 %v691
      %v727 = vpop.f32.mrf.mxu0
      %v728 = vadd.f32 0.0, %v727
      %729 = vdwg.mxu0
      %v730 = vsel %vm420, %v719, -inf
      %731 = vmax.xlane.f32.xlu0 %v730
      %v732 = vpop.xlane.xlu0 %731
      %v733 = vsel %vm420, %v722, -inf
      %734 = vmax.xlane.f32.xlu0 %v733
      %v735 = vpop.xlane.xlu0 %734
      %v736 = vsel %vm420, %v725, -inf
      %737 = vmax.xlane.f32.xlu0 %v736
      %v738 = vpop.xlane.xlu0 %737
      %v739 = vsel %vm420, %v728, -inf
      %740 = vmax.xlane.f32.xlu0 %v739
      %v741 = vpop.xlane.xlu0 %740
      %v742 = vsub.f32 %v719, %v732
      %v743 = vsub.f32 %v722, %v735
      %v744 = vsub.f32 %v725, %v738
      %v745 = vsub.f32 %v728, %v741
      %v746 = vmul.f32 %v742, 1.442695
      %v747 = vpow.pop %v746
      %v748 = vmul.f32 %v743, 1.442695
      %v749 = vpow.pop %v748
      %v750 = vmul.f32 %v744, 1.442695
      %v751 = vpow.pop %v750
      %v752 = vmul.f32 %v745, 1.442695
      %v753 = vpow.pop %v752
      %v754 = vsel %vm420, %v747, 0.0
      %755 = vadd.xlane.f32.xlu0 %v754
      %v756 = vpop.xlane.xlu0 %755
      %v757 = vsel %vm420, %v749, 0.0
      %758 = vadd.xlane.f32.xlu0 %v757
      %v759 = vpop.xlane.xlu0 %758
      %v760 = vsel %vm420, %v751, 0.0
      %761 = vadd.xlane.f32.xlu0 %v760
      %v762 = vpop.xlane.xlu0 %761
      %v763 = vsel %vm420, %v753, 0.0
      %764 = vadd.xlane.f32.xlu0 %v763
      %v765 = vpop.xlane.xlu0 %764
      %v766 = vrcp.pop %v756
      %v767 = vmul.f32 %v756, %v766
      %v768 = vsub.f32 1.0, %v767
      %v769 = vmul.f32 %v766, %v768
      %v770 = vadd.f32 %v766, %v769
      %vm771 = vweird.f32 %v756
      %vm772 = vweird.f32 %v766
      %vm773 = vmor %vm771, %vm772
      %v774 = vsel %vm773, %v766, %v770
      %v775 = vand.u32 2147483647, %v756
      %vm776 = vcmp.eq.f32.partialorder %v775, 8.507059e+37
      %v777 = vand.u32 %v756, 2147483648
      %v778 = vor.u32 1.1754944e-38, %v777
      %v779 = vsel %vm776, %v778, %v774
      %v780 = vrcp.pop %v759
      %v781 = vmul.f32 %v759, %v780
      %v782 = vsub.f32 1.0, %v781
      %v783 = vmul.f32 %v780, %v782
      %v784 = vadd.f32 %v780, %v783
      %vm785 = vweird.f32 %v759
      %vm786 = vweird.f32 %v780
      %vm787 = vmor %vm785, %vm786
      %v788 = vsel %vm787, %v780, %v784
      %v789 = vand.u32 2147483647, %v759
      %vm790 = vcmp.eq.f32.partialorder %v789, 8.507059e+37
      %v791 = vand.u32 %v759, 2147483648
      %v792 = vor.u32 1.1754944e-38, %v791
      %v793 = vsel %vm790, %v792, %v788
      %v794 = vrcp.pop %v762
      %v795 = vmul.f32 %v762, %v794
      %v796 = vsub.f32 1.0, %v795
      %v797 = vmul.f32 %v794, %v796
      %v798 = vadd.f32 %v794, %v797
      %vm799 = vweird.f32 %v762
      %vm800 = vweird.f32 %v794
      %vm801 = vmor %vm799, %vm800
      %v802 = vsel %vm801, %v794, %v798
      %v803 = vand.u32 2147483647, %v762
      %vm804 = vcmp.eq.f32.partialorder %v803, 8.507059e+37
      %v805 = vand.u32 %v762, 2147483648
      %v806 = vor.u32 1.1754944e-38, %v805
      %v807 = vsel %vm804, %v806, %v802
      %v808 = vrcp.pop %v765
      %v809 = vmul.f32 %v765, %v808
      %v810 = vsub.f32 1.0, %v809
      %v811 = vmul.f32 %v808, %v810
      %v812 = vadd.f32 %v808, %v811
      %vm813 = vweird.f32 %v765
      %vm814 = vweird.f32 %v808
      %vm815 = vmor %vm813, %vm814
      %v816 = vsel %vm815, %v808, %v812
      %v817 = vand.u32 2147483647, %v765
      %vm818 = vcmp.eq.f32.partialorder %v817, 8.507059e+37
      %v819 = vand.u32 %v765, 2147483648
      %v820 = vor.u32 1.1754944e-38, %v819
      %v821 = vsel %vm818, %v820, %v816
      %v822 = vmul.f32 %v747, %v779
      %v823 = vmul.f32 %v749, %v793
      %v824 = vmul.f32 %v751, %v807
      %v825 = vmul.f32 %v753, %v821
      %v827 = vsel %vm420, %v822, 0
      %v830 = vsel %vm420, %v823, 0
      %v833 = vsel %vm420, %v824, 0
      %v836 = vsel %vm420, %v825, 0
      %838 = vmatpush.msra.mxu0 0.0
      %839 = vmatpush.msra.mxu0 0.0
      %840 = vmatpush.msra.mxu0 0.0
      %841 = vmatpush.msra.mxu0 0.0
      %842 = vmatpush.msra.mxu0 0.0
      %843 = vmatpush.msra.mxu0 0.0
      %844 = vmatpush.msra.mxu0 0.0
      %845 = vmatpush.msra.mxu0 0.0
      %846 = vmatpush.msra.mxu0 0.0
      %847 = vmatpush.msra.mxu0 0.0
      %848 = vmatpush.msra.mxu0 0.0
      %849 = vmatpush.msra.mxu0 0.0
      %850 = vmatpush.msra.mxu0 %v670
      %851 = vmatpush.msra.mxu0 %v667
      %852 = vmatpush.msra.mxu0 %v664
      %853 = vmatpush.msra.mxu0 %v661
      %854 = vmatmul.f32.gmra.mxu0 %v827
      %v855 = vpop.f32.mrf.mxu0
      %v856 = vadd.f32 0.0, %v855
      %857 = vmatmul.f32.gmra.mxu0 %v830
      %v858 = vpop.f32.mrf.mxu0
      %v859 = vadd.f32 0.0, %v858
      %860 = vmatmul.f32.gmra.mxu0 %v833
      %v861 = vpop.f32.mrf.mxu0
      %v862 = vadd.f32 0.0, %v861
      %863 = vmatmul.f32.gmra.mxu0 %v836
      %v864 = vpop.f32.mrf.mxu0
      %v865 = vadd.f32 0.0, %v864
      %866 = vdwg.mxu0
      %867 = vrot.lane.b32.xlu0 %v632, 112
      %v868 = vpop.permute.xlu0 %867
      %869 = vrot.lane.b32.xlu0 %v635, 112
      %v870 = vpop.permute.xlu0 %869
      %871 = vrot.lane.b32.xlu0 %v638, 112
      %v872 = vpop.permute.xlu0 %871
      %873 = vrot.lane.b32.xlu0 %v641, 112
      %v874 = vpop.permute.xlu0 %873
      %875 = vrot.lane.b32.xlu0 %v632, 48
      %v876 = vpop.permute.xlu0 %875
      %877 = vrot.lane.b32.xlu0 %v635, 48
      %v878 = vpop.permute.xlu0 %877
      %879 = vrot.lane.b32.xlu0 %v638, 48
      %v880 = vpop.permute.xlu0 %879
      %881 = vrot.lane.b32.xlu0 %v641, 48
      %v882 = vpop.permute.xlu0 %881
      %v883 = vsel %vm684, %v868, 0
      %v885 = vsel %vm684, %v870, 0
      %v887 = vsel %vm684, %v872, 0
      %v889 = vsel %vm684, %v874, 0
      %v891 = vsel %vm684, %v876, 0
      %v893 = vsel %vm684, %v878, 0
      %v895 = vsel %vm684, %v880, 0
      %v897 = vsel %vm684, %v882, 0
      %899 = vmatpush.xpose.msra.mxu0 0.0
      %900 = vmatpush.xpose.msra.mxu0 0.0
      %901 = vmatpush.xpose.msra.mxu0 0.0
      %902 = vmatpush.xpose.msra.mxu0 0.0
      %903 = vmatpush.xpose.msra.mxu0 0.0
      %904 = vmatpush.xpose.msra.mxu0 0.0
      %905 = vmatpush.xpose.msra.mxu0 0.0
      %906 = vmatpush.xpose.msra.mxu0 0.0
      %907 = vmatpush.xpose.msra.mxu0 0.0
      %908 = vmatpush.xpose.msra.mxu0 0.0
      %909 = vmatpush.xpose.msra.mxu0 0.0
      %910 = vmatpush.xpose.msra.mxu0 0.0
      %911 = vmatpush.xpose.msra.mxu0 %v897
      %912 = vmatpush.xpose.msra.mxu0 %v895
      %913 = vmatpush.xpose.msra.mxu0 %v893
      %914 = vmatpush.xpose.msra.mxu0 %v891
      %915 = vmatmul.f32.gmra.mxu0 %v883
      %v916 = vpop.f32.mrf.mxu0
      %v917 = vadd.f32 0.0, %v916
      %918 = vmatmul.f32.gmra.mxu0 %v885
      %v919 = vpop.f32.mrf.mxu0
      %v920 = vadd.f32 0.0, %v919
      %921 = vmatmul.f32.gmra.mxu0 %v887
      %v922 = vpop.f32.mrf.mxu0
      %v923 = vadd.f32 0.0, %v922
      %924 = vmatmul.f32.gmra.mxu0 %v889
      %v925 = vpop.f32.mrf.mxu0
      %v926 = vadd.f32 0.0, %v925
      %927 = vdwg.mxu0
      %v928 = vsel %vm420, %v917, -inf
      %929 = vmax.xlane.f32.xlu0 %v928
      %v930 = vpop.xlane.xlu0 %929
      %v931 = vsel %vm420, %v920, -inf
      %932 = vmax.xlane.f32.xlu0 %v931
      %v933 = vpop.xlane.xlu0 %932
      %v934 = vsel %vm420, %v923, -inf
      %935 = vmax.xlane.f32.xlu0 %v934
      %v936 = vpop.xlane.xlu0 %935
      %v937 = vsel %vm420, %v926, -inf
      %938 = vmax.xlane.f32.xlu0 %v937
      %v939 = vpop.xlane.xlu0 %938
      %v940 = vsub.f32 %v917, %v930
      %v941 = vsub.f32 %v920, %v933
      %v942 = vsub.f32 %v923, %v936
      %v943 = vsub.f32 %v926, %v939
      %v944 = vmul.f32 %v940, 1.442695
      %v945 = vpow.pop %v944
      %v946 = vmul.f32 %v941, 1.442695
      %v947 = vpow.pop %v946
      %v948 = vmul.f32 %v942, 1.442695
      %v949 = vpow.pop %v948
      %v950 = vmul.f32 %v943, 1.442695
      %v951 = vpow.pop %v950
      %v952 = vsel %vm420, %v945, 0.0
      %953 = vadd.xlane.f32.xlu0 %v952
      %v954 = vpop.xlane.xlu0 %953
      %v955 = vsel %vm420, %v947, 0.0
      %956 = vadd.xlane.f32.xlu0 %v955
      %v957 = vpop.xlane.xlu0 %956
      %v958 = vsel %vm420, %v949, 0.0
      %959 = vadd.xlane.f32.xlu0 %v958
      %v960 = vpop.xlane.xlu0 %959
      %v961 = vsel %vm420, %v951, 0.0
      %962 = vadd.xlane.f32.xlu0 %v961
      %v963 = vpop.xlane.xlu0 %962
      %v964 = vrcp.pop %v954
      %v965 = vmul.f32 %v954, %v964
      %v966 = vsub.f32 1.0, %v965
      %v967 = vmul.f32 %v964, %v966
      %v968 = vadd.f32 %v964, %v967
      %vm969 = vweird.f32 %v954
      %vm970 = vweird.f32 %v964
      %vm971 = vmor %vm969, %vm970
      %v972 = vsel %vm971, %v964, %v968
      %v973 = vand.u32 2147483647, %v954
      %vm974 = vcmp.eq.f32.partialorder %v973, 8.507059e+37
      %v975 = vand.u32 %v954, 2147483648
      %v976 = vor.u32 1.1754944e-38, %v975
      %v977 = vsel %vm974, %v976, %v972
      %v978 = vrcp.pop %v957
      %v979 = vmul.f32 %v957, %v978
      %v980 = vsub.f32 1.0, %v979
      %v981 = vmul.f32 %v978, %v980
      %v982 = vadd.f32 %v978, %v981
      %vm983 = vweird.f32 %v957
      %vm984 = vweird.f32 %v978
      %vm985 = vmor %vm983, %vm984
      %v986 = vsel %vm985, %v978, %v982
      %v987 = vand.u32 2147483647, %v957
      %vm988 = vcmp.eq.f32.partialorder %v987, 8.507059e+37
      %v989 = vand.u32 %v957, 2147483648
      %v990 = vor.u32 1.1754944e-38, %v989
      %v991 = vsel %vm988, %v990, %v986
      %v992 = vrcp.pop %v960
      %v993 = vmul.f32 %v960, %v992
      %v994 = vsub.f32 1.0, %v993
      %v995 = vmul.f32 %v992, %v994
      %v996 = vadd.f32 %v992, %v995
      %vm997 = vweird.f32 %v960
      %vm998 = vweird.f32 %v992
      %vm999 = vmor %vm997, %vm998
      %v1000 = vsel %vm999, %v992, %v996
      %v1001 = vand.u32 2147483647, %v960
      %vm1002 = vcmp.eq.f32.partialorder %v1001, 8.507059e+37
      %v1003 = vand.u32 %v960, 2147483648
      %v1004 = vor.u32 1.1754944e-38, %v1003
      %v1005 = vsel %vm1002, %v1004, %v1000
      %v1006 = vrcp.pop %v963
      %v1007 = vmul.f32 %v963, %v1006
      %v1008 = vsub.f32 1.0, %v1007
      %v1009 = vmul.f32 %v1006, %v1008
      %v1010 = vadd.f32 %v1006, %v1009
      %vm1011 = vweird.f32 %v963
      %vm1012 = vweird.f32 %v1006
      %vm1013 = vmor %vm1011, %vm1012
      %v1014 = vsel %vm1013, %v1006, %v1010
      %v1015 = vand.u32 2147483647, %v963
      %vm1016 = vcmp.eq.f32.partialorder %v1015, 8.507059e+37
      %v1017 = vand.u32 %v963, 2147483648
      %v1018 = vor.u32 1.1754944e-38, %v1017
      %v1019 = vsel %vm1016, %v1018, %v1014
      %v1020 = vmul.f32 %v945, %v977
      %v1021 = vmul.f32 %v947, %v991
      %v1022 = vmul.f32 %v949, %v1005
      %v1023 = vmul.f32 %v951, %v1019
      %1028 = vrot.lane.b32.xlu0 %v661, 112
      %v1029 = vpop.permute.xlu0 %1028
      %1030 = vrot.lane.b32.xlu0 %v664, 112
      %v1031 = vpop.permute.xlu0 %1030
      %1032 = vrot.lane.b32.xlu0 %v667, 112
      %v1033 = vpop.permute.xlu0 %1032
      %1034 = vrot.lane.b32.xlu0 %v670, 112
      %v1035 = vpop.permute.xlu0 %1034
      %v1041 = vsel %vm420, %v1020, 0
      %v1044 = vsel %vm420, %v1021, 0
      %v1047 = vsel %vm420, %v1022, 0
      %v1050 = vsel %vm420, %v1023, 0
      %1052 = vmatpush.msra.mxu0 0.0
      %1053 = vmatpush.msra.mxu0 0.0
      %1054 = vmatpush.msra.mxu0 0.0
      %1055 = vmatpush.msra.mxu0 0.0
      %1056 = vmatpush.msra.mxu0 0.0
      %1057 = vmatpush.msra.mxu0 0.0
      %1058 = vmatpush.msra.mxu0 0.0
      %1059 = vmatpush.msra.mxu0 0.0
      %1060 = vmatpush.msra.mxu0 0.0
      %1061 = vmatpush.msra.mxu0 0.0
      %1062 = vmatpush.msra.mxu0 0.0
      %1063 = vmatpush.msra.mxu0 0.0
      %1064 = vmatpush.msra.mxu0 %v1035
      %1065 = vmatpush.msra.mxu0 %v1033
      %1066 = vmatpush.msra.mxu0 %v1031
      %1067 = vmatpush.msra.mxu0 %v1029
      %1068 = vmatmul.f32.gmra.mxu0 %v1041
      %v1069 = vpop.f32.mrf.mxu0
      %v1070 = vadd.f32 0.0, %v1069
      %1071 = vmatmul.f32.gmra.mxu0 %v1044
      %v1072 = vpop.f32.mrf.mxu0
      %v1073 = vadd.f32 0.0, %v1072
      %1074 = vmatmul.f32.gmra.mxu0 %v1047
      %v1075 = vpop.f32.mrf.mxu0
      %v1076 = vadd.f32 0.0, %v1075
      %1077 = vmatmul.f32.gmra.mxu0 %v1050
      %v1078 = vpop.f32.mrf.mxu0
      %v1079 = vadd.f32 0.0, %v1078
      %1080 = vdwg.mxu0
      %1081 = vrot.lane.b32.xlu0 %v632, 96
      %v1082 = vpop.permute.xlu0 %1081
      %1083 = vrot.lane.b32.xlu0 %v635, 96
      %v1084 = vpop.permute.xlu0 %1083
      %1085 = vrot.lane.b32.xlu0 %v638, 96
      %v1086 = vpop.permute.xlu0 %1085
      %1087 = vrot.lane.b32.xlu0 %v641, 96
      %v1088 = vpop.permute.xlu0 %1087
      %1089 = vrot.lane.b32.xlu0 %v632, 32
      %v1090 = vpop.permute.xlu0 %1089
      %1091 = vrot.lane.b32.xlu0 %v635, 32
      %v1092 = vpop.permute.xlu0 %1091
      %1093 = vrot.lane.b32.xlu0 %v638, 32
      %v1094 = vpop.permute.xlu0 %1093
      %1095 = vrot.lane.b32.xlu0 %v641, 32
      %v1096 = vpop.permute.xlu0 %1095
      %v1097 = vsel %vm684, %v1082, 0
      %v1099 = vsel %vm684, %v1084, 0
      %v1101 = vsel %vm684, %v1086, 0
      %v1103 = vsel %vm684, %v1088, 0
      %v1105 = vsel %vm684, %v1090, 0
      %v1107 = vsel %vm684, %v1092, 0
      %v1109 = vsel %vm684, %v1094, 0
      %v1111 = vsel %vm684, %v1096, 0
      %1113 = vmatpush.xpose.msra.mxu0 0.0
      %1114 = vmatpush.xpose.msra.mxu0 0.0
      %1115 = vmatpush.xpose.msra.mxu0 0.0
      %1116 = vmatpush.xpose.msra.mxu0 0.0
      %1117 = vmatpush.xpose.msra.mxu0 0.0
      %1118 = vmatpush.xpose.msra.mxu0 0.0
      %1119 = vmatpush.xpose.msra.mxu0 0.0
      %1120 = vmatpush.xpose.msra.mxu0 0.0
      %1121 = vmatpush.xpose.msra.mxu0 0.0
      %1122 = vmatpush.xpose.msra.mxu0 0.0
      %1123 = vmatpush.xpose.msra.mxu0 0.0
      %1124 = vmatpush.xpose.msra.mxu0 0.0
      %1125 = vmatpush.xpose.msra.mxu0 %v1111
      %1126 = vmatpush.xpose.msra.mxu0 %v1109
      %1127 = vmatpush.xpose.msra.mxu0 %v1107
      %1128 = vmatpush.xpose.msra.mxu0 %v1105
      %1129 = vmatmul.f32.gmra.mxu0 %v1097
      %v1130 = vpop.f32.mrf.mxu0
      %v1131 = vadd.f32 0.0, %v1130
      %1132 = vmatmul.f32.gmra.mxu0 %v1099
      %v1133 = vpop.f32.mrf.mxu0
      %v1134 = vadd.f32 0.0, %v1133
      %1135 = vmatmul.f32.gmra.mxu0 %v1101
      %v1136 = vpop.f32.mrf.mxu0
      %v1137 = vadd.f32 0.0, %v1136
      %1138 = vmatmul.f32.gmra.mxu0 %v1103
      %v1139 = vpop.f32.mrf.mxu0
      %v1140 = vadd.f32 0.0, %v1139
      %1141 = vdwg.mxu0
      %v1142 = vsel %vm420, %v1131, -inf
      %1143 = vmax.xlane.f32.xlu0 %v1142
      %v1144 = vpop.xlane.xlu0 %1143
      %v1145 = vsel %vm420, %v1134, -inf
      %1146 = vmax.xlane.f32.xlu0 %v1145
      %v1147 = vpop.xlane.xlu0 %1146
      %v1148 = vsel %vm420, %v1137, -inf
      %1149 = vmax.xlane.f32.xlu0 %v1148
      %v1150 = vpop.xlane.xlu0 %1149
      %v1151 = vsel %vm420, %v1140, -inf
      %1152 = vmax.xlane.f32.xlu0 %v1151
      %v1153 = vpop.xlane.xlu0 %1152
      %v1154 = vsub.f32 %v1131, %v1144
      %v1155 = vsub.f32 %v1134, %v1147
      %v1156 = vsub.f32 %v1137, %v1150
      %v1157 = vsub.f32 %v1140, %v1153
      %v1158 = vmul.f32 %v1154, 1.442695
      %v1159 = vpow.pop %v1158
      %v1160 = vmul.f32 %v1155, 1.442695
      %v1161 = vpow.pop %v1160
      %v1162 = vmul.f32 %v1156, 1.442695
      %v1163 = vpow.pop %v1162
      %v1164 = vmul.f32 %v1157, 1.442695
      %v1165 = vpow.pop %v1164
      %v1166 = vsel %vm420, %v1159, 0.0
      %1167 = vadd.xlane.f32.xlu0 %v1166
      %v1168 = vpop.xlane.xlu0 %1167
      %v1169 = vsel %vm420, %v1161, 0.0
      %1170 = vadd.xlane.f32.xlu0 %v1169
      %v1171 = vpop.xlane.xlu0 %1170
      %v1172 = vsel %vm420, %v1163, 0.0
      %1173 = vadd.xlane.f32.xlu0 %v1172
      %v1174 = vpop.xlane.xlu0 %1173
      %v1175 = vsel %vm420, %v1165, 0.0
      %1176 = vadd.xlane.f32.xlu0 %v1175
      %v1177 = vpop.xlane.xlu0 %1176
      %v1178 = vrcp.pop %v1168
      %v1179 = vmul.f32 %v1168, %v1178
      %v1180 = vsub.f32 1.0, %v1179
      %v1181 = vmul.f32 %v1178, %v1180
      %v1182 = vadd.f32 %v1178, %v1181
      %vm1183 = vweird.f32 %v1168
      %vm1184 = vweird.f32 %v1178
      %vm1185 = vmor %vm1183, %vm1184
      %v1186 = vsel %vm1185, %v1178, %v1182
      %v1187 = vand.u32 2147483647, %v1168
      %vm1188 = vcmp.eq.f32.partialorder %v1187, 8.507059e+37
      %v1189 = vand.u32 %v1168, 2147483648
      %v1190 = vor.u32 1.1754944e-38, %v1189
      %v1191 = vsel %vm1188, %v1190, %v1186
      %v1192 = vrcp.pop %v1171
      %v1193 = vmul.f32 %v1171, %v1192
      %v1194 = vsub.f32 1.0, %v1193
      %v1195 = vmul.f32 %v1192, %v1194
      %v1196 = vadd.f32 %v1192, %v1195
      %vm1197 = vweird.f32 %v1171
      %vm1198 = vweird.f32 %v1192
      %vm1199 = vmor %vm1197, %vm1198
      %v1200 = vsel %vm1199, %v1192, %v1196
      %v1201 = vand.u32 2147483647, %v1171
      %vm1202 = vcmp.eq.f32.partialorder %v1201, 8.507059e+37
      %v1203 = vand.u32 %v1171, 2147483648
      %v1204 = vor.u32 1.1754944e-38, %v1203
      %v1205 = vsel %vm1202, %v1204, %v1200
      %v1206 = vrcp.pop %v1174
      %v1207 = vmul.f32 %v1174, %v1206
      %v1208 = vsub.f32 1.0, %v1207
      %v1209 = vmul.f32 %v1206, %v1208
      %v1210 = vadd.f32 %v1206, %v1209
      %vm1211 = vweird.f32 %v1174
      %vm1212 = vweird.f32 %v1206
      %vm1213 = vmor %vm1211, %vm1212
      %v1214 = vsel %vm1213, %v1206, %v1210
      %v1215 = vand.u32 2147483647, %v1174
      %vm1216 = vcmp.eq.f32.partialorder %v1215, 8.507059e+37
      %v1217 = vand.u32 %v1174, 2147483648
      %v1218 = vor.u32 1.1754944e-38, %v1217
      %v1219 = vsel %vm1216, %v1218, %v1214
      %v1220 = vrcp.pop %v1177
      %v1221 = vmul.f32 %v1177, %v1220
      %v1222 = vsub.f32 1.0, %v1221
      %v1223 = vmul.f32 %v1220, %v1222
      %v1224 = vadd.f32 %v1220, %v1223
      %vm1225 = vweird.f32 %v1177
      %vm1226 = vweird.f32 %v1220
      %vm1227 = vmor %vm1225, %vm1226
      %v1228 = vsel %vm1227, %v1220, %v1224
      %v1229 = vand.u32 2147483647, %v1177
      %vm1230 = vcmp.eq.f32.partialorder %v1229, 8.507059e+37
      %v1231 = vand.u32 %v1177, 2147483648
      %v1232 = vor.u32 1.1754944e-38, %v1231
      %v1233 = vsel %vm1230, %v1232, %v1228
      %v1234 = vmul.f32 %v1159, %v1191
      %v1235 = vmul.f32 %v1161, %v1205
      %v1236 = vmul.f32 %v1163, %v1219
      %v1237 = vmul.f32 %v1165, %v1233
      %1238 = vrot.lane.b32.xlu0 %v661, 96
      %v1239 = vpop.permute.xlu0 %1238
      %1240 = vrot.lane.b32.xlu0 %v664, 96
      %v1241 = vpop.permute.xlu0 %1240
      %1242 = vrot.lane.b32.xlu0 %v667, 96
      %v1243 = vpop.permute.xlu0 %1242
      %1244 = vrot.lane.b32.xlu0 %v670, 96
      %v1245 = vpop.permute.xlu0 %1244
      %v1251 = vsel %vm420, %v1234, 0
      %v1254 = vsel %vm420, %v1235, 0
      %v1257 = vsel %vm420, %v1236, 0
      %v1260 = vsel %vm420, %v1237, 0
      %1262 = vmatpush.msra.mxu0 0.0
      %1263 = vmatpush.msra.mxu0 0.0
      %1264 = vmatpush.msra.mxu0 0.0
      %1265 = vmatpush.msra.mxu0 0.0
      %1266 = vmatpush.msra.mxu0 0.0
      %1267 = vmatpush.msra.mxu0 0.0
      %1268 = vmatpush.msra.mxu0 0.0
      %1269 = vmatpush.msra.mxu0 0.0
      %1270 = vmatpush.msra.mxu0 0.0
      %1271 = vmatpush.msra.mxu0 0.0
      %1272 = vmatpush.msra.mxu0 0.0
      %1273 = vmatpush.msra.mxu0 0.0
      %1274 = vmatpush.msra.mxu0 %v1245
      %1275 = vmatpush.msra.mxu0 %v1243
      %1276 = vmatpush.msra.mxu0 %v1241
      %1277 = vmatpush.msra.mxu0 %v1239
      %1278 = vmatmul.f32.gmra.mxu0 %v1251
      %v1279 = vpop.f32.mrf.mxu0
      %v1280 = vadd.f32 0.0, %v1279
      %1281 = vmatmul.f32.gmra.mxu0 %v1254
      %v1282 = vpop.f32.mrf.mxu0
      %v1283 = vadd.f32 0.0, %v1282
      %1284 = vmatmul.f32.gmra.mxu0 %v1257
      %v1285 = vpop.f32.mrf.mxu0
      %v1286 = vadd.f32 0.0, %v1285
      %1287 = vmatmul.f32.gmra.mxu0 %v1260
      %v1288 = vpop.f32.mrf.mxu0
      %v1289 = vadd.f32 0.0, %v1288
      %1290 = vdwg.mxu0
      %1291 = vrot.lane.b32.xlu0 %v632, 80
      %v1292 = vpop.permute.xlu0 %1291
      %1293 = vrot.lane.b32.xlu0 %v635, 80
      %v1294 = vpop.permute.xlu0 %1293
      %1295 = vrot.lane.b32.xlu0 %v638, 80
      %v1296 = vpop.permute.xlu0 %1295
      %1297 = vrot.lane.b32.xlu0 %v641, 80
      %v1298 = vpop.permute.xlu0 %1297
      %1299 = vrot.lane.b32.xlu0 %v632, 16
      %v1300 = vpop.permute.xlu0 %1299
      %1301 = vrot.lane.b32.xlu0 %v635, 16
      %v1302 = vpop.permute.xlu0 %1301
      %1303 = vrot.lane.b32.xlu0 %v638, 16
      %v1304 = vpop.permute.xlu0 %1303
      %1305 = vrot.lane.b32.xlu0 %v641, 16
      %v1306 = vpop.permute.xlu0 %1305
      %v1307 = vsel %vm684, %v1292, 0
      %v1309 = vsel %vm684, %v1294, 0
      %v1311 = vsel %vm684, %v1296, 0
      %v1313 = vsel %vm684, %v1298, 0
      %v1315 = vsel %vm684, %v1300, 0
      %v1317 = vsel %vm684, %v1302, 0
      %v1319 = vsel %vm684, %v1304, 0
      %v1321 = vsel %vm684, %v1306, 0
      %1323 = vmatpush.xpose.msra.mxu0 0.0
      %1324 = vmatpush.xpose.msra.mxu0 0.0
      %1325 = vmatpush.xpose.msra.mxu0 0.0
      %1326 = vmatpush.xpose.msra.mxu0 0.0
      %1327 = vmatpush.xpose.msra.mxu0 0.0
      %1328 = vmatpush.xpose.msra.mxu0 0.0
      %1329 = vmatpush.xpose.msra.mxu0 0.0
      %1330 = vmatpush.xpose.msra.mxu0 0.0
      %1331 = vmatpush.xpose.msra.mxu0 0.0
      %1332 = vmatpush.xpose.msra.mxu0 0.0
      %1333 = vmatpush.xpose.msra.mxu0 0.0
      %1334 = vmatpush.xpose.msra.mxu0 0.0
      %1335 = vmatpush.xpose.msra.mxu0 %v1321
      %1336 = vmatpush.xpose.msra.mxu0 %v1319
      %1337 = vmatpush.xpose.msra.mxu0 %v1317
      %1338 = vmatpush.xpose.msra.mxu0 %v1315
      %1339 = vmatmul.f32.gmra.mxu0 %v1307
      %v1340 = vpop.f32.mrf.mxu0
      %v1341 = vadd.f32 0.0, %v1340
      %1342 = vmatmul.f32.gmra.mxu0 %v1309
      %v1343 = vpop.f32.mrf.mxu0
      %v1344 = vadd.f32 0.0, %v1343
      %1345 = vmatmul.f32.gmra.mxu0 %v1311
      %v1346 = vpop.f32.mrf.mxu0
      %v1347 = vadd.f32 0.0, %v1346
      %1348 = vmatmul.f32.gmra.mxu0 %v1313
      %v1349 = vpop.f32.mrf.mxu0
      %v1350 = vadd.f32 0.0, %v1349
      %1351 = vdwg.mxu0
      %v1352 = vsel %vm420, %v1341, -inf
      %1353 = vmax.xlane.f32.xlu0 %v1352
      %v1354 = vpop.xlane.xlu0 %1353
      %v1355 = vsel %vm420, %v1344, -inf
      %1356 = vmax.xlane.f32.xlu0 %v1355
      %v1357 = vpop.xlane.xlu0 %1356
      %v1358 = vsel %vm420, %v1347, -inf
      %1359 = vmax.xlane.f32.xlu0 %v1358
      %v1360 = vpop.xlane.xlu0 %1359
      %v1361 = vsel %vm420, %v1350, -inf
      %1362 = vmax.xlane.f32.xlu0 %v1361
      %v1363 = vpop.xlane.xlu0 %1362
      %v1364 = vsub.f32 %v1341, %v1354
      %v1365 = vsub.f32 %v1344, %v1357
      %v1366 = vsub.f32 %v1347, %v1360
      %v1367 = vsub.f32 %v1350, %v1363
      %v1368 = vmul.f32 %v1364, 1.442695
      %v1369 = vpow.pop %v1368
      %v1370 = vmul.f32 %v1365, 1.442695
      %v1371 = vpow.pop %v1370
      %v1372 = vmul.f32 %v1366, 1.442695
      %v1373 = vpow.pop %v1372
      %v1374 = vmul.f32 %v1367, 1.442695
      %v1375 = vpow.pop %v1374
      %v1376 = vsel %vm420, %v1369, 0.0
      %1377 = vadd.xlane.f32.xlu0 %v1376
      %v1378 = vpop.xlane.xlu0 %1377
      %v1379 = vsel %vm420, %v1371, 0.0
      %1380 = vadd.xlane.f32.xlu0 %v1379
      %v1381 = vpop.xlane.xlu0 %1380
      %v1382 = vsel %vm420, %v1373, 0.0
      %1383 = vadd.xlane.f32.xlu0 %v1382
      %v1384 = vpop.xlane.xlu0 %1383
      %v1385 = vsel %vm420, %v1375, 0.0
      %1386 = vadd.xlane.f32.xlu0 %v1385
      %v1387 = vpop.xlane.xlu0 %1386
      %v1388 = vrcp.pop %v1378
      %v1389 = vmul.f32 %v1378, %v1388
      %v1390 = vsub.f32 1.0, %v1389
      %v1391 = vmul.f32 %v1388, %v1390
      %v1392 = vadd.f32 %v1388, %v1391
      %vm1393 = vweird.f32 %v1378
      %vm1394 = vweird.f32 %v1388
      %vm1395 = vmor %vm1393, %vm1394
      %v1396 = vsel %vm1395, %v1388, %v1392
      %v1397 = vand.u32 2147483647, %v1378
      %vm1398 = vcmp.eq.f32.partialorder %v1397, 8.507059e+37
      %v1399 = vand.u32 %v1378, 2147483648
      %v1400 = vor.u32 1.1754944e-38, %v1399
      %v1401 = vsel %vm1398, %v1400, %v1396
      %v1402 = vrcp.pop %v1381
      %v1403 = vmul.f32 %v1381, %v1402
      %v1404 = vsub.f32 1.0, %v1403
      %v1405 = vmul.f32 %v1402, %v1404
      %v1406 = vadd.f32 %v1402, %v1405
      %vm1407 = vweird.f32 %v1381
      %vm1408 = vweird.f32 %v1402
      %vm1409 = vmor %vm1407, %vm1408
      %v1410 = vsel %vm1409, %v1402, %v1406
      %v1411 = vand.u32 2147483647, %v1381
      %vm1412 = vcmp.eq.f32.partialorder %v1411, 8.507059e+37
      %v1413 = vand.u32 %v1381, 2147483648
      %v1414 = vor.u32 1.1754944e-38, %v1413
      %v1415 = vsel %vm1412, %v1414, %v1410
      %v1416 = vrcp.pop %v1384
      %v1417 = vmul.f32 %v1384, %v1416
      %v1418 = vsub.f32 1.0, %v1417
      %v1419 = vmul.f32 %v1416, %v1418
      %v1420 = vadd.f32 %v1416, %v1419
      %vm1421 = vweird.f32 %v1384
      %vm1422 = vweird.f32 %v1416
      %vm1423 = vmor %vm1421, %vm1422
      %v1424 = vsel %vm1423, %v1416, %v1420
      %v1425 = vand.u32 2147483647, %v1384
      %vm1426 = vcmp.eq.f32.partialorder %v1425, 8.507059e+37
      %v1427 = vand.u32 %v1384, 2147483648
      %v1428 = vor.u32 1.1754944e-38, %v1427
      %v1429 = vsel %vm1426, %v1428, %v1424
      %v1430 = vrcp.pop %v1387
      %v1431 = vmul.f32 %v1387, %v1430
      %v1432 = vsub.f32 1.0, %v1431
      %v1433 = vmul.f32 %v1430, %v1432
      %v1434 = vadd.f32 %v1430, %v1433
      %vm1435 = vweird.f32 %v1387
      %vm1436 = vweird.f32 %v1430
      %vm1437 = vmor %vm1435, %vm1436
      %v1438 = vsel %vm1437, %v1430, %v1434
      %v1439 = vand.u32 2147483647, %v1387
      %vm1440 = vcmp.eq.f32.partialorder %v1439, 8.507059e+37
      %v1441 = vand.u32 %v1387, 2147483648
      %v1442 = vor.u32 1.1754944e-38, %v1441
      %v1443 = vsel %vm1440, %v1442, %v1438
      %v1444 = vmul.f32 %v1369, %v1401
      %v1445 = vmul.f32 %v1371, %v1415
      %v1446 = vmul.f32 %v1373, %v1429
      %v1447 = vmul.f32 %v1375, %v1443
      %1448 = vrot.lane.b32.xlu0 %v661, 80
      %v1449 = vpop.permute.xlu0 %1448
      %1450 = vrot.lane.b32.xlu0 %v664, 80
      %v1451 = vpop.permute.xlu0 %1450
      %1452 = vrot.lane.b32.xlu0 %v667, 80
      %v1453 = vpop.permute.xlu0 %1452
      %1454 = vrot.lane.b32.xlu0 %v670, 80
      %v1455 = vpop.permute.xlu0 %1454
      %v1461 = vsel %vm420, %v1444, 0
      %v1464 = vsel %vm420, %v1445, 0
      %v1467 = vsel %vm420, %v1446, 0
      %v1470 = vsel %vm420, %v1447, 0
      %1472 = vmatpush.msra.mxu0 0.0
      %1473 = vmatpush.msra.mxu0 0.0
      %1474 = vmatpush.msra.mxu0 0.0
      %1475 = vmatpush.msra.mxu0 0.0
      %1476 = vmatpush.msra.mxu0 0.0
      %1477 = vmatpush.msra.mxu0 0.0
      %1478 = vmatpush.msra.mxu0 0.0
      %1479 = vmatpush.msra.mxu0 0.0
      %1480 = vmatpush.msra.mxu0 0.0
      %1481 = vmatpush.msra.mxu0 0.0
      %1482 = vmatpush.msra.mxu0 0.0
      %1483 = vmatpush.msra.mxu0 0.0
      %1484 = vmatpush.msra.mxu0 %v1455
      %1485 = vmatpush.msra.mxu0 %v1453
      %1486 = vmatpush.msra.mxu0 %v1451
      %1487 = vmatpush.msra.mxu0 %v1449
      %1488 = vmatmul.f32.gmra.mxu0 %v1461
      %v1489 = vpop.f32.mrf.mxu0
      %v1490 = vadd.f32 0.0, %v1489
      %1491 = vmatmul.f32.gmra.mxu0 %v1464
      %v1492 = vpop.f32.mrf.mxu0
      %v1493 = vadd.f32 0.0, %v1492
      %1494 = vmatmul.f32.gmra.mxu0 %v1467
      %v1495 = vpop.f32.mrf.mxu0
      %v1496 = vadd.f32 0.0, %v1495
      %1497 = vmatmul.f32.gmra.mxu0 %v1470
      %v1498 = vpop.f32.mrf.mxu0
      %v1499 = vadd.f32 0.0, %v1498
      %1500 = vdwg.mxu0
      %1505 = vrot.lane.b32.xlu0 %v1070, 16
      %v1506 = vpop.permute.xlu0 %1505
      %1507 = vrot.lane.b32.xlu0 %v1073, 16
      %v1508 = vpop.permute.xlu0 %1507
      %1509 = vrot.lane.b32.xlu0 %v1076, 16
      %v1510 = vpop.permute.xlu0 %1509
      %1511 = vrot.lane.b32.xlu0 %v1079, 16
      %v1512 = vpop.permute.xlu0 %1511
      %1521 = vrot.lane.b32.xlu0 %v1280, 32
      %v1522 = vpop.permute.xlu0 %1521
      %1523 = vrot.lane.b32.xlu0 %v1283, 32
      %v1524 = vpop.permute.xlu0 %1523
      %1525 = vrot.lane.b32.xlu0 %v1286, 32
      %v1526 = vpop.permute.xlu0 %1525
      %1527 = vrot.lane.b32.xlu0 %v1289, 32
      %v1528 = vpop.permute.xlu0 %1527
      %1537 = vrot.lane.b32.xlu0 %v1490, 48
      %v1538 = vpop.permute.xlu0 %1537
      %1539 = vrot.lane.b32.xlu0 %v1493, 48
      %v1540 = vpop.permute.xlu0 %1539
      %1541 = vrot.lane.b32.xlu0 %v1496, 48
      %v1542 = vpop.permute.xlu0 %1541
      %1543 = vrot.lane.b32.xlu0 %v1499, 48
      %v1544 = vpop.permute.xlu0 %1543
      %v1549 = vsel %vm684, %v856, %v1506
      %v1550 = vsel %vm684, %v859, %v1508
      %v1551 = vsel %vm684, %v862, %v1510
      %v1552 = vsel %vm684, %v865, %v1512
      %v1553 = vsel %vm420, %v1549, %v1522
      %v1554 = vsel %vm420, %v1550, %v1524
      %v1555 = vsel %vm420, %v1551, %v1526
      %v1556 = vsel %vm420, %v1552, %v1528
      %vm1557 = vcmask 392192
      %v1558 = vsel %vm1557, %v1553, %v1538
      %v1559 = vsel %vm1557, %v1554, %v1540
      %v1560 = vsel %vm1557, %v1555, %v1542
      %v1561 = vsel %vm1557, %v1556, %v1544
      %v1562 = vld [vmem:[%s4] sm:$0xff]
      %v1563 = vld [vmem:[%s4 + $0x8] sm:$0xff]
      %v1564 = vld [vmem:[%s4 + $0x10] sm:$0xff]
      %v1565 = vld [vmem:[%s4 + $0x18] sm:$0xff]
      %v1566 = vld [vmem:[%s4 + $0x20] sm:$0xff]
      %v1567 = vld [vmem:[%s4 + $0x28] sm:$0xff]
      %v1568 = vld [vmem:[%s4 + $0x30] sm:$0xff]
      %v1569 = vld [vmem:[%s4 + $0x38] sm:$0xff]
      %v1570 = vld [vmem:[%s5] sm:$0x1]
      %v1572 = vperm.slane %v1570, 0
      %vm1574 = vcmask 523264
      %v1576 = vsel %vm1574, %v1558, 0
      %v1579 = vsel %vm1574, %v1559, 0
      %v1582 = vsel %vm1574, %v1560, 0
      %v1585 = vsel %vm1574, %v1561, 0
      %1587 = vmatpush.msra.mxu0 0.0
      %1588 = vmatpush.msra.mxu0 0.0
      %1589 = vmatpush.msra.mxu0 0.0
      %1590 = vmatpush.msra.mxu0 0.0
      %1591 = vmatpush.msra.mxu0 0.0
      %1592 = vmatpush.msra.mxu0 0.0
      %1593 = vmatpush.msra.mxu0 0.0
      %1594 = vmatpush.msra.mxu0 0.0
      %1595 = vmatpush.msra.mxu0 %v1569
      %1596 = vmatpush.msra.mxu0 %v1568
      %1597 = vmatpush.msra.mxu0 %v1567
      %1598 = vmatpush.msra.mxu0 %v1566
      %1599 = vmatpush.msra.mxu0 %v1565
      %1600 = vmatpush.msra.mxu0 %v1564
      %1601 = vmatpush.msra.mxu0 %v1563
      %1602 = vmatpush.msra.mxu0 %v1562
      %1603 = vmatmul.f32.gmra.mxu0 %v1576
      %v1604 = vpop.f32.mrf.mxu0
      %v1605 = vadd.f32 %v1572, %v1604
      %1606 = vmatmul.f32.gmra.mxu0 %v1579
      %v1607 = vpop.f32.mrf.mxu0
      %v1608 = vadd.f32 %v1572, %v1607
      %1609 = vmatmul.f32.gmra.mxu0 %v1582
      %v1610 = vpop.f32.mrf.mxu0
      %v1611 = vadd.f32 %v1572, %v1610
      %1612 = vmatmul.f32.gmra.mxu0 %v1585
      %v1613 = vpop.f32.mrf.mxu0
      %v1614 = vadd.f32 %v1572, %v1613
      %1615 = vdwg.mxu0
      %v1616 = vadd.f32 %v1605, %v414
      %v1617 = vadd.f32 %v1608, %v415
      %v1618 = vadd.f32 %v1611, %v416
      %v1619 = vadd.f32 %v1614, %v417
      %v1620 = vld [vmem:[%s6] sm:$0x1]
      %v1621 = vld [vmem:[%s7] sm:$0x1]
      %v1622 = vsel %vm420, %v1616, 0.0
      %1623 = vadd.xlane.f32.xlu0 %v1622
      %v1624 = vpop.xlane.xlu0 %1623
      %v1625 = vsel %vm420, %v1617, 0.0
      %1626 = vadd.xlane.f32.xlu0 %v1625
      %v1627 = vpop.xlane.xlu0 %1626
      %v1628 = vsel %vm420, %v1618, 0.0
      %1629 = vadd.xlane.f32.xlu0 %v1628
      %v1630 = vpop.xlane.xlu0 %1629
      %v1631 = vsel %vm420, %v1619, 0.0
      %1632 = vadd.xlane.f32.xlu0 %v1631
      %v1633 = vpop.xlane.xlu0 %1632
      %v1634 = vmul.f32 %v1624, %v439
      %v1635 = vmul.f32 %v1627, %v439
      %v1636 = vmul.f32 %v1630, %v439
      %v1637 = vmul.f32 %v1633, %v439
      %v1638 = vsub.f32 %v1616, %v1634
      %v1639 = vsub.f32 %v1617, %v1635
      %v1640 = vsub.f32 %v1618, %v1636
      %v1641 = vsub.f32 %v1619, %v1637
      %v1642 = vmul.f32 %v1638, %v1638
      %v1643 = vmul.f32 %v1639, %v1639
      %v1644 = vmul.f32 %v1640, %v1640
      %v1645 = vmul.f32 %v1641, %v1641
      %v1646 = vsel %vm420, %v1642, 0.0
      %1647 = vadd.xlane.f32.xlu0 %v1646
      %v1648 = vpop.xlane.xlu0 %1647
      %v1649 = vsel %vm420, %v1643, 0.0
      %1650 = vadd.xlane.f32.xlu0 %v1649
      %v1651 = vpop.xlane.xlu0 %1650
      %v1652 = vsel %vm420, %v1644, 0.0
      %1653 = vadd.xlane.f32.xlu0 %v1652
      %v1654 = vpop.xlane.xlu0 %1653
      %v1655 = vsel %vm420, %v1645, 0.0
      %1656 = vadd.xlane.f32.xlu0 %v1655
      %v1657 = vpop.xlane.xlu0 %1656
      %v1658 = vmul.f32 %v1648, %v439
      %v1659 = vmul.f32 %v1651, %v439
      %v1660 = vmul.f32 %v1654, %v439
      %v1661 = vmul.f32 %v1657, %v439
      %v1662 = vrsqrt.pop %v1658
      %v1663 = vmul.f32 %v1662, %v1658
      %v1664 = vmul.f32 %v1663, %v1662
      %v1665 = vmul.f32 0.5, %v1664
      %v1666 = vsub.f32 1.5, %v1665
      %v1667 = vmul.f32 %v1662, %v1666
      %v1668 = vmul.f32 %v1658, %v1667
      %vm1669 = vcmp.eq.f32.partialorder %v1658, inf
      %v1670 = vsel %vm1669, %v1658, %v1668
      %vm1671 = vcmp.eq.f32.partialorder %v1658, 0.0
      %v1672 = vand.u32 %v1658, 2147483648
      %v1673 = vsel %vm1671, %v1672, %v1670
      %v1674 = vrsqrt.pop %v1659
      %v1675 = vmul.f32 %v1674, %v1659
      %v1676 = vmul.f32 %v1675, %v1674
      %v1677 = vmul.f32 0.5, %v1676
      %v1678 = vsub.f32 1.5, %v1677
      %v1679 = vmul.f32 %v1674, %v1678
      %v1680 = vmul.f32 %v1659, %v1679
      %vm1681 = vcmp.eq.f32.partialorder %v1659, inf
      %v1682 = vsel %vm1681, %v1659, %v1680
      %vm1683 = vcmp.eq.f32.partialorder %v1659, 0.0
      %v1684 = vand.u32 %v1659, 2147483648
      %v1685 = vsel %vm1683, %v1684, %v1682
      %v1686 = vrsqrt.pop %v1660
      %v1687 = vmul.f32 %v1686, %v1660
      %v1688 = vmul.f32 %v1687, %v1686
      %v1689 = vmul.f32 0.5, %v1688
      %v1690 = vsub.f32 1.5, %v1689
      %v1691 = vmul.f32 %v1686, %v1690
      %v1692 = vmul.f32 %v1660, %v1691
      %vm1693 = vcmp.eq.f32.partialorder %v1660, inf
      %v1694 = vsel %vm1693, %v1660, %v1692
      %vm1695 = vcmp.eq.f32.partialorder %v1660, 0.0
      %v1696 = vand.u32 %v1660, 2147483648
      %v1697 = vsel %vm1695, %v1696, %v1694
      %v1698 = vrsqrt.pop %v1661
      %v1699 = vmul.f32 %v1698, %v1661
      %v1700 = vmul.f32 %v1699, %v1698
      %v1701 = vmul.f32 0.5, %v1700
      %v1702 = vsub.f32 1.5, %v1701
      %v1703 = vmul.f32 %v1698, %v1702
      %v1704 = vmul.f32 %v1661, %v1703
      %vm1705 = vcmp.eq.f32.partialorder %v1661, inf
      %v1706 = vsel %vm1705, %v1661, %v1704
      %vm1707 = vcmp.eq.f32.partialorder %v1661, 0.0
      %v1708 = vand.u32 %v1661, 2147483648
      %v1709 = vsel %vm1707, %v1708, %v1706
      %v1710 = vadd.f32 %v1673, 1e-05
      %v1711 = vadd.f32 %v1685, 1e-05
      %v1712 = vadd.f32 %v1697, 1e-05
      %v1713 = vadd.f32 %v1709, 1e-05
      %v1714 = vrcp.pop %v1710
      %v1715 = vmul.f32 %v1710, %v1714
      %v1716 = vsub.f32 1.0, %v1715
      %v1717 = vmul.f32 %v1714, %v1716
      %v1718 = vadd.f32 %v1714, %v1717
      %vm1719 = vweird.f32 %v1710
      %vm1720 = vweird.f32 %v1714
      %vm1721 = vmor %vm1719, %vm1720
      %v1722 = vsel %vm1721, %v1714, %v1718
      %v1723 = vand.u32 2147483647, %v1710
      %vm1724 = vcmp.eq.f32.partialorder %v1723, 8.507059e+37
      %v1725 = vand.u32 %v1710, 2147483648
      %v1726 = vor.u32 1.1754944e-38, %v1725
      %v1727 = vsel %vm1724, %v1726, %v1722
      %v1728 = vmul.f32 %v1638, %v1727
      %v1729 = vrcp.pop %v1711
      %v1730 = vmul.f32 %v1711, %v1729
      %v1731 = vsub.f32 1.0, %v1730
      %v1732 = vmul.f32 %v1729, %v1731
      %v1733 = vadd.f32 %v1729, %v1732
      %vm1734 = vweird.f32 %v1711
      %vm1735 = vweird.f32 %v1729
      %vm1736 = vmor %vm1734, %vm1735
      %v1737 = vsel %vm1736, %v1729, %v1733
      %v1738 = vand.u32 2147483647, %v1711
      %vm1739 = vcmp.eq.f32.partialorder %v1738, 8.507059e+37
      %v1740 = vand.u32 %v1711, 2147483648
      %v1741 = vor.u32 1.1754944e-38, %v1740
      %v1742 = vsel %vm1739, %v1741, %v1737
      %v1743 = vmul.f32 %v1639, %v1742
      %v1744 = vrcp.pop %v1712
      %v1745 = vmul.f32 %v1712, %v1744
      %v1746 = vsub.f32 1.0, %v1745
      %v1747 = vmul.f32 %v1744, %v1746
      %v1748 = vadd.f32 %v1744, %v1747
      %vm1749 = vweird.f32 %v1712
      %vm1750 = vweird.f32 %v1744
      %vm1751 = vmor %vm1749, %vm1750
      %v1752 = vsel %vm1751, %v1744, %v1748
      %v1753 = vand.u32 2147483647, %v1712
      %vm1754 = vcmp.eq.f32.partialorder %v1753, 8.507059e+37
      %v1755 = vand.u32 %v1712, 2147483648
      %v1756 = vor.u32 1.1754944e-38, %v1755
      %v1757 = vsel %vm1754, %v1756, %v1752
      %v1758 = vmul.f32 %v1640, %v1757
      %v1759 = vrcp.pop %v1713
      %v1760 = vmul.f32 %v1713, %v1759
      %v1761 = vsub.f32 1.0, %v1760
      %v1762 = vmul.f32 %v1759, %v1761
      %v1763 = vadd.f32 %v1759, %v1762
      %vm1764 = vweird.f32 %v1713
      %vm1765 = vweird.f32 %v1759
      %vm1766 = vmor %vm1764, %vm1765
      %v1767 = vsel %vm1766, %v1759, %v1763
      %v1768 = vand.u32 2147483647, %v1713
      %vm1769 = vcmp.eq.f32.partialorder %v1768, 8.507059e+37
      %v1770 = vand.u32 %v1713, 2147483648
      %v1771 = vor.u32 1.1754944e-38, %v1770
      %v1772 = vsel %vm1769, %v1771, %v1767
      %v1773 = vmul.f32 %v1641, %v1772
      %v1775 = vperm.slane %v1620, 0
      %v1777 = vmul.f32 %v1728, %v1775
      %v1778 = vmul.f32 %v1743, %v1775
      %v1779 = vmul.f32 %v1758, %v1775
      %v1780 = vmul.f32 %v1773, %v1775
      %v1782 = vperm.slane %v1621, 0
      %v1784 = vadd.f32 %v1777, %v1782
      %v1785 = vadd.f32 %v1778, %v1782
      %v1786 = vadd.f32 %v1779, %v1782
      %v1787 = vadd.f32 %v1780, %v1782
      %v1788 = vld [vmem:[%s8] sm:$0xff]
      %v1789 = vld [vmem:[%s8 + $0x8] sm:$0xff]
      %v1790 = vld [vmem:[%s8 + $0x10] sm:$0xff]
      %v1791 = vld [vmem:[%s8 + $0x18] sm:$0xff]
      %v1792 = vld [vmem:[%s9] sm:$0x1]
      %v1794 = vperm.slane %v1792, 0
      %v1797 = vsel %vm420, %v1784, 0
      %v1800 = vsel %vm420, %v1785, 0
      %v1803 = vsel %vm420, %v1786, 0
      %v1806 = vsel %vm420, %v1787, 0
      %1808 = vmatpush.msra.mxu0 0.0
      %1809 = vmatpush.msra.mxu0 0.0
      %1810 = vmatpush.msra.mxu0 0.0
      %1811 = vmatpush.msra.mxu0 0.0
      %1812 = vmatpush.msra.mxu0 0.0
      %1813 = vmatpush.msra.mxu0 0.0
      %1814 = vmatpush.msra.mxu0 0.0
      %1815 = vmatpush.msra.mxu0 0.0
      %1816 = vmatpush.msra.mxu0 0.0
      %1817 = vmatpush.msra.mxu0 0.0
      %1818 = vmatpush.msra.mxu0 0.0
      %1819 = vmatpush.msra.mxu0 0.0
      %1820 = vmatpush.msra.mxu0 %v1791
      %1821 = vmatpush.msra.mxu0 %v1790
      %1822 = vmatpush.msra.mxu0 %v1789
      %1823 = vmatpush.msra.mxu0 %v1788
      %1824 = vmatmul.f32.gmra.mxu0 %v1797
      %v1825 = vpop.f32.mrf.mxu0
      %v1826 = vadd.f32 %v1794, %v1825
      %1827 = vmatmul.f32.gmra.mxu0 %v1800
      %v1828 = vpop.f32.mrf.mxu0
      %v1829 = vadd.f32 %v1794, %v1828
      %1830 = vmatmul.f32.gmra.mxu0 %v1803
      %v1831 = vpop.f32.mrf.mxu0
      %v1832 = vadd.f32 %v1794, %v1831
      %1833 = vmatmul.f32.gmra.mxu0 %v1806
      %v1834 = vpop.f32.mrf.mxu0
      %v1835 = vadd.f32 %v1794, %v1834
      %1836 = vdwg.mxu0
      %v1837 = vmul.f32 %v1826, 0.5
      %v1838 = vmul.f32 %v1829, 0.5
      %v1839 = vmul.f32 %v1832, 0.5
      %v1840 = vmul.f32 %v1835, 0.5
      %v1841 = vmul.f32 %v1826, 0.70710677
      %v1842 = vmul.f32 %v1829, 0.70710677
      %v1843 = vmul.f32 %v1832, 0.70710677
      %v1844 = vmul.f32 %v1835, 0.70710677
      %v1845 = vand.u32 2147483647, %v1841
      %v1846 = vand.u32 2147483647, %v1842
      %v1847 = vand.u32 2147483647, %v1843
      %v1848 = vand.u32 2147483647, %v1844
      %v1849 = vmul.f32 %v1845, 0.3275911
      %v1850 = vmul.f32 %v1846, 0.3275911
      %v1851 = vmul.f32 %v1847, 0.3275911
      %v1852 = vmul.f32 %v1848, 0.3275911
      %v1853 = vadd.f32 %v1849, 1.0
      %v1854 = vadd.f32 %v1850, 1.0
      %v1855 = vadd.f32 %v1851, 1.0
      %v1856 = vadd.f32 %v1852, 1.0
      %v1857 = vrcp.pop %v1853
      %v1858 = vmul.f32 %v1853, %v1857
      %v1859 = vsub.f32 1.0, %v1858
      %v1860 = vmul.f32 %v1857, %v1859
      %v1861 = vadd.f32 %v1857, %v1860
      %vm1862 = vweird.f32 %v1853
      %vm1863 = vweird.f32 %v1857
      %vm1864 = vmor %vm1862, %vm1863
      %v1865 = vsel %vm1864, %v1857, %v1861
      %v1866 = vand.u32 2147483647, %v1853
      %vm1867 = vcmp.eq.f32.partialorder %v1866, 8.507059e+37
      %v1868 = vand.u32 %v1853, 2147483648
      %v1869 = vor.u32 1.1754944e-38, %v1868
      %v1870 = vsel %vm1867, %v1869, %v1865
      %v1871 = vmul.f32 1.0, %v1870
      %v1872 = vrcp.pop %v1854
      %v1873 = vmul.f32 %v1854, %v1872
      %v1874 = vsub.f32 1.0, %v1873
      %v1875 = vmul.f32 %v1872, %v1874
      %v1876 = vadd.f32 %v1872, %v1875
      %vm1877 = vweird.f32 %v1854
      %vm1878 = vweird.f32 %v1872
      %vm1879 = vmor %vm1877, %vm1878
      %v1880 = vsel %vm1879, %v1872, %v1876
      %v1881 = vand.u32 2147483647, %v1854
      %vm1882 = vcmp.eq.f32.partialorder %v1881, 8.507059e+37
      %v1883 = vand.u32 %v1854, 2147483648
      %v1884 = vor.u32 1.1754944e-38, %v1883
      %v1885 = vsel %vm1882, %v1884, %v1880
      %v1886 = vmul.f32 1.0, %v1885
      %v1887 = vrcp.pop %v1855
      %v1888 = vmul.f32 %v1855, %v1887
      %v1889 = vsub.f32 1.0, %v1888
      %v1890 = vmul.f32 %v1887, %v1889
      %v1891 = vadd.f32 %v1887, %v1890
      %vm1892 = vweird.f32 %v1855
      %vm1893 = vweird.f32 %v1887
      %vm1894 = vmor %vm1892, %vm1893
      %v1895 = vsel %vm1894, %v1887, %v1891
      %v1896 = vand.u32 2147483647, %v1855
      %vm1897 = vcmp.eq.f32.partialorder %v1896, 8.507059e+37
      %v1898 = vand.u32 %v1855, 2147483648
      %v1899 = vor.u32 1.1754944e-38, %v1898
      %v1900 = vsel %vm1897, %v1899, %v1895
      %v1901 = vmul.f32 1.0, %v1900
      %v1902 = vrcp.pop %v1856
      %v1903 = vmul.f32 %v1856, %v1902
      %v1904 = vsub.f32 1.0, %v1903
      %v1905 = vmul.f32 %v1902, %v1904
      %v1906 = vadd.f32 %v1902, %v1905
      %vm1907 = vweird.f32 %v1856
      %vm1908 = vweird.f32 %v1902
      %vm1909 = vmor %vm1907, %vm1908
      %v1910 = vsel %vm1909, %v1902, %v1906
      %v1911 = vand.u32 2147483647, %v1856
      %vm1912 = vcmp.eq.f32.partialorder %v1911, 8.507059e+37
      %v1913 = vand.u32 %v1856, 2147483648
      %v1914 = vor.u32 1.1754944e-38, %v1913
      %v1915 = vsel %vm1912, %v1914, %v1910
      %v1916 = vmul.f32 1.0, %v1915
      %v1917 = vmul.f32 %v1871, 1.0614054
      %v1918 = vmul.f32 %v1886, 1.0614054
      %v1919 = vmul.f32 %v1901, 1.0614054
      %v1920 = vmul.f32 %v1916, 1.0614054
      %v1921 = vadd.f32 %v1917, -1.4531521
      %v1922 = vadd.f32 %v1918, -1.4531521
      %v1923 = vadd.f32 %v1919, -1.4531521
      %v1924 = vadd.f32 %v1920, -1.4531521
      %v1925 = vmul.f32 %v1921, %v1871
      %v1926 = vmul.f32 %v1922, %v1886
      %v1927 = vmul.f32 %v1923, %v1901
      %v1928 = vmul.f32 %v1924, %v1916
      %v1929 = vadd.f32 %v1925, 1.4214138
      %v1930 = vadd.f32 %v1926, 1.4214138
      %v1931 = vadd.f32 %v1927, 1.4214138
      %v1932 = vadd.f32 %v1928, 1.4214138
      %v1933 = vmul.f32 %v1929, %v1871
      %v1934 = vmul.f32 %v1930, %v1886
      %v1935 = vmul.f32 %v1931, %v1901
      %v1936 = vmul.f32 %v1932, %v1916
      %v1937 = vadd.f32 %v1933, -0.28449672
      %v1938 = vadd.f32 %v1934, -0.28449672
      %v1939 = vadd.f32 %v1935, -0.28449672
      %v1940 = vadd.f32 %v1936, -0.28449672
      %v1941 = vmul.f32 %v1937, %v1871
      %v1942 = vmul.f32 %v1938, %v1886
      %v1943 = vmul.f32 %v1939, %v1901
      %v1944 = vmul.f32 %v1940, %v1916
      %v1945 = vadd.f32 %v1941, 0.2548296
      %v1946 = vadd.f32 %v1942, 0.2548296
      %v1947 = vadd.f32 %v1943, 0.2548296
      %v1948 = vadd.f32 %v1944, 0.2548296
      %v1949 = vmul.f32 %v1945, %v1871
      %v1950 = vmul.f32 %v1946, %v1886
      %v1951 = vmul.f32 %v1947, %v1901
      %v1952 = vmul.f32 %v1948, %v1916
      %v1953 = vsub.f32 0.0, %v1845
      %v1954 = vsub.f32 0.0, %v1846
      %v1955 = vsub.f32 0.0, %v1847
      %v1956 = vsub.f32 0.0, %v1848
      %v1957 = vmul.f32 %v1953, %v1845
      %v1958 = vmul.f32 %v1954, %v1846
      %v1959 = vmul.f32 %v1955, %v1847
      %v1960 = vmul.f32 %v1956, %v1848
      %v1961 = vmul.f32 %v1957, 1.442695
      %v1962 = vpow.pop %v1961
      %v1963 = vmul.f32 %v1958, 1.442695
      %v1964 = vpow.pop %v1963
      %v1965 = vmul.f32 %v1959, 1.442695
      %v1966 = vpow.pop %v1965
      %v1967 = vmul.f32 %v1960, 1.442695
      %v1968 = vpow.pop %v1967
      %v1969 = vmul.f32 %v1949, %v1962
      %v1970 = vmul.f32 %v1950, %v1964
      %v1971 = vmul.f32 %v1951, %v1966
      %v1972 = vmul.f32 %v1952, %v1968
      %v1973 = vsub.f32 1.0, %v1969
      %v1974 = vsub.f32 1.0, %v1970
      %v1975 = vsub.f32 1.0, %v1971
      %v1976 = vsub.f32 1.0, %v1972
      %vm1977 = vcmp.ge.f32.partialorder %v1841, 0.0
      %vm1978 = vcmp.ge.f32.partialorder %v1842, 0.0
      %vm1979 = vcmp.ge.f32.partialorder %v1843, 0.0
      %vm1980 = vcmp.ge.f32.partialorder %v1844, 0.0
      %v1981 = vsub.f32 0.0, %v1973
      %v1982 = vsub.f32 0.0, %v1974
      %v1983 = vsub.f32 0.0, %v1975
      %v1984 = vsub.f32 0.0, %v1976
      %v1985 = vsel %vm1977, %v1973, %v1981
      %v1986 = vsel %vm1978, %v1974, %v1982
      %v1987 = vsel %vm1979, %v1975, %v1983
      %v1988 = vsel %vm1980, %v1976, %v1984
      %v1989 = vadd.f32 %v1985, 1.0
      %v1990 = vadd.f32 %v1986, 1.0
      %v1991 = vadd.f32 %v1987, 1.0
      %v1992 = vadd.f32 %v1988, 1.0
      %v1993 = vmul.f32 %v1837, %v1989
      %v1994 = vmul.f32 %v1838, %v1990
      %v1995 = vmul.f32 %v1839, %v1991
      %v1996 = vmul.f32 %v1840, %v1992
      %v1997 = vld [vmem:[%s10] sm:$0xff]
      %v1998 = vld [vmem:[%s10 + $0x8] sm:$0xff]
      %v1999 = vld [vmem:[%s10 + $0x10] sm:$0xff]
      %v2000 = vld [vmem:[%s10 + $0x18] sm:$0xff]
      %v2001 = vld [vmem:[%s10 + $0x20] sm:$0xff]
      %v2002 = vld [vmem:[%s10 + $0x28] sm:$0xff]
      %v2003 = vld [vmem:[%s10 + $0x30] sm:$0xff]
      %v2004 = vld [vmem:[%s10 + $0x38] sm:$0xff]
      %v2005 = vld [vmem:[%s10 + $0x40] sm:$0xff]
      %v2006 = vld [vmem:[%s10 + $0x48] sm:$0xff]
      %v2007 = vld [vmem:[%s10 + $0x50] sm:$0xff]
      %v2008 = vld [vmem:[%s10 + $0x58] sm:$0xff]
      %v2009 = vld [vmem:[%s10 + $0x60] sm:$0xff]
      %v2010 = vld [vmem:[%s10 + $0x68] sm:$0xff]
      %v2011 = vld [vmem:[%s10 + $0x70] sm:$0xff]
      %v2012 = vld [vmem:[%s10 + $0x78] sm:$0xff]
      %v2013 = vld [vmem:[%s11] sm:$0x1]
      %v2015 = vperm.slane %v2013, 0
      %2017 = vmatpush.msra.mxu0 %v2012
      %2018 = vmatpush.msra.mxu0 %v2011
      %2019 = vmatpush.msra.mxu0 %v2010
      %2020 = vmatpush.msra.mxu0 %v2009
      %2021 = vmatpush.msra.mxu0 %v2008
      %2022 = vmatpush.msra.mxu0 %v2007
      %2023 = vmatpush.msra.mxu0 %v2006
      %2024 = vmatpush.msra.mxu0 %v2005
      %2025 = vmatpush.msra.mxu0 %v2004
      %2026 = vmatpush.msra.mxu0 %v2003
      %2027 = vmatpush.msra.mxu0 %v2002
      %2028 = vmatpush.msra.mxu0 %v2001
      %2029 = vmatpush.msra.mxu0 %v2000
      %2030 = vmatpush.msra.mxu0 %v1999
      %2031 = vmatpush.msra.mxu0 %v1998
      %2032 = vmatpush.msra.mxu0 %v1997
      %2033 = vmatmul.f32.gmra.mxu0 %v1993
      %v2034 = vpop.f32.mrf.mxu0
      %v2035 = vadd.f32 %v2015, %v2034
      %2036 = vmatmul.f32.gmra.mxu0 %v1994
      %v2037 = vpop.f32.mrf.mxu0
      %v2038 = vadd.f32 %v2015, %v2037
      %2039 = vmatmul.f32.gmra.mxu0 %v1995
      %v2040 = vpop.f32.mrf.mxu0
      %v2041 = vadd.f32 %v2015, %v2040
      %2042 = vmatmul.f32.gmra.mxu0 %v1996
      %v2043 = vpop.f32.mrf.mxu0
      %v2044 = vadd.f32 %v2015, %v2043
      %2045 = vdwg.mxu0
      %v2046 = vadd.f32 %v2035, %v1616
      %v2047 = vadd.f32 %v2038, %v1617
      %v2048 = vadd.f32 %v2041, %v1618
      %v2049 = vadd.f32 %v2044, %v1619
      %2050 = vst.msk [vmem:[%s413] sm:$0xff] %vm420, %v2046
      %2051 = vst.msk [vmem:[%s413 + $0x8] sm:$0xff] %vm420, %v2047
      %2052 = vst.msk [vmem:[%s413 + $0x10] sm:$0xff] %vm420, %v2048
      %2053 = vst.msk [vmem:[%s413 + $0x18] sm:$0xff] %vm420, %v2049
      %p2054 = scmp.lt.s32.totalorder %s23, 1
      %s2055 = scalar_select %p2054, %s23, 1
      %s2056 = smul.addr %s2055, 4
      %s2057 = smul.addr %s2056, 8
      %s2058 = scalar_lea.vmem %s12, %s2057
      // Predicated region
      $region69: #{esbn_forward.5} parent=67 // pred_check
        %p2059 = pneg %p298
      $region70: #{esbn_forward.5} parent=67 // pred_check_branch
        %2061 = sbr.rel (%p2059) target = $region72
      $region71: #{esbn_forward.5} parent=67 // pred_region
        _
      $region72: #{esbn_forward.5} parent=67 // pred_fallthru
        _
    $region68: #{esbn_forward.5} parent=5 // pred_fallthru
      _
    %p2062 = scmp.le.s32.totalorder 2, %s18
    // Predicated region
    $region73: #{esbn_forward.5} parent=5 // pred_check
      %p2063 = pneg %p2062
    $region74: #{esbn_forward.5} parent=5 // pred_check_branch
      %2065 = sbr.rel (%p2063) target = $region76
    $region75: #{esbn_forward.5} parent=5 // pred_region
      %s2066 = ssub.s32 %s18, 2
      // Predicated region
      $region77: #{esbn_forward.5} parent=75 // pred_check
        %p2067 = pneg %p304
      $region78: #{esbn_forward.5} parent=75 // pred_check_branch
        %2069 = sbr.rel (%p2067) target = $region80
      $region79: #{esbn_forward.5} parent=75 // pred_region
        %p2070 = scmp.lt.s32.totalorder %s24, 1
        %s2071 = scalar_select %p2070, %s24, 1
        %s2072 = smul.addr %s2071, 4
        %s2073 = smul.addr %s2072, 8
        %s2074 = scalar_lea.vmem %s12, %s2073
      $region80: #{esbn_forward.5} parent=75 // pred_fallthru
        _
    $region76: #{esbn_forward.5} parent=5 // pred_fallthru
      _
  $region6: #{esbn_forward.5} parent=0 // loop_footer
    %s22 = sadd.s32 1, %s18
  $region7: #{esbn_forward.5} parent=0 // loop_footer_branch
    %17 = sbr.rel target = $region3
  $region8: #{esbn_forward.5} parent=0 // loop_exit
    _

// kernel: esbn_forward.6
$region0: #{esbn_forward.6}
  #allocation0 [shape = 'u32[]', space=smem, size = 0x4, offset = 0x4, fixed_abs, tag = 'smem constant byte address 0x4 - core index']
  #allocation1 [shape = 'u32[72,128]{1,0:T(1,128)}', space=vmem, size = 0x9000, scoped, tag = 'internal scratch']
  %s0 = inlined_call_operand.vmem [shape: f32[2,32,64], index: 0, kind: input, shape index: {}]
  %s1 = inlined_call_operand.vmem [shape: f32[1,64], index: 1, kind: input, shape index: {}]
  %s2 = inlined_call_operand.vmem [shape: f32[1,64], index: 2, kind: input, shape index: {}]
  %s3 = inlined_call_operand.vmem [shape: f32[64,384], index: 3, kind: input, shape index: {}]
  %s4 = inlined_call_operand.vmem [shape: f32[128,64], index: 4, kind: input, shape index: {}]
  %s5 = inlined_call_operand.vmem [shape: f32[1,64], index: 5, kind: input, shape index: {}]
  %s6 = inlined_call_operand.vmem [shape: f32[1,64], index: 6, kind: input, shape index: {}]
  %s7 = inlined_call_operand.vmem [shape: f32[1,64], index: 7, kind: input, shape index: {}]
  %s8 = inlined_call_operand.vmem [shape: f32[64,256], index: 8, kind: input, shape index: {}]
  %s9 = inlined_call_operand.vmem [shape: f32[1,256], index: 9, kind: input, shape index: {}]
  %s10 = inlined_call_operand.vmem [shape: f32[256,64], index: 10, kind: input, shape index: {}]
  %s11 = inlined_call_operand.vmem [shape: f32[1,64], index: 11, kind: input, shape index: {}]
  %s12 = inlined_call_operand.vmem [shape: f32[2,32,64], index: 12, kind: output, shape index: {}]
  %s13 = sld [smem:[#allocation0]]
  $region81: #{esbn_forward.6} parent=0
    _
  %s15 = ssub.s32 1, %s13
  %s16 = scalar_select 0, %s15, %s13
  loop: start=0, step=1, limit=4
  $region2: #{esbn_forward.6} parent=0 // loop_pre_header
    _
  $region3: #{esbn_forward.6} parent=0 // loop_header
    %s18 = sphi 0, %s22
    %p19 = scmp.ge.s32.totalorder %s18, 4
    %s28 = sphi 0, %s30
    %s31 = sphi 0, %s28
    %s32 = sphi 0, %s31
    %s48 = sphi 0, %s32
    %s52 = sphi 0, %s52
    %s54 = sphi 0, %s52
    %s55 = sphi 0, %s54
    %s69 = sphi 0, %s55
    %s73 = sphi 0, %s73
    %s75 = sphi 0, %s73
    %s76 = sphi 0, %s75
    %s90 = sphi 0, %s76
    %s94 = sphi 0, %s94
    %s96 = sphi 0, %s94
    %s97 = sphi 0, %s96
    %s111 = sphi 0, %s97
    %s115 = sphi 0, %s115
    %s117 = sphi 0, %s115
    %s118 = sphi 0, %s117
    %s132 = sphi 0, %s118
    %s136 = sphi 0, %s136
    %s138 = sphi 0, %s136
    %s139 = sphi 0, %s138
    %s153 = sphi 0, %s139
    %s157 = sphi 0, %s157
    %s159 = sphi 0, %s157
    %s160 = sphi 0, %s159
    %s174 = sphi 0, %s160
    %s178 = sphi 0, %s178
    %s180 = sphi 0, %s178
    %s181 = sphi 0, %s180
    %s195 = sphi 0, %s181
    %s199 = sphi 0, %s199
    %s201 = sphi 0, %s199
    %s202 = sphi 0, %s201
    %s216 = sphi 0, %s202
    %s220 = sphi 0, %s220
    %s222 = sphi 0, %s220
    %s223 = sphi 0, %s222
    %s237 = sphi 0, %s223
    %s241 = sphi 0, %s241
    %s243 = sphi 0, %s241
    %s244 = sphi 0, %s243
    %s258 = sphi 0, %s244
    %s262 = sphi 0, %s262
    %s264 = sphi 0, %s262
    %s265 = sphi 0, %s264
    %s279 = sphi 0, %s265
    %s285 = sphi 0, %s287
    %s288 = sphi 0, %s285
    %s289 = sphi 0, %s288
    %s305 = sphi 0, %s289
  $region4: #{esbn_forward.6} parent=0 // loop_header_branch
    %21 = sbr.rel (%p19) target = $region8
  $region5: #{esbn_forward.6} parent=0 // loop_body
    %s23 = ssub.s32 %s18, 1
    %s24 = ssub.s32 %s18, 2
    %s25 = sadd.s32 %s18, 1
    %s26 = ssub.s32 %s18, %s25
    %p27 = scmp.eq.s32.totalorder %s26, 0
    %s29 = sadd.s32 %s28, 1
    %s30 = scalar_select %p27, %s28, %s29
    %p33 = pneg %p27
    %p34 = scmp.eq.s32.totalorder %s18, 1
    %p35 = por %p33, %p34
    %p36 = scmp.ne.s32.totalorder %s28, %s31
    %p37 = scmp.eq.s32.totalorder %s18, 0
    %p38 = por %p36, %p37
    %p39 = scmp.ne.s32.totalorder %s28, %s31
    %p40 = scmp.eq.s32.totalorder %s23, 1
    %p41 = por %p39, %p40
    %p42 = scmp.ne.s32.totalorder %s31, %s32
    %p43 = scmp.eq.s32.totalorder %s23, 0
    %p44 = por %p42, %p43
    %p45 = scmp.ne.s32.totalorder %s31, %s32
    %p46 = scmp.eq.s32.totalorder %s24, 1
    %p47 = por %p45, %p46
    %p49 = scmp.ne.s32.totalorder %s32, %s48
    %p50 = scmp.eq.s32.totalorder %s24, 0
    %p51 = por %p49, %p50
    %s53 = sadd.s32 %s52, 1
    %p56 = scmp.eq.s32.totalorder %s18, 1
    %p57 = scmp.ne.s32.totalorder %s52, %s54
    %p58 = scmp.eq.s32.totalorder %s18, 0
    %p59 = por %p57, %p58
    %p60 = scmp.ne.s32.totalorder %s52, %s54
    %p61 = scmp.eq.s32.totalorder %s23, 1
    %p62 = por %p60, %p61
    %p63 = scmp.ne.s32.totalorder %s54, %s55
    %p64 = scmp.eq.s32.totalorder %s23, 0
    %p65 = por %p63, %p64
    %p66 = scmp.ne.s32.totalorder %s54, %s55
    %p67 = scmp.eq.s32.totalorder %s24, 1
    %p68 = por %p66, %p67
    %p70 = scmp.ne.s32.totalorder %s55, %s69
    %p71 = scmp.eq.s32.totalorder %s24, 0
    %p72 = por %p70, %p71
    %s74 = sadd.s32 %s73, 1
    %p77 = scmp.eq.s32.totalorder %s18, 1
    %p78 = scmp.ne.s32.totalorder %s73, %s75
    %p79 = scmp.eq.s32.totalorder %s18, 0
    %p80 = por %p78, %p79
    %p81 = scmp.ne.s32.totalorder %s73, %s75
    %p82 = scmp.eq.s32.totalorder %s23, 1
    %p83 = por %p81, %p82
    %p84 = scmp.ne.s32.totalorder %s75, %s76
    %p85 = scmp.eq.s32.totalorder %s23, 0
    %p86 = por %p84, %p85
    %p87 = scmp.ne.s32.totalorder %s75, %s76
    %p88 = scmp.eq.s32.totalorder %s24, 1
    %p89 = por %p87, %p88
    %p91 = scmp.ne.s32.totalorder %s76, %s90
    %p92 = scmp.eq.s32.totalorder %s24, 0
    %p93 = por %p91, %p92
    %s95 = sadd.s32 %s94, 1
    %p98 = scmp.eq.s32.totalorder %s18, 1
    %p99 = scmp.ne.s32.totalorder %s94, %s96
    %p100 = scmp.eq.s32.totalorder %s18, 0
    %p101 = por %p99, %p100
    %p102 = scmp.ne.s32.totalorder %s94, %s96
    %p103 = scmp.eq.s32.totalorder %s23, 1
    %p104 = por %p102, %p103
    %p105 = scmp.ne.s32.totalorder %s96, %s97
    %p106 = scmp.eq.s32.totalorder %s23, 0
    %p107 = por %p105, %p106
    %p108 = scmp.ne.s32.totalorder %s96, %s97
    %p109 = scmp.eq.s32.totalorder %s24, 1
    %p110 = por %p108, %p109
    %p112 = scmp.ne.s32.totalorder %s97, %s111
    %p113 = scmp.eq.s32.totalorder %s24, 0
    %p114 = por %p112, %p113
    %s116 = sadd.s32 %s115, 1
    %p119 = scmp.eq.s32.totalorder %s18, 1
    %p120 = scmp.ne.s32.totalorder %s115, %s117
    %p121 = scmp.eq.s32.totalorder %s18, 0
    %p122 = por %p120, %p121
    %p123 = scmp.ne.s32.totalorder %s115, %s117
    %p124 = scmp.eq.s32.totalorder %s23, 1
    %p125 = por %p123, %p124
    %p126 = scmp.ne.s32.totalorder %s117, %s118
    %p127 = scmp.eq.s32.totalorder %s23, 0
    %p128 = por %p126, %p127
    %p129 = scmp.ne.s32.totalorder %s117, %s118
    %p130 = scmp.eq.s32.totalorder %s24, 1
    %p131 = por %p129, %p130
    %p133 = scmp.ne.s32.totalorder %s118, %s132
    %p134 = scmp.eq.s32.totalorder %s24, 0
    %p135 = por %p133, %p134
    %s137 = sadd.s32 %s136, 1
    %p140 = scmp.eq.s32.totalorder %s18, 1
    %p141 = scmp.ne.s32.totalorder %s136, %s138
    %p142 = scmp.eq.s32.totalorder %s18, 0
    %p143 = por %p141, %p142
    %p144 = scmp.ne.s32.totalorder %s136, %s138
    %p145 = scmp.eq.s32.totalorder %s23, 1
    %p146 = por %p144, %p145
    %p147 = scmp.ne.s32.totalorder %s138, %s139
    %p148 = scmp.eq.s32.totalorder %s23, 0
    %p149 = por %p147, %p148
    %p150 = scmp.ne.s32.totalorder %s138, %s139
    %p151 = scmp.eq.s32.totalorder %s24, 1
    %p152 = por %p150, %p151
    %p154 = scmp.ne.s32.totalorder %s139, %s153
    %p155 = scmp.eq.s32.totalorder %s24, 0
    %p156 = por %p154, %p155
    %s158 = sadd.s32 %s157, 1
    %p161 = scmp.eq.s32.totalorder %s18, 1
    %p162 = scmp.ne.s32.totalorder %s157, %s159
    %p163 = scmp.eq.s32.totalorder %s18, 0
    %p164 = por %p162, %p163
    %p165 = scmp.ne.s32.totalorder %s157, %s159
    %p166 = scmp.eq.s32.totalorder %s23, 1
    %p167 = por %p165, %p166
    %p168 = scmp.ne.s32.totalorder %s159, %s160
    %p169 = scmp.eq.s32.totalorder %s23, 0
    %p170 = por %p168, %p169
    %p171 = scmp.ne.s32.totalorder %s159, %s160
    %p172 = scmp.eq.s32.totalorder %s24, 1
    %p173 = por %p171, %p172
    %p175 = scmp.ne.s32.totalorder %s160, %s174
    %p176 = scmp.eq.s32.totalorder %s24, 0
    %p177 = por %p175, %p176
    %s179 = sadd.s32 %s178, 1
    %p182 = scmp.eq.s32.totalorder %s18, 1
    %p183 = scmp.ne.s32.totalorder %s178, %s180
    %p184 = scmp.eq.s32.totalorder %s18, 0
    %p185 = por %p183, %p184
    %p186 = scmp.ne.s32.totalorder %s178, %s180
    %p187 = scmp.eq.s32.totalorder %s23, 1
    %p188 = por %p186, %p187
    %p189 = scmp.ne.s32.totalorder %s180, %s181
    %p190 = scmp.eq.s32.totalorder %s23, 0
    %p191 = por %p189, %p190
    %p192 = scmp.ne.s32.totalorder %s180, %s181
    %p193 = scmp.eq.s32.totalorder %s24, 1
    %p194 = por %p192, %p193
    %p196 = scmp.ne.s32.totalorder %s181, %s195
    %p197 = scmp.eq.s32.totalorder %s24, 0
    %p198 = por %p196, %p197
    %s200 = sadd.s32 %s199, 1
    %p203 = scmp.eq.s32.totalorder %s18, 1
    %p204 = scmp.ne.s32.totalorder %s199, %s201
    %p205 = scmp.eq.s32.totalorder %s18, 0
    %p206 = por %p204, %p205
    %p207 = scmp.ne.s32.totalorder %s199, %s201
    %p208 = scmp.eq.s32.totalorder %s23, 1
    %p209 = por %p207, %p208
    %p210 = scmp.ne.s32.totalorder %s201, %s202
    %p211 = scmp.eq.s32.totalorder %s23, 0
    %p212 = por %p210, %p211
    %p213 = scmp.ne.s32.totalorder %s201, %s202
    %p214 = scmp.eq.s32.totalorder %s24, 1
    %p215 = por %p213, %p214
    %p217 = scmp.ne.s32.totalorder %s202, %s216
    %p218 = scmp.eq.s32.totalorder %s24, 0
    %p219 = por %p217, %p218
    %s221 = sadd.s32 %s220, 1
    %p224 = scmp.eq.s32.totalorder %s18, 1
    %p225 = scmp.ne.s32.totalorder %s220, %s222
    %p226 = scmp.eq.s32.totalorder %s18, 0
    %p227 = por %p225, %p226
    %p228 = scmp.ne.s32.totalorder %s220, %s222
    %p229 = scmp.eq.s32.totalorder %s23, 1
    %p230 = por %p228, %p229
    %p231 = scmp.ne.s32.totalorder %s222, %s223
    %p232 = scmp.eq.s32.totalorder %s23, 0
    %p233 = por %p231, %p232
    %p234 = scmp.ne.s32.totalorder %s222, %s223
    %p235 = scmp.eq.s32.totalorder %s24, 1
    %p236 = por %p234, %p235
    %p238 = scmp.ne.s32.totalorder %s223, %s237
    %p239 = scmp.eq.s32.totalorder %s24, 0
    %p240 = por %p238, %p239
    %s242 = sadd.s32 %s241, 1
    %p245 = scmp.eq.s32.totalorder %s18, 1
    %p246 = scmp.ne.s32.totalorder %s241, %s243
    %p247 = scmp.eq.s32.totalorder %s18, 0
    %p248 = por %p246, %p247
    %p249 = scmp.ne.s32.totalorder %s241, %s243
    %p250 = scmp.eq.s32.totalorder %s23, 1
    %p251 = por %p249, %p250
    %p252 = scmp.ne.s32.totalorder %s243, %s244
    %p253 = scmp.eq.s32.totalorder %s23, 0
    %p254 = por %p252, %p253
    %p255 = scmp.ne.s32.totalorder %s243, %s244
    %p256 = scmp.eq.s32.totalorder %s24, 1
    %p257 = por %p255, %p256
    %p259 = scmp.ne.s32.totalorder %s244, %s258
    %p260 = scmp.eq.s32.totalorder %s24, 0
    %p261 = por %p259, %p260
    %s263 = sadd.s32 %s262, 1
    %p266 = scmp.eq.s32.totalorder %s18, 1
    %p267 = scmp.ne.s32.totalorder %s262, %s264
    %p268 = scmp.eq.s32.totalorder %s18, 0
    %p269 = por %p267, %p268
    %p270 = scmp.ne.s32.totalorder %s262, %s264
    %p271 = scmp.eq.s32.totalorder %s23, 1
    %p272 = por %p270, %p271
    %p273 = scmp.ne.s32.totalorder %s264, %s265
    %p274 = scmp.eq.s32.totalorder %s23, 0
    %p275 = por %p273, %p274
    %p276 = scmp.ne.s32.totalorder %s264, %s265
    %p277 = scmp.eq.s32.totalorder %s24, 1
    %p278 = por %p276, %p277
    %p280 = scmp.ne.s32.totalorder %s265, %s279
    %p281 = scmp.eq.s32.totalorder %s24, 0
    %p282 = por %p280, %p281
    %s283 = ssub.s32 %s18, %s25
    %p284 = scmp.eq.s32.totalorder %s283, 0
    %s286 = sadd.s32 %s285, 1
    %s287 = scalar_select %p284, %s285, %s286
    %p290 = pneg %p284
    %p291 = scmp.eq.s32.totalorder %s18, 1
    %p292 = por %p290, %p291
    %p293 = scmp.ne.s32.totalorder %s285, %s288
    %p294 = scmp.eq.s32.totalorder %s18, 0
    %p295 = por %p293, %p294
    %p296 = scmp.ne.s32.totalorder %s285, %s288
    %p297 = scmp.eq.s32.totalorder %s23, 1
    %p298 = por %p296, %p297
    %p299 = scmp.ne.s32.totalorder %s288, %s289
    %p300 = scmp.eq.s32.totalorder %s23, 0
    %p301 = por %p299, %p300
    %p302 = scmp.ne.s32.totalorder %s288, %s289
    %p303 = scmp.eq.s32.totalorder %s24, 1
    %p304 = por %p302, %p303
    %p306 = scmp.ne.s32.totalorder %s289, %s305
    %p307 = scmp.eq.s32.totalorder %s24, 0
    %p308 = por %p306, %p307
    %p309 = scmp.le.s32.totalorder 1, %s18
    %p310 = scmp.lt.s32.totalorder %s18, 3
    %p311 = pnand %p309, %p310
    %p312 = pneg %p311
    // Predicated region
    $region9: #{esbn_forward.6} parent=5 // pred_check
      _
    $region10: #{esbn_forward.6} parent=5 // pred_check_branch
      %314 = sbr.rel (%p311) target = $region12
    $region11: #{esbn_forward.6} parent=5 // pred_region
      %s315 = ssub.s32 %s18, 1
      // Predicated region
      $region13: #{esbn_forward.6} parent=11 // pred_check
        %p316 = pneg %p65
      $region14: #{esbn_forward.6} parent=11 // pred_check_branch
        %318 = sbr.rel (%p316) target = $region16
      $region15: #{esbn_forward.6} parent=11 // pred_region
        _
      $region16: #{esbn_forward.6} parent=11 // pred_fallthru
        _
      // Predicated region
      $region17: #{esbn_forward.6} parent=11 // pred_check
        %p319 = pneg %p86
      $region18: #{esbn_forward.6} parent=11 // pred_check_branch
        %321 = sbr.rel (%p319) target = $region20
      $region19: #{esbn_forward.6} parent=11 // pred_region
        _
      $region20: #{esbn_forward.6} parent=11 // pred_fallthru
        _
      // Predicated region
      $region21: #{esbn_forward.6} parent=11 // pred_check
        %p322 = pneg %p107
      $region22: #{esbn_forward.6} parent=11 // pred_check_branch
        %324 = sbr.rel (%p322) target = $region24
      $region23: #{esbn_forward.6} parent=11 // pred_region
        _
      $region24: #{esbn_forward.6} parent=11 // pred_fallthru
        _
      // Predicated region
      $region25: #{esbn_forward.6} parent=11 // pred_check
        %p325 = pneg %p128
      $region26: #{esbn_forward.6} parent=11 // pred_check_branch
        %327 = sbr.rel (%p325) target = $region28
      $region27: #{esbn_forward.6} parent=11 // pred_region
        _
      $region28: #{esbn_forward.6} parent=11 // pred_fallthru
        _
      // Predicated region
      $region29: #{esbn_forward.6} parent=11 // pred_check
        %p328 = pneg %p149
      $region30: #{esbn_forward.6} parent=11 // pred_check_branch
        %330 = sbr.rel (%p328) target = $region32
      $region31: #{esbn_forward.6} parent=11 // pred_region
        _
      $region32: #{esbn_forward.6} parent=11 // pred_fallthru
        _
      // Predicated region
      $region33: #{esbn_forward.6} parent=11 // pred_check
        %p331 = pneg %p170
      $region34: #{esbn_forward.6} parent=11 // pred_check_branch
        %333 = sbr.rel (%p331) target = $region36
      $region35: #{esbn_forward.6} parent=11 // pred_region
        _
      $region36: #{esbn_forward.6} parent=11 // pred_fallthru
        _
      // Predicated region
      $region37: #{esbn_forward.6} parent=11 // pred_check
        %p334 = pneg %p191
      $region38: #{esbn_forward.6} parent=11 // pred_check_branch
        %336 = sbr.rel (%p334) target = $region40
      $region39: #{esbn_forward.6} parent=11 // pred_region
        _
      $region40: #{esbn_forward.6} parent=11 // pred_fallthru
        _
      // Predicated region
      $region41: #{esbn_forward.6} parent=11 // pred_check
        %p337 = pneg %p212
      $region42: #{esbn_forward.6} parent=11 // pred_check_branch
        %339 = sbr.rel (%p337) target = $region44
      $region43: #{esbn_forward.6} parent=11 // pred_region
        _
      $region44: #{esbn_forward.6} parent=11 // pred_fallthru
        _
      // Predicated region
      $region45: #{esbn_forward.6} parent=11 // pred_check
        %p340 = pneg %p233
      $region46: #{esbn_forward.6} parent=11 // pred_check_branch
        %342 = sbr.rel (%p340) target = $region48
      $region47: #{esbn_forward.6} parent=11 // pred_region
        _
      $region48: #{esbn_forward.6} parent=11 // pred_fallthru
        _
      // Predicated region
      $region49: #{esbn_forward.6} parent=11 // pred_check
        %p343 = pneg %p254
      $region50: #{esbn_forward.6} parent=11 // pred_check_branch
        %345 = sbr.rel (%p343) target = $region52
      $region51: #{esbn_forward.6} parent=11 // pred_region
        _
      $region52: #{esbn_forward.6} parent=11 // pred_fallthru
        _
      // Predicated region
      $region53: #{esbn_forward.6} parent=11 // pred_check
        %p346 = pneg %p275
      $region54: #{esbn_forward.6} parent=11 // pred_check_branch
        %348 = sbr.rel (%p346) target = $region56
      $region55: #{esbn_forward.6} parent=11 // pred_region
        _
      $region56: #{esbn_forward.6} parent=11 // pred_fallthru
        _
    $region12: #{esbn_forward.6} parent=5 // pred_fallthru
      _
    %p349 = scmp.lt.s32.totalorder %s18, 2
    // Predicated region
    $region57: #{esbn_forward.6} parent=5 // pred_check
      %p350 = pneg %p349
    $region58: #{esbn_forward.6} parent=5 // pred_check_branch
      %352 = sbr.rel (%p350) target = $region60
    $region59: #{esbn_forward.6} parent=5 // pred_region
      // Predicated region
      $region61: #{esbn_forward.6} parent=59 // pred_check
        %p353 = pneg %p38
      $region62: #{esbn_forward.6} parent=59 // pred_check_branch
        %355 = sbr.rel (%p353) target = $region64
      $region63: #{esbn_forward.6} parent=59 // pred_region
        %p356 = scmp.lt.s32.totalorder %s18, 1
        %s357 = scalar_select %p356, %s18, 1
        %s358 = smul.addr %s357, 4
        %s359 = smul.addr %s358, 8
        %s360 = scalar_lea.vmem %s0, %s359
      $region64: #{esbn_forward.6} parent=59 // pred_fallthru
        _
    $region60: #{esbn_forward.6} parent=5 // pred_fallthru
      _
    %p361 = scmp.le.s32.totalorder 1, %s18
    %p362 = scmp.lt.s32.totalorder %s18, 3
    %p363 = pnand %p361, %p362
    %p364 = pneg %p363
    // Predicated region
    $region65: #{esbn_forward.6} parent=5 // pred_check
      _
    $region66: #{esbn_forward.6} parent=5 // pred_check_branch
      %366 = sbr.rel (%p363) target = $region68
    $region67: #{esbn_forward.6} parent=5 // pred_region
      %s367 = ssub.s32 %s18, 1
      %p368 = scmp.lt.s32.totalorder %s23, 1
      %s369 = scalar_select %p368, %s23, 1
      %s370 = smul.addr %s369, 4
      %s371 = smul.addr %s370, 8
      %s372 = scalar_lea.vmem %s0, %s371
      %p373 = pneg %p44
      %p374 = pneg %p41
      %p375 = pneg %p65
      %p376 = pneg %p62
      %p377 = pneg %p86
      %p378 = pneg %p83
      %p379 = pneg %p107
      %p380 = pneg %p104
      %p381 = pneg %p128
      %p382 = pneg %p125
      %p383 = pneg %p149
      %p384 = pneg %p146
      %p385 = pneg %p170
      %p386 = pneg %p167
      %p387 = pneg %p191
      %p388 = pneg %p188
      %p389 = pneg %p212
      %p390 = pneg %p209
      %p391 = pneg %p233
      %p392 = pneg %p230
      %p393 = pneg %p254
      %p394 = pneg %p251
      %p395 = pneg %p275
      %p396 = pneg %p272
      %p397 = pneg %p301
      %p398 = pneg %p298
      %p399 = scmp.lt.s32.totalorder %s23, 1
      %s400 = scalar_select %p399, %s23, 1
      %s401 = smul.addr %s400, 4
      %s402 = smul.addr %s401, 8
      %s403 = scalar_lea.vmem %s12, %s402
      %p404 = scmp.lt.s32.totalorder %s23, 1
      %s405 = scalar_select %p404, %s23, 1
      %s406 = smul.addr %s405, 4
      %s407 = smul.addr %s406, 8
      %s408 = scalar_lea.vmem %s0, %s407
      %p409 = scmp.lt.s32.totalorder %s23, 1
      %s410 = scalar_select %p409, %s23, 1
      %s411 = smul.addr %s410, 4
      %s412 = smul.addr %s411, 8
      %s413 = scalar_lea.vmem %s12, %s412
      %v414 = vld [vmem:[%s408] sm:$0xff]
      %v415 = vld [vmem:[%s408 + $0x8] sm:$0xff]
      %v416 = vld [vmem:[%s408 + $0x10] sm:$0xff]
      %v417 = vld [vmem:[%s408 + $0x18] sm:$0xff]
      %v418 = vld [vmem:[%s1] sm:$0x1]
      %v419 = vld [vmem:[%s2] sm:$0x1]
      %vm420 = vcmask 261120
      %v421 = vsel %vm420, %v414, 0.0
      %422 = vadd.xlane.f32.xlu0 %v421
      %v423 = vpop.xlane.xlu0 %422
      %v424 = vsel %vm420, %v415, 0.0
      %425 = vadd.xlane.f32.xlu0 %v424
      %v426 = vpop.xlane.xlu0 %425
      %v427 = vsel %vm420, %v416, 0.0
      %428 = vadd.xlane.f32.xlu0 %v427
      %v429 = vpop.xlane.xlu0 %428
      %v430 = vsel %vm420, %v417, 0.0
      %431 = vadd.xlane.f32.xlu0 %v430
      %v432 = vpop.xlane.xlu0 %431
      %v433 = vrcp.pop 32.0
      %v434 = vmul.f32 32.0, %v433
      %v435 = vsub.f32 1.0, %v434
      %v436 = vmul.f32 %v433, %v435
      %v437 = vadd.f32 %v433, %v436
      %vm438 = vweird.f32 %v433
      %v439 = vsel %vm438, %v433, %v437
      %v440 = vmul.f32 %v423, %v439
      %v441 = vmul.f32 %v426, %v439
      %v442 = vmul.f32 %v429, %v439
      %v443 = vmul.f32 %v432, %v439
      %v444 = vsub.f32 %v414, %v440
      %v445 = vsub.f32 %v415, %v441
      %v446 = vsub.f32 %v416, %v442
      %v447 = vsub.f32 %v417, %v443
      %v448 = vmul.f32 %v444, %v444
      %v449 = vmul.f32 %v445, %v445
      %v450 = vmul.f32 %v446, %v446
      %v451 = vmul.f32 %v447, %v447
      %v452 = vsel %vm420, %v448, 0.0
      %453 = vadd.xlane.f32.xlu0 %v452
      %v454 = vpop.xlane.xlu0 %453
      %v455 = vsel %vm420, %v449, 0.0
      %456 = vadd.xlane.f32.xlu0 %v455
      %v457 = vpop.xlane.xlu0 %456
      %v458 = vsel %vm420, %v450, 0.0
      %459 = vadd.xlane.f32.xlu0 %v458
      %v460 = vpop.xlane.xlu0 %459
      %v461 = vsel %vm420, %v451, 0.0
      %462 = vadd.xlane.f32.xlu0 %v461
      %v463 = vpop.xlane.xlu0 %462
      %v464 = vmul.f32 %v454, %v439
      %v465 = vmul.f32 %v457, %v439
      %v466 = vmul.f32 %v460, %v439
      %v467 = vmul.f32 %v463, %v439
      %v468 = vrsqrt.pop %v464
      %v469 = vmul.f32 %v468, %v464
      %v470 = vmul.f32 %v469, %v468
      %v471 = vmul.f32 0.5, %v470
      %v472 = vsub.f32 1.5, %v471
      %v473 = vmul.f32 %v468, %v472
      %v474 = vmul.f32 %v464, %v473
      %vm475 = vcmp.eq.f32.partialorder %v464, inf
      %v476 = vsel %vm475, %v464, %v474
      %vm477 = vcmp.eq.f32.partialorder %v464, 0.0
      %v478 = vand.u32 %v464, 2147483648
      %v479 = vsel %vm477, %v478, %v476
      %v480 = vrsqrt.pop %v465
      %v481 = vmul.f32 %v480, %v465
      %v482 = vmul.f32 %v481, %v480
      %v483 = vmul.f32 0.5, %v482
      %v484 = vsub.f32 1.5, %v483
      %v485 = vmul.f32 %v480, %v484
      %v486 = vmul.f32 %v465, %v485
      %vm487 = vcmp.eq.f32.partialorder %v465, inf
      %v488 = vsel %vm487, %v465, %v486
      %vm489 = vcmp.eq.f32.partialorder %v465, 0.0
      %v490 = vand.u32 %v465, 2147483648
      %v491 = vsel %vm489, %v490, %v488
      %v492 = vrsqrt.pop %v466
      %v493 = vmul.f32 %v492, %v466
      %v494 = vmul.f32 %v493, %v492
      %v495 = vmul.f32 0.5, %v494
      %v496 = vsub.f32 1.5, %v495
      %v497 = vmul.f32 %v492, %v496
      %v498 = vmul.f32 %v466, %v497
      %vm499 = vcmp.eq.f32.partialorder %v466, inf
      %v500 = vsel %vm499, %v466, %v498
      %vm501 = vcmp.eq.f32.partialorder %v466, 0.0
      %v502 = vand.u32 %v466, 2147483648
      %v503 = vsel %vm501, %v502, %v500
      %v504 = vrsqrt.pop %v467
      %v505 = vmul.f32 %v504, %v467
      %v506 = vmul.f32 %v505, %v504
      %v507 = vmul.f32 0.5, %v506
      %v508 = vsub.f32 1.5, %v507
      %v509 = vmul.f32 %v504, %v508
      %v510 = vmul.f32 %v467, %v509
      %vm511 = vcmp.eq.f32.partialorder %v467, inf
      %v512 = vsel %vm511, %v467, %v510
      %vm513 = vcmp.eq.f32.partialorder %v467, 0.0
      %v514 = vand.u32 %v467, 2147483648
      %v515 = vsel %vm513, %v514, %v512
      %v516 = vadd.f32 %v479, 1e-05
      %v517 = vadd.f32 %v491, 1e-05
      %v518 = vadd.f32 %v503, 1e-05
      %v519 = vadd.f32 %v515, 1e-05
      %v520 = vrcp.pop %v516
      %v521 = vmul.f32 %v516, %v520
      %v522 = vsub.f32 1.0, %v521
      %v523 = vmul.f32 %v520, %v522
      %v524 = vadd.f32 %v520, %v523
      %vm525 = vweird.f32 %v516
      %vm526 = vweird.f32 %v520
      %vm527 = vmor %vm525, %vm526
      %v528 = vsel %vm527, %v520, %v524
      %v529 = vand.u32 2147483647, %v516
      %vm530 = vcmp.eq.f32.partialorder %v529, 8.507059e+37
      %v531 = vand.u32 %v516, 2147483648
      %v532 = vor.u32 1.1754944e-38, %v531
      %v533 = vsel %vm530, %v532, %v528
      %v534 = vmul.f32 %v444, %v533
      %v535 = vrcp.pop %v517
      %v536 = vmul.f32 %v517, %v535
      %v537 = vsub.f32 1.0, %v536
      %v538 = vmul.f32 %v535, %v537
      %v539 = vadd.f32 %v535, %v538
      %vm540 = vweird.f32 %v517
      %vm541 = vweird.f32 %v535
      %vm542 = vmor %vm540, %vm541
      %v543 = vsel %vm542, %v535, %v539
      %v544 = vand.u32 2147483647, %v517
      %vm545 = vcmp.eq.f32.partialorder %v544, 8.507059e+37
      %v546 = vand.u32 %v517, 2147483648
      %v547 = vor.u32 1.1754944e-38, %v546
      %v548 = vsel %vm545, %v547, %v543
      %v549 = vmul.f32 %v445, %v548
      %v550 = vrcp.pop %v518
      %v551 = vmul.f32 %v518, %v550
      %v552 = vsub.f32 1.0, %v551
      %v553 = vmul.f32 %v550, %v552
      %v554 = vadd.f32 %v550, %v553
      %vm555 = vweird.f32 %v518
      %vm556 = vweird.f32 %v550
      %vm557 = vmor %vm555, %vm556
      %v558 = vsel %vm557, %v550, %v554
      %v559 = vand.u32 2147483647, %v518
      %vm560 = vcmp.eq.f32.partialorder %v559, 8.507059e+37
      %v561 = vand.u32 %v518, 2147483648
      %v562 = vor.u32 1.1754944e-38, %v561
      %v563 = vsel %vm560, %v562, %v558
      %v564 = vmul.f32 %v446, %v563
      %v565 = vrcp.pop %v519
      %v566 = vmul.f32 %v519, %v565
      %v567 = vsub.f32 1.0, %v566
      %v568 = vmul.f32 %v565, %v567
      %v569 = vadd.f32 %v565, %v568
      %vm570 = vweird.f32 %v519
      %vm571 = vweird.f32 %v565
      %vm572 = vmor %vm570, %vm571
      %v573 = vsel %vm572, %v565, %v569
      %v574 = vand.u32 2147483647, %v519
      %vm575 = vcmp.eq.f32.partialorder %v574, 8.507059e+37
      %v576 = vand.u32 %v519, 2147483648
      %v577 = vor.u32 1.1754944e-38, %v576
      %v578 = vsel %vm575, %v577, %v573
      %v579 = vmul.f32 %v447, %v578
      %584 = vrot.lane.b32.xlu0 %v414, 96
      %v585 = vpop.permute.xlu0 %584
      %586 = vrot.lane.b32.xlu0 %v415, 96
      %v587 = vpop.permute.xlu0 %586
      %588 = vrot.lane.b32.xlu0 %v416, 96
      %v589 = vpop.permute.xlu0 %588
      %590 = vrot.lane.b32.xlu0 %v417, 96
      %v591 = vpop.permute.xlu0 %590
      %v596 = vsel %vm420, %v585, 0.0
      %597 = vadd.xlane.f32.xlu0 %v596
      %v598 = vpop.xlane.xlu0 %597
      %v599 = vsel %vm420, %v587, 0.0
      %600 = vadd.xlane.f32.xlu0 %v599
      %v601 = vpop.xlane.xlu0 %600
      %v602 = vsel %vm420, %v589, 0.0
      %603 = vadd.xlane.f32.xlu0 %v602
      %v604 = vpop.xlane.xlu0 %603
      %v605 = vsel %vm420, %v591, 0.0
      %606 = vadd.xlane.f32.xlu0 %v605
      %v607 = vpop.xlane.xlu0 %606
      %v608 = vmul.f32 %v598, %v439
      %v609 = vmul.f32 %v601, %v439
      %v610 = vmul.f32 %v604, %v439
      %v611 = vmul.f32 %v607, %v439
      %v612 = vsub.f32 %v414, %v608
      %v613 = vsub.f32 %v415, %v609
      %v614 = vsub.f32 %v416, %v610
      %v615 = vsub.f32 %v417, %v611
      %v616 = vmul.f32 %v612, %v612
      %v617 = vmul.f32 %v613, %v613
      %v618 = vmul.f32 %v614, %v614
      %v619 = vmul.f32 %v615, %v615
      %624 = vrot.lane.b32.xlu0 %v616, 96
      %v625 = vpop.permute.xlu0 %624
      %626 = vrot.lane.b32.xlu0 %v617, 96
      %v627 = vpop.permute.xlu0 %626
      %628 = vrot.lane.b32.xlu0 %v618, 96
      %v629 = vpop.permute.xlu0 %628
      %630 = vrot.lane.b32.xlu0 %v619, 96
      %v631 = vpop.permute.xlu0 %630
      %v636 = vsel %vm420, %v625, 0.0
      %637 = vadd.xlane.f32.xlu0 %v636
      %v638 = vpop.xlane.xlu0 %637
      %v639 = vsel %vm420, %v627, 0.0
      %640 = vadd.xlane.f32.xlu0 %v639
      %v641 = vpop.xlane.xlu0 %640
      %v642 = vsel %vm420, %v629, 0.0
      %643 = vadd.xlane.f32.xlu0 %v642
      %v644 = vpop.xlane.xlu0 %643
      %v645 = vsel %vm420, %v631, 0.0
      %646 = vadd.xlane.f32.xlu0 %v645
      %v647 = vpop.xlane.xlu0 %646
      %v648 = vmul.f32 %v638, %v439
      %v649 = vmul.f32 %v641, %v439
      %v650 = vmul.f32 %v644, %v439
      %v651 = vmul.f32 %v647, %v439
      %v652 = vrsqrt.pop %v648
      %v653 = vmul.f32 %v652, %v648
      %v654 = vmul.f32 %v653, %v652
      %v655 = vmul.f32 0.5, %v654
      %v656 = vsub.f32 1.5, %v655
      %v657 = vmul.f32 %v652, %v656
      %v658 = vmul.f32 %v648, %v657
      %vm659 = vcmp.eq.f32.partialorder %v648, inf
      %v660 = vsel %vm659, %v648, %v658
      %vm661 = vcmp.eq.f32.partialorder %v648, 0.0
      %v662 = vand.u32 %v648, 2147483648
      %v663 = vsel %vm661, %v662, %v660
      %v664 = vrsqrt.pop %v649
      %v665 = vmul.f32 %v664, %v649
      %v666 = vmul.f32 %v665, %v664
      %v667 = vmul.f32 0.5, %v666
      %v668 = vsub.f32 1.5, %v667
      %v669 = vmul.f32 %v664, %v668
      %v670 = vmul.f32 %v649, %v669
      %vm671 = vcmp.eq.f32.partialorder %v649, inf
      %v672 = vsel %vm671, %v649, %v670
      %vm673 = vcmp.eq.f32.partialorder %v649, 0.0
      %v674 = vand.u32 %v649, 2147483648
      %v675 = vsel %vm673, %v674, %v672
      %v676 = vrsqrt.pop %v650
      %v677 = vmul.f32 %v676, %v650
      %v678 = vmul.f32 %v677, %v676
      %v679 = vmul.f32 0.5, %v678
      %v680 = vsub.f32 1.5, %v679
      %v681 = vmul.f32 %v676, %v680
      %v682 = vmul.f32 %v650, %v681
      %vm683 = vcmp.eq.f32.partialorder %v650, inf
      %v684 = vsel %vm683, %v650, %v682
      %vm685 = vcmp.eq.f32.partialorder %v650, 0.0
      %v686 = vand.u32 %v650, 2147483648
      %v687 = vsel %vm685, %v686, %v684
      %v688 = vrsqrt.pop %v651
      %v689 = vmul.f32 %v688, %v651
      %v690 = vmul.f32 %v689, %v688
      %v691 = vmul.f32 0.5, %v690
      %v692 = vsub.f32 1.5, %v691
      %v693 = vmul.f32 %v688, %v692
      %v694 = vmul.f32 %v651, %v693
      %vm695 = vcmp.eq.f32.partialorder %v651, inf
      %v696 = vsel %vm695, %v651, %v694
      %vm697 = vcmp.eq.f32.partialorder %v651, 0.0
      %v698 = vand.u32 %v651, 2147483648
      %v699 = vsel %vm697, %v698, %v696
      %v700 = vadd.f32 %v663, 1e-05
      %v701 = vadd.f32 %v675, 1e-05
      %v702 = vadd.f32 %v687, 1e-05
      %v703 = vadd.f32 %v699, 1e-05
      %v704 = vrcp.pop %v700
      %v705 = vmul.f32 %v700, %v704
      %v706 = vsub.f32 1.0, %v705
      %v707 = vmul.f32 %v704, %v706
      %v708 = vadd.f32 %v704, %v707
      %vm709 = vweird.f32 %v700
      %vm710 = vweird.f32 %v704
      %vm711 = vmor %vm709, %vm710
      %v712 = vsel %vm711, %v704, %v708
      %v713 = vand.u32 2147483647, %v700
      %vm714 = vcmp.eq.f32.partialorder %v713, 8.507059e+37
      %v715 = vand.u32 %v700, 2147483648
      %v716 = vor.u32 1.1754944e-38, %v715
      %v717 = vsel %vm714, %v716, %v712
      %v718 = vmul.f32 %v612, %v717
      %v719 = vrcp.pop %v701
      %v720 = vmul.f32 %v701, %v719
      %v721 = vsub.f32 1.0, %v720
      %v722 = vmul.f32 %v719, %v721
      %v723 = vadd.f32 %v719, %v722
      %vm724 = vweird.f32 %v701
      %vm725 = vweird.f32 %v719
      %vm726 = vmor %vm724, %vm725
      %v727 = vsel %vm726, %v719, %v723
      %v728 = vand.u32 2147483647, %v701
      %vm729 = vcmp.eq.f32.partialorder %v728, 8.507059e+37
      %v730 = vand.u32 %v701, 2147483648
      %v731 = vor.u32 1.1754944e-38, %v730
      %v732 = vsel %vm729, %v731, %v727
      %v733 = vmul.f32 %v613, %v732
      %v734 = vrcp.pop %v702
      %v735 = vmul.f32 %v702, %v734
      %v736 = vsub.f32 1.0, %v735
      %v737 = vmul.f32 %v734, %v736
      %v738 = vadd.f32 %v734, %v737
      %vm739 = vweird.f32 %v702
      %vm740 = vweird.f32 %v734
      %vm741 = vmor %vm739, %vm740
      %v742 = vsel %vm741, %v734, %v738
      %v743 = vand.u32 2147483647, %v702
      %vm744 = vcmp.eq.f32.partialorder %v743, 8.507059e+37
      %v745 = vand.u32 %v702, 2147483648
      %v746 = vor.u32 1.1754944e-38, %v745
      %v747 = vsel %vm744, %v746, %v742
      %v748 = vmul.f32 %v614, %v747
      %v749 = vrcp.pop %v703
      %v750 = vmul.f32 %v703, %v749
      %v751 = vsub.f32 1.0, %v750
      %v752 = vmul.f32 %v749, %v751
      %v753 = vadd.f32 %v749, %v752
      %vm754 = vweird.f32 %v703
      %vm755 = vweird.f32 %v749
      %vm756 = vmor %vm754, %vm755
      %v757 = vsel %vm756, %v749, %v753
      %v758 = vand.u32 2147483647, %v703
      %vm759 = vcmp.eq.f32.partialorder %v758, 8.507059e+37
      %v760 = vand.u32 %v703, 2147483648
      %v761 = vor.u32 1.1754944e-38, %v760
      %v762 = vsel %vm759, %v761, %v757
      %v763 = vmul.f32 %v615, %v762
      %v764 = vsel %vm420, %v534, %v718
      %v765 = vsel %vm420, %v549, %v733
      %v766 = vsel %vm420, %v564, %v748
      %v767 = vsel %vm420, %v579, %v763
      %v769 = vperm.slane %v418, 0
      %v771 = vmul.f32 %v764, %v769
      %v772 = vmul.f32 %v765, %v769
      %v773 = vmul.f32 %v766, %v769
      %v774 = vmul.f32 %v767, %v769
      %v776 = vperm.slane %v419, 0
      %v778 = vadd.f32 %v771, %v776
      %v779 = vadd.f32 %v772, %v776
      %v780 = vadd.f32 %v773, %v776
      %v781 = vadd.f32 %v774, %v776
      %v782 = vld [vmem:[%s3] sm:$0xff]
      %v783 = vld [vmem:[%s3 + $0x8] sm:$0xff]
      %v784 = vld [vmem:[%s3 + $0x10] sm:$0xff]
      %v785 = vld [vmem:[%s3 + $0x18] sm:$0xff]
      %v786 = vld [vmem:[%s3 + $0x20] sm:$0xff]
      %v787 = vld [vmem:[%s3 + $0x28] sm:$0xff]
      %v788 = vld [vmem:[%s3 + $0x30] sm:$0xff]
      %v789 = vld [vmem:[%s3 + $0x38] sm:$0xff]
      %v790 = vld [vmem:[%s3 + $0x40] sm:$0xff]
      %v791 = vld [vmem:[%s3 + $0x48] sm:$0xff]
      %v792 = vld [vmem:[%s3 + $0x50] sm:$0xff]
      %v793 = vld [vmem:[%s3 + $0x58] sm:$0xff]
      %v794 = vld [vmem:[%s3 + $0x60] sm:$0xff]
      %v795 = vld [vmem:[%s3 + $0x68] sm:$0xff]
      %v796 = vld [vmem:[%s3 + $0x70] sm:$0xff]
      %v797 = vld [vmem:[%s3 + $0x78] sm:$0xff]
      %v798 = vld [vmem:[%s3 + $0x80] sm:$0xff]
      %v799 = vld [vmem:[%s3 + $0x88] sm:$0xff]
      %v800 = vld [vmem:[%s3 + $0x90] sm:$0xff]
      %v801 = vld [vmem:[%s3 + $0x98] sm:$0xff]
      %v802 = vld [vmem:[%s3 + $0xa0] sm:$0xff]
      %v803 = vld [vmem:[%s3 + $0xa8] sm:$0xff]
      %v804 = vld [vmem:[%s3 + $0xb0] sm:$0xff]
      %v805 = vld [vmem:[%s3 + $0xb8] sm:$0xff]
      %vm806 = vcmask 523264
      %v808 = vsel %vm806, %v778, 0
      %v811 = vsel %vm806, %v779, 0
      %v814 = vsel %vm806, %v780, 0
      %v817 = vsel %vm806, %v781, 0
      %819 = vmatpush.msra.mxu0 0.0
      %820 = vmatpush.msra.mxu0 0.0
      %821 = vmatpush.msra.mxu0 0.0
      %822 = vmatpush.msra.mxu0 0.0
      %823 = vmatpush.msra.mxu0 0.0
      %824 = vmatpush.msra.mxu0 0.0
      %825 = vmatpush.msra.mxu0 0.0
      %826 = vmatpush.msra.mxu0 0.0
      %827 = vmatpush.msra.mxu0 %v803
      %828 = vmatpush.msra.mxu0 %v800
      %829 = vmatpush.msra.mxu0 %v797
      %830 = vmatpush.msra.mxu0 %v794
      %831 = vmatpush.msra.mxu0 %v791
      %832 = vmatpush.msra.mxu0 %v788
      %833 = vmatpush.msra.mxu0 %v785
      %834 = vmatpush.msra.mxu0 %v782
      %835 = vmatmul.f32.gmra.mxu0 %v808
      %v836 = vpop.f32.mrf.mxu0
      %v837 = vadd.f32 0.0, %v836
      %838 = vmatmul.f32.gmra.mxu0 %v811
      %v839 = vpop.f32.mrf.mxu0
      %v840 = vadd.f32 0.0, %v839
      %841 = vmatmul.f32.gmra.mxu0 %v814
      %v842 = vpop.f32.mrf.mxu0
      %v843 = vadd.f32 0.0, %v842
      %844 = vmatmul.f32.gmra.mxu0 %v817
      %v845 = vpop.f32.mrf.mxu0
      %v846 = vadd.f32 0.0, %v845
      %847 = vdwg.mxu0
      %848 = vmatpush.msra.mxu0 0.0
      %849 = vmatpush.msra.mxu0 0.0
      %850 = vmatpush.msra.mxu0 0.0
      %851 = vmatpush.msra.mxu0 0.0
      %852 = vmatpush.msra.mxu0 0.0
      %853 = vmatpush.msra.mxu0 0.0
      %854 = vmatpush.msra.mxu0 0.0
      %855 = vmatpush.msra.mxu0 0.0
      %856 = vmatpush.msra.mxu0 %v804
      %857 = vmatpush.msra.mxu0 %v801
      %858 = vmatpush.msra.mxu0 %v798
      %859 = vmatpush.msra.mxu0 %v795
      %860 = vmatpush.msra.mxu0 %v792
      %861 = vmatpush.msra.mxu0 %v789
      %862 = vmatpush.msra.mxu0 %v786
      %863 = vmatpush.msra.mxu0 %v783
      %864 = vmatmul.f32.gmra.mxu0 %v808
      %v865 = vpop.f32.mrf.mxu0
      %v866 = vadd.f32 0.0, %v865
      %867 = vmatmul.f32.gmra.mxu0 %v811
      %v868 = vpop.f32.mrf.mxu0
      %v869 = vadd.f32 0.0, %v868
      %870 = vmatmul.f32.gmra.mxu0 %v814
      %v871 = vpop.f32.mrf.mxu0
      %v872 = vadd.f32 0.0, %v871
      %873 = vmatmul.f32.gmra.mxu0 %v817
      %v874 = vpop.f32.mrf.mxu0
      %v875 = vadd.f32 0.0, %v874
      %876 = vdwg.mxu0
      %877 = vmatpush.msra.mxu0 0.0
      %878 = vmatpush.msra.mxu0 0.0
      %879 = vmatpush.msra.mxu0 0.0
      %880 = vmatpush.msra.mxu0 0.0
      %881 = vmatpush.msra.mxu0 0.0
      %882 = vmatpush.msra.mxu0 0.0
      %883 = vmatpush.msra.mxu0 0.0
      %884 = vmatpush.msra.mxu0 0.0
      %885 = vmatpush.msra.mxu0 %v805
      %886 = vmatpush.msra.mxu0 %v802
      %887 = vmatpush.msra.mxu0 %v799
      %888 = vmatpush.msra.mxu0 %v796
      %889 = vmatpush.msra.mxu0 %v793
      %890 = vmatpush.msra.mxu0 %v790
      %891 = vmatpush.msra.mxu0 %v787
      %892 = vmatpush.msra.mxu0 %v784
      %893 = vmatmul.f32.gmra.mxu0 %v808
      %v894 = vpop.f32.mrf.mxu0
      %v895 = vadd.f32 0.0, %v894
      %896 = vmatmul.f32.gmra.mxu0 %v811
      %v897 = vpop.f32.mrf.mxu0
      %v898 = vadd.f32 0.0, %v897
      %899 = vmatmul.f32.gmra.mxu0 %v814
      %v900 = vpop.f32.mrf.mxu0
      %v901 = vadd.f32 0.0, %v900
      %902 = vmatmul.f32.gmra.mxu0 %v817
      %v903 = vpop.f32.mrf.mxu0
      %v904 = vadd.f32 0.0, %v903
      %905 = vdwg.mxu0
      %vm906 = vcmask 130048
      %v908 = vsel %vm906, %v837, 0
      %v911 = vsel %vm906, %v840, 0
      %v914 = vsel %vm906, %v843, 0
      %v917 = vsel %vm906, %v846, 0
      %v920 = vsel %vm906, %v866, 0
      %v923 = vsel %vm906, %v869, 0
      %v926 = vsel %vm906, %v872, 0
      %v929 = vsel %vm906, %v875, 0
      %931 = vmatpush.xpose.msra.mxu0 0.0
      %932 = vmatpush.xpose.msra.mxu0 0.0
      %933 = vmatpush.xpose.msra.mxu0 0.0
      %934 = vmatpush.xpose.msra.mxu0 0.0
      %935 = vmatpush.xpose.msra.mxu0 0.0
      %936 = vmatpush.xpose.msra.mxu0 0.0
      %937 = vmatpush.xpose.msra.mxu0 0.0
      %938 = vmatpush.xpose.msra.mxu0 0.0
      %939 = vmatpush.xpose.msra.mxu0 0.0
      %940 = vmatpush.xpose.msra.mxu0 0.0
      %941 = vmatpush.xpose.msra.mxu0 0.0
      %942 = vmatpush.xpose.msra.mxu0 0.0
      %943 = vmatpush.xpose.msra.mxu0 %v929
      %944 = vmatpush.xpose.msra.mxu0 %v926
      %945 = vmatpush.xpose.msra.mxu0 %v923
      %946 = vmatpush.xpose.msra.mxu0 %v920
      %947 = vmatmul.f32.gmra.mxu0 %v908
      %v948 = vpop.f32.mrf.mxu0
      %v949 = vadd.f32 0.0, %v948
      %950 = vmatmul.f32.gmra.mxu0 %v911
      %v951 = vpop.f32.mrf.mxu0
      %v952 = vadd.f32 0.0, %v951
      %953 = vmatmul.f32.gmra.mxu0 %v914
      %v954 = vpop.f32.mrf.mxu0
      %v955 = vadd.f32 0.0, %v954
      %956 = vmatmul.f32.gmra.mxu0 %v917
      %v957 = vpop.f32.mrf.mxu0
      %v958 = vadd.f32 0.0, %v957
      %959 = vdwg.mxu0
      %v960 = vsel %vm420, %v949, -inf
      %961 = vmax.xlane.f32.xlu0 %v960
      %v962 = vpop.xlane.xlu0 %961
      %v963 = vsel %vm420, %v952, -inf
      %964 = vmax.xlane.f32.xlu0 %v963
      %v965 = vpop.xlane.xlu0 %964
      %v966 = vsel %vm420, %v955, -inf
      %967 = vmax.xlane.f32.xlu0 %v966
      %v968 = vpop.xlane.xlu0 %967
      %v969 = vsel %vm420, %v958, -inf
      %970 = vmax.xlane.f32.xlu0 %v969
      %v971 = vpop.xlane.xlu0 %970
      %v972 = vsub.f32 %v949, %v962
      %v973 = vsub.f32 %v952, %v965
      %v974 = vsub.f32 %v955, %v968
      %v975 = vsub.f32 %v958, %v971
      %v976 = vmul.f32 %v972, 1.442695
      %v977 = vpow.pop %v976
      %v978 = vmul.f32 %v973, 1.442695
      %v979 = vpow.pop %v978
      %v980 = vmul.f32 %v974, 1.442695
      %v981 = vpow.pop %v980
      %v982 = vmul.f32 %v975, 1.442695
      %v983 = vpow.pop %v982
      %v984 = vsel %vm420, %v977, 0.0
      %985 = vadd.xlane.f32.xlu0 %v984
      %v986 = vpop.xlane.xlu0 %985
      %v987 = vsel %vm420, %v979, 0.0
      %988 = vadd.xlane.f32.xlu0 %v987
      %v989 = vpop.xlane.xlu0 %988
      %v990 = vsel %vm420, %v981, 0.0
      %991 = vadd.xlane.f32.xlu0 %v990
      %v992 = vpop.xlane.xlu0 %991
      %v993 = vsel %vm420, %v983, 0.0
      %994 = vadd.xlane.f32.xlu0 %v993
      %v995 = vpop.xlane.xlu0 %994
      %v996 = vrcp.pop %v986
      %v997 = vmul.f32 %v986, %v996
      %v998 = vsub.f32 1.0, %v997
      %v999 = vmul.f32 %v996, %v998
      %v1000 = vadd.f32 %v996, %v999
      %vm1001 = vweird.f32 %v986
      %vm1002 = vweird.f32 %v996
      %vm1003 = vmor %vm1001, %vm1002
      %v1004 = vsel %vm1003, %v996, %v1000
      %v1005 = vand.u32 2147483647, %v986
      %vm1006 = vcmp.eq.f32.partialorder %v1005, 8.507059e+37
      %v1007 = vand.u32 %v986, 2147483648
      %v1008 = vor.u32 1.1754944e-38, %v1007
      %v1009 = vsel %vm1006, %v1008, %v1004
      %v1010 = vrcp.pop %v989
      %v1011 = vmul.f32 %v989, %v1010
      %v1012 = vsub.f32 1.0, %v1011
      %v1013 = vmul.f32 %v1010, %v1012
      %v1014 = vadd.f32 %v1010, %v1013
      %vm1015 = vweird.f32 %v989
      %vm1016 = vweird.f32 %v1010
      %vm1017 = vmor %vm1015, %vm1016
      %v1018 = vsel %vm1017, %v1010, %v1014
      %v1019 = vand.u32 2147483647, %v989
      %vm1020 = vcmp.eq.f32.partialorder %v1019, 8.507059e+37
      %v1021 = vand.u32 %v989, 2147483648
      %v1022 = vor.u32 1.1754944e-38, %v1021
      %v1023 = vsel %vm1020, %v1022, %v1018
      %v1024 = vrcp.pop %v992
      %v1025 = vmul.f32 %v992, %v1024
      %v1026 = vsub.f32 1.0, %v1025
      %v1027 = vmul.f32 %v1024, %v1026
      %v1028 = vadd.f32 %v1024, %v1027
      %vm1029 = vweird.f32 %v992
      %vm1030 = vweird.f32 %v1024
      %vm1031 = vmor %vm1029, %vm1030
      %v1032 = vsel %vm1031, %v1024, %v1028
      %v1033 = vand.u32 2147483647, %v992
      %vm1034 = vcmp.eq.f32.partialorder %v1033, 8.507059e+37
      %v1035 = vand.u32 %v992, 2147483648
      %v1036 = vor.u32 1.1754944e-38, %v1035
      %v1037 = vsel %vm1034, %v1036, %v1032
      %v1038 = vrcp.pop %v995
      %v1039 = vmul.f32 %v995, %v1038
      %v1040 = vsub.f32 1.0, %v1039
      %v1041 = vmul.f32 %v1038, %v1040
      %v1042 = vadd.f32 %v1038, %v1041
      %vm1043 = vweird.f32 %v995
      %vm1044 = vweird.f32 %v1038
      %vm1045 = vmor %vm1043, %vm1044
      %v1046 = vsel %vm1045, %v1038, %v1042
      %v1047 = vand.u32 2147483647, %v995
      %vm1048 = vcmp.eq.f32.partialorder %v1047, 8.507059e+37
      %v1049 = vand.u32 %v995, 2147483648
      %v1050 = vor.u32 1.1754944e-38, %v1049
      %v1051 = vsel %vm1048, %v1050, %v1046
      %v1052 = vmul.f32 %v977, %v1009
      %v1053 = vmul.f32 %v979, %v1023
      %v1054 = vmul.f32 %v981, %v1037
      %v1055 = vmul.f32 %v983, %v1051
      %v1057 = vsel %vm420, %v1052, 0
      %v1060 = vsel %vm420, %v1053, 0
      %v1063 = vsel %vm420, %v1054, 0
      %v1066 = vsel %vm420, %v1055, 0
      %1068 = vmatpush.msra.mxu0 0.0
      %1069 = vmatpush.msra.mxu0 0.0
      %1070 = vmatpush.msra.mxu0 0.0
      %1071 = vmatpush.msra.mxu0 0.0
      %1072 = vmatpush.msra.mxu0 0.0
      %1073 = vmatpush.msra.mxu0 0.0
      %1074 = vmatpush.msra.mxu0 0.0
      %1075 = vmatpush.msra.mxu0 0.0
      %1076 = vmatpush.msra.mxu0 0.0
      %1077 = vmatpush.msra.mxu0 0.0
      %1078 = vmatpush.msra.mxu0 0.0
      %1079 = vmatpush.msra.mxu0 0.0
      %1080 = vmatpush.msra.mxu0 %v904
      %1081 = vmatpush.msra.mxu0 %v901
      %1082 = vmatpush.msra.mxu0 %v898
      %1083 = vmatpush.msra.mxu0 %v895
      %1084 = vmatmul.f32.gmra.mxu0 %v1057
      %v1085 = vpop.f32.mrf.mxu0
      %v1086 = vadd.f32 0.0, %v1085
      %1087 = vmatmul.f32.gmra.mxu0 %v1060
      %v1088 = vpop.f32.mrf.mxu0
      %v1089 = vadd.f32 0.0, %v1088
      %1090 = vmatmul.f32.gmra.mxu0 %v1063
      %v1091 = vpop.f32.mrf.mxu0
      %v1092 = vadd.f32 0.0, %v1091
      %1093 = vmatmul.f32.gmra.mxu0 %v1066
      %v1094 = vpop.f32.mrf.mxu0
      %v1095 = vadd.f32 0.0, %v1094
      %1096 = vdwg.mxu0
      %1097 = vrot.lane.b32.xlu0 %v837, 64
      %v1098 = vpop.permute.xlu0 %1097
      %1099 = vrot.lane.b32.xlu0 %v840, 64
      %v1100 = vpop.permute.xlu0 %1099
      %1101 = vrot.lane.b32.xlu0 %v843, 64
      %v1102 = vpop.permute.xlu0 %1101
      %1103 = vrot.lane.b32.xlu0 %v846, 64
      %v1104 = vpop.permute.xlu0 %1103
      %1105 = vrot.lane.b32.xlu0 %v866, 64
      %v1106 = vpop.permute.xlu0 %1105
      %1107 = vrot.lane.b32.xlu0 %v869, 64
      %v1108 = vpop.permute.xlu0 %1107
      %1109 = vrot.lane.b32.xlu0 %v872, 64
      %v1110 = vpop.permute.xlu0 %1109
      %1111 = vrot.lane.b32.xlu0 %v875, 64
      %v1112 = vpop.permute.xlu0 %1111
      %v1113 = vsel %vm906, %v1098, 0
      %v1115 = vsel %vm906, %v1100, 0
      %v1117 = vsel %vm906, %v1102, 0
      %v1119 = vsel %vm906, %v1104, 0
      %v1121 = vsel %vm906, %v1106, 0
      %v1123 = vsel %vm906, %v1108, 0
      %v1125 = vsel %vm906, %v1110, 0
      %v1127 = vsel %vm906, %v1112, 0
      %1129 = vmatpush.xpose.msra.mxu0 0.0
      %1130 = vmatpush.xpose.msra.mxu0 0.0
      %1131 = vmatpush.xpose.msra.mxu0 0.0
      %1132 = vmatpush.xpose.msra.mxu0 0.0
      %1133 = vmatpush.xpose.msra.mxu0 0.0
      %1134 = vmatpush.xpose.msra.mxu0 0.0
      %1135 = vmatpush.xpose.msra.mxu0 0.0
      %1136 = vmatpush.xpose.msra.mxu0 0.0
      %1137 = vmatpush.xpose.msra.mxu0 0.0
      %1138 = vmatpush.xpose.msra.mxu0 0.0
      %1139 = vmatpush.xpose.msra.mxu0 0.0
      %1140 = vmatpush.xpose.msra.mxu0 0.0
      %1141 = vmatpush.xpose.msra.mxu0 %v1127
      %1142 = vmatpush.xpose.msra.mxu0 %v1125
      %1143 = vmatpush.xpose.msra.mxu0 %v1123
      %1144 = vmatpush.xpose.msra.mxu0 %v1121
      %1145 = vmatmul.f32.gmra.mxu0 %v1113
      %v1146 = vpop.f32.mrf.mxu0
      %v1147 = vadd.f32 0.0, %v1146
      %1148 = vmatmul.f32.gmra.mxu0 %v1115
      %v1149 = vpop.f32.mrf.mxu0
      %v1150 = vadd.f32 0.0, %v1149
      %1151 = vmatmul.f32.gmra.mxu0 %v1117
      %v1152 = vpop.f32.mrf.mxu0
      %v1153 = vadd.f32 0.0, %v1152
      %1154 = vmatmul.f32.gmra.mxu0 %v1119
      %v1155 = vpop.f32.mrf.mxu0
      %v1156 = vadd.f32 0.0, %v1155
      %1157 = vdwg.mxu0
      %v1158 = vadd.f32 %v949, %v1147
      %v1159 = vadd.f32 %v952, %v1150
      %v1160 = vadd.f32 %v955, %v1153
      %v1161 = vadd.f32 %v958, %v1156
      %v1162 = vsel %vm420, %v1158, -inf
      %1163 = vmax.xlane.f32.xlu0 %v1162
      %v1164 = vpop.xlane.xlu0 %1163
      %v1165 = vsel %vm420, %v1159, -inf
      %1166 = vmax.xlane.f32.xlu0 %v1165
      %v1167 = vpop.xlane.xlu0 %1166
      %v1168 = vsel %vm420, %v1160, -inf
      %1169 = vmax.xlane.f32.xlu0 %v1168
      %v1170 = vpop.xlane.xlu0 %1169
      %v1171 = vsel %vm420, %v1161, -inf
      %1172 = vmax.xlane.f32.xlu0 %v1171
      %v1173 = vpop.xlane.xlu0 %1172
      %v1174 = vsub.f32 %v1158, %v1164
      %v1175 = vsub.f32 %v1159, %v1167
      %v1176 = vsub.f32 %v1160, %v1170
      %v1177 = vsub.f32 %v1161, %v1173
      %v1178 = vmul.f32 %v1174, 1.442695
      %v1179 = vpow.pop %v1178
      %v1180 = vmul.f32 %v1175, 1.442695
      %v1181 = vpow.pop %v1180
      %v1182 = vmul.f32 %v1176, 1.442695
      %v1183 = vpow.pop %v1182
      %v1184 = vmul.f32 %v1177, 1.442695
      %v1185 = vpow.pop %v1184
      %v1186 = vsel %vm420, %v1179, 0.0
      %1187 = vadd.xlane.f32.xlu0 %v1186
      %v1188 = vpop.xlane.xlu0 %1187
      %v1189 = vsel %vm420, %v1181, 0.0
      %1190 = vadd.xlane.f32.xlu0 %v1189
      %v1191 = vpop.xlane.xlu0 %1190
      %v1192 = vsel %vm420, %v1183, 0.0
      %1193 = vadd.xlane.f32.xlu0 %v1192
      %v1194 = vpop.xlane.xlu0 %1193
      %v1195 = vsel %vm420, %v1185, 0.0
      %1196 = vadd.xlane.f32.xlu0 %v1195
      %v1197 = vpop.xlane.xlu0 %1196
      %v1198 = vrcp.pop %v1188
      %v1199 = vmul.f32 %v1188, %v1198
      %v1200 = vsub.f32 1.0, %v1199
      %v1201 = vmul.f32 %v1198, %v1200
      %v1202 = vadd.f32 %v1198, %v1201
      %vm1203 = vweird.f32 %v1188
      %vm1204 = vweird.f32 %v1198
      %vm1205 = vmor %vm1203, %vm1204
      %v1206 = vsel %vm1205, %v1198, %v1202
      %v1207 = vand.u32 2147483647, %v1188
      %vm1208 = vcmp.eq.f32.partialorder %v1207, 8.507059e+37
      %v1209 = vand.u32 %v1188, 2147483648
      %v1210 = vor.u32 1.1754944e-38, %v1209
      %v1211 = vsel %vm1208, %v1210, %v1206
      %v1212 = vrcp.pop %v1191
      %v1213 = vmul.f32 %v1191, %v1212
      %v1214 = vsub.f32 1.0, %v1213
      %v1215 = vmul.f32 %v1212, %v1214
      %v1216 = vadd.f32 %v1212, %v1215
      %vm1217 = vweird.f32 %v1191
      %vm1218 = vweird.f32 %v1212
      %vm1219 = vmor %vm1217, %vm1218
      %v1220 = vsel %vm1219, %v1212, %v1216
      %v1221 = vand.u32 2147483647, %v1191
      %vm1222 = vcmp.eq.f32.partialorder %v1221, 8.507059e+37
      %v1223 = vand.u32 %v1191, 2147483648
      %v1224 = vor.u32 1.1754944e-38, %v1223
      %v1225 = vsel %vm1222, %v1224, %v1220
      %v1226 = vrcp.pop %v1194
      %v1227 = vmul.f32 %v1194, %v1226
      %v1228 = vsub.f32 1.0, %v1227
      %v1229 = vmul.f32 %v1226, %v1228
      %v1230 = vadd.f32 %v1226, %v1229
      %vm1231 = vweird.f32 %v1194
      %vm1232 = vweird.f32 %v1226
      %vm1233 = vmor %vm1231, %vm1232
      %v1234 = vsel %vm1233, %v1226, %v1230
      %v1235 = vand.u32 2147483647, %v1194
      %vm1236 = vcmp.eq.f32.partialorder %v1235, 8.507059e+37
      %v1237 = vand.u32 %v1194, 2147483648
      %v1238 = vor.u32 1.1754944e-38, %v1237
      %v1239 = vsel %vm1236, %v1238, %v1234
      %v1240 = vrcp.pop %v1197
      %v1241 = vmul.f32 %v1197, %v1240
      %v1242 = vsub.f32 1.0, %v1241
      %v1243 = vmul.f32 %v1240, %v1242
      %v1244 = vadd.f32 %v1240, %v1243
      %vm1245 = vweird.f32 %v1197
      %vm1246 = vweird.f32 %v1240
      %vm1247 = vmor %vm1245, %vm1246
      %v1248 = vsel %vm1247, %v1240, %v1244
      %v1249 = vand.u32 2147483647, %v1197
      %vm1250 = vcmp.eq.f32.partialorder %v1249, 8.507059e+37
      %v1251 = vand.u32 %v1197, 2147483648
      %v1252 = vor.u32 1.1754944e-38, %v1251
      %v1253 = vsel %vm1250, %v1252, %v1248
      %v1254 = vmul.f32 %v1179, %v1211
      %v1255 = vmul.f32 %v1181, %v1225
      %v1256 = vmul.f32 %v1183, %v1239
      %v1257 = vmul.f32 %v1185, %v1253
      %1262 = vrot.lane.b32.xlu0 %v895, 64
      %v1263 = vpop.permute.xlu0 %1262
      %1264 = vrot.lane.b32.xlu0 %v898, 64
      %v1265 = vpop.permute.xlu0 %1264
      %1266 = vrot.lane.b32.xlu0 %v901, 64
      %v1267 = vpop.permute.xlu0 %1266
      %1268 = vrot.lane.b32.xlu0 %v904, 64
      %v1269 = vpop.permute.xlu0 %1268
      %v1275 = vsel %vm420, %v1254, 0
      %v1278 = vsel %vm420, %v1255, 0
      %v1281 = vsel %vm420, %v1256, 0
      %v1284 = vsel %vm420, %v1257, 0
      %1286 = vmatpush.msra.mxu0 0.0
      %1287 = vmatpush.msra.mxu0 0.0
      %1288 = vmatpush.msra.mxu0 0.0
      %1289 = vmatpush.msra.mxu0 0.0
      %1290 = vmatpush.msra.mxu0 0.0
      %1291 = vmatpush.msra.mxu0 0.0
      %1292 = vmatpush.msra.mxu0 0.0
      %1293 = vmatpush.msra.mxu0 0.0
      %1294 = vmatpush.msra.mxu0 0.0
      %1295 = vmatpush.msra.mxu0 0.0
      %1296 = vmatpush.msra.mxu0 0.0
      %1297 = vmatpush.msra.mxu0 0.0
      %1298 = vmatpush.msra.mxu0 %v1269
      %1299 = vmatpush.msra.mxu0 %v1267
      %1300 = vmatpush.msra.mxu0 %v1265
      %1301 = vmatpush.msra.mxu0 %v1263
      %1302 = vmatmul.f32.gmra.mxu0 %v1275
      %v1303 = vpop.f32.mrf.mxu0
      %v1304 = vadd.f32 0.0, %v1303
      %1305 = vmatmul.f32.gmra.mxu0 %v1278
      %v1306 = vpop.f32.mrf.mxu0
      %v1307 = vadd.f32 0.0, %v1306
      %1308 = vmatmul.f32.gmra.mxu0 %v1281
      %v1309 = vpop.f32.mrf.mxu0
      %v1310 = vadd.f32 0.0, %v1309
      %1311 = vmatmul.f32.gmra.mxu0 %v1284
      %v1312 = vpop.f32.mrf.mxu0
      %v1313 = vadd.f32 0.0, %v1312
      %1314 = vdwg.mxu0
      %1315 = vrot.lane.b32.xlu0 %v837, 112
      %v1316 = vpop.permute.xlu0 %1315
      %1317 = vrot.lane.b32.xlu0 %v840, 112
      %v1318 = vpop.permute.xlu0 %1317
      %1319 = vrot.lane.b32.xlu0 %v843, 112
      %v1320 = vpop.permute.xlu0 %1319
      %1321 = vrot.lane.b32.xlu0 %v846, 112
      %v1322 = vpop.permute.xlu0 %1321
      %1323 = vrot.lane.b32.xlu0 %v866, 112
      %v1324 = vpop.permute.xlu0 %1323
      %1325 = vrot.lane.b32.xlu0 %v869, 112
      %v1326 = vpop.permute.xlu0 %1325
      %1327 = vrot.lane.b32.xlu0 %v872, 112
      %v1328 = vpop.permute.xlu0 %1327
      %1329 = vrot.lane.b32.xlu0 %v875, 112
      %v1330 = vpop.permute.xlu0 %1329
      %v1331 = vsel %vm906, %v1316, 0
      %v1333 = vsel %vm906, %v1318, 0
      %v1335 = vsel %vm906, %v1320, 0
      %v1337 = vsel %vm906, %v1322, 0
      %v1339 = vsel %vm906, %v1324, 0
      %v1341 = vsel %vm906, %v1326, 0
      %v1343 = vsel %vm906, %v1328, 0
      %v1345 = vsel %vm906, %v1330, 0
      %1347 = vmatpush.xpose.msra.mxu0 0.0
      %1348 = vmatpush.xpose.msra.mxu0 0.0
      %1349 = vmatpush.xpose.msra.mxu0 0.0
      %1350 = vmatpush.xpose.msra.mxu0 0.0
      %1351 = vmatpush.xpose.msra.mxu0 0.0
      %1352 = vmatpush.xpose.msra.mxu0 0.0
      %1353 = vmatpush.xpose.msra.mxu0 0.0
      %1354 = vmatpush.xpose.msra.mxu0 0.0
      %1355 = vmatpush.xpose.msra.mxu0 0.0
      %1356 = vmatpush.xpose.msra.mxu0 0.0
      %1357 = vmatpush.xpose.msra.mxu0 0.0
      %1358 = vmatpush.xpose.msra.mxu0 0.0
      %1359 = vmatpush.xpose.msra.mxu0 %v1345
      %1360 = vmatpush.xpose.msra.mxu0 %v1343
      %1361 = vmatpush.xpose.msra.mxu0 %v1341
      %1362 = vmatpush.xpose.msra.mxu0 %v1339
      %1363 = vmatmul.f32.gmra.mxu0 %v1331
      %v1364 = vpop.f32.mrf.mxu0
      %v1365 = vadd.f32 0.0, %v1364
      %1366 = vmatmul.f32.gmra.mxu0 %v1333
      %v1367 = vpop.f32.mrf.mxu0
      %v1368 = vadd.f32 0.0, %v1367
      %1369 = vmatmul.f32.gmra.mxu0 %v1335
      %v1370 = vpop.f32.mrf.mxu0
      %v1371 = vadd.f32 0.0, %v1370
      %1372 = vmatmul.f32.gmra.mxu0 %v1337
      %v1373 = vpop.f32.mrf.mxu0
      %v1374 = vadd.f32 0.0, %v1373
      %1375 = vdwg.mxu0
      %v1376 = vsel %vm420, %v1365, -inf
      %1377 = vmax.xlane.f32.xlu0 %v1376
      %v1378 = vpop.xlane.xlu0 %1377
      %v1379 = vsel %vm420, %v1368, -inf
      %1380 = vmax.xlane.f32.xlu0 %v1379
      %v1381 = vpop.xlane.xlu0 %1380
      %v1382 = vsel %vm420, %v1371, -inf
      %1383 = vmax.xlane.f32.xlu0 %v1382
      %v1384 = vpop.xlane.xlu0 %1383
      %v1385 = vsel %vm420, %v1374, -inf
      %1386 = vmax.xlane.f32.xlu0 %v1385
      %v1387 = vpop.xlane.xlu0 %1386
      %v1388 = vsub.f32 %v1365, %v1378
      %v1389 = vsub.f32 %v1368, %v1381
      %v1390 = vsub.f32 %v1371, %v1384
      %v1391 = vsub.f32 %v1374, %v1387
      %v1392 = vmul.f32 %v1388, 1.442695
      %v1393 = vpow.pop %v1392
      %v1394 = vmul.f32 %v1389, 1.442695
      %v1395 = vpow.pop %v1394
      %v1396 = vmul.f32 %v1390, 1.442695
      %v1397 = vpow.pop %v1396
      %v1398 = vmul.f32 %v1391, 1.442695
      %v1399 = vpow.pop %v1398
      %v1400 = vsel %vm420, %v1393, 0.0
      %1401 = vadd.xlane.f32.xlu0 %v1400
      %v1402 = vpop.xlane.xlu0 %1401
      %v1403 = vsel %vm420, %v1395, 0.0
      %1404 = vadd.xlane.f32.xlu0 %v1403
      %v1405 = vpop.xlane.xlu0 %1404
      %v1406 = vsel %vm420, %v1397, 0.0
      %1407 = vadd.xlane.f32.xlu0 %v1406
      %v1408 = vpop.xlane.xlu0 %1407
      %v1409 = vsel %vm420, %v1399, 0.0
      %1410 = vadd.xlane.f32.xlu0 %v1409
      %v1411 = vpop.xlane.xlu0 %1410
      %v1412 = vrcp.pop %v1402
      %v1413 = vmul.f32 %v1402, %v1412
      %v1414 = vsub.f32 1.0, %v1413
      %v1415 = vmul.f32 %v1412, %v1414
      %v1416 = vadd.f32 %v1412, %v1415
      %vm1417 = vweird.f32 %v1402
      %vm1418 = vweird.f32 %v1412
      %vm1419 = vmor %vm1417, %vm1418
      %v1420 = vsel %vm1419, %v1412, %v1416
      %v1421 = vand.u32 2147483647, %v1402
      %vm1422 = vcmp.eq.f32.partialorder %v1421, 8.507059e+37
      %v1423 = vand.u32 %v1402, 2147483648
      %v1424 = vor.u32 1.1754944e-38, %v1423
      %v1425 = vsel %vm1422, %v1424, %v1420
      %v1426 = vrcp.pop %v1405
      %v1427 = vmul.f32 %v1405, %v1426
      %v1428 = vsub.f32 1.0, %v1427
      %v1429 = vmul.f32 %v1426, %v1428
      %v1430 = vadd.f32 %v1426, %v1429
      %vm1431 = vweird.f32 %v1405
      %vm1432 = vweird.f32 %v1426
      %vm1433 = vmor %vm1431, %vm1432
      %v1434 = vsel %vm1433, %v1426, %v1430
      %v1435 = vand.u32 2147483647, %v1405
      %vm1436 = vcmp.eq.f32.partialorder %v1435, 8.507059e+37
      %v1437 = vand.u32 %v1405, 2147483648
      %v1438 = vor.u32 1.1754944e-38, %v1437
      %v1439 = vsel %vm1436, %v1438, %v1434
      %v1440 = vrcp.pop %v1408
      %v1441 = vmul.f32 %v1408, %v1440
      %v1442 = vsub.f32 1.0, %v1441
      %v1443 = vmul.f32 %v1440, %v1442
      %v1444 = vadd.f32 %v1440, %v1443
      %vm1445 = vweird.f32 %v1408
      %vm1446 = vweird.f32 %v1440
      %vm1447 = vmor %vm1445, %vm1446
      %v1448 = vsel %vm1447, %v1440, %v1444
      %v1449 = vand.u32 2147483647, %v1408
      %vm1450 = vcmp.eq.f32.partialorder %v1449, 8.507059e+37
      %v1451 = vand.u32 %v1408, 2147483648
      %v1452 = vor.u32 1.1754944e-38, %v1451
      %v1453 = vsel %vm1450, %v1452, %v1448
      %v1454 = vrcp.pop %v1411
      %v1455 = vmul.f32 %v1411, %v1454
      %v1456 = vsub.f32 1.0, %v1455
      %v1457 = vmul.f32 %v1454, %v1456
      %v1458 = vadd.f32 %v1454, %v1457
      %vm1459 = vweird.f32 %v1411
      %vm1460 = vweird.f32 %v1454
      %vm1461 = vmor %vm1459, %vm1460
      %v1462 = vsel %vm1461, %v1454, %v1458
      %v1463 = vand.u32 2147483647, %v1411
      %vm1464 = vcmp.eq.f32.partialorder %v1463, 8.507059e+37
      %v1465 = vand.u32 %v1411, 2147483648
      %v1466 = vor.u32 1.1754944e-38, %v1465
      %v1467 = vsel %vm1464, %v1466, %v1462
      %v1468 = vmul.f32 %v1393, %v1425
      %v1469 = vmul.f32 %v1395, %v1439
      %v1470 = vmul.f32 %v1397, %v1453
      %v1471 = vmul.f32 %v1399, %v1467
      %1472 = vrot.lane.b32.xlu0 %v895, 112
      %v1473 = vpop.permute.xlu0 %1472
      %1474 = vrot.lane.b32.xlu0 %v898, 112
      %v1475 = vpop.permute.xlu0 %1474
      %1476 = vrot.lane.b32.xlu0 %v901, 112
      %v1477 = vpop.permute.xlu0 %1476
      %1478 = vrot.lane.b32.xlu0 %v904, 112
      %v1479 = vpop.permute.xlu0 %1478
      %v1485 = vsel %vm420, %v1468, 0
      %v1488 = vsel %vm420, %v1469, 0
      %v1491 = vsel %vm420, %v1470, 0
      %v1494 = vsel %vm420, %v1471, 0
      %1496 = vmatpush.msra.mxu0 0.0
      %1497 = vmatpush.msra.mxu0 0.0
      %1498 = vmatpush.msra.mxu0 0.0
      %1499 = vmatpush.msra.mxu0 0.0
      %1500 = vmatpush.msra.mxu0 0.0
      %1501 = vmatpush.msra.mxu0 0.0
      %1502 = vmatpush.msra.mxu0 0.0
      %1503 = vmatpush.msra.mxu0 0.0
      %1504 = vmatpush.msra.mxu0 0.0
      %1505 = vmatpush.msra.mxu0 0.0
      %1506 = vmatpush.msra.mxu0 0.0
      %1507 = vmatpush.msra.mxu0 0.0
      %1508 = vmatpush.msra.mxu0 %v1479
      %1509 = vmatpush.msra.mxu0 %v1477
      %1510 = vmatpush.msra.mxu0 %v1475
      %1511 = vmatpush.msra.mxu0 %v1473
      %1512 = vmatmul.f32.gmra.mxu0 %v1485
      %v1513 = vpop.f32.mrf.mxu0
      %v1514 = vadd.f32 0.0, %v1513
      %1515 = vmatmul.f32.gmra.mxu0 %v1488
      %v1516 = vpop.f32.mrf.mxu0
      %v1517 = vadd.f32 0.0, %v1516
      %1518 = vmatmul.f32.gmra.mxu0 %v1491
      %v1519 = vpop.f32.mrf.mxu0
      %v1520 = vadd.f32 0.0, %v1519
      %1521 = vmatmul.f32.gmra.mxu0 %v1494
      %v1522 = vpop.f32.mrf.mxu0
      %v1523 = vadd.f32 0.0, %v1522
      %1524 = vdwg.mxu0
      %1525 = vrot.lane.b32.xlu0 %v837, 48
      %v1526 = vpop.permute.xlu0 %1525
      %1527 = vrot.lane.b32.xlu0 %v840, 48
      %v1528 = vpop.permute.xlu0 %1527
      %1529 = vrot.lane.b32.xlu0 %v843, 48
      %v1530 = vpop.permute.xlu0 %1529
      %1531 = vrot.lane.b32.xlu0 %v846, 48
      %v1532 = vpop.permute.xlu0 %1531
      %1533 = vrot.lane.b32.xlu0 %v866, 48
      %v1534 = vpop.permute.xlu0 %1533
      %1535 = vrot.lane.b32.xlu0 %v869, 48
      %v1536 = vpop.permute.xlu0 %1535
      %1537 = vrot.lane.b32.xlu0 %v872, 48
      %v1538 = vpop.permute.xlu0 %1537
      %1539 = vrot.lane.b32.xlu0 %v875, 48
      %v1540 = vpop.permute.xlu0 %1539
      %v1541 = vsel %vm906, %v1526, 0
      %v1543 = vsel %vm906, %v1528, 0
      %v1545 = vsel %vm906, %v1530, 0
      %v1547 = vsel %vm906, %v1532, 0
      %v1549 = vsel %vm906, %v1534, 0
      %v1551 = vsel %vm906, %v1536, 0
      %v1553 = vsel %vm906, %v1538, 0
      %v1555 = vsel %vm906, %v1540, 0
      %1557 = vmatpush.xpose.msra.mxu0 0.0
      %1558 = vmatpush.xpose.msra.mxu0 0.0
      %1559 = vmatpush.xpose.msra.mxu0 0.0
      %1560 = vmatpush.xpose.msra.mxu0 0.0
      %1561 = vmatpush.xpose.msra.mxu0 0.0
      %1562 = vmatpush.xpose.msra.mxu0 0.0
      %1563 = vmatpush.xpose.msra.mxu0 0.0
      %1564 = vmatpush.xpose.msra.mxu0 0.0
      %1565 = vmatpush.xpose.msra.mxu0 0.0
      %1566 = vmatpush.xpose.msra.mxu0 0.0
      %1567 = vmatpush.xpose.msra.mxu0 0.0
      %1568 = vmatpush.xpose.msra.mxu0 0.0
      %1569 = vmatpush.xpose.msra.mxu0 %v1555
      %1570 = vmatpush.xpose.msra.mxu0 %v1553
      %1571 = vmatpush.xpose.msra.mxu0 %v1551
      %1572 = vmatpush.xpose.msra.mxu0 %v1549
      %1573 = vmatmul.f32.gmra.mxu0 %v1541
      %v1574 = vpop.f32.mrf.mxu0
      %v1575 = vadd.f32 0.0, %v1574
      %1576 = vmatmul.f32.gmra.mxu0 %v1543
      %v1577 = vpop.f32.mrf.mxu0
      %v1578 = vadd.f32 0.0, %v1577
      %1579 = vmatmul.f32.gmra.mxu0 %v1545
      %v1580 = vpop.f32.mrf.mxu0
      %v1581 = vadd.f32 0.0, %v1580
      %1582 = vmatmul.f32.gmra.mxu0 %v1547
      %v1583 = vpop.f32.mrf.mxu0
      %v1584 = vadd.f32 0.0, %v1583
      %1585 = vdwg.mxu0
      %v1586 = vadd.f32 %v1365, %v1575
      %v1587 = vadd.f32 %v1368, %v1578
      %v1588 = vadd.f32 %v1371, %v1581
      %v1589 = vadd.f32 %v1374, %v1584
      %v1590 = vsel %vm420, %v1586, -inf
      %1591 = vmax.xlane.f32.xlu0 %v1590
      %v1592 = vpop.xlane.xlu0 %1591
      %v1593 = vsel %vm420, %v1587, -inf
      %1594 = vmax.xlane.f32.xlu0 %v1593
      %v1595 = vpop.xlane.xlu0 %1594
      %v1596 = vsel %vm420, %v1588, -inf
      %1597 = vmax.xlane.f32.xlu0 %v1596
      %v1598 = vpop.xlane.xlu0 %1597
      %v1599 = vsel %vm420, %v1589, -inf
      %1600 = vmax.xlane.f32.xlu0 %v1599
      %v1601 = vpop.xlane.xlu0 %1600
      %v1602 = vsub.f32 %v1586, %v1592
      %v1603 = vsub.f32 %v1587, %v1595
      %v1604 = vsub.f32 %v1588, %v1598
      %v1605 = vsub.f32 %v1589, %v1601
      %v1606 = vmul.f32 %v1602, 1.442695
      %v1607 = vpow.pop %v1606
      %v1608 = vmul.f32 %v1603, 1.442695
      %v1609 = vpow.pop %v1608
      %v1610 = vmul.f32 %v1604, 1.442695
      %v1611 = vpow.pop %v1610
      %v1612 = vmul.f32 %v1605, 1.442695
      %v1613 = vpow.pop %v1612
      %v1614 = vsel %vm420, %v1607, 0.0
      %1615 = vadd.xlane.f32.xlu0 %v1614
      %v1616 = vpop.xlane.xlu0 %1615
      %v1617 = vsel %vm420, %v1609, 0.0
      %1618 = vadd.xlane.f32.xlu0 %v1617
      %v1619 = vpop.xlane.xlu0 %1618
      %v1620 = vsel %vm420, %v1611, 0.0
      %1621 = vadd.xlane.f32.xlu0 %v1620
      %v1622 = vpop.xlane.xlu0 %1621
      %v1623 = vsel %vm420, %v1613, 0.0
      %1624 = vadd.xlane.f32.xlu0 %v1623
      %v1625 = vpop.xlane.xlu0 %1624
      %v1626 = vrcp.pop %v1616
      %v1627 = vmul.f32 %v1616, %v1626
      %v1628 = vsub.f32 1.0, %v1627
      %v1629 = vmul.f32 %v1626, %v1628
      %v1630 = vadd.f32 %v1626, %v1629
      %vm1631 = vweird.f32 %v1616
      %vm1632 = vweird.f32 %v1626
      %vm1633 = vmor %vm1631, %vm1632
      %v1634 = vsel %vm1633, %v1626, %v1630
      %v1635 = vand.u32 2147483647, %v1616
      %vm1636 = vcmp.eq.f32.partialorder %v1635, 8.507059e+37
      %v1637 = vand.u32 %v1616, 2147483648
      %v1638 = vor.u32 1.1754944e-38, %v1637
      %v1639 = vsel %vm1636, %v1638, %v1634
      %v1640 = vrcp.pop %v1619
      %v1641 = vmul.f32 %v1619, %v1640
      %v1642 = vsub.f32 1.0, %v1641
      %v1643 = vmul.f32 %v1640, %v1642
      %v1644 = vadd.f32 %v1640, %v1643
      %vm1645 = vweird.f32 %v1619
      %vm1646 = vweird.f32 %v1640
      %vm1647 = vmor %vm1645, %vm1646
      %v1648 = vsel %vm1647, %v1640, %v1644
      %v1649 = vand.u32 2147483647, %v1619
      %vm1650 = vcmp.eq.f32.partialorder %v1649, 8.507059e+37
      %v1651 = vand.u32 %v1619, 2147483648
      %v1652 = vor.u32 1.1754944e-38, %v1651
      %v1653 = vsel %vm1650, %v1652, %v1648
      %v1654 = vrcp.pop %v1622
      %v1655 = vmul.f32 %v1622, %v1654
      %v1656 = vsub.f32 1.0, %v1655
      %v1657 = vmul.f32 %v1654, %v1656
      %v1658 = vadd.f32 %v1654, %v1657
      %vm1659 = vweird.f32 %v1622
      %vm1660 = vweird.f32 %v1654
      %vm1661 = vmor %vm1659, %vm1660
      %v1662 = vsel %vm1661, %v1654, %v1658
      %v1663 = vand.u32 2147483647, %v1622
      %vm1664 = vcmp.eq.f32.partialorder %v1663, 8.507059e+37
      %v1665 = vand.u32 %v1622, 2147483648
      %v1666 = vor.u32 1.1754944e-38, %v1665
      %v1667 = vsel %vm1664, %v1666, %v1662
      %v1668 = vrcp.pop %v1625
      %v1669 = vmul.f32 %v1625, %v1668
      %v1670 = vsub.f32 1.0, %v1669
      %v1671 = vmul.f32 %v1668, %v1670
      %v1672 = vadd.f32 %v1668, %v1671
      %vm1673 = vweird.f32 %v1625
      %vm1674 = vweird.f32 %v1668
      %vm1675 = vmor %vm1673, %vm1674
      %v1676 = vsel %vm1675, %v1668, %v1672
      %v1677 = vand.u32 2147483647, %v1625
      %vm1678 = vcmp.eq.f32.partialorder %v1677, 8.507059e+37
      %v1679 = vand.u32 %v1625, 2147483648
      %v1680 = vor.u32 1.1754944e-38, %v1679
      %v1681 = vsel %vm1678, %v1680, %v1676
      %v1682 = vmul.f32 %v1607, %v1639
      %v1683 = vmul.f32 %v1609, %v1653
      %v1684 = vmul.f32 %v1611, %v1667
      %v1685 = vmul.f32 %v1613, %v1681
      %1686 = vrot.lane.b32.xlu0 %v895, 48
      %v1687 = vpop.permute.xlu0 %1686
      %1688 = vrot.lane.b32.xlu0 %v898, 48
      %v1689 = vpop.permute.xlu0 %1688
      %1690 = vrot.lane.b32.xlu0 %v901, 48
      %v1691 = vpop.permute.xlu0 %1690
      %1692 = vrot.lane.b32.xlu0 %v904, 48
      %v1693 = vpop.permute.xlu0 %1692
      %v1699 = vsel %vm420, %v1682, 0
      %v1702 = vsel %vm420, %v1683, 0
      %v1705 = vsel %vm420, %v1684, 0
      %v1708 = vsel %vm420, %v1685, 0
      %1710 = vmatpush.msra.mxu0 0.0
      %1711 = vmatpush.msra.mxu0 0.0
      %1712 = vmatpush.msra.mxu0 0.0
      %1713 = vmatpush.msra.mxu0 0.0
      %1714 = vmatpush.msra.mxu0 0.0
      %1715 = vmatpush.msra.mxu0 0.0
      %1716 = vmatpush.msra.mxu0 0.0
      %1717 = vmatpush.msra.mxu0 0.0
      %1718 = vmatpush.msra.mxu0 0.0
      %1719 = vmatpush.msra.mxu0 0.0
      %1720 = vmatpush.msra.mxu0 0.0
      %1721 = vmatpush.msra.mxu0 0.0
      %1722 = vmatpush.msra.mxu0 %v1693
      %1723 = vmatpush.msra.mxu0 %v1691
      %1724 = vmatpush.msra.mxu0 %v1689
      %1725 = vmatpush.msra.mxu0 %v1687
      %1726 = vmatmul.f32.gmra.mxu0 %v1699
      %v1727 = vpop.f32.mrf.mxu0
      %v1728 = vadd.f32 0.0, %v1727
      %1729 = vmatmul.f32.gmra.mxu0 %v1702
      %v1730 = vpop.f32.mrf.mxu0
      %v1731 = vadd.f32 0.0, %v1730
      %1732 = vmatmul.f32.gmra.mxu0 %v1705
      %v1733 = vpop.f32.mrf.mxu0
      %v1734 = vadd.f32 0.0, %v1733
      %1735 = vmatmul.f32.gmra.mxu0 %v1708
      %v1736 = vpop.f32.mrf.mxu0
      %v1737 = vadd.f32 0.0, %v1736
      %1738 = vdwg.mxu0
      %1739 = vrot.lane.b32.xlu0 %v837, 96
      %v1740 = vpop.permute.xlu0 %1739
      %1741 = vrot.lane.b32.xlu0 %v840, 96
      %v1742 = vpop.permute.xlu0 %1741
      %1743 = vrot.lane.b32.xlu0 %v843, 96
      %v1744 = vpop.permute.xlu0 %1743
      %1745 = vrot.lane.b32.xlu0 %v846, 96
      %v1746 = vpop.permute.xlu0 %1745
      %1747 = vrot.lane.b32.xlu0 %v866, 96
      %v1748 = vpop.permute.xlu0 %1747
      %1749 = vrot.lane.b32.xlu0 %v869, 96
      %v1750 = vpop.permute.xlu0 %1749
      %1751 = vrot.lane.b32.xlu0 %v872, 96
      %v1752 = vpop.permute.xlu0 %1751
      %1753 = vrot.lane.b32.xlu0 %v875, 96
      %v1754 = vpop.permute.xlu0 %1753
      %v1755 = vsel %vm906, %v1740, 0
      %v1757 = vsel %vm906, %v1742, 0
      %v1759 = vsel %vm906, %v1744, 0
      %v1761 = vsel %vm906, %v1746, 0
      %v1763 = vsel %vm906, %v1748, 0
      %v1765 = vsel %vm906, %v1750, 0
      %v1767 = vsel %vm906, %v1752, 0
      %v1769 = vsel %vm906, %v1754, 0
      %1771 = vmatpush.xpose.msra.mxu0 0.0
      %1772 = vmatpush.xpose.msra.mxu0 0.0
      %1773 = vmatpush.xpose.msra.mxu0 0.0
      %1774 = vmatpush.xpose.msra.mxu0 0.0
      %1775 = vmatpush.xpose.msra.mxu0 0.0
      %1776 = vmatpush.xpose.msra.mxu0 0.0
      %1777 = vmatpush.xpose.msra.mxu0 0.0
      %1778 = vmatpush.xpose.msra.mxu0 0.0
      %1779 = vmatpush.xpose.msra.mxu0 0.0
      %1780 = vmatpush.xpose.msra.mxu0 0.0
      %1781 = vmatpush.xpose.msra.mxu0 0.0
      %1782 = vmatpush.xpose.msra.mxu0 0.0
      %1783 = vmatpush.xpose.msra.mxu0 %v1769
      %1784 = vmatpush.xpose.msra.mxu0 %v1767
      %1785 = vmatpush.xpose.msra.mxu0 %v1765
      %1786 = vmatpush.xpose.msra.mxu0 %v1763
      %1787 = vmatmul.f32.gmra.mxu0 %v1755
      %v1788 = vpop.f32.mrf.mxu0
      %v1789 = vadd.f32 0.0, %v1788
      %1790 = vmatmul.f32.gmra.mxu0 %v1757
      %v1791 = vpop.f32.mrf.mxu0
      %v1792 = vadd.f32 0.0, %v1791
      %1793 = vmatmul.f32.gmra.mxu0 %v1759
      %v1794 = vpop.f32.mrf.mxu0
      %v1795 = vadd.f32 0.0, %v1794
      %1796 = vmatmul.f32.gmra.mxu0 %v1761
      %v1797 = vpop.f32.mrf.mxu0
      %v1798 = vadd.f32 0.0, %v1797
      %1799 = vdwg.mxu0
      %v1800 = vsel %vm420, %v1789, -inf
      %1801 = vmax.xlane.f32.xlu0 %v1800
      %v1802 = vpop.xlane.xlu0 %1801
      %v1803 = vsel %vm420, %v1792, -inf
      %1804 = vmax.xlane.f32.xlu0 %v1803
      %v1805 = vpop.xlane.xlu0 %1804
      %v1806 = vsel %vm420, %v1795, -inf
      %1807 = vmax.xlane.f32.xlu0 %v1806
      %v1808 = vpop.xlane.xlu0 %1807
      %v1809 = vsel %vm420, %v1798, -inf
      %1810 = vmax.xlane.f32.xlu0 %v1809
      %v1811 = vpop.xlane.xlu0 %1810
      %v1812 = vsub.f32 %v1789, %v1802
      %v1813 = vsub.f32 %v1792, %v1805
      %v1814 = vsub.f32 %v1795, %v1808
      %v1815 = vsub.f32 %v1798, %v1811
      %v1816 = vmul.f32 %v1812, 1.442695
      %v1817 = vpow.pop %v1816
      %v1818 = vmul.f32 %v1813, 1.442695
      %v1819 = vpow.pop %v1818
      %v1820 = vmul.f32 %v1814, 1.442695
      %v1821 = vpow.pop %v1820
      %v1822 = vmul.f32 %v1815, 1.442695
      %v1823 = vpow.pop %v1822
      %v1824 = vsel %vm420, %v1817, 0.0
      %1825 = vadd.xlane.f32.xlu0 %v1824
      %v1826 = vpop.xlane.xlu0 %1825
      %v1827 = vsel %vm420, %v1819, 0.0
      %1828 = vadd.xlane.f32.xlu0 %v1827
      %v1829 = vpop.xlane.xlu0 %1828
      %v1830 = vsel %vm420, %v1821, 0.0
      %1831 = vadd.xlane.f32.xlu0 %v1830
      %v1832 = vpop.xlane.xlu0 %1831
      %v1833 = vsel %vm420, %v1823, 0.0
      %1834 = vadd.xlane.f32.xlu0 %v1833
      %v1835 = vpop.xlane.xlu0 %1834
      %v1836 = vrcp.pop %v1826
      %v1837 = vmul.f32 %v1826, %v1836
      %v1838 = vsub.f32 1.0, %v1837
      %v1839 = vmul.f32 %v1836, %v1838
      %v1840 = vadd.f32 %v1836, %v1839
      %vm1841 = vweird.f32 %v1826
      %vm1842 = vweird.f32 %v1836
      %vm1843 = vmor %vm1841, %vm1842
      %v1844 = vsel %vm1843, %v1836, %v1840
      %v1845 = vand.u32 2147483647, %v1826
      %vm1846 = vcmp.eq.f32.partialorder %v1845, 8.507059e+37
      %v1847 = vand.u32 %v1826, 2147483648
      %v1848 = vor.u32 1.1754944e-38, %v1847
      %v1849 = vsel %vm1846, %v1848, %v1844
      %v1850 = vrcp.pop %v1829
      %v1851 = vmul.f32 %v1829, %v1850
      %v1852 = vsub.f32 1.0, %v1851
      %v1853 = vmul.f32 %v1850, %v1852
      %v1854 = vadd.f32 %v1850, %v1853
      %vm1855 = vweird.f32 %v1829
      %vm1856 = vweird.f32 %v1850
      %vm1857 = vmor %vm1855, %vm1856
      %v1858 = vsel %vm1857, %v1850, %v1854
      %v1859 = vand.u32 2147483647, %v1829
      %vm1860 = vcmp.eq.f32.partialorder %v1859, 8.507059e+37
      %v1861 = vand.u32 %v1829, 2147483648
      %v1862 = vor.u32 1.1754944e-38, %v1861
      %v1863 = vsel %vm1860, %v1862, %v1858
      %v1864 = vrcp.pop %v1832
      %v1865 = vmul.f32 %v1832, %v1864
      %v1866 = vsub.f32 1.0, %v1865
      %v1867 = vmul.f32 %v1864, %v1866
      %v1868 = vadd.f32 %v1864, %v1867
      %vm1869 = vweird.f32 %v1832
      %vm1870 = vweird.f32 %v1864
      %vm1871 = vmor %vm1869, %vm1870
      %v1872 = vsel %vm1871, %v1864, %v1868
      %v1873 = vand.u32 2147483647, %v1832
      %vm1874 = vcmp.eq.f32.partialorder %v1873, 8.507059e+37
      %v1875 = vand.u32 %v1832, 2147483648
      %v1876 = vor.u32 1.1754944e-38, %v1875
      %v1877 = vsel %vm1874, %v1876, %v1872
      %v1878 = vrcp.pop %v1835
      %v1879 = vmul.f32 %v1835, %v1878
      %v1880 = vsub.f32 1.0, %v1879
      %v1881 = vmul.f32 %v1878, %v1880
      %v1882 = vadd.f32 %v1878, %v1881
      %vm1883 = vweird.f32 %v1835
      %vm1884 = vweird.f32 %v1878
      %vm1885 = vmor %vm1883, %vm1884
      %v1886 = vsel %vm1885, %v1878, %v1882
      %v1887 = vand.u32 2147483647, %v1835
      %vm1888 = vcmp.eq.f32.partialorder %v1887, 8.507059e+37
      %v1889 = vand.u32 %v1835, 2147483648
      %v1890 = vor.u32 1.1754944e-38, %v1889
      %v1891 = vsel %vm1888, %v1890, %v1886
      %v1892 = vmul.f32 %v1817, %v1849
      %v1893 = vmul.f32 %v1819, %v1863
      %v1894 = vmul.f32 %v1821, %v1877
      %v1895 = vmul.f32 %v1823, %v1891
      %1896 = vrot.lane.b32.xlu0 %v895, 96
      %v1897 = vpop.permute.xlu0 %1896
      %1898 = vrot.lane.b32.xlu0 %v898, 96
      %v1899 = vpop.permute.xlu0 %1898
      %1900 = vrot.lane.b32.xlu0 %v901, 96
      %v1901 = vpop.permute.xlu0 %1900
      %1902 = vrot.lane.b32.xlu0 %v904, 96
      %v1903 = vpop.permute.xlu0 %1902
      %v1909 = vsel %vm420, %v1892, 0
      %v1912 = vsel %vm420, %v1893, 0
      %v1915 = vsel %vm420, %v1894, 0
      %v1918 = vsel %vm420, %v1895, 0
      %1920 = vmatpush.msra.mxu0 0.0
      %1921 = vmatpush.msra.mxu0 0.0
      %1922 = vmatpush.msra.mxu0 0.0
      %1923 = vmatpush.msra.mxu0 0.0
      %1924 = vmatpush.msra.mxu0 0.0
      %1925 = vmatpush.msra.mxu0 0.0
      %1926 = vmatpush.msra.mxu0 0.0
      %1927 = vmatpush.msra.mxu0 0.0
      %1928 = vmatpush.msra.mxu0 0.0
      %1929 = vmatpush.msra.mxu0 0.0
      %1930 = vmatpush.msra.mxu0 0.0
      %1931 = vmatpush.msra.mxu0 0.0
      %1932 = vmatpush.msra.mxu0 %v1903
      %1933 = vmatpush.msra.mxu0 %v1901
      %1934 = vmatpush.msra.mxu0 %v1899
      %1935 = vmatpush.msra.mxu0 %v1897
      %1936 = vmatmul.f32.gmra.mxu0 %v1909
      %v1937 = vpop.f32.mrf.mxu0
      %v1938 = vadd.f32 0.0, %v1937
      %1939 = vmatmul.f32.gmra.mxu0 %v1912
      %v1940 = vpop.f32.mrf.mxu0
      %v1941 = vadd.f32 0.0, %v1940
      %1942 = vmatmul.f32.gmra.mxu0 %v1915
      %v1943 = vpop.f32.mrf.mxu0
      %v1944 = vadd.f32 0.0, %v1943
      %1945 = vmatmul.f32.gmra.mxu0 %v1918
      %v1946 = vpop.f32.mrf.mxu0
      %v1947 = vadd.f32 0.0, %v1946
      %1948 = vdwg.mxu0
      %1949 = vrot.lane.b32.xlu0 %v837, 32
      %v1950 = vpop.permute.xlu0 %1949
      %1951 = vrot.lane.b32.xlu0 %v840, 32
      %v1952 = vpop.permute.xlu0 %1951
      %1953 = vrot.lane.b32.xlu0 %v843, 32
      %v1954 = vpop.permute.xlu0 %1953
      %1955 = vrot.lane.b32.xlu0 %v846, 32
      %v1956 = vpop.permute.xlu0 %1955
      %1957 = vrot.lane.b32.xlu0 %v866, 32
      %v1958 = vpop.permute.xlu0 %1957
      %1959 = vrot.lane.b32.xlu0 %v869, 32
      %v1960 = vpop.permute.xlu0 %1959
      %1961 = vrot.lane.b32.xlu0 %v872, 32
      %v1962 = vpop.permute.xlu0 %1961
      %1963 = vrot.lane.b32.xlu0 %v875, 32
      %v1964 = vpop.permute.xlu0 %1963
      %v1965 = vsel %vm906, %v1950, 0
      %v1967 = vsel %vm906, %v1952, 0
      %v1969 = vsel %vm906, %v1954, 0
      %v1971 = vsel %vm906, %v1956, 0
      %v1973 = vsel %vm906, %v1958, 0
      %v1975 = vsel %vm906, %v1960, 0
      %v1977 = vsel %vm906, %v1962, 0
      %v1979 = vsel %vm906, %v1964, 0
      %1981 = vmatpush.xpose.msra.mxu0 0.0
      %1982 = vmatpush.xpose.msra.mxu0 0.0
      %1983 = vmatpush.xpose.msra.mxu0 0.0
      %1984 = vmatpush.xpose.msra.mxu0 0.0
      %1985 = vmatpush.xpose.msra.mxu0 0.0
      %1986 = vmatpush.xpose.msra.mxu0 0.0
      %1987 = vmatpush.xpose.msra.mxu0 0.0
      %1988 = vmatpush.xpose.msra.mxu0 0.0
      %1989 = vmatpush.xpose.msra.mxu0 0.0
      %1990 = vmatpush.xpose.msra.mxu0 0.0
      %1991 = vmatpush.xpose.msra.mxu0 0.0
      %1992 = vmatpush.xpose.msra.mxu0 0.0
      %1993 = vmatpush.xpose.msra.mxu0 %v1979
      %1994 = vmatpush.xpose.msra.mxu0 %v1977
      %1995 = vmatpush.xpose.msra.mxu0 %v1975
      %1996 = vmatpush.xpose.msra.mxu0 %v1973
      %1997 = vmatmul.f32.gmra.mxu0 %v1965
      %v1998 = vpop.f32.mrf.mxu0
      %v1999 = vadd.f32 0.0, %v1998
      %2000 = vmatmul.f32.gmra.mxu0 %v1967
      %v2001 = vpop.f32.mrf.mxu0
      %v2002 = vadd.f32 0.0, %v2001
      %2003 = vmatmul.f32.gmra.mxu0 %v1969
      %v2004 = vpop.f32.mrf.mxu0
      %v2005 = vadd.f32 0.0, %v2004
      %2006 = vmatmul.f32.gmra.mxu0 %v1971
      %v2007 = vpop.f32.mrf.mxu0
      %v2008 = vadd.f32 0.0, %v2007
      %2009 = vdwg.mxu0
      %v2010 = vadd.f32 %v1789, %v1999
      %v2011 = vadd.f32 %v1792, %v2002
      %v2012 = vadd.f32 %v1795, %v2005
      %v2013 = vadd.f32 %v1798, %v2008
      %v2014 = vsel %vm420, %v2010, -inf
      %2015 = vmax.xlane.f32.xlu0 %v2014
      %v2016 = vpop.xlane.xlu0 %2015
      %v2017 = vsel %vm420, %v2011, -inf
      %2018 = vmax.xlane.f32.xlu0 %v2017
      %v2019 = vpop.xlane.xlu0 %2018
      %v2020 = vsel %vm420, %v2012, -inf
      %2021 = vmax.xlane.f32.xlu0 %v2020
      %v2022 = vpop.xlane.xlu0 %2021
      %v2023 = vsel %vm420, %v2013, -inf
      %2024 = vmax.xlane.f32.xlu0 %v2023
      %v2025 = vpop.xlane.xlu0 %2024
      %v2026 = vsub.f32 %v2010, %v2016
      %v2027 = vsub.f32 %v2011, %v2019
      %v2028 = vsub.f32 %v2012, %v2022
      %v2029 = vsub.f32 %v2013, %v2025
      %v2030 = vmul.f32 %v2026, 1.442695
      %v2031 = vpow.pop %v2030
      %v2032 = vmul.f32 %v2027, 1.442695
      %v2033 = vpow.pop %v2032
      %v2034 = vmul.f32 %v2028, 1.442695
      %v2035 = vpow.pop %v2034
      %v2036 = vmul.f32 %v2029, 1.442695
      %v2037 = vpow.pop %v2036
      %v2038 = vsel %vm420, %v2031, 0.0
      %2039 = vadd.xlane.f32.xlu0 %v2038
      %v2040 = vpop.xlane.xlu0 %2039
      %v2041 = vsel %vm420, %v2033, 0.0
      %2042 = vadd.xlane.f32.xlu0 %v2041
      %v2043 = vpop.xlane.xlu0 %2042
      %v2044 = vsel %vm420, %v2035, 0.0
      %2045 = vadd.xlane.f32.xlu0 %v2044
      %v2046 = vpop.xlane.xlu0 %2045
      %v2047 = vsel %vm420, %v2037, 0.0
      %2048 = vadd.xlane.f32.xlu0 %v2047
      %v2049 = vpop.xlane.xlu0 %2048
      %v2050 = vrcp.pop %v2040
      %v2051 = vmul.f32 %v2040, %v2050
      %v2052 = vsub.f32 1.0, %v2051
      %v2053 = vmul.f32 %v2050, %v2052
      %v2054 = vadd.f32 %v2050, %v2053
      %vm2055 = vweird.f32 %v2040
      %vm2056 = vweird.f32 %v2050
      %vm2057 = vmor %vm2055, %vm2056
      %v2058 = vsel %vm2057, %v2050, %v2054
      %v2059 = vand.u32 2147483647, %v2040
      %vm2060 = vcmp.eq.f32.partialorder %v2059, 8.507059e+37
      %v2061 = vand.u32 %v2040, 2147483648
      %v2062 = vor.u32 1.1754944e-38, %v2061
      %v2063 = vsel %vm2060, %v2062, %v2058
      %v2064 = vrcp.pop %v2043
      %v2065 = vmul.f32 %v2043, %v2064
      %v2066 = vsub.f32 1.0, %v2065
      %v2067 = vmul.f32 %v2064, %v2066
      %v2068 = vadd.f32 %v2064, %v2067
      %vm2069 = vweird.f32 %v2043
      %vm2070 = vweird.f32 %v2064
      %vm2071 = vmor %vm2069, %vm2070
      %v2072 = vsel %vm2071, %v2064, %v2068
      %v2073 = vand.u32 2147483647, %v2043
      %vm2074 = vcmp.eq.f32.partialorder %v2073, 8.507059e+37
      %v2075 = vand.u32 %v2043, 2147483648
      %v2076 = vor.u32 1.1754944e-38, %v2075
      %v2077 = vsel %vm2074, %v2076, %v2072
      %v2078 = vrcp.pop %v2046
      %v2079 = vmul.f32 %v2046, %v2078
      %v2080 = vsub.f32 1.0, %v2079
      %v2081 = vmul.f32 %v2078, %v2080
      %v2082 = vadd.f32 %v2078, %v2081
      %vm2083 = vweird.f32 %v2046
      %vm2084 = vweird.f32 %v2078
      %vm2085 = vmor %vm2083, %vm2084
      %v2086 = vsel %vm2085, %v2078, %v2082
      %v2087 = vand.u32 2147483647, %v2046
      %vm2088 = vcmp.eq.f32.partialorder %v2087, 8.507059e+37
      %v2089 = vand.u32 %v2046, 2147483648
      %v2090 = vor.u32 1.1754944e-38, %v2089
      %v2091 = vsel %vm2088, %v2090, %v2086
      %v2092 = vrcp.pop %v2049
      %v2093 = vmul.f32 %v2049, %v2092
      %v2094 = vsub.f32 1.0, %v2093
      %v2095 = vmul.f32 %v2092, %v2094
      %v2096 = vadd.f32 %v2092, %v2095
      %vm2097 = vweird.f32 %v2049
      %vm2098 = vweird.f32 %v2092
      %vm2099 = vmor %vm2097, %vm2098
      %v2100 = vsel %vm2099, %v2092, %v2096
      %v2101 = vand.u32 2147483647, %v2049
      %vm2102 = vcmp.eq.f32.partialorder %v2101, 8.507059e+37
      %v2103 = vand.u32 %v2049, 2147483648
      %v2104 = vor.u32 1.1754944e-38, %v2103
      %v2105 = vsel %vm2102, %v2104, %v2100
      %v2106 = vmul.f32 %v2031, %v2063
      %v2107 = vmul.f32 %v2033, %v2077
      %v2108 = vmul.f32 %v2035, %v2091
      %v2109 = vmul.f32 %v2037, %v2105
      %2110 = vrot.lane.b32.xlu0 %v895, 32
      %v2111 = vpop.permute.xlu0 %2110
      %2112 = vrot.lane.b32.xlu0 %v898, 32
      %v2113 = vpop.permute.xlu0 %2112
      %2114 = vrot.lane.b32.xlu0 %v901, 32
      %v2115 = vpop.permute.xlu0 %2114
      %2116 = vrot.lane.b32.xlu0 %v904, 32
      %v2117 = vpop.permute.xlu0 %2116
      %v2123 = vsel %vm420, %v2106, 0
      %v2126 = vsel %vm420, %v2107, 0
      %v2129 = vsel %vm420, %v2108, 0
      %v2132 = vsel %vm420, %v2109, 0
      %2134 = vmatpush.msra.mxu0 0.0
      %2135 = vmatpush.msra.mxu0 0.0
      %2136 = vmatpush.msra.mxu0 0.0
      %2137 = vmatpush.msra.mxu0 0.0
      %2138 = vmatpush.msra.mxu0 0.0
      %2139 = vmatpush.msra.mxu0 0.0
      %2140 = vmatpush.msra.mxu0 0.0
      %2141 = vmatpush.msra.mxu0 0.0
      %2142 = vmatpush.msra.mxu0 0.0
      %2143 = vmatpush.msra.mxu0 0.0
      %2144 = vmatpush.msra.mxu0 0.0
      %2145 = vmatpush.msra.mxu0 0.0
      %2146 = vmatpush.msra.mxu0 %v2117
      %2147 = vmatpush.msra.mxu0 %v2115
      %2148 = vmatpush.msra.mxu0 %v2113
      %2149 = vmatpush.msra.mxu0 %v2111
      %2150 = vmatmul.f32.gmra.mxu0 %v2123
      %v2151 = vpop.f32.mrf.mxu0
      %v2152 = vadd.f32 0.0, %v2151
      %2153 = vmatmul.f32.gmra.mxu0 %v2126
      %v2154 = vpop.f32.mrf.mxu0
      %v2155 = vadd.f32 0.0, %v2154
      %2156 = vmatmul.f32.gmra.mxu0 %v2129
      %v2157 = vpop.f32.mrf.mxu0
      %v2158 = vadd.f32 0.0, %v2157
      %2159 = vmatmul.f32.gmra.mxu0 %v2132
      %v2160 = vpop.f32.mrf.mxu0
      %v2161 = vadd.f32 0.0, %v2160
      %2162 = vdwg.mxu0
      %2163 = vrot.lane.b32.xlu0 %v837, 80
      %v2164 = vpop.permute.xlu0 %2163
      %2165 = vrot.lane.b32.xlu0 %v840, 80
      %v2166 = vpop.permute.xlu0 %2165
      %2167 = vrot.lane.b32.xlu0 %v843, 80
      %v2168 = vpop.permute.xlu0 %2167
      %2169 = vrot.lane.b32.xlu0 %v846, 80
      %v2170 = vpop.permute.xlu0 %2169
      %2171 = vrot.lane.b32.xlu0 %v866, 80
      %v2172 = vpop.permute.xlu0 %2171
      %2173 = vrot.lane.b32.xlu0 %v869, 80
      %v2174 = vpop.permute.xlu0 %2173
      %2175 = vrot.lane.b32.xlu0 %v872, 80
      %v2176 = vpop.permute.xlu0 %2175
      %2177 = vrot.lane.b32.xlu0 %v875, 80
      %v2178 = vpop.permute.xlu0 %2177
      %v2179 = vsel %vm906, %v2164, 0
      %v2181 = vsel %vm906, %v2166, 0
      %v2183 = vsel %vm906, %v2168, 0
      %v2185 = vsel %vm906, %v2170, 0
      %v2187 = vsel %vm906, %v2172, 0
      %v2189 = vsel %vm906, %v2174, 0
      %v2191 = vsel %vm906, %v2176, 0
      %v2193 = vsel %vm906, %v2178, 0
      %2195 = vmatpush.xpose.msra.mxu0 0.0
      %2196 = vmatpush.xpose.msra.mxu0 0.0
      %2197 = vmatpush.xpose.msra.mxu0 0.0
      %2198 = vmatpush.xpose.msra.mxu0 0.0
      %2199 = vmatpush.xpose.msra.mxu0 0.0
      %2200 = vmatpush.xpose.msra.mxu0 0.0
      %2201 = vmatpush.xpose.msra.mxu0 0.0
      %2202 = vmatpush.xpose.msra.mxu0 0.0
      %2203 = vmatpush.xpose.msra.mxu0 0.0
      %2204 = vmatpush.xpose.msra.mxu0 0.0
      %2205 = vmatpush.xpose.msra.mxu0 0.0
      %2206 = vmatpush.xpose.msra.mxu0 0.0
      %2207 = vmatpush.xpose.msra.mxu0 %v2193
      %2208 = vmatpush.xpose.msra.mxu0 %v2191
      %2209 = vmatpush.xpose.msra.mxu0 %v2189
      %2210 = vmatpush.xpose.msra.mxu0 %v2187
      %2211 = vmatmul.f32.gmra.mxu0 %v2179
      %v2212 = vpop.f32.mrf.mxu0
      %v2213 = vadd.f32 0.0, %v2212
      %2214 = vmatmul.f32.gmra.mxu0 %v2181
      %v2215 = vpop.f32.mrf.mxu0
      %v2216 = vadd.f32 0.0, %v2215
      %2217 = vmatmul.f32.gmra.mxu0 %v2183
      %v2218 = vpop.f32.mrf.mxu0
      %v2219 = vadd.f32 0.0, %v2218
      %2220 = vmatmul.f32.gmra.mxu0 %v2185
      %v2221 = vpop.f32.mrf.mxu0
      %v2222 = vadd.f32 0.0, %v2221
      %2223 = vdwg.mxu0
      %v2224 = vsel %vm420, %v2213, -inf
      %2225 = vmax.xlane.f32.xlu0 %v2224
      %v2226 = vpop.xlane.xlu0 %2225
      %v2227 = vsel %vm420, %v2216, -inf
      %2228 = vmax.xlane.f32.xlu0 %v2227
      %v2229 = vpop.xlane.xlu0 %2228
      %v2230 = vsel %vm420, %v2219, -inf
      %2231 = vmax.xlane.f32.xlu0 %v2230
      %v2232 = vpop.xlane.xlu0 %2231
      %v2233 = vsel %vm420, %v2222, -inf
      %2234 = vmax.xlane.f32.xlu0 %v2233
      %v2235 = vpop.xlane.xlu0 %2234
      %v2236 = vsub.f32 %v2213, %v2226
      %v2237 = vsub.f32 %v2216, %v2229
      %v2238 = vsub.f32 %v2219, %v2232
      %v2239 = vsub.f32 %v2222, %v2235
      %v2240 = vmul.f32 %v2236, 1.442695
      %v2241 = vpow.pop %v2240
      %v2242 = vmul.f32 %v2237, 1.442695
      %v2243 = vpow.pop %v2242
      %v2244 = vmul.f32 %v2238, 1.442695
      %v2245 = vpow.pop %v2244
      %v2246 = vmul.f32 %v2239, 1.442695
      %v2247 = vpow.pop %v2246
      %v2248 = vsel %vm420, %v2241, 0.0
      %2249 = vadd.xlane.f32.xlu0 %v2248
      %v2250 = vpop.xlane.xlu0 %2249
      %v2251 = vsel %vm420, %v2243, 0.0
      %2252 = vadd.xlane.f32.xlu0 %v2251
      %v2253 = vpop.xlane.xlu0 %2252
      %v2254 = vsel %vm420, %v2245, 0.0
      %2255 = vadd.xlane.f32.xlu0 %v2254
      %v2256 = vpop.xlane.xlu0 %2255
      %v2257 = vsel %vm420, %v2247, 0.0
      %2258 = vadd.xlane.f32.xlu0 %v2257
      %v2259 = vpop.xlane.xlu0 %2258
      %v2260 = vrcp.pop %v2250
      %v2261 = vmul.f32 %v2250, %v2260
      %v2262 = vsub.f32 1.0, %v2261
      %v2263 = vmul.f32 %v2260, %v2262
      %v2264 = vadd.f32 %v2260, %v2263
      %vm2265 = vweird.f32 %v2250
      %vm2266 = vweird.f32 %v2260
      %vm2267 = vmor %vm2265, %vm2266
      %v2268 = vsel %vm2267, %v2260, %v2264
      %v2269 = vand.u32 2147483647, %v2250
      %vm2270 = vcmp.eq.f32.partialorder %v2269, 8.507059e+37
      %v2271 = vand.u32 %v2250, 2147483648
      %v2272 = vor.u32 1.1754944e-38, %v2271
      %v2273 = vsel %vm2270, %v2272, %v2268
      %v2274 = vrcp.pop %v2253
      %v2275 = vmul.f32 %v2253, %v2274
      %v2276 = vsub.f32 1.0, %v2275
      %v2277 = vmul.f32 %v2274, %v2276
      %v2278 = vadd.f32 %v2274, %v2277
      %vm2279 = vweird.f32 %v2253
      %vm2280 = vweird.f32 %v2274
      %vm2281 = vmor %vm2279, %vm2280
      %v2282 = vsel %vm2281, %v2274, %v2278
      %v2283 = vand.u32 2147483647, %v2253
      %vm2284 = vcmp.eq.f32.partialorder %v2283, 8.507059e+37
      %v2285 = vand.u32 %v2253, 2147483648
      %v2286 = vor.u32 1.1754944e-38, %v2285
      %v2287 = vsel %vm2284, %v2286, %v2282
      %v2288 = vrcp.pop %v2256
      %v2289 = vmul.f32 %v2256, %v2288
      %v2290 = vsub.f32 1.0, %v2289
      %v2291 = vmul.f32 %v2288, %v2290
      %v2292 = vadd.f32 %v2288, %v2291
      %vm2293 = vweird.f32 %v2256
      %vm2294 = vweird.f32 %v2288
      %vm2295 = vmor %vm2293, %vm2294
      %v2296 = vsel %vm2295, %v2288, %v2292
      %v2297 = vand.u32 2147483647, %v2256
      %vm2298 = vcmp.eq.f32.partialorder %v2297, 8.507059e+37
      %v2299 = vand.u32 %v2256, 2147483648
      %v2300 = vor.u32 1.1754944e-38, %v2299
      %v2301 = vsel %vm2298, %v2300, %v2296
      %v2302 = vrcp.pop %v2259
      %v2303 = vmul.f32 %v2259, %v2302
      %v2304 = vsub.f32 1.0, %v2303
      %v2305 = vmul.f32 %v2302, %v2304
      %v2306 = vadd.f32 %v2302, %v2305
      %vm2307 = vweird.f32 %v2259
      %vm2308 = vweird.f32 %v2302
      %vm2309 = vmor %vm2307, %vm2308
      %v2310 = vsel %vm2309, %v2302, %v2306
      %v2311 = vand.u32 2147483647, %v2259
      %vm2312 = vcmp.eq.f32.partialorder %v2311, 8.507059e+37
      %v2313 = vand.u32 %v2259, 2147483648
      %v2314 = vor.u32 1.1754944e-38, %v2313
      %v2315 = vsel %vm2312, %v2314, %v2310
      %v2316 = vmul.f32 %v2241, %v2273
      %v2317 = vmul.f32 %v2243, %v2287
      %v2318 = vmul.f32 %v2245, %v2301
      %v2319 = vmul.f32 %v2247, %v2315
      %2320 = vrot.lane.b32.xlu0 %v895, 80
      %v2321 = vpop.permute.xlu0 %2320
      %2322 = vrot.lane.b32.xlu0 %v898, 80
      %v2323 = vpop.permute.xlu0 %2322
      %2324 = vrot.lane.b32.xlu0 %v901, 80
      %v2325 = vpop.permute.xlu0 %2324
      %2326 = vrot.lane.b32.xlu0 %v904, 80
      %v2327 = vpop.permute.xlu0 %2326
      %v2333 = vsel %vm420, %v2316, 0
      %v2336 = vsel %vm420, %v2317, 0
      %v2339 = vsel %vm420, %v2318, 0
      %v2342 = vsel %vm420, %v2319, 0
      %2344 = vmatpush.msra.mxu0 0.0
      %2345 = vmatpush.msra.mxu0 0.0
      %2346 = vmatpush.msra.mxu0 0.0
      %2347 = vmatpush.msra.mxu0 0.0
      %2348 = vmatpush.msra.mxu0 0.0
      %2349 = vmatpush.msra.mxu0 0.0
      %2350 = vmatpush.msra.mxu0 0.0
      %2351 = vmatpush.msra.mxu0 0.0
      %2352 = vmatpush.msra.mxu0 0.0
      %2353 = vmatpush.msra.mxu0 0.0
      %2354 = vmatpush.msra.mxu0 0.0
      %2355 = vmatpush.msra.mxu0 0.0
      %2356 = vmatpush.msra.mxu0 %v2327
      %2357 = vmatpush.msra.mxu0 %v2325
      %2358 = vmatpush.msra.mxu0 %v2323
      %2359 = vmatpush.msra.mxu0 %v2321
      %2360 = vmatmul.f32.gmra.mxu0 %v2333
      %v2361 = vpop.f32.mrf.mxu0
      %v2362 = vadd.f32 0.0, %v2361
      %2363 = vmatmul.f32.gmra.mxu0 %v2336
      %v2364 = vpop.f32.mrf.mxu0
      %v2365 = vadd.f32 0.0, %v2364
      %2366 = vmatmul.f32.gmra.mxu0 %v2339
      %v2367 = vpop.f32.mrf.mxu0
      %v2368 = vadd.f32 0.0, %v2367
      %2369 = vmatmul.f32.gmra.mxu0 %v2342
      %v2370 = vpop.f32.mrf.mxu0
      %v2371 = vadd.f32 0.0, %v2370
      %2372 = vdwg.mxu0
      %2373 = vrot.lane.b32.xlu0 %v837, 16
      %v2374 = vpop.permute.xlu0 %2373
      %2375 = vrot.lane.b32.xlu0 %v840, 16
      %v2376 = vpop.permute.xlu0 %2375
      %2377 = vrot.lane.b32.xlu0 %v843, 16
      %v2378 = vpop.permute.xlu0 %2377
      %2379 = vrot.lane.b32.xlu0 %v846, 16
      %v2380 = vpop.permute.xlu0 %2379
      %2381 = vrot.lane.b32.xlu0 %v866, 16
      %v2382 = vpop.permute.xlu0 %2381
      %2383 = vrot.lane.b32.xlu0 %v869, 16
      %v2384 = vpop.permute.xlu0 %2383
      %2385 = vrot.lane.b32.xlu0 %v872, 16
      %v2386 = vpop.permute.xlu0 %2385
      %2387 = vrot.lane.b32.xlu0 %v875, 16
      %v2388 = vpop.permute.xlu0 %2387
      %v2389 = vsel %vm906, %v2374, 0
      %v2391 = vsel %vm906, %v2376, 0
      %v2393 = vsel %vm906, %v2378, 0
      %v2395 = vsel %vm906, %v2380, 0
      %v2397 = vsel %vm906, %v2382, 0
      %v2399 = vsel %vm906, %v2384, 0
      %v2401 = vsel %vm906, %v2386, 0
      %v2403 = vsel %vm906, %v2388, 0
      %2405 = vmatpush.xpose.msra.mxu0 0.0
      %2406 = vmatpush.xpose.msra.mxu0 0.0
      %2407 = vmatpush.xpose.msra.mxu0 0.0
      %2408 = vmatpush.xpose.msra.mxu0 0.0
      %2409 = vmatpush.xpose.msra.mxu0 0.0
      %2410 = vmatpush.xpose.msra.mxu0 0.0
      %2411 = vmatpush.xpose.msra.mxu0 0.0
      %2412 = vmatpush.xpose.msra.mxu0 0.0
      %2413 = vmatpush.xpose.msra.mxu0 0.0
      %2414 = vmatpush.xpose.msra.mxu0 0.0
      %2415 = vmatpush.xpose.msra.mxu0 0.0
      %2416 = vmatpush.xpose.msra.mxu0 0.0
      %2417 = vmatpush.xpose.msra.mxu0 %v2403
      %2418 = vmatpush.xpose.msra.mxu0 %v2401
      %2419 = vmatpush.xpose.msra.mxu0 %v2399
      %2420 = vmatpush.xpose.msra.mxu0 %v2397
      %2421 = vmatmul.f32.gmra.mxu0 %v2389
      %v2422 = vpop.f32.mrf.mxu0
      %v2423 = vadd.f32 0.0, %v2422
      %2424 = vmatmul.f32.gmra.mxu0 %v2391
      %v2425 = vpop.f32.mrf.mxu0
      %v2426 = vadd.f32 0.0, %v2425
      %2427 = vmatmul.f32.gmra.mxu0 %v2393
      %v2428 = vpop.f32.mrf.mxu0
      %v2429 = vadd.f32 0.0, %v2428
      %2430 = vmatmul.f32.gmra.mxu0 %v2395
      %v2431 = vpop.f32.mrf.mxu0
      %v2432 = vadd.f32 0.0, %v2431
      %2433 = vdwg.mxu0
      %v2434 = vadd.f32 %v2213, %v2423
      %v2435 = vadd.f32 %v2216, %v2426
      %v2436 = vadd.f32 %v2219, %v2429
      %v2437 = vadd.f32 %v2222, %v2432
      %v2438 = vsel %vm420, %v2434, -inf
      %2439 = vmax.xlane.f32.xlu0 %v2438
      %v2440 = vpop.xlane.xlu0 %2439
      %v2441 = vsel %vm420, %v2435, -inf
      %2442 = vmax.xlane.f32.xlu0 %v2441
      %v2443 = vpop.xlane.xlu0 %2442
      %v2444 = vsel %vm420, %v2436, -inf
      %2445 = vmax.xlane.f32.xlu0 %v2444
      %v2446 = vpop.xlane.xlu0 %2445
      %v2447 = vsel %vm420, %v2437, -inf
      %2448 = vmax.xlane.f32.xlu0 %v2447
      %v2449 = vpop.xlane.xlu0 %2448
      %v2450 = vsub.f32 %v2434, %v2440
      %v2451 = vsub.f32 %v2435, %v2443
      %v2452 = vsub.f32 %v2436, %v2446
      %v2453 = vsub.f32 %v2437, %v2449
      %v2454 = vmul.f32 %v2450, 1.442695
      %v2455 = vpow.pop %v2454
      %v2456 = vmul.f32 %v2451, 1.442695
      %v2457 = vpow.pop %v2456
      %v2458 = vmul.f32 %v2452, 1.442695
      %v2459 = vpow.pop %v2458
      %v2460 = vmul.f32 %v2453, 1.442695
      %v2461 = vpow.pop %v2460
      %v2462 = vsel %vm420, %v2455, 0.0
      %2463 = vadd.xlane.f32.xlu0 %v2462
      %v2464 = vpop.xlane.xlu0 %2463
      %v2465 = vsel %vm420, %v2457, 0.0
      %2466 = vadd.xlane.f32.xlu0 %v2465
      %v2467 = vpop.xlane.xlu0 %2466
      %v2468 = vsel %vm420, %v2459, 0.0
      %2469 = vadd.xlane.f32.xlu0 %v2468
      %v2470 = vpop.xlane.xlu0 %2469
      %v2471 = vsel %vm420, %v2461, 0.0
      %2472 = vadd.xlane.f32.xlu0 %v2471
      %v2473 = vpop.xlane.xlu0 %2472
      %v2474 = vrcp.pop %v2464
      %v2475 = vmul.f32 %v2464, %v2474
      %v2476 = vsub.f32 1.0, %v2475
      %v2477 = vmul.f32 %v2474, %v2476
      %v2478 = vadd.f32 %v2474, %v2477
      %vm2479 = vweird.f32 %v2464
      %vm2480 = vweird.f32 %v2474
      %vm2481 = vmor %vm2479, %vm2480
      %v2482 = vsel %vm2481, %v2474, %v2478
      %v2483 = vand.u32 2147483647, %v2464
      %vm2484 = vcmp.eq.f32.partialorder %v2483, 8.507059e+37
      %v2485 = vand.u32 %v2464, 2147483648
      %v2486 = vor.u32 1.1754944e-38, %v2485
      %v2487 = vsel %vm2484, %v2486, %v2482
      %v2488 = vrcp.pop %v2467
      %v2489 = vmul.f32 %v2467, %v2488
      %v2490 = vsub.f32 1.0, %v2489
      %v2491 = vmul.f32 %v2488, %v2490
      %v2492 = vadd.f32 %v2488, %v2491
      %vm2493 = vweird.f32 %v2467
      %vm2494 = vweird.f32 %v2488
      %vm2495 = vmor %vm2493, %vm2494
      %v2496 = vsel %vm2495, %v2488, %v2492
      %v2497 = vand.u32 2147483647, %v2467
      %vm2498 = vcmp.eq.f32.partialorder %v2497, 8.507059e+37
      %v2499 = vand.u32 %v2467, 2147483648
      %v2500 = vor.u32 1.1754944e-38, %v2499
      %v2501 = vsel %vm2498, %v2500, %v2496
      %v2502 = vrcp.pop %v2470
      %v2503 = vmul.f32 %v2470, %v2502
      %v2504 = vsub.f32 1.0, %v2503
      %v2505 = vmul.f32 %v2502, %v2504
      %v2506 = vadd.f32 %v2502, %v2505
      %vm2507 = vweird.f32 %v2470
      %vm2508 = vweird.f32 %v2502
      %vm2509 = vmor %vm2507, %vm2508
      %v2510 = vsel %vm2509, %v2502, %v2506
      %v2511 = vand.u32 2147483647, %v2470
      %vm2512 = vcmp.eq.f32.partialorder %v2511, 8.507059e+37
      %v2513 = vand.u32 %v2470, 2147483648
      %v2514 = vor.u32 1.1754944e-38, %v2513
      %v2515 = vsel %vm2512, %v2514, %v2510
      %v2516 = vrcp.pop %v2473
      %v2517 = vmul.f32 %v2473, %v2516
      %v2518 = vsub.f32 1.0, %v2517
      %v2519 = vmul.f32 %v2516, %v2518
      %v2520 = vadd.f32 %v2516, %v2519
      %vm2521 = vweird.f32 %v2473
      %vm2522 = vweird.f32 %v2516
      %vm2523 = vmor %vm2521, %vm2522
      %v2524 = vsel %vm2523, %v2516, %v2520
      %v2525 = vand.u32 2147483647, %v2473
      %vm2526 = vcmp.eq.f32.partialorder %v2525, 8.507059e+37
      %v2527 = vand.u32 %v2473, 2147483648
      %v2528 = vor.u32 1.1754944e-38, %v2527
      %v2529 = vsel %vm2526, %v2528, %v2524
      %v2530 = vmul.f32 %v2455, %v2487
      %v2531 = vmul.f32 %v2457, %v2501
      %v2532 = vmul.f32 %v2459, %v2515
      %v2533 = vmul.f32 %v2461, %v2529
      %2534 = vrot.lane.b32.xlu0 %v895, 16
      %v2535 = vpop.permute.xlu0 %2534
      %2536 = vrot.lane.b32.xlu0 %v898, 16
      %v2537 = vpop.permute.xlu0 %2536
      %2538 = vrot.lane.b32.xlu0 %v901, 16
      %v2539 = vpop.permute.xlu0 %2538
      %2540 = vrot.lane.b32.xlu0 %v904, 16
      %v2541 = vpop.permute.xlu0 %2540
      %v2547 = vsel %vm420, %v2530, 0
      %v2550 = vsel %vm420, %v2531, 0
      %v2553 = vsel %vm420, %v2532, 0
      %v2556 = vsel %vm420, %v2533, 0
      %2558 = vmatpush.msra.mxu0 0.0
      %2559 = vmatpush.msra.mxu0 0.0
      %2560 = vmatpush.msra.mxu0 0.0
      %2561 = vmatpush.msra.mxu0 0.0
      %2562 = vmatpush.msra.mxu0 0.0
      %2563 = vmatpush.msra.mxu0 0.0
      %2564 = vmatpush.msra.mxu0 0.0
      %2565 = vmatpush.msra.mxu0 0.0
      %2566 = vmatpush.msra.mxu0 0.0
      %2567 = vmatpush.msra.mxu0 0.0
      %2568 = vmatpush.msra.mxu0 0.0
      %2569 = vmatpush.msra.mxu0 0.0
      %2570 = vmatpush.msra.mxu0 %v2541
      %2571 = vmatpush.msra.mxu0 %v2539
      %2572 = vmatpush.msra.mxu0 %v2537
      %2573 = vmatpush.msra.mxu0 %v2535
      %2574 = vmatmul.f32.gmra.mxu0 %v2547
      %v2575 = vpop.f32.mrf.mxu0
      %v2576 = vadd.f32 0.0, %v2575
      %2577 = vmatmul.f32.gmra.mxu0 %v2550
      %v2578 = vpop.f32.mrf.mxu0
      %v2579 = vadd.f32 0.0, %v2578
      %2580 = vmatmul.f32.gmra.mxu0 %v2553
      %v2581 = vpop.f32.mrf.mxu0
      %v2582 = vadd.f32 0.0, %v2581
      %2583 = vmatmul.f32.gmra.mxu0 %v2556
      %v2584 = vpop.f32.mrf.mxu0
      %v2585 = vadd.f32 0.0, %v2584
      %2586 = vdwg.mxu0
      %2591 = vrot.lane.b32.xlu0 %v1514, 16
      %v2592 = vpop.permute.xlu0 %2591
      %2593 = vrot.lane.b32.xlu0 %v1517, 16
      %v2594 = vpop.permute.xlu0 %2593
      %2595 = vrot.lane.b32.xlu0 %v1520, 16
      %v2596 = vpop.permute.xlu0 %2595
      %2597 = vrot.lane.b32.xlu0 %v1523, 16
      %v2598 = vpop.permute.xlu0 %2597
      %2607 = vrot.lane.b32.xlu0 %v1938, 32
      %v2608 = vpop.permute.xlu0 %2607
      %2609 = vrot.lane.b32.xlu0 %v1941, 32
      %v2610 = vpop.permute.xlu0 %2609
      %2611 = vrot.lane.b32.xlu0 %v1944, 32
      %v2612 = vpop.permute.xlu0 %2611
      %2613 = vrot.lane.b32.xlu0 %v1947, 32
      %v2614 = vpop.permute.xlu0 %2613
      %2623 = vrot.lane.b32.xlu0 %v2362, 48
      %v2624 = vpop.permute.xlu0 %2623
      %2625 = vrot.lane.b32.xlu0 %v2365, 48
      %v2626 = vpop.permute.xlu0 %2625
      %2627 = vrot.lane.b32.xlu0 %v2368, 48
      %v2628 = vpop.permute.xlu0 %2627
      %2629 = vrot.lane.b32.xlu0 %v2371, 48
      %v2630 = vpop.permute.xlu0 %2629
      %2639 = vrot.lane.b32.xlu0 %v1304, 64
      %v2640 = vpop.permute.xlu0 %2639
      %2641 = vrot.lane.b32.xlu0 %v1307, 64
      %v2642 = vpop.permute.xlu0 %2641
      %2643 = vrot.lane.b32.xlu0 %v1310, 64
      %v2644 = vpop.permute.xlu0 %2643
      %2645 = vrot.lane.b32.xlu0 %v1313, 64
      %v2646 = vpop.permute.xlu0 %2645
      %2655 = vrot.lane.b32.xlu0 %v1728, 80
      %v2656 = vpop.permute.xlu0 %2655
      %2657 = vrot.lane.b32.xlu0 %v1731, 80
      %v2658 = vpop.permute.xlu0 %2657
      %2659 = vrot.lane.b32.xlu0 %v1734, 80
      %v2660 = vpop.permute.xlu0 %2659
      %2661 = vrot.lane.b32.xlu0 %v1737, 80
      %v2662 = vpop.permute.xlu0 %2661
      %2671 = vrot.lane.b32.xlu0 %v2152, 96
      %v2672 = vpop.permute.xlu0 %2671
      %2673 = vrot.lane.b32.xlu0 %v2155, 96
      %v2674 = vpop.permute.xlu0 %2673
      %2675 = vrot.lane.b32.xlu0 %v2158, 96
      %v2676 = vpop.permute.xlu0 %2675
      %2677 = vrot.lane.b32.xlu0 %v2161, 96
      %v2678 = vpop.permute.xlu0 %2677
      %2687 = vrot.lane.b32.xlu0 %v2576, 112
      %v2688 = vpop.permute.xlu0 %2687
      %2689 = vrot.lane.b32.xlu0 %v2579, 112
      %v2690 = vpop.permute.xlu0 %2689
      %2691 = vrot.lane.b32.xlu0 %v2582, 112
      %v2692 = vpop.permute.xlu0 %2691
      %2693 = vrot.lane.b32.xlu0 %v2585, 112
      %v2694 = vpop.permute.xlu0 %2693
      %v2699 = vsel %vm906, %v1086, %v2592
      %v2700 = vsel %vm906, %v1089, %v2594
      %v2701 = vsel %vm906, %v1092, %v2596
      %v2702 = vsel %vm906, %v1095, %v2598
      %v2703 = vsel %vm420, %v2699, %v2608
      %v2704 = vsel %vm420, %v2700, %v2610
      %v2705 = vsel %vm420, %v2701, %v2612
      %v2706 = vsel %vm420, %v2702, %v2614
      %vm2707 = vcmask 392192
      %v2708 = vsel %vm2707, %v2703, %v2624
      %v2709 = vsel %vm2707, %v2704, %v2626
      %v2710 = vsel %vm2707, %v2705, %v2628
      %v2711 = vsel %vm2707, %v2706, %v2630
      %v2712 = vsel %vm806, %v2708, %v2640
      %v2713 = vsel %vm806, %v2709, %v2642
      %v2714 = vsel %vm806, %v2710, %v2644
      %v2715 = vsel %vm806, %v2711, %v2646
      %vm2716 = vcmask 654336
      %v2717 = vsel %vm2716, %v2712, %v2656
      %v2718 = vsel %vm2716, %v2713, %v2658
      %v2719 = vsel %vm2716, %v2714, %v2660
      %v2720 = vsel %vm2716, %v2715, %v2662
      %vm2721 = vcmask 785408
      %v2722 = vsel %vm2721, %v2717, %v2672
      %v2723 = vsel %vm2721, %v2718, %v2674
      %v2724 = vsel %vm2721, %v2719, %v2676
      %v2725 = vsel %vm2721, %v2720, %v2678
      %vm2726 = vcmask 916480
      %v2727 = vsel %vm2726, %v2722, %v2688
      %v2728 = vsel %vm2726, %v2723, %v2690
      %v2729 = vsel %vm2726, %v2724, %v2692
      %v2730 = vsel %vm2726, %v2725, %v2694
      %v2731 = vld [vmem:[%s4] sm:$0xff]
      %v2732 = vld [vmem:[%s4 + $0x8] sm:$0xff]
      %v2733 = vld [vmem:[%s4 + $0x10] sm:$0xff]
      %v2734 = vld [vmem:[%s4 + $0x18] sm:$0xff]
      %v2735 = vld [vmem:[%s4 + $0x20] sm:$0xff]
      %v2736 = vld [vmem:[%s4 + $0x28] sm:$0xff]
      %v2737 = vld [vmem:[%s4 + $0x30] sm:$0xff]
      %v2738 = vld [vmem:[%s4 + $0x38] sm:$0xff]
      %v2739 = vld [vmem:[%s4 + $0x40] sm:$0xff]
      %v2740 = vld [vmem:[%s4 + $0x48] sm:$0xff]
      %v2741 = vld [vmem:[%s4 + $0x50] sm:$0xff]
      %v2742 = vld [vmem:[%s4 + $0x58] sm:$0xff]
      %v2743 = vld [vmem:[%s4 + $0x60] sm:$0xff]
      %v2744 = vld [vmem:[%s4 + $0x68] sm:$0xff]
      %v2745 = vld [vmem:[%s4 + $0x70] sm:$0xff]
      %v2746 = vld [vmem:[%s4 + $0x78] sm:$0xff]
      %v2747 = vld [vmem:[%s5] sm:$0x1]
      %v2749 = vperm.slane %v2747, 0
      %2751 = vmatpush.msra.mxu0 %v2746
      %2752 = vmatpush.msra.mxu0 %v2745
      %2753 = vmatpush.msra.mxu0 %v2744
      %2754 = vmatpush.msra.mxu0 %v2743
      %2755 = vmatpush.msra.mxu0 %v2742
      %2756 = vmatpush.msra.mxu0 %v2741
      %2757 = vmatpush.msra.mxu0 %v2740
      %2758 = vmatpush.msra.mxu0 %v2739
      %2759 = vmatpush.msra.mxu0 %v2738
      %2760 = vmatpush.msra.mxu0 %v2737
      %2761 = vmatpush.msra.mxu0 %v2736
      %2762 = vmatpush.msra.mxu0 %v2735
      %2763 = vmatpush.msra.mxu0 %v2734
      %2764 = vmatpush.msra.mxu0 %v2733
      %2765 = vmatpush.msra.mxu0 %v2732
      %2766 = vmatpush.msra.mxu0 %v2731
      %2767 = vmatmul.f32.gmra.mxu0 %v2727
      %v2768 = vpop.f32.mrf.mxu0
      %v2769 = vadd.f32 %v2749, %v2768
      %2770 = vmatmul.f32.gmra.mxu0 %v2728
      %v2771 = vpop.f32.mrf.mxu0
      %v2772 = vadd.f32 %v2749, %v2771
      %2773 = vmatmul.f32.gmra.mxu0 %v2729
      %v2774 = vpop.f32.mrf.mxu0
      %v2775 = vadd.f32 %v2749, %v2774
      %2776 = vmatmul.f32.gmra.mxu0 %v2730
      %v2777 = vpop.f32.mrf.mxu0
      %v2778 = vadd.f32 %v2749, %v2777
      %2779 = vdwg.mxu0
      %v2780 = vadd.f32 %v2769, %v414
      %v2781 = vadd.f32 %v2772, %v415
      %v2782 = vadd.f32 %v2775, %v416
      %v2783 = vadd.f32 %v2778, %v417
      %v2784 = vld [vmem:[%s6] sm:$0x1]
      %v2785 = vld [vmem:[%s7] sm:$0x1]
      %v2786 = vsel %vm420, %v2780, 0.0
      %2787 = vadd.xlane.f32.xlu0 %v2786
      %v2788 = vpop.xlane.xlu0 %2787
      %v2789 = vsel %vm420, %v2781, 0.0
      %2790 = vadd.xlane.f32.xlu0 %v2789
      %v2791 = vpop.xlane.xlu0 %2790
      %v2792 = vsel %vm420, %v2782, 0.0
      %2793 = vadd.xlane.f32.xlu0 %v2792
      %v2794 = vpop.xlane.xlu0 %2793
      %v2795 = vsel %vm420, %v2783, 0.0
      %2796 = vadd.xlane.f32.xlu0 %v2795
      %v2797 = vpop.xlane.xlu0 %2796
      %v2798 = vmul.f32 %v2788, %v439
      %v2799 = vmul.f32 %v2791, %v439
      %v2800 = vmul.f32 %v2794, %v439
      %v2801 = vmul.f32 %v2797, %v439
      %v2802 = vsub.f32 %v2780, %v2798
      %v2803 = vsub.f32 %v2781, %v2799
      %v2804 = vsub.f32 %v2782, %v2800
      %v2805 = vsub.f32 %v2783, %v2801
      %v2806 = vmul.f32 %v2802, %v2802
      %v2807 = vmul.f32 %v2803, %v2803
      %v2808 = vmul.f32 %v2804, %v2804
      %v2809 = vmul.f32 %v2805, %v2805
      %v2810 = vsel %vm420, %v2806, 0.0
      %2811 = vadd.xlane.f32.xlu0 %v2810
      %v2812 = vpop.xlane.xlu0 %2811
      %v2813 = vsel %vm420, %v2807, 0.0
      %2814 = vadd.xlane.f32.xlu0 %v2813
      %v2815 = vpop.xlane.xlu0 %2814
      %v2816 = vsel %vm420, %v2808, 0.0
      %2817 = vadd.xlane.f32.xlu0 %v2816
      %v2818 = vpop.xlane.xlu0 %2817
      %v2819 = vsel %vm420, %v2809, 0.0
      %2820 = vadd.xlane.f32.xlu0 %v2819
      %v2821 = vpop.xlane.xlu0 %2820
      %v2822 = vmul.f32 %v2812, %v439
      %v2823 = vmul.f32 %v2815, %v439
      %v2824 = vmul.f32 %v2818, %v439
      %v2825 = vmul.f32 %v2821, %v439
      %v2826 = vrsqrt.pop %v2822
      %v2827 = vmul.f32 %v2826, %v2822
      %v2828 = vmul.f32 %v2827, %v2826
      %v2829 = vmul.f32 0.5, %v2828
      %v2830 = vsub.f32 1.5, %v2829
      %v2831 = vmul.f32 %v2826, %v2830
      %v2832 = vmul.f32 %v2822, %v2831
      %vm2833 = vcmp.eq.f32.partialorder %v2822, inf
      %v2834 = vsel %vm2833, %v2822, %v2832
      %vm2835 = vcmp.eq.f32.partialorder %v2822, 0.0
      %v2836 = vand.u32 %v2822, 2147483648
      %v2837 = vsel %vm2835, %v2836, %v2834
      %v2838 = vrsqrt.pop %v2823
      %v2839 = vmul.f32 %v2838, %v2823
      %v2840 = vmul.f32 %v2839, %v2838
      %v2841 = vmul.f32 0.5, %v2840
      %v2842 = vsub.f32 1.5, %v2841
      %v2843 = vmul.f32 %v2838, %v2842
      %v2844 = vmul.f32 %v2823, %v2843
      %vm2845 = vcmp.eq.f32.partialorder %v2823, inf
      %v2846 = vsel %vm2845, %v2823, %v2844
      %vm2847 = vcmp.eq.f32.partialorder %v2823, 0.0
      %v2848 = vand.u32 %v2823, 2147483648
      %v2849 = vsel %vm2847, %v2848, %v2846
      %v2850 = vrsqrt.pop %v2824
      %v2851 = vmul.f32 %v2850, %v2824
      %v2852 = vmul.f32 %v2851, %v2850
      %v2853 = vmul.f32 0.5, %v2852
      %v2854 = vsub.f32 1.5, %v2853
      %v2855 = vmul.f32 %v2850, %v2854
      %v2856 = vmul.f32 %v2824, %v2855
      %vm2857 = vcmp.eq.f32.partialorder %v2824, inf
      %v2858 = vsel %vm2857, %v2824, %v2856
      %vm2859 = vcmp.eq.f32.partialorder %v2824, 0.0
      %v2860 = vand.u32 %v2824, 2147483648
      %v2861 = vsel %vm2859, %v2860, %v2858
      %v2862 = vrsqrt.pop %v2825
      %v2863 = vmul.f32 %v2862, %v2825
      %v2864 = vmul.f32 %v2863, %v2862
      %v2865 = vmul.f32 0.5, %v2864
      %v2866 = vsub.f32 1.5, %v2865
      %v2867 = vmul.f32 %v2862, %v2866
      %v2868 = vmul.f32 %v2825, %v2867
      %vm2869 = vcmp.eq.f32.partialorder %v2825, inf
      %v2870 = vsel %vm2869, %v2825, %v2868
      %vm2871 = vcmp.eq.f32.partialorder %v2825, 0.0
      %v2872 = vand.u32 %v2825, 2147483648
      %v2873 = vsel %vm2871, %v2872, %v2870
      %v2874 = vadd.f32 %v2837, 1e-05
      %v2875 = vadd.f32 %v2849, 1e-05
      %v2876 = vadd.f32 %v2861, 1e-05
      %v2877 = vadd.f32 %v2873, 1e-05
      %v2878 = vrcp.pop %v2874
      %v2879 = vmul.f32 %v2874, %v2878
      %v2880 = vsub.f32 1.0, %v2879
      %v2881 = vmul.f32 %v2878, %v2880
      %v2882 = vadd.f32 %v2878, %v2881
      %vm2883 = vweird.f32 %v2874
      %vm2884 = vweird.f32 %v2878
      %vm2885 = vmor %vm2883, %vm2884
      %v2886 = vsel %vm2885, %v2878, %v2882
      %v2887 = vand.u32 2147483647, %v2874
      %vm2888 = vcmp.eq.f32.partialorder %v2887, 8.507059e+37
      %v2889 = vand.u32 %v2874, 2147483648
      %v2890 = vor.u32 1.1754944e-38, %v2889
      %v2891 = vsel %vm2888, %v2890, %v2886
      %v2892 = vmul.f32 %v2802, %v2891
      %v2893 = vrcp.pop %v2875
      %v2894 = vmul.f32 %v2875, %v2893
      %v2895 = vsub.f32 1.0, %v2894
      %v2896 = vmul.f32 %v2893, %v2895
      %v2897 = vadd.f32 %v2893, %v2896
      %vm2898 = vweird.f32 %v2875
      %vm2899 = vweird.f32 %v2893
      %vm2900 = vmor %vm2898, %vm2899
      %v2901 = vsel %vm2900, %v2893, %v2897
      %v2902 = vand.u32 2147483647, %v2875
      %vm2903 = vcmp.eq.f32.partialorder %v2902, 8.507059e+37
      %v2904 = vand.u32 %v2875, 2147483648
      %v2905 = vor.u32 1.1754944e-38, %v2904
      %v2906 = vsel %vm2903, %v2905, %v2901
      %v2907 = vmul.f32 %v2803, %v2906
      %v2908 = vrcp.pop %v2876
      %v2909 = vmul.f32 %v2876, %v2908
      %v2910 = vsub.f32 1.0, %v2909
      %v2911 = vmul.f32 %v2908, %v2910
      %v2912 = vadd.f32 %v2908, %v2911
      %vm2913 = vweird.f32 %v2876
      %vm2914 = vweird.f32 %v2908
      %vm2915 = vmor %vm2913, %vm2914
      %v2916 = vsel %vm2915, %v2908, %v2912
      %v2917 = vand.u32 2147483647, %v2876
      %vm2918 = vcmp.eq.f32.partialorder %v2917, 8.507059e+37
      %v2919 = vand.u32 %v2876, 2147483648
      %v2920 = vor.u32 1.1754944e-38, %v2919
      %v2921 = vsel %vm2918, %v2920, %v2916
      %v2922 = vmul.f32 %v2804, %v2921
      %v2923 = vrcp.pop %v2877
      %v2924 = vmul.f32 %v2877, %v2923
      %v2925 = vsub.f32 1.0, %v2924
      %v2926 = vmul.f32 %v2923, %v2925
      %v2927 = vadd.f32 %v2923, %v2926
      %vm2928 = vweird.f32 %v2877
      %vm2929 = vweird.f32 %v2923
      %vm2930 = vmor %vm2928, %vm2929
      %v2931 = vsel %vm2930, %v2923, %v2927
      %v2932 = vand.u32 2147483647, %v2877
      %vm2933 = vcmp.eq.f32.partialorder %v2932, 8.507059e+37
      %v2934 = vand.u32 %v2877, 2147483648
      %v2935 = vor.u32 1.1754944e-38, %v2934
      %v2936 = vsel %vm2933, %v2935, %v2931
      %v2937 = vmul.f32 %v2805, %v2936
      %2942 = vrot.lane.b32.xlu0 %v2780, 96
      %v2943 = vpop.permute.xlu0 %2942
      %2944 = vrot.lane.b32.xlu0 %v2781, 96
      %v2945 = vpop.permute.xlu0 %2944
      %2946 = vrot.lane.b32.xlu0 %v2782, 96
      %v2947 = vpop.permute.xlu0 %2946
      %2948 = vrot.lane.b32.xlu0 %v2783, 96
      %v2949 = vpop.permute.xlu0 %2948
      %v2954 = vsel %vm420, %v2943, 0.0
      %2955 = vadd.xlane.f32.xlu0 %v2954
      %v2956 = vpop.xlane.xlu0 %2955
      %v2957 = vsel %vm420, %v2945, 0.0
      %2958 = vadd.xlane.f32.xlu0 %v2957
      %v2959 = vpop.xlane.xlu0 %2958
      %v2960 = vsel %vm420, %v2947, 0.0
      %2961 = vadd.xlane.f32.xlu0 %v2960
      %v2962 = vpop.xlane.xlu0 %2961
      %v2963 = vsel %vm420, %v2949, 0.0
      %2964 = vadd.xlane.f32.xlu0 %v2963
      %v2965 = vpop.xlane.xlu0 %2964
      %v2966 = vmul.f32 %v2956, %v439
      %v2967 = vmul.f32 %v2959, %v439
      %v2968 = vmul.f32 %v2962, %v439
      %v2969 = vmul.f32 %v2965, %v439
      %v2970 = vsub.f32 %v2780, %v2966
      %v2971 = vsub.f32 %v2781, %v2967
      %v2972 = vsub.f32 %v2782, %v2968
      %v2973 = vsub.f32 %v2783, %v2969
      %v2974 = vmul.f32 %v2970, %v2970
      %v2975 = vmul.f32 %v2971, %v2971
      %v2976 = vmul.f32 %v2972, %v2972
      %v2977 = vmul.f32 %v2973, %v2973
      %2982 = vrot.lane.b32.xlu0 %v2974, 96
      %v2983 = vpop.permute.xlu0 %2982
      %2984 = vrot.lane.b32.xlu0 %v2975, 96
      %v2985 = vpop.permute.xlu0 %2984
      %2986 = vrot.lane.b32.xlu0 %v2976, 96
      %v2987 = vpop.permute.xlu0 %2986
      %2988 = vrot.lane.b32.xlu0 %v2977, 96
      %v2989 = vpop.permute.xlu0 %2988
      %v2994 = vsel %vm420, %v2983, 0.0
      %2995 = vadd.xlane.f32.xlu0 %v2994
      %v2996 = vpop.xlane.xlu0 %2995
      %v2997 = vsel %vm420, %v2985, 0.0
      %2998 = vadd.xlane.f32.xlu0 %v2997
      %v2999 = vpop.xlane.xlu0 %2998
      %v3000 = vsel %vm420, %v2987, 0.0
      %3001 = vadd.xlane.f32.xlu0 %v3000
      %v3002 = vpop.xlane.xlu0 %3001
      %v3003 = vsel %vm420, %v2989, 0.0
      %3004 = vadd.xlane.f32.xlu0 %v3003
      %v3005 = vpop.xlane.xlu0 %3004
      %v3006 = vmul.f32 %v2996, %v439
      %v3007 = vmul.f32 %v2999, %v439
      %v3008 = vmul.f32 %v3002, %v439
      %v3009 = vmul.f32 %v3005, %v439
      %v3010 = vrsqrt.pop %v3006
      %v3011 = vmul.f32 %v3010, %v3006
      %v3012 = vmul.f32 %v3011, %v3010
      %v3013 = vmul.f32 0.5, %v3012
      %v3014 = vsub.f32 1.5, %v3013
      %v3015 = vmul.f32 %v3010, %v3014
      %v3016 = vmul.f32 %v3006, %v3015
      %vm3017 = vcmp.eq.f32.partialorder %v3006, inf
      %v3018 = vsel %vm3017, %v3006, %v3016
      %vm3019 = vcmp.eq.f32.partialorder %v3006, 0.0
      %v3020 = vand.u32 %v3006, 2147483648
      %v3021 = vsel %vm3019, %v3020, %v3018
      %v3022 = vrsqrt.pop %v3007
      %v3023 = vmul.f32 %v3022, %v3007
      %v3024 = vmul.f32 %v3023, %v3022
      %v3025 = vmul.f32 0.5, %v3024
      %v3026 = vsub.f32 1.5, %v3025
      %v3027 = vmul.f32 %v3022, %v3026
      %v3028 = vmul.f32 %v3007, %v3027
      %vm3029 = vcmp.eq.f32.partialorder %v3007, inf
      %v3030 = vsel %vm3029, %v3007, %v3028
      %vm3031 = vcmp.eq.f32.partialorder %v3007, 0.0
      %v3032 = vand.u32 %v3007, 2147483648
      %v3033 = vsel %vm3031, %v3032, %v3030
      %v3034 = vrsqrt.pop %v3008
      %v3035 = vmul.f32 %v3034, %v3008
      %v3036 = vmul.f32 %v3035, %v3034
      %v3037 = vmul.f32 0.5, %v3036
      %v3038 = vsub.f32 1.5, %v3037
      %v3039 = vmul.f32 %v3034, %v3038
      %v3040 = vmul.f32 %v3008, %v3039
      %vm3041 = vcmp.eq.f32.partialorder %v3008, inf
      %v3042 = vsel %vm3041, %v3008, %v3040
      %vm3043 = vcmp.eq.f32.partialorder %v3008, 0.0
      %v3044 = vand.u32 %v3008, 2147483648
      %v3045 = vsel %vm3043, %v3044, %v3042
      %v3046 = vrsqrt.pop %v3009
      %v3047 = vmul.f32 %v3046, %v3009
      %v3048 = vmul.f32 %v3047, %v3046
      %v3049 = vmul.f32 0.5, %v3048
      %v3050 = vsub.f32 1.5, %v3049
      %v3051 = vmul.f32 %v3046, %v3050
      %v3052 = vmul.f32 %v3009, %v3051
      %vm3053 = vcmp.eq.f32.partialorder %v3009, inf
      %v3054 = vsel %vm3053, %v3009, %v3052
      %vm3055 = vcmp.eq.f32.partialorder %v3009, 0.0
      %v3056 = vand.u32 %v3009, 2147483648
      %v3057 = vsel %vm3055, %v3056, %v3054
      %v3058 = vadd.f32 %v3021, 1e-05
      %v3059 = vadd.f32 %v3033, 1e-05
      %v3060 = vadd.f32 %v3045, 1e-05
      %v3061 = vadd.f32 %v3057, 1e-05
      %v3062 = vrcp.pop %v3058
      %v3063 = vmul.f32 %v3058, %v3062
      %v3064 = vsub.f32 1.0, %v3063
      %v3065 = vmul.f32 %v3062, %v3064
      %v3066 = vadd.f32 %v3062, %v3065
      %vm3067 = vweird.f32 %v3058
      %vm3068 = vweird.f32 %v3062
      %vm3069 = vmor %vm3067, %vm3068
      %v3070 = vsel %vm3069, %v3062, %v3066
      %v3071 = vand.u32 2147483647, %v3058
      %vm3072 = vcmp.eq.f32.partialorder %v3071, 8.507059e+37
      %v3073 = vand.u32 %v3058, 2147483648
      %v3074 = vor.u32 1.1754944e-38, %v3073
      %v3075 = vsel %vm3072, %v3074, %v3070
      %v3076 = vmul.f32 %v2970, %v3075
      %v3077 = vrcp.pop %v3059
      %v3078 = vmul.f32 %v3059, %v3077
      %v3079 = vsub.f32 1.0, %v3078
      %v3080 = vmul.f32 %v3077, %v3079
      %v3081 = vadd.f32 %v3077, %v3080
      %vm3082 = vweird.f32 %v3059
      %vm3083 = vweird.f32 %v3077
      %vm3084 = vmor %vm3082, %vm3083
      %v3085 = vsel %vm3084, %v3077, %v3081
      %v3086 = vand.u32 2147483647, %v3059
      %vm3087 = vcmp.eq.f32.partialorder %v3086, 8.507059e+37
      %v3088 = vand.u32 %v3059, 2147483648
      %v3089 = vor.u32 1.1754944e-38, %v3088
      %v3090 = vsel %vm3087, %v3089, %v3085
      %v3091 = vmul.f32 %v2971, %v3090
      %v3092 = vrcp.pop %v3060
      %v3093 = vmul.f32 %v3060, %v3092
      %v3094 = vsub.f32 1.0, %v3093
      %v3095 = vmul.f32 %v3092, %v3094
      %v3096 = vadd.f32 %v3092, %v3095
      %vm3097 = vweird.f32 %v3060
      %vm3098 = vweird.f32 %v3092
      %vm3099 = vmor %vm3097, %vm3098
      %v3100 = vsel %vm3099, %v3092, %v3096
      %v3101 = vand.u32 2147483647, %v3060
      %vm3102 = vcmp.eq.f32.partialorder %v3101, 8.507059e+37
      %v3103 = vand.u32 %v3060, 2147483648
      %v3104 = vor.u32 1.1754944e-38, %v3103
      %v3105 = vsel %vm3102, %v3104, %v3100
      %v3106 = vmul.f32 %v2972, %v3105
      %v3107 = vrcp.pop %v3061
      %v3108 = vmul.f32 %v3061, %v3107
      %v3109 = vsub.f32 1.0, %v3108
      %v3110 = vmul.f32 %v3107, %v3109
      %v3111 = vadd.f32 %v3107, %v3110
      %vm3112 = vweird.f32 %v3061
      %vm3113 = vweird.f32 %v3107
      %vm3114 = vmor %vm3112, %vm3113
      %v3115 = vsel %vm3114, %v3107, %v3111
      %v3116 = vand.u32 2147483647, %v3061
      %vm3117 = vcmp.eq.f32.partialorder %v3116, 8.507059e+37
      %v3118 = vand.u32 %v3061, 2147483648
      %v3119 = vor.u32 1.1754944e-38, %v3118
      %v3120 = vsel %vm3117, %v3119, %v3115
      %v3121 = vmul.f32 %v2973, %v3120
      %v3122 = vsel %vm420, %v2892, %v3076
      %v3123 = vsel %vm420, %v2907, %v3091
      %v3124 = vsel %vm420, %v2922, %v3106
      %v3125 = vsel %vm420, %v2937, %v3121
      %v3127 = vperm.slane %v2784, 0
      %v3129 = vmul.f32 %v3122, %v3127
      %v3130 = vmul.f32 %v3123, %v3127
      %v3131 = vmul.f32 %v3124, %v3127
      %v3132 = vmul.f32 %v3125, %v3127
      %v3134 = vperm.slane %v2785, 0
      %v3136 = vadd.f32 %v3129, %v3134
      %v3137 = vadd.f32 %v3130, %v3134
      %v3138 = vadd.f32 %v3131, %v3134
      %v3139 = vadd.f32 %v3132, %v3134
      %v3140 = vld [vmem:[%s8] sm:$0xff]
      %v3141 = vld [vmem:[%s8 + $0x8] sm:$0xff]
      %v3142 = vld [vmem:[%s8 + $0x10] sm:$0xff]
      %v3143 = vld [vmem:[%s8 + $0x18] sm:$0xff]
      %v3144 = vld [vmem:[%s8 + $0x20] sm:$0xff]
      %v3145 = vld [vmem:[%s8 + $0x28] sm:$0xff]
      %v3146 = vld [vmem:[%s8 + $0x30] sm:$0xff]
      %v3147 = vld [vmem:[%s8 + $0x38] sm:$0xff]
      %v3148 = vld [vmem:[%s8 + $0x40] sm:$0xff]
      %v3149 = vld [vmem:[%s8 + $0x48] sm:$0xff]
      %v3150 = vld [vmem:[%s8 + $0x50] sm:$0xff]
      %v3151 = vld [vmem:[%s8 + $0x58] sm:$0xff]
      %v3152 = vld [vmem:[%s8 + $0x60] sm:$0xff]
      %v3153 = vld [vmem:[%s8 + $0x68] sm:$0xff]
      %v3154 = vld [vmem:[%s8 + $0x70] sm:$0xff]
      %v3155 = vld [vmem:[%s8 + $0x78] sm:$0xff]
      %v3156 = vld [vmem:[%s9] sm:$0x3]
      %v3158 = vperm.slane %v3156, 0
      %v3159 = vperm.slane %v3156, 1
      %v3163 = vsel %vm806, %v3136, 0
      %v3166 = vsel %vm806, %v3137, 0
      %v3169 = vsel %vm806, %v3138, 0
      %v3172 = vsel %vm806, %v3139, 0
      %3174 = vmatpush.msra.mxu0 0.0
      %3175 = vmatpush.msra.mxu0 0.0
      %3176 = vmatpush.msra.mxu0 0.0
      %3177 = vmatpush.msra.mxu0 0.0
      %3178 = vmatpush.msra.mxu0 0.0
      %3179 = vmatpush.msra.mxu0 0.0
      %3180 = vmatpush.msra.mxu0 0.0
      %3181 = vmatpush.msra.mxu0 0.0
      %3182 = vmatpush.msra.mxu0 %v3154
      %3183 = vmatpush.msra.mxu0 %v3152
      %3184 = vmatpush.msra.mxu0 %v3150
      %3185 = vmatpush.msra.mxu0 %v3148
      %3186 = vmatpush.msra.mxu0 %v3146
      %3187 = vmatpush.msra.mxu0 %v3144
      %3188 = vmatpush.msra.mxu0 %v3142
      %3189 = vmatpush.msra.mxu0 %v3140
      %3190 = vmatmul.f32.gmra.mxu0 %v3163
      %v3191 = vpop.f32.mrf.mxu0
      %v3192 = vadd.f32 %v3158, %v3191
      %3193 = vmatmul.f32.gmra.mxu0 %v3166
      %v3194 = vpop.f32.mrf.mxu0
      %v3195 = vadd.f32 %v3158, %v3194
      %3196 = vmatmul.f32.gmra.mxu0 %v3169
      %v3197 = vpop.f32.mrf.mxu0
      %v3198 = vadd.f32 %v3158, %v3197
      %3199 = vmatmul.f32.gmra.mxu0 %v3172
      %v3200 = vpop.f32.mrf.mxu0
      %v3201 = vadd.f32 %v3158, %v3200
      %3202 = vdwg.mxu0
      %3203 = vmatpush.msra.mxu0 0.0
      %3204 = vmatpush.msra.mxu0 0.0
      %3205 = vmatpush.msra.mxu0 0.0
      %3206 = vmatpush.msra.mxu0 0.0
      %3207 = vmatpush.msra.mxu0 0.0
      %3208 = vmatpush.msra.mxu0 0.0
      %3209 = vmatpush.msra.mxu0 0.0
      %3210 = vmatpush.msra.mxu0 0.0
      %3211 = vmatpush.msra.mxu0 %v3155
      %3212 = vmatpush.msra.mxu0 %v3153
      %3213 = vmatpush.msra.mxu0 %v3151
      %3214 = vmatpush.msra.mxu0 %v3149
      %3215 = vmatpush.msra.mxu0 %v3147
      %3216 = vmatpush.msra.mxu0 %v3145
      %3217 = vmatpush.msra.mxu0 %v3143
      %3218 = vmatpush.msra.mxu0 %v3141
      %3219 = vmatmul.f32.gmra.mxu0 %v3163
      %v3220 = vpop.f32.mrf.mxu0
      %v3221 = vadd.f32 %v3159, %v3220
      %3222 = vmatmul.f32.gmra.mxu0 %v3166
      %v3223 = vpop.f32.mrf.mxu0
      %v3224 = vadd.f32 %v3159, %v3223
      %3225 = vmatmul.f32.gmra.mxu0 %v3169
      %v3226 = vpop.f32.mrf.mxu0
      %v3227 = vadd.f32 %v3159, %v3226
      %3228 = vmatmul.f32.gmra.mxu0 %v3172
      %v3229 = vpop.f32.mrf.mxu0
      %v3230 = vadd.f32 %v3159, %v3229
      %3231 = vdwg.mxu0
      %v3232 = vmul.f32 %v3192, 0.5
      %v3233 = vmul.f32 %v3221, 0.5
      %v3234 = vmul.f32 %v3195, 0.5
      %v3235 = vmul.f32 %v3224, 0.5
      %v3236 = vmul.f32 %v3198, 0.5
      %v3237 = vmul.f32 %v3227, 0.5
      %v3238 = vmul.f32 %v3201, 0.5
      %v3239 = vmul.f32 %v3230, 0.5
      %v3240 = vmul.f32 %v3192, 0.70710677
      %v3241 = vmul.f32 %v3221, 0.70710677
      %v3242 = vmul.f32 %v3195, 0.70710677
      %v3243 = vmul.f32 %v3224, 0.70710677
      %v3244 = vmul.f32 %v3198, 0.70710677
      %v3245 = vmul.f32 %v3227, 0.70710677
      %v3246 = vmul.f32 %v3201, 0.70710677
      %v3247 = vmul.f32 %v3230, 0.70710677
      %v3248 = vand.u32 2147483647, %v3240
      %v3249 = vand.u32 2147483647, %v3241
      %v3250 = vand.u32 2147483647, %v3242
      %v3251 = vand.u32 2147483647, %v3243
      %v3252 = vand.u32 2147483647, %v3244
      %v3253 = vand.u32 2147483647, %v3245
      %v3254 = vand.u32 2147483647, %v3246
      %v3255 = vand.u32 2147483647, %v3247
      %v3256 = vmul.f32 %v3248, 0.3275911
      %v3257 = vmul.f32 %v3249, 0.3275911
      %v3258 = vmul.f32 %v3250, 0.3275911
      %v3259 = vmul.f32 %v3251, 0.3275911
      %v3260 = vmul.f32 %v3252, 0.3275911
      %v3261 = vmul.f32 %v3253, 0.3275911
      %v3262 = vmul.f32 %v3254, 0.3275911
      %v3263 = vmul.f32 %v3255, 0.3275911
      %v3264 = vadd.f32 %v3256, 1.0
      %v3265 = vadd.f32 %v3257, 1.0
      %v3266 = vadd.f32 %v3258, 1.0
      %v3267 = vadd.f32 %v3259, 1.0
      %v3268 = vadd.f32 %v3260, 1.0
      %v3269 = vadd.f32 %v3261, 1.0
      %v3270 = vadd.f32 %v3262, 1.0
      %v3271 = vadd.f32 %v3263, 1.0
      %v3272 = vrcp.pop %v3264
      %v3273 = vmul.f32 %v3264, %v3272
      %v3274 = vsub.f32 1.0, %v3273
      %v3275 = vmul.f32 %v3272, %v3274
      %v3276 = vadd.f32 %v3272, %v3275
      %vm3277 = vweird.f32 %v3264
      %vm3278 = vweird.f32 %v3272
      %vm3279 = vmor %vm3277, %vm3278
      %v3280 = vsel %vm3279, %v3272, %v3276
      %v3281 = vand.u32 2147483647, %v3264
      %vm3282 = vcmp.eq.f32.partialorder %v3281, 8.507059e+37
      %v3283 = vand.u32 %v3264, 2147483648
      %v3284 = vor.u32 1.1754944e-38, %v3283
      %v3285 = vsel %vm3282, %v3284, %v3280
      %v3286 = vmul.f32 1.0, %v3285
      %v3287 = vrcp.pop %v3265
      %v3288 = vmul.f32 %v3265, %v3287
      %v3289 = vsub.f32 1.0, %v3288
      %v3290 = vmul.f32 %v3287, %v3289
      %v3291 = vadd.f32 %v3287, %v3290
      %vm3292 = vweird.f32 %v3265
      %vm3293 = vweird.f32 %v3287
      %vm3294 = vmor %vm3292, %vm3293
      %v3295 = vsel %vm3294, %v3287, %v3291
      %v3296 = vand.u32 2147483647, %v3265
      %vm3297 = vcmp.eq.f32.partialorder %v3296, 8.507059e+37
      %v3298 = vand.u32 %v3265, 2147483648
      %v3299 = vor.u32 1.1754944e-38, %v3298
      %v3300 = vsel %vm3297, %v3299, %v3295
      %v3301 = vmul.f32 1.0, %v3300
      %v3302 = vrcp.pop %v3266
      %v3303 = vmul.f32 %v3266, %v3302
      %v3304 = vsub.f32 1.0, %v3303
      %v3305 = vmul.f32 %v3302, %v3304
      %v3306 = vadd.f32 %v3302, %v3305
      %vm3307 = vweird.f32 %v3266
      %vm3308 = vweird.f32 %v3302
      %vm3309 = vmor %vm3307, %vm3308
      %v3310 = vsel %vm3309, %v3302, %v3306
      %v3311 = vand.u32 2147483647, %v3266
      %vm3312 = vcmp.eq.f32.partialorder %v3311, 8.507059e+37
      %v3313 = vand.u32 %v3266, 2147483648
      %v3314 = vor.u32 1.1754944e-38, %v3313
      %v3315 = vsel %vm3312, %v3314, %v3310
      %v3316 = vmul.f32 1.0, %v3315
      %v3317 = vrcp.pop %v3267
      %v3318 = vmul.f32 %v3267, %v3317
      %v3319 = vsub.f32 1.0, %v3318
      %v3320 = vmul.f32 %v3317, %v3319
      %v3321 = vadd.f32 %v3317, %v3320
      %vm3322 = vweird.f32 %v3267
      %vm3323 = vweird.f32 %v3317
      %vm3324 = vmor %vm3322, %vm3323
      %v3325 = vsel %vm3324, %v3317, %v3321
      %v3326 = vand.u32 2147483647, %v3267
      %vm3327 = vcmp.eq.f32.partialorder %v3326, 8.507059e+37
      %v3328 = vand.u32 %v3267, 2147483648
      %v3329 = vor.u32 1.1754944e-38, %v3328
      %v3330 = vsel %vm3327, %v3329, %v3325
      %v3331 = vmul.f32 1.0, %v3330
      %v3332 = vrcp.pop %v3268
      %v3333 = vmul.f32 %v3268, %v3332
      %v3334 = vsub.f32 1.0, %v3333
      %v3335 = vmul.f32 %v3332, %v3334
      %v3336 = vadd.f32 %v3332, %v3335
      %vm3337 = vweird.f32 %v3268
      %vm3338 = vweird.f32 %v3332
      %vm3339 = vmor %vm3337, %vm3338
      %v3340 = vsel %vm3339, %v3332, %v3336
      %v3341 = vand.u32 2147483647, %v3268
      %vm3342 = vcmp.eq.f32.partialorder %v3341, 8.507059e+37
      %v3343 = vand.u32 %v3268, 2147483648
      %v3344 = vor.u32 1.1754944e-38, %v3343
      %v3345 = vsel %vm3342, %v3344, %v3340
      %v3346 = vmul.f32 1.0, %v3345
      %v3347 = vrcp.pop %v3269
      %v3348 = vmul.f32 %v3269, %v3347
      %v3349 = vsub.f32 1.0, %v3348
      %v3350 = vmul.f32 %v3347, %v3349
      %v3351 = vadd.f32 %v3347, %v3350
      %vm3352 = vweird.f32 %v3269
      %vm3353 = vweird.f32 %v3347
      %vm3354 = vmor %vm3352, %vm3353
      %v3355 = vsel %vm3354, %v3347, %v3351
      %v3356 = vand.u32 2147483647, %v3269
      %vm3357 = vcmp.eq.f32.partialorder %v3356, 8.507059e+37
      %v3358 = vand.u32 %v3269, 2147483648
      %v3359 = vor.u32 1.1754944e-38, %v3358
      %v3360 = vsel %vm3357, %v3359, %v3355
      %v3361 = vmul.f32 1.0, %v3360
      %v3362 = vrcp.pop %v3270
      %v3363 = vmul.f32 %v3270, %v3362
      %v3364 = vsub.f32 1.0, %v3363
      %v3365 = vmul.f32 %v3362, %v3364
      %v3366 = vadd.f32 %v3362, %v3365
      %vm3367 = vweird.f32 %v3270
      %vm3368 = vweird.f32 %v3362
      %vm3369 = vmor %vm3367, %vm3368
      %v3370 = vsel %vm3369, %v3362, %v3366
      %v3371 = vand.u32 2147483647, %v3270
      %vm3372 = vcmp.eq.f32.partialorder %v3371, 8.507059e+37
      %v3373 = vand.u32 %v3270, 2147483648
      %v3374 = vor.u32 1.1754944e-38, %v3373
      %v3375 = vsel %vm3372, %v3374, %v3370
      %v3376 = vmul.f32 1.0, %v3375
      %v3377 = vrcp.pop %v3271
      %v3378 = vmul.f32 %v3271, %v3377
      %v3379 = vsub.f32 1.0, %v3378
      %v3380 = vmul.f32 %v3377, %v3379
      %v3381 = vadd.f32 %v3377, %v3380
      %vm3382 = vweird.f32 %v3271
      %vm3383 = vweird.f32 %v3377
      %vm3384 = vmor %vm3382, %vm3383
      %v3385 = vsel %vm3384, %v3377, %v3381
      %v3386 = vand.u32 2147483647, %v3271
      %vm3387 = vcmp.eq.f32.partialorder %v3386, 8.507059e+37
      %v3388 = vand.u32 %v3271, 2147483648
      %v3389 = vor.u32 1.1754944e-38, %v3388
      %v3390 = vsel %vm3387, %v3389, %v3385
      %v3391 = vmul.f32 1.0, %v3390
      %v3392 = vmul.f32 %v3286, 1.0614054
      %v3393 = vmul.f32 %v3301, 1.0614054
      %v3394 = vmul.f32 %v3316, 1.0614054
      %v3395 = vmul.f32 %v3331, 1.0614054
      %v3396 = vmul.f32 %v3346, 1.0614054
      %v3397 = vmul.f32 %v3361, 1.0614054
      %v3398 = vmul.f32 %v3376, 1.0614054
      %v3399 = vmul.f32 %v3391, 1.0614054
      %v3400 = vadd.f32 %v3392, -1.4531521
      %v3401 = vadd.f32 %v3393, -1.4531521
      %v3402 = vadd.f32 %v3394, -1.4531521
      %v3403 = vadd.f32 %v3395, -1.4531521
      %v3404 = vadd.f32 %v3396, -1.4531521
      %v3405 = vadd.f32 %v3397, -1.4531521
      %v3406 = vadd.f32 %v3398, -1.4531521
      %v3407 = vadd.f32 %v3399, -1.4531521
      %v3408 = vmul.f32 %v3400, %v3286
      %v3409 = vmul.f32 %v3401, %v3301
      %v3410 = vmul.f32 %v3402, %v3316
      %v3411 = vmul.f32 %v3403, %v3331
      %v3412 = vmul.f32 %v3404, %v3346
      %v3413 = vmul.f32 %v3405, %v3361
      %v3414 = vmul.f32 %v3406, %v3376
      %v3415 = vmul.f32 %v3407, %v3391
      %v3416 = vadd.f32 %v3408, 1.4214138
      %v3417 = vadd.f32 %v3409, 1.4214138
      %v3418 = vadd.f32 %v3410, 1.4214138
      %v3419 = vadd.f32 %v3411, 1.4214138
      %v3420 = vadd.f32 %v3412, 1.4214138
      %v3421 = vadd.f32 %v3413, 1.4214138
      %v3422 = vadd.f32 %v3414, 1.4214138
      %v3423 = vadd.f32 %v3415, 1.4214138
      %v3424 = vmul.f32 %v3416, %v3286
      %v3425 = vmul.f32 %v3417, %v3301
      %v3426 = vmul.f32 %v3418, %v3316
      %v3427 = vmul.f32 %v3419, %v3331
      %v3428 = vmul.f32 %v3420, %v3346
      %v3429 = vmul.f32 %v3421, %v3361
      %v3430 = vmul.f32 %v3422, %v3376
      %v3431 = vmul.f32 %v3423, %v3391
      %v3432 = vadd.f32 %v3424, -0.28449672
      %v3433 = vadd.f32 %v3425, -0.28449672
      %v3434 = vadd.f32 %v3426, -0.28449672
      %v3435 = vadd.f32 %v3427, -0.28449672
      %v3436 = vadd.f32 %v3428, -0.28449672
      %v3437 = vadd.f32 %v3429, -0.28449672
      %v3438 = vadd.f32 %v3430, -0.28449672
      %v3439 = vadd.f32 %v3431, -0.28449672
      %v3440 = vmul.f32 %v3432, %v3286
      %v3441 = vmul.f32 %v3433, %v3301
      %v3442 = vmul.f32 %v3434, %v3316
      %v3443 = vmul.f32 %v3435, %v3331
      %v3444 = vmul.f32 %v3436, %v3346
      %v3445 = vmul.f32 %v3437, %v3361
      %v3446 = vmul.f32 %v3438, %v3376
      %v3447 = vmul.f32 %v3439, %v3391
      %v3448 = vadd.f32 %v3440, 0.2548296
      %v3449 = vadd.f32 %v3441, 0.2548296
      %v3450 = vadd.f32 %v3442, 0.2548296
      %v3451 = vadd.f32 %v3443, 0.2548296
      %v3452 = vadd.f32 %v3444, 0.2548296
      %v3453 = vadd.f32 %v3445, 0.2548296
      %v3454 = vadd.f32 %v3446, 0.2548296
      %v3455 = vadd.f32 %v3447, 0.2548296
      %v3456 = vmul.f32 %v3448, %v3286
      %v3457 = vmul.f32 %v3449, %v3301
      %v3458 = vmul.f32 %v3450, %v3316
      %v3459 = vmul.f32 %v3451, %v3331
      %v3460 = vmul.f32 %v3452, %v3346
      %v3461 = vmul.f32 %v3453, %v3361
      %v3462 = vmul.f32 %v3454, %v3376
      %v3463 = vmul.f32 %v3455, %v3391
      %v3464 = vsub.f32 0.0, %v3248
      %v3465 = vsub.f32 0.0, %v3249
      %v3466 = vsub.f32 0.0, %v3250
      %v3467 = vsub.f32 0.0, %v3251
      %v3468 = vsub.f32 0.0, %v3252
      %v3469 = vsub.f32 0.0, %v3253
      %v3470 = vsub.f32 0.0, %v3254
      %v3471 = vsub.f32 0.0, %v3255
      %v3472 = vmul.f32 %v3464, %v3248
      %v3473 = vmul.f32 %v3465, %v3249
      %v3474 = vmul.f32 %v3466, %v3250
      %v3475 = vmul.f32 %v3467, %v3251
      %v3476 = vmul.f32 %v3468, %v3252
      %v3477 = vmul.f32 %v3469, %v3253
      %v3478 = vmul.f32 %v3470, %v3254
      %v3479 = vmul.f32 %v3471, %v3255
      %v3480 = vmul.f32 %v3472, 1.442695
      %v3481 = vpow.pop %v3480
      %v3482 = vmul.f32 %v3473, 1.442695
      %v3483 = vpow.pop %v3482
      %v3484 = vmul.f32 %v3474, 1.442695
      %v3485 = vpow.pop %v3484
      %v3486 = vmul.f32 %v3475, 1.442695
      %v3487 = vpow.pop %v3486
      %v3488 = vmul.f32 %v3476, 1.442695
      %v3489 = vpow.pop %v3488
      %v3490 = vmul.f32 %v3477, 1.442695
      %v3491 = vpow.pop %v3490
      %v3492 = vmul.f32 %v3478, 1.442695
      %v3493 = vpow.pop %v3492
      %v3494 = vmul.f32 %v3479, 1.442695
      %v3495 = vpow.pop %v3494
      %v3496 = vmul.f32 %v3456, %v3481
      %v3497 = vmul.f32 %v3457, %v3483
      %v3498 = vmul.f32 %v3458, %v3485
      %v3499 = vmul.f32 %v3459, %v3487
      %v3500 = vmul.f32 %v3460, %v3489
      %v3501 = vmul.f32 %v3461, %v3491
      %v3502 = vmul.f32 %v3462, %v3493
      %v3503 = vmul.f32 %v3463, %v3495
      %v3504 = vsub.f32 1.0, %v3496
      %v3505 = vsub.f32 1.0, %v3497
      %v3506 = vsub.f32 1.0, %v3498
      %v3507 = vsub.f32 1.0, %v3499
      %v3508 = vsub.f32 1.0, %v3500
      %v3509 = vsub.f32 1.0, %v3501
      %v3510 = vsub.f32 1.0, %v3502
      %v3511 = vsub.f32 1.0, %v3503
      %vm3512 = vcmp.ge.f32.partialorder %v3240, 0.0
      %vm3513 = vcmp.ge.f32.partialorder %v3241, 0.0
      %vm3514 = vcmp.ge.f32.partialorder %v3242, 0.0
      %vm3515 = vcmp.ge.f32.partialorder %v3243, 0.0
      %vm3516 = vcmp.ge.f32.partialorder %v3244, 0.0
      %vm3517 = vcmp.ge.f32.partialorder %v3245, 0.0
      %vm3518 = vcmp.ge.f32.partialorder %v3246, 0.0
      %vm3519 = vcmp.ge.f32.partialorder %v3247, 0.0
      %v3520 = vsub.f32 0.0, %v3504
      %v3521 = vsub.f32 0.0, %v3505
      %v3522 = vsub.f32 0.0, %v3506
      %v3523 = vsub.f32 0.0, %v3507
      %v3524 = vsub.f32 0.0, %v3508
      %v3525 = vsub.f32 0.0, %v3509
      %v3526 = vsub.f32 0.0, %v3510
      %v3527 = vsub.f32 0.0, %v3511
      %v3528 = vsel %vm3512, %v3504, %v3520
      %v3529 = vsel %vm3513, %v3505, %v3521
      %v3530 = vsel %vm3514, %v3506, %v3522
      %v3531 = vsel %vm3515, %v3507, %v3523
      %v3532 = vsel %vm3516, %v3508, %v3524
      %v3533 = vsel %vm3517, %v3509, %v3525
      %v3534 = vsel %vm3518, %v3510, %v3526
      %v3535 = vsel %vm3519, %v3511, %v3527
      %v3536 = vadd.f32 %v3528, 1.0
      %v3537 = vadd.f32 %v3529, 1.0
      %v3538 = vadd.f32 %v3530, 1.0
      %v3539 = vadd.f32 %v3531, 1.0
      %v3540 = vadd.f32 %v3532, 1.0
      %v3541 = vadd.f32 %v3533, 1.0
      %v3542 = vadd.f32 %v3534, 1.0
      %v3543 = vadd.f32 %v3535, 1.0
      %v3544 = vmul.f32 %v3232, %v3536
      %v3545 = vmul.f32 %v3233, %v3537
      %v3546 = vmul.f32 %v3234, %v3538
      %v3547 = vmul.f32 %v3235, %v3539
      %v3548 = vmul.f32 %v3236, %v3540
      %v3549 = vmul.f32 %v3237, %v3541
      %v3550 = vmul.f32 %v3238, %v3542
      %v3551 = vmul.f32 %v3239, %v3543
      %v3552 = vld [vmem:[%s10] sm:$0xff]
      %v3553 = vld [vmem:[%s10 + $0x8] sm:$0xff]
      %v3554 = vld [vmem:[%s10 + $0x10] sm:$0xff]
      %v3555 = vld [vmem:[%s10 + $0x18] sm:$0xff]
      %v3556 = vld [vmem:[%s10 + $0x20] sm:$0xff]
      %v3557 = vld [vmem:[%s10 + $0x28] sm:$0xff]
      %v3558 = vld [vmem:[%s10 + $0x30] sm:$0xff]
      %v3559 = vld [vmem:[%s10 + $0x38] sm:$0xff]
      %v3560 = vld [vmem:[%s10 + $0x40] sm:$0xff]
      %v3561 = vld [vmem:[%s10 + $0x48] sm:$0xff]
      %v3562 = vld [vmem:[%s10 + $0x50] sm:$0xff]
      %v3563 = vld [vmem:[%s10 + $0x58] sm:$0xff]
      %v3564 = vld [vmem:[%s10 + $0x60] sm:$0xff]
      %v3565 = vld [vmem:[%s10 + $0x68] sm:$0xff]
      %v3566 = vld [vmem:[%s10 + $0x70] sm:$0xff]
      %v3567 = vld [vmem:[%s10 + $0x78] sm:$0xff]
      %v3568 = vld [vmem:[%s10 + $0x80] sm:$0xff]
      %v3569 = vld [vmem:[%s10 + $0x88] sm:$0xff]
      %v3570 = vld [vmem:[%s10 + $0x90] sm:$0xff]
      %v3571 = vld [vmem:[%s10 + $0x98] sm:$0xff]
      %v3572 = vld [vmem:[%s10 + $0xa0] sm:$0xff]
      %v3573 = vld [vmem:[%s10 + $0xa8] sm:$0xff]
      %v3574 = vld [vmem:[%s10 + $0xb0] sm:$0xff]
      %v3575 = vld [vmem:[%s10 + $0xb8] sm:$0xff]
      %v3576 = vld [vmem:[%s10 + $0xc0] sm:$0xff]
      %v3577 = vld [vmem:[%s10 + $0xc8] sm:$0xff]
      %v3578 = vld [vmem:[%s10 + $0xd0] sm:$0xff]
      %v3579 = vld [vmem:[%s10 + $0xd8] sm:$0xff]
      %v3580 = vld [vmem:[%s10 + $0xe0] sm:$0xff]
      %v3581 = vld [vmem:[%s10 + $0xe8] sm:$0xff]
      %v3582 = vld [vmem:[%s10 + $0xf0] sm:$0xff]
      %v3583 = vld [vmem:[%s10 + $0xf8] sm:$0xff]
      %v3584 = vld [vmem:[%s11] sm:$0x1]
      %v3586 = vperm.slane %v3584, 0
      %3588 = vmatpush.msra.mxu0 %v3567
      %3589 = vmatpush.msra.mxu0 %v3566
      %3590 = vmatpush.msra.mxu0 %v3565
      %3591 = vmatpush.msra.mxu0 %v3564
      %3592 = vmatpush.msra.mxu0 %v3563
      %3593 = vmatpush.msra.mxu0 %v3562
      %3594 = vmatpush.msra.mxu0 %v3561
      %3595 = vmatpush.msra.mxu0 %v3560
      %3596 = vmatpush.msra.mxu0 %v3559
      %3597 = vmatpush.msra.mxu0 %v3558
      %3598 = vmatpush.msra.mxu0 %v3557
      %3599 = vmatpush.msra.mxu0 %v3556
      %3600 = vmatpush.msra.mxu0 %v3555
      %3601 = vmatpush.msra.mxu0 %v3554
      %3602 = vmatpush.msra.mxu0 %v3553
      %3603 = vmatpush.msra.mxu0 %v3552
      %3604 = vmatmul.f32.gmra.mxu0 %v3544
      %v3605 = vpop.f32.mrf.mxu0
      %v3606 = vadd.f32 %v3586, %v3605
      %3607 = vmatmul.f32.gmra.mxu0 %v3546
      %v3608 = vpop.f32.mrf.mxu0
      %v3609 = vadd.f32 %v3586, %v3608
      %3610 = vmatmul.f32.gmra.mxu0 %v3548
      %v3611 = vpop.f32.mrf.mxu0
      %v3612 = vadd.f32 %v3586, %v3611
      %3613 = vmatmul.f32.gmra.mxu0 %v3550
      %v3614 = vpop.f32.mrf.mxu0
      %v3615 = vadd.f32 %v3586, %v3614
      %3616 = vdwg.mxu0
      %3617 = vmatpush.msra.mxu0 %v3583
      %3618 = vmatpush.msra.mxu0 %v3582
      %3619 = vmatpush.msra.mxu0 %v3581
      %3620 = vmatpush.msra.mxu0 %v3580
      %3621 = vmatpush.msra.mxu0 %v3579
      %3622 = vmatpush.msra.mxu0 %v3578
      %3623 = vmatpush.msra.mxu0 %v3577
      %3624 = vmatpush.msra.mxu0 %v3576
      %3625 = vmatpush.msra.mxu0 %v3575
      %3626 = vmatpush.msra.mxu0 %v3574
      %3627 = vmatpush.msra.mxu0 %v3573
      %3628 = vmatpush.msra.mxu0 %v3572
      %3629 = vmatpush.msra.mxu0 %v3571
      %3630 = vmatpush.msra.mxu0 %v3570
      %3631 = vmatpush.msra.mxu0 %v3569
      %3632 = vmatpush.msra.mxu0 %v3568
      %3633 = vmatmul.f32.gmra.mxu0 %v3545
      %v3634 = vpop.f32.mrf.mxu0
      %v3635 = vadd.f32 %v3606, %v3634
      %3636 = vmatmul.f32.gmra.mxu0 %v3547
      %v3637 = vpop.f32.mrf.mxu0
      %v3638 = vadd.f32 %v3609, %v3637
      %3639 = vmatmul.f32.gmra.mxu0 %v3549
      %v3640 = vpop.f32.mrf.mxu0
      %v3641 = vadd.f32 %v3612, %v3640
      %3642 = vmatmul.f32.gmra.mxu0 %v3551
      %v3643 = vpop.f32.mrf.mxu0
      %v3644 = vadd.f32 %v3615, %v3643
      %3645 = vdwg.mxu0
      %v3646 = vadd.f32 %v3635, %v2780
      %v3647 = vadd.f32 %v3638, %v2781
      %v3648 = vadd.f32 %v3641, %v2782
      %v3649 = vadd.f32 %v3644, %v2783
      %3650 = vst.msk [vmem:[%s413] sm:$0xff] %vm806, %v3646
      %3651 = vst.msk [vmem:[%s413 + $0x8] sm:$0xff] %vm806, %v3647
      %3652 = vst.msk [vmem:[%s413 + $0x10] sm:$0xff] %vm806, %v3648
      %3653 = vst.msk [vmem:[%s413 + $0x18] sm:$0xff] %vm806, %v3649
      %p3654 = scmp.lt.s32.totalorder %s23, 1
      %s3655 = scalar_select %p3654, %s23, 1
      %s3656 = smul.addr %s3655, 4
      %s3657 = smul.addr %s3656, 8
      %s3658 = scalar_lea.vmem %s12, %s3657
      // Predicated region
      $region69: #{esbn_forward.6} parent=67 // pred_check
        %p3659 = pneg %p298
      $region70: #{esbn_forward.6} parent=67 // pred_check_branch
        %3661 = sbr.rel (%p3659) target = $region72
      $region71: #{esbn_forward.6} parent=67 // pred_region
        _
      $region72: #{esbn_forward.6} parent=67 // pred_fallthru
        _
    $region68: #{esbn_forward.6} parent=5 // pred_fallthru
      _
    %p3662 = scmp.le.s32.totalorder 2, %s18
    // Predicated region
    $region73: #{esbn_forward.6} parent=5 // pred_check
      %p3663 = pneg %p3662
    $region74: #{esbn_forward.6} parent=5 // pred_check_branch
      %3665 = sbr.rel (%p3663) target = $region76
    $region75: #{esbn_forward.6} parent=5 // pred_region
      %s3666 = ssub.s32 %s18, 2
      // Predicated region
      $region77: #{esbn_forward.6} parent=75 // pred_check
        %p3667 = pneg %p304
      $region78: #{esbn_forward.6} parent=75 // pred_check_branch
        %3669 = sbr.rel (%p3667) target = $region80
      $region79: #{esbn_forward.6} parent=75 // pred_region
        %p3670 = scmp.lt.s32.totalorder %s24, 1
        %s3671 = scalar_select %p3670, %s24, 1
        %s3672 = smul.addr %s3671, 4
        %s3673 = smul.addr %s3672, 8
        %s3674 = scalar_lea.vmem %s12, %s3673
      $region80: #{esbn_forward.6} parent=75 // pred_fallthru
        _
    $region76: #{esbn_forward.6} parent=5 // pred_fallthru
      _
  $region6: #{esbn_forward.6} parent=0 // loop_footer
    %s22 = sadd.s32 1, %s18
  $region7: #{esbn_forward.6} parent=0 // loop_footer_branch
    %17 = sbr.rel target = $region3
  $region8: #{esbn_forward.6} parent=0 // loop_exit
    _

</llo_original>
